<compile_context>
chip_gen: v7x
topology: tpu7x:2x2x1
jax: 0.10.0
libtpu: 0.0.40
codegen_flags: <defaults>
</compile_context>

<pallas_src>
import jax
import jax.numpy as jnp
import numpy as np
from jax.experimental import pallas as pl
from jax.experimental.pallas import tpu as pltpu

RES_SCALE = 0.9
BN_EPS = 1e-5


# ---------------------------------------------------------------------------
# Fused kernel: 3 convs + folded BN + ReLU + 3x SE residual + glass fusion
# ---------------------------------------------------------------------------
def _mcc_kernel(rgb_ref, nir_ref, wr_ref, wn_ref, scale_ref, shift_ref,
                w1_ref, b1_ref, w2_ref, b2_ref, out_ref,
                xcol_rgb, xcol_nir, rf_sc, n_sc):
    # rgb_ref / nir_ref : (H, W, C)  one batch element, NHWC, bf16
    # wr_ref / wn_ref   : (3, 3*C, 2*C) bf16  -- per-kh taps, K=(kw,ci), N=[own|fused]
    # scale/shift       : (3, 1, C) f32 folded BN for [rgb, nir, fused]
    # w1/b1/w2/b2       : stacked SE params for [rgb, nir, fused]
    # out_ref           : (H, W, C) f32
    # xcol_*            : ((H+2)*W, 3*C) bf16 scratch (padded, W-shifted taps)
    # rf_sc             : (H*W, 2*C) f32 scratch -> holds post-act [rgb | fused]
    # n_sc              : (H*W, C)   f32 scratch -> holds post-act nir
    H, W, C = out_ref.shape
    HW = H * W
    K3 = 3 * C

    zero_row = jnp.zeros((W, K3), jnp.bfloat16)

    # ---- halo + W-shifted taps, built as register values, one full store ----
    def build_xcol(x_ref, xcol):
        xb = x_ref[...]                                          # (H, W, C) bf16
        zc = jnp.zeros((H, 1, C), jnp.bfloat16)
        xm1 = jnp.concatenate([zc, xb[:, :W - 1, :]], axis=1)    # x[h, w-1], 0 at w=0
        xp1 = jnp.concatenate([xb[:, 1:, :], zc], axis=1)        # x[h, w+1], 0 at w=W-1
        row = jnp.concatenate([xm1, xb, xp1], axis=2)            # (H, W, 3C) lane concat
        xcol[0:W, :] = zero_row                                  # padded row 0
        xcol[(H + 1) * W:(H + 2) * W, :] = zero_row              # padded row H+1
        xcol[W:(H + 1) * W, :] = row.reshape(HW, K3)             # one aligned full store

    build_xcol(rgb_ref, xcol_rgb)
    build_xcol(nir_ref, xcol_nir)

    # ---- 3x3 conv as 3 MXU matmuls (M=HW, K=3C, N=2C), value-chained f32 acc ----
    def conv3(xcol, w_ref):
        # patch for kh = padded rows kh..kh+H-1 -> contiguous, copy-free row slice
        acc = jnp.dot(xcol[0:HW, :], w_ref[0],
                      preferred_element_type=jnp.float32)
        acc = acc + jnp.dot(xcol[W:W + HW, :], w_ref[1],
                            preferred_element_type=jnp.float32)
        acc = acc + jnp.dot(xcol[2 * W:2 * W + HW, :], w_ref[2],
                            preferred_element_type=jnp.float32)
        return acc                                               # (HW, 2C) f32

    ar = conv3(xcol_rgb, wr_ref)      # [:, :C] rgb conv, [:, C:] fused rgb-half
    an = conv3(xcol_nir, wn_ref)      # [:, :C] nir conv, [:, C:] fused nir-half

    # ---- folded BatchNorm + ReLU; stage results in scratch (bounds liveness) ----
    def bn_relu(pre, i):
        return jnp.maximum(pre * scale_ref[i] + shift_ref[i], 0.0)

    rf_sc[:, 0:C] = bn_relu(ar[:, 0:C], 0)                        # rgb
    n_sc[...] = bn_relu(an[:, 0:C], 1)                            # nir
    rf_sc[:, C:2 * C] = bn_relu(ar[:, C:2 * C] + an[:, C:2 * C], 2)  # fused

    # ---- SE residual gain: SE(x)*res_scale + x == x * (1 + res_scale*gate) ----
    inv_hw = 1.0 / HW

    def se_gain(x, i):
        m = jnp.sum(x, axis=0, keepdims=True) * inv_hw            # (1, C) global pool
        h = jnp.dot(m, w1_ref[i], preferred_element_type=jnp.float32) + b1_ref[i]
        h = jnp.maximum(h, 0.0)                                   # (1, Cr)
        g = jnp.dot(h, w2_ref[i], preferred_element_type=jnp.float32) + b2_ref[i]
        return 1.0 + RES_SCALE * jax.nn.sigmoid(g)                # (1, C)

    g_rgb = se_gain(rf_sc[:, 0:C], 0)
    g_nir = se_gain(n_sc[...], 1)
    g_fus = se_gain(rf_sc[:, C:2 * C], 2)

    # ---- glass region + fusion ----
    glass = jax.nn.sigmoid(rf_sc[:, 0:C] * g_rgb - n_sc[...] * g_nir)
    out_ref[...] = (rf_sc[:, C:2 * C] * g_fus * glass).reshape(H, W, C).astype(out_ref.dtype)


# ---------------------------------------------------------------------------
# Parameter packing (do this ONCE, outside the jitted step)
# ---------------------------------------------------------------------------
def pack_mcc_params(p):
    C = p["rgb_conv"][0].shape[2]
    Cr = p["se_rgb"][0].shape[-1]
    w_rgb, s_rgb, sh_rgb = p["rgb_conv"]
    w_nir, s_nir, sh_nir = p["nir_conv"]
    w_fus, s_fus, sh_fus = p["fused_conv"]     # (3,3,2C,C) HWIO, I = [rgb | nir]

    # Combined weights: one matmul per input yields [own conv | fused-half].
    wr = jnp.concatenate([w_rgb, w_fus[:, :, :C, :]], axis=-1)    # (3,3,C,2C)
    wn = jnp.concatenate([w_nir, w_fus[:, :, C:, :]], axis=-1)    # (3,3,C,2C)
    wr = wr.reshape(3, 3 * C, 2 * C).astype(jnp.bfloat16)         # K = (kw, ci)
    wn = wn.reshape(3, 3 * C, 2 * C).astype(jnp.bfloat16)

    return {
        "wr": wr, "wn": wn,
        "scales": jnp.stack([s_rgb, s_nir, s_fus]).reshape(3, 1, C),
        "shifts": jnp.stack([sh_rgb, sh_nir, sh_fus]).reshape(3, 1, C),
        "w1": jnp.stack([p["se_rgb"][0], p["se_nir"][0], p["se_fuse"][0]]),
        "b1": jnp.stack([p["se_rgb"][1], p["se_nir"][1], p["se_fuse"][1]]).reshape(3, 1, Cr),
        "w2": jnp.stack([p["se_rgb"][2], p["se_nir"][2], p["se_fuse"][2]]),
        "b2": jnp.stack([p["se_rgb"][3], p["se_nir"][3], p["se_fuse"][3]]).reshape(3, 1, C),
    }


# ---------------------------------------------------------------------------
# NHWC core (no transposes) + NCHW adaptor matching the PyTorch interface
# ---------------------------------------------------------------------------
def mcc_forward_nhwc(rgb, nir, pk):
    # rgb / nir: (B, H, W, C) bf16, channels-last so C maps to TPU lanes.
    B, H, W, C = rgb.shape
    Cr = pk["w1"].shape[-1]

    feat_spec = pl.BlockSpec((None, H, W, C), lambda b: (b, 0, 0, 0))

    def const_spec(shape):
        # Constant index map -> no re-fetch; single buffer reclaims VMEM.
        return pl.BlockSpec(shape, lambda b: (0,) * len(shape),
                            pipeline_mode=pl.Buffered(1))

    flops = int(72 * B * H * W * C * C)                 # 2 inputs x 3 kh x (HW,3C)@(3C,2C)
    bytes_accessed = int(2 * B * H * W * C * 2          # bf16 features in
                         + B * H * W * C * 4            # f32 output
                         + 2 * 3 * 3 * C * 2 * C * 2    # bf16 packed conv weights
                         + 6 * C * Cr * 4)              # SE params
    transcendentals = int(2 * B * H * W * C)            # glass sigmoid (+ SE, small)

    return pl.pallas_call(
        _mcc_kernel,
        out_shape=jax.ShapeDtypeStruct((B, H, W, C), jnp.float32),
        grid=(B,),
        in_specs=[
            feat_spec,                                  # rgb (bf16)
            feat_spec,                                  # nir (bf16)
            const_spec((3, 3 * C, 2 * C)),              # wr
            const_spec((3, 3 * C, 2 * C)),              # wn
            const_spec((3, 1, C)),                      # BN scales
            const_spec((3, 1, C)),                      # BN shifts
            const_spec((3, C, Cr)),                     # SE w1
            const_spec((3, 1, Cr)),                     # SE b1
            const_spec((3, Cr, C)),                     # SE w2
            const_spec((3, 1, C)),                      # SE b2
        ],
        out_specs=feat_spec,
        scratch_shapes=[
            pltpu.VMEM(((H + 2) * W, 3 * C), jnp.bfloat16),   # xcol_rgb
            pltpu.VMEM(((H + 2) * W, 3 * C), jnp.bfloat16),   # xcol_nir
            pltpu.VMEM((H * W, 2 * C), jnp.float32),          # [rgb | fused] post-act
            pltpu.VMEM((H * W, C), jnp.float32),              # nir post-act
        ],
        compiler_params=pltpu.CompilerParams(
            dimension_semantics=("parallel",),
            vmem_limit_bytes=48 * 1024 * 1024),
        cost_estimate=pl.CostEstimate(flops=flops,
                                      transcendentals=transcendentals,
                                      bytes_accessed=bytes_accessed),
    )(rgb, nir, pk["wr"], pk["wn"], pk["scales"], pk["shifts"],
      pk["w1"], pk["b1"], pk["w2"], pk["b2"])


def mcc_forward_pallas(rgb_fea_nchw, nir_fea_nchw, packed):
    # NCHW adaptor for parity with the PyTorch module.  In an NHWC-end-to-end
    # model call mcc_forward_nhwc directly and drop these transposes.
    rgb = jnp.transpose(rgb_fea_nchw, (0, 2, 3, 1)).astype(jnp.bfloat16)
    nir = jnp.transpose(nir_fea_nchw, (0, 2, 3, 1)).astype(jnp.bfloat16)
    out = mcc_forward_nhwc(rgb, nir, packed)
    return jnp.transpose(out, (0, 3, 1, 2))


# ---------------------------------------------------------------------------
# Parameter init (deterministic, synthetic)
# ---------------------------------------------------------------------------
def init_params(key, channel, reduction=16):
    C, Cr = channel, channel // reduction
    keys = iter(jax.random.split(key, 32))

    def conv_params(cin, cout):
        w = 0.1 * jax.random.normal(next(keys), (3, 3, cin, cout), jnp.float32)
        gamma = 1.0 + 0.1 * jax.random.normal(next(keys), (cout,), jnp.float32)
        beta = 0.1 * jax.random.normal(next(keys), (cout,), jnp.float32)
        mean = 0.1 * jax.random.normal(next(keys), (cout,), jnp.float32)
        var = 1.0 + 0.5 * jax.random.uniform(next(keys), (cout,), jnp.float32)
        scale = gamma / jnp.sqrt(var + BN_EPS)   # folded eval-mode BatchNorm
        shift = beta - mean * scale
        return w, scale, shift

    def se_params():
        w1 = 0.1 * jax.random.normal(next(keys), (C, Cr), jnp.float32)
        b1 = 0.1 * jax.random.normal(next(keys), (Cr,), jnp.float32)
        w2 = 0.1 * jax.random.normal(next(keys), (Cr, C), jnp.float32)
        b2 = 0.1 * jax.random.normal(next(keys), (C,), jnp.float32)
        return w1, b1, w2, b2

    return {
        "rgb_conv": conv_params(C, C),
        "nir_conv": conv_params(C, C),
        "fused_conv": conv_params(2 * C, C),
        "se_rgb": se_params(),
        "se_nir": se_params(),
        "se_fuse": se_params(),
    }


# ---------------------------------------------------------------------------
# Pure-JAX reference (same bf16-operand / f32-accumulate MXU precision)
# ---------------------------------------------------------------------------
def mcc_forward_ref(rgb_fea_nchw, nir_fea_nchw, p):
    rgb_fea = jnp.transpose(rgb_fea_nchw, (0, 2, 3, 1))
    nir_fea = jnp.transpose(nir_fea_nchw, (0, 2, 3, 1))

    def conv_bn_relu_ref(x, w, scale, shift):
        y = jax.lax.conv_general_dilated(
            x.astype(jnp.bfloat16), w.astype(jnp.bfloat16), (1, 1), "SAME",
            dimension_numbers=("NHWC", "HWIO", "NHWC"),
            preferred_element_type=jnp.float32)
        y = y * scale[None, None, None, :] + shift[None, None, None, :]
        return jnp.maximum(y, 0.0)

    def se_res(x, w1, b1, w2, b2):
        m = jnp.mean(x, axis=(1, 2))                      # (B, C)
        h = jnp.maximum(m @ w1 + b1, 0.0)
        y = jax.nn.sigmoid(h @ w2 + b2)                   # (B, C)
        return x * (1.0 + RES_SCALE * y[:, None, None, :])

    rgb = conv_bn_relu_ref(rgb_fea, *p["rgb_conv"])
    nir = conv_bn_relu_ref(nir_fea, *p["nir_conv"])
    fused = conv_bn_relu_ref(jnp.concatenate([rgb_fea, nir_fea], -1),
                             *p["fused_conv"])
    rgb = se_res(rgb, *p["se_rgb"])
    nir = se_res(nir, *p["se_nir"])
    fused = se_res(fused, *p["se_fuse"])
    glass = jax.nn.sigmoid(rgb - nir)
    return jnp.transpose(fused * glass, (0, 3, 1, 2))


if __name__ == "__main__":
    B, C, H, W = 2, 128, 16, 16   # channel >= 16 required by SE reduction=16
    key = jax.random.PRNGKey(0)
    k1, k2, k3 = jax.random.split(key, 3)
    rgb_fea = jax.random.normal(k1, (B, C, H, W), jnp.float32)   # NCHW like PyTorch
    nir_fea = jax.random.normal(k2, (B, C, H, W), jnp.float32)
    params = init_params(k3, C)
    packed = pack_mcc_params(params)        # pack bf16 conv weights once

    fwd = jax.jit(lambda a, b: mcc_forward_pallas(a, b, packed))
    out = jax.block_until_ready(fwd(rgb_fea, nir_fea))

    ref = mcc_forward_ref(rgb_fea, nir_fea, params)
    np.testing.assert_allclose(np.asarray(out), np.asarray(ref),
                               rtol=2e-3, atol=2e-3)
    print("KERNEL_OK")
</pallas_src>

<mosaic_0001>
module attributes {stable_mosaic.version = 11 : i64} {
  func.func @_mcc_kernel(%arg0: i32, %arg1: memref<1x16x16x128xbf16, #tpu.memory_space<vmem>>, %arg2: memref<1x16x16x128xbf16, #tpu.memory_space<vmem>>, %arg3: memref<3x384x256xbf16, #tpu.memory_space<vmem>>, %arg4: memref<3x384x256xbf16, #tpu.memory_space<vmem>>, %arg5: memref<3x1x128xf32, #tpu.memory_space<vmem>>, %arg6: memref<3x1x128xf32, #tpu.memory_space<vmem>>, %arg7: memref<3x128x8xf32, #tpu.memory_space<vmem>>, %arg8: memref<3x1x8xf32, #tpu.memory_space<vmem>>, %arg9: memref<3x8x128xf32, #tpu.memory_space<vmem>>, %arg10: memref<3x1x128xf32, #tpu.memory_space<vmem>>, %arg11: memref<1x16x16x128xf32, #tpu.memory_space<vmem>>, %arg12: memref<288x384xbf16, #tpu.memory_space<vmem>>, %arg13: memref<288x384xbf16, #tpu.memory_space<vmem>>, %arg14: memref<256x256xf32, #tpu.memory_space<vmem>>, %arg15: memref<256x128xf32, #tpu.memory_space<vmem>>) attributes {dimension_semantics = [#tpu.dimension_semantics<parallel>], iteration_bounds = array<i64: 2>, scalar_prefetch = 0 : i64, scratch_operands = 4 : i64, tpu.core_type = #tpu.core_type<tc>, window_params = [{transform_indices = @transform_0, window_bounds = array<i64: 1, 16, 16, 128>}, {transform_indices = @transform_1, window_bounds = array<i64: 1, 16, 16, 128>}, {pipeline_mode = #tpu.pipeline_mode<synchronous>, transform_indices = @transform_2, window_bounds = array<i64: 3, 384, 256>}, {pipeline_mode = #tpu.pipeline_mode<synchronous>, transform_indices = @transform_3, window_bounds = array<i64: 3, 384, 256>}, {pipeline_mode = #tpu.pipeline_mode<synchronous>, transform_indices = @transform_4, window_bounds = array<i64: 3, 1, 128>}, {pipeline_mode = #tpu.pipeline_mode<synchronous>, transform_indices = @transform_5, window_bounds = array<i64: 3, 1, 128>}, {pipeline_mode = #tpu.pipeline_mode<synchronous>, transform_indices = @transform_6, window_bounds = array<i64: 3, 128, 8>}, {pipeline_mode = #tpu.pipeline_mode<synchronous>, transform_indices = @transform_7, window_bounds = array<i64: 3, 1, 8>}, {pipeline_mode = #tpu.pipeline_mode<synchronous>, transform_indices = @transform_8, window_bounds = array<i64: 3, 8, 128>}, {pipeline_mode = #tpu.pipeline_mode<synchronous>, transform_indices = @transform_9, window_bounds = array<i64: 3, 1, 128>}, {transform_indices = @transform_10, window_bounds = array<i64: 1, 16, 16, 128>}]} {
    %cst = arith.constant 0.000000e+00 : bf16
    %0 = vector.broadcast %cst : bf16 to vector<16x384xbf16>
    %c0 = arith.constant 0 : index
    %c0_0 = arith.constant 0 : index
    %c0_1 = arith.constant 0 : index
    %c0_2 = arith.constant 0 : index
    %1 = vector.load %arg1[%c0, %c0_0, %c0_1, %c0_2] : memref<1x16x16x128xbf16, #tpu.memory_space<vmem>>, vector<1x16x16x128xbf16>
    %2 = vector.shape_cast %1 : vector<1x16x16x128xbf16> to vector<16x16x128xbf16>
    %cst_3 = arith.constant 0.000000e+00 : bf16
    %3 = vector.broadcast %cst_3 : bf16 to vector<16x1x128xbf16>
    %4 = vector.extract_strided_slice %2 {offsets = [0, 0, 0], sizes = [16, 15, 128], strides = [1, 1, 1]} : vector<16x16x128xbf16> to vector<16x15x128xbf16>
    %5 = tpu.concatenate %3, %4 in 1 : vector<16x1x128xbf16>, vector<16x15x128xbf16> -> vector<16x16x128xbf16>
    %6 = vector.extract_strided_slice %2 {offsets = [0, 1, 0], sizes = [16, 15, 128], strides = [1, 1, 1]} : vector<16x16x128xbf16> to vector<16x15x128xbf16>
    %7 = tpu.concatenate %6, %3 in 1 : vector<16x15x128xbf16>, vector<16x1x128xbf16> -> vector<16x16x128xbf16>
    %8 = tpu.concatenate %5, %2, %7 in 2 : vector<16x16x128xbf16>, vector<16x16x128xbf16>, vector<16x16x128xbf16> -> vector<16x16x384xbf16>
    %c0_4 = arith.constant 0 : index
    %c0_5 = arith.constant 0 : index
    %9 = vector.load %arg12[%c0_4, %c0_5] : memref<288x384xbf16, #tpu.memory_space<vmem>>, vector<16x384xbf16>
    tpu.vector_store %arg12[%c0_4, %c0_5], %0 {strides = array<i32>} : memref<288x384xbf16, #tpu.memory_space<vmem>>, vector<16x384xbf16>,
    %c272 = arith.constant 272 : index
    %c0_6 = arith.constant 0 : index
    %10 = vector.load %arg12[%c272, %c0_6] : memref<288x384xbf16, #tpu.memory_space<vmem>>, vector<16x384xbf16>
    tpu.vector_store %arg12[%c272, %c0_6], %0 {strides = array<i32>} : memref<288x384xbf16, #tpu.memory_space<vmem>>, vector<16x384xbf16>,
    %11 = vector.shape_cast %8 : vector<16x16x384xbf16> to vector<256x384xbf16>
    %c16 = arith.constant 16 : index
    %c0_7 = arith.constant 0 : index
    %12 = vector.load %arg12[%c16, %c0_7] : memref<288x384xbf16, #tpu.memory_space<vmem>>, vector<256x384xbf16>
    tpu.vector_store %arg12[%c16, %c0_7], %11 {strides = array<i32>} : memref<288x384xbf16, #tpu.memory_space<vmem>>, vector<256x384xbf16>,
    %c0_8 = arith.constant 0 : index
    %c0_9 = arith.constant 0 : index
    %c0_10 = arith.constant 0 : index
    %c0_11 = arith.constant 0 : index
    %13 = vector.load %arg2[%c0_8, %c0_9, %c0_10, %c0_11] : memref<1x16x16x128xbf16, #tpu.memory_space<vmem>>, vector<1x16x16x128xbf16>
    %14 = vector.shape_cast %13 : vector<1x16x16x128xbf16> to vector<16x16x128xbf16>
    %cst_12 = arith.constant 0.000000e+00 : bf16
    %15 = vector.broadcast %cst_12 : bf16 to vector<16x1x128xbf16>
    %16 = vector.extract_strided_slice %14 {offsets = [0, 0, 0], sizes = [16, 15, 128], strides = [1, 1, 1]} : vector<16x16x128xbf16> to vector<16x15x128xbf16>
    %17 = tpu.concatenate %15, %16 in 1 : vector<16x1x128xbf16>, vector<16x15x128xbf16> -> vector<16x16x128xbf16>
    %18 = vector.extract_strided_slice %14 {offsets = [0, 1, 0], sizes = [16, 15, 128], strides = [1, 1, 1]} : vector<16x16x128xbf16> to vector<16x15x128xbf16>
    %19 = tpu.concatenate %18, %15 in 1 : vector<16x15x128xbf16>, vector<16x1x128xbf16> -> vector<16x16x128xbf16>
    %20 = tpu.concatenate %17, %14, %19 in 2 : vector<16x16x128xbf16>, vector<16x16x128xbf16>, vector<16x16x128xbf16> -> vector<16x16x384xbf16>
    %c0_13 = arith.constant 0 : index
    %c0_14 = arith.constant 0 : index
    %21 = vector.load %arg13[%c0_13, %c0_14] : memref<288x384xbf16, #tpu.memory_space<vmem>>, vector<16x384xbf16>
    tpu.vector_store %arg13[%c0_13, %c0_14], %0 {strides = array<i32>} : memref<288x384xbf16, #tpu.memory_space<vmem>>, vector<16x384xbf16>,
    %c272_15 = arith.constant 272 : index
    %c0_16 = arith.constant 0 : index
    %22 = vector.load %arg13[%c272_15, %c0_16] : memref<288x384xbf16, #tpu.memory_space<vmem>>, vector<16x384xbf16>
    tpu.vector_store %arg13[%c272_15, %c0_16], %0 {strides = array<i32>} : memref<288x384xbf16, #tpu.memory_space<vmem>>, vector<16x384xbf16>,
    %23 = vector.shape_cast %20 : vector<16x16x384xbf16> to vector<256x384xbf16>
    %c16_17 = arith.constant 16 : index
    %c0_18 = arith.constant 0 : index
    %24 = vector.load %arg13[%c16_17, %c0_18] : memref<288x384xbf16, #tpu.memory_space<vmem>>, vector<256x384xbf16>
    tpu.vector_store %arg13[%c16_17, %c0_18], %23 {strides = array<i32>} : memref<288x384xbf16, #tpu.memory_space<vmem>>, vector<256x384xbf16>,
    %c0_19 = arith.constant 0 : index
    %c0_20 = arith.constant 0 : index
    %25 = vector.load %arg12[%c0_19, %c0_20] : memref<288x384xbf16, #tpu.memory_space<vmem>>, vector<256x384xbf16>
    %c0_21 = arith.constant 0 : index
    %c0_22 = arith.constant 0 : index
    %c0_23 = arith.constant 0 : index
    %26 = vector.load %arg3[%c0_21, %c0_22, %c0_23] : memref<3x384x256xbf16, #tpu.memory_space<vmem>>, vector<1x384x256xbf16>
    %27 = vector.shape_cast %26 : vector<1x384x256xbf16> to vector<384x256xbf16>
    %cst_24 = arith.constant dense<0.000000e+00> : vector<256x256xf32>
    %28 = tpu.matmul %25, %27, %cst_24 {dimension_numbers = #tpu.dot_dimension_numbers<[1], [0], [0], [1], [0, 0, 1, 1], [], []>} : vector<256x384xbf16>, vector<384x256xbf16>, vector<256x256xf32> -> vector<256x256xf32>
    %c16_25 = arith.constant 16 : index
    %c0_26 = arith.constant 0 : index
    %29 = vector.load %arg12[%c16_25, %c0_26] : memref<288x384xbf16, #tpu.memory_space<vmem>>, vector<256x384xbf16>
    %c1 = arith.constant 1 : index
    %c0_27 = arith.constant 0 : index
    %c0_28 = arith.constant 0 : index
    %30 = vector.load %arg3[%c1, %c0_27, %c0_28] : memref<3x384x256xbf16, #tpu.memory_space<vmem>>, vector<1x384x256xbf16>
    %31 = vector.shape_cast %30 : vector<1x384x256xbf16> to vector<384x256xbf16>
    %cst_29 = arith.constant dense<0.000000e+00> : vector<256x256xf32>
    %32 = tpu.matmul %29, %31, %cst_29 {dimension_numbers = #tpu.dot_dimension_numbers<[1], [0], [0], [1], [0, 0, 1, 1], [], []>} : vector<256x384xbf16>, vector<384x256xbf16>, vector<256x256xf32> -> vector<256x256xf32>
    %33 = arith.addf %28, %32 : vector<256x256xf32>
    %c32 = arith.constant 32 : index
    %c0_30 = arith.constant 0 : index
    %34 = vector.load %arg12[%c32, %c0_30] : memref<288x384xbf16, #tpu.memory_space<vmem>>, vector<256x384xbf16>
    %c2 = arith.constant 2 : index
    %c0_31 = arith.constant 0 : index
    %c0_32 = arith.constant 0 : index
    %35 = vector.load %arg3[%c2, %c0_31, %c0_32] : memref<3x384x256xbf16, #tpu.memory_space<vmem>>, vector<1x384x256xbf16>
    %36 = vector.shape_cast %35 : vector<1x384x256xbf16> to vector<384x256xbf16>
    %cst_33 = arith.constant dense<0.000000e+00> : vector<256x256xf32>
    %37 = tpu.matmul %34, %36, %cst_33 {dimension_numbers = #tpu.dot_dimension_numbers<[1], [0], [0], [1], [0, 0, 1, 1], [], []>} : vector<256x384xbf16>, vector<384x256xbf16>, vector<256x256xf32> -> vector<256x256xf32>
    %38 = arith.addf %33, %37 : vector<256x256xf32>
    %c0_34 = arith.constant 0 : index
    %c0_35 = arith.constant 0 : index
    %39 = vector.load %arg13[%c0_34, %c0_35] : memref<288x384xbf16, #tpu.memory_space<vmem>>, vector<256x384xbf16>
    %c0_36 = arith.constant 0 : index
    %c0_37 = arith.constant 0 : index
    %c0_38 = arith.constant 0 : index
    %40 = vector.load %arg4[%c0_36, %c0_37, %c0_38] : memref<3x384x256xbf16, #tpu.memory_space<vmem>>, vector<1x384x256xbf16>
    %41 = vector.shape_cast %40 : vector<1x384x256xbf16> to vector<384x256xbf16>
    %cst_39 = arith.constant dense<0.000000e+00> : vector<256x256xf32>
    %42 = tpu.matmul %39, %41, %cst_39 {dimension_numbers = #tpu.dot_dimension_numbers<[1], [0], [0], [1], [0, 0, 1, 1], [], []>} : vector<256x384xbf16>, vector<384x256xbf16>, vector<256x256xf32> -> vector<256x256xf32>
    %c16_40 = arith.constant 16 : index
    %c0_41 = arith.constant 0 : index
    %43 = vector.load %arg13[%c16_40, %c0_41] : memref<288x384xbf16, #tpu.memory_space<vmem>>, vector<256x384xbf16>
    %c1_42 = arith.constant 1 : index
    %c0_43 = arith.constant 0 : index
    %c0_44 = arith.constant 0 : index
    %44 = vector.load %arg4[%c1_42, %c0_43, %c0_44] : memref<3x384x256xbf16, #tpu.memory_space<vmem>>, vector<1x384x256xbf16>
    %45 = vector.shape_cast %44 : vector<1x384x256xbf16> to vector<384x256xbf16>
    %cst_45 = arith.constant dense<0.000000e+00> : vector<256x256xf32>
    %46 = tpu.matmul %43, %45, %cst_45 {dimension_numbers = #tpu.dot_dimension_numbers<[1], [0], [0], [1], [0, 0, 1, 1], [], []>} : vector<256x384xbf16>, vector<384x256xbf16>, vector<256x256xf32> -> vector<256x256xf32>
    %47 = arith.addf %42, %46 : vector<256x256xf32>
    %c32_46 = arith.constant 32 : index
    %c0_47 = arith.constant 0 : index
    %48 = vector.load %arg13[%c32_46, %c0_47] : memref<288x384xbf16, #tpu.memory_space<vmem>>, vector<256x384xbf16>
    %c2_48 = arith.constant 2 : index
    %c0_49 = arith.constant 0 : index
    %c0_50 = arith.constant 0 : index
    %49 = vector.load %arg4[%c2_48, %c0_49, %c0_50] : memref<3x384x256xbf16, #tpu.memory_space<vmem>>, vector<1x384x256xbf16>
    %50 = vector.shape_cast %49 : vector<1x384x256xbf16> to vector<384x256xbf16>
    %cst_51 = arith.constant dense<0.000000e+00> : vector<256x256xf32>
    %51 = tpu.matmul %48, %50, %cst_51 {dimension_numbers = #tpu.dot_dimension_numbers<[1], [0], [0], [1], [0, 0, 1, 1], [], []>} : vector<256x384xbf16>, vector<384x256xbf16>, vector<256x256xf32> -> vector<256x256xf32>
    %52 = arith.addf %47, %51 : vector<256x256xf32>
    %53 = vector.extract_strided_slice %38 {offsets = [0, 0], sizes = [256, 128], strides = [1, 1]} : vector<256x256xf32> to vector<256x128xf32>
    %c0_52 = arith.constant 0 : index
    %c0_53 = arith.constant 0 : index
    %c0_54 = arith.constant 0 : index
    %54 = vector.load %arg5[%c0_52, %c0_53, %c0_54] : memref<3x1x128xf32, #tpu.memory_space<vmem>>, vector<1x1x128xf32>
    %55 = vector.shape_cast %54 : vector<1x1x128xf32> to vector<1x128xf32>
    %56 = vector.broadcast %55 : vector<1x128xf32> to vector<256x128xf32>
    %57 = arith.mulf %53, %56 : vector<256x128xf32>
    %c0_55 = arith.constant 0 : index
    %c0_56 = arith.constant 0 : index
    %c0_57 = arith.constant 0 : index
    %58 = vector.load %arg6[%c0_55, %c0_56, %c0_57] : memref<3x1x128xf32, #tpu.memory_space<vmem>>, vector<1x1x128xf32>
    %59 = vector.shape_cast %58 : vector<1x1x128xf32> to vector<1x128xf32>
    %60 = vector.broadcast %59 : vector<1x128xf32> to vector<256x128xf32>
    %61 = arith.addf %57, %60 : vector<256x128xf32>
    %cst_58 = arith.constant 0.000000e+00 : f32
    %62 = vector.broadcast %cst_58 : f32 to vector<256x128xf32>
    %63 = arith.maximumf %61, %62 : vector<256x128xf32>
    %c0_59 = arith.constant 0 : index
    %c0_60 = arith.constant 0 : index
    %64 = vector.load %arg14[%c0_59, %c0_60] : memref<256x256xf32, #tpu.memory_space<vmem>>, vector<256x128xf32>
    tpu.vector_store %arg14[%c0_59, %c0_60], %63 {strides = array<i32>} : memref<256x256xf32, #tpu.memory_space<vmem>>, vector<256x128xf32>,
    %65 = vector.extract_strided_slice %52 {offsets = [0, 0], sizes = [256, 128], strides = [1, 1]} : vector<256x256xf32> to vector<256x128xf32>
    %c1_61 = arith.constant 1 : index
    %c0_62 = arith.constant 0 : index
    %c0_63 = arith.constant 0 : index
    %66 = vector.load %arg5[%c1_61, %c0_62, %c0_63] : memref<3x1x128xf32, #tpu.memory_space<vmem>>, vector<1x1x128xf32>
    %67 = vector.shape_cast %66 : vector<1x1x128xf32> to vector<1x128xf32>
    %68 = vector.broadcast %67 : vector<1x128xf32> to vector<256x128xf32>
    %69 = arith.mulf %65, %68 : vector<256x128xf32>
    %c1_64 = arith.constant 1 : index
    %c0_65 = arith.constant 0 : index
    %c0_66 = arith.constant 0 : index
    %70 = vector.load %arg6[%c1_64, %c0_65, %c0_66] : memref<3x1x128xf32, #tpu.memory_space<vmem>>, vector<1x1x128xf32>
    %71 = vector.shape_cast %70 : vector<1x1x128xf32> to vector<1x128xf32>
    %72 = vector.broadcast %71 : vector<1x128xf32> to vector<256x128xf32>
    %73 = arith.addf %69, %72 : vector<256x128xf32>
    %cst_67 = arith.constant 0.000000e+00 : f32
    %74 = vector.broadcast %cst_67 : f32 to vector<256x128xf32>
    %75 = arith.maximumf %73, %74 : vector<256x128xf32>
    %c0_68 = arith.constant 0 : index
    %c0_69 = arith.constant 0 : index
    %76 = vector.load %arg15[%c0_68, %c0_69] : memref<256x128xf32, #tpu.memory_space<vmem>>, vector<256x128xf32>
    tpu.vector_store %arg15[%c0_68, %c0_69], %75 {strides = array<i32>} : memref<256x128xf32, #tpu.memory_space<vmem>>, vector<256x128xf32>,
    %77 = vector.extract_strided_slice %38 {offsets = [0, 128], sizes = [256, 128], strides = [1, 1]} : vector<256x256xf32> to vector<256x128xf32>
    %78 = vector.extract_strided_slice %52 {offsets = [0, 128], sizes = [256, 128], strides = [1, 1]} : vector<256x256xf32> to vector<256x128xf32>
    %79 = arith.addf %77, %78 : vector<256x128xf32>
    %c2_70 = arith.constant 2 : index
    %c0_71 = arith.constant 0 : index
    %c0_72 = arith.constant 0 : index
    %80 = vector.load %arg5[%c2_70, %c0_71, %c0_72] : memref<3x1x128xf32, #tpu.memory_space<vmem>>, vector<1x1x128xf32>
    %81 = vector.shape_cast %80 : vector<1x1x128xf32> to vector<1x128xf32>
    %82 = vector.broadcast %81 : vector<1x128xf32> to vector<256x128xf32>
    %83 = arith.mulf %79, %82 : vector<256x128xf32>
    %c2_73 = arith.constant 2 : index
    %c0_74 = arith.constant 0 : index
    %c0_75 = arith.constant 0 : index
    %84 = vector.load %arg6[%c2_73, %c0_74, %c0_75] : memref<3x1x128xf32, #tpu.memory_space<vmem>>, vector<1x1x128xf32>
    %85 = vector.shape_cast %84 : vector<1x1x128xf32> to vector<1x128xf32>
    %86 = vector.broadcast %85 : vector<1x128xf32> to vector<256x128xf32>
    %87 = arith.addf %83, %86 : vector<256x128xf32>
    %cst_76 = arith.constant 0.000000e+00 : f32
    %88 = vector.broadcast %cst_76 : f32 to vector<256x128xf32>
    %89 = arith.maximumf %87, %88 : vector<256x128xf32>
    %c0_77 = arith.constant 0 : index
    %c128 = arith.constant 128 : index
    %90 = vector.load %arg14[%c0_77, %c128] : memref<256x256xf32, #tpu.memory_space<vmem>>, vector<256x128xf32>
    tpu.vector_store %arg14[%c0_77, %c128], %89 {strides = array<i32>} : memref<256x256xf32, #tpu.memory_space<vmem>>, vector<256x128xf32>,
    %c0_78 = arith.constant 0 : index
    %c0_79 = arith.constant 0 : index
    %91 = vector.load %arg14[%c0_78, %c0_79] : memref<256x256xf32, #tpu.memory_space<vmem>>, vector<256x128xf32>
    %cst_80 = arith.constant dense<0.000000e+00> : vector<128xf32>
    %92 = vector.multi_reduction <add>, %91, %cst_80 [0] : vector<256x128xf32> to vector<128xf32>
    %93 = vector.shape_cast %92 : vector<128xf32> to vector<1x128xf32>
    %cst_81 = arith.constant 3.906250e-03 : f32
    %94 = vector.broadcast %cst_81 : f32 to vector<1x128xf32>
    %95 = arith.mulf %93, %94 : vector<1x128xf32>
    %c0_82 = arith.constant 0 : index
    %c0_83 = arith.constant 0 : index
    %c0_84 = arith.constant 0 : index
    %96 = vector.load %arg7[%c0_82, %c0_83, %c0_84] : memref<3x128x8xf32, #tpu.memory_space<vmem>>, vector<1x128x8xf32>
    %97 = vector.shape_cast %96 : vector<1x128x8xf32> to vector<128x8xf32>
    %cst_85 = arith.constant dense<0.000000e+00> : vector<1x8xf32>
    %98 = tpu.matmul %95, %97, %cst_85 {dimension_numbers = #tpu.dot_dimension_numbers<[1], [0], [0], [1], [0, 0, 1, 1], [], []>} : vector<1x128xf32>, vector<128x8xf32>, vector<1x8xf32> -> vector<1x8xf32>
    %c0_86 = arith.constant 0 : index
    %c0_87 = arith.constant 0 : index
    %c0_88 = arith.constant 0 : index
    %99 = vector.load %arg8[%c0_86, %c0_87, %c0_88] : memref<3x1x8xf32, #tpu.memory_space<vmem>>, vector<1x1x8xf32>
    %100 = vector.shape_cast %99 : vector<1x1x8xf32> to vector<1x8xf32>
    %101 = arith.addf %98, %100 : vector<1x8xf32>
    %cst_89 = arith.constant 0.000000e+00 : f32
    %102 = vector.broadcast %cst_89 : f32 to vector<1x8xf32>
    %103 = arith.maximumf %101, %102 : vector<1x8xf32>
    %c0_90 = arith.constant 0 : index
    %c0_91 = arith.constant 0 : index
    %c0_92 = arith.constant 0 : index
    %104 = vector.load %arg9[%c0_90, %c0_91, %c0_92] : memref<3x8x128xf32, #tpu.memory_space<vmem>>, vector<1x8x128xf32>
    %105 = vector.shape_cast %104 : vector<1x8x128xf32> to vector<8x128xf32>
    %cst_93 = arith.constant dense<0.000000e+00> : vector<1x128xf32>
    %106 = tpu.matmul %103, %105, %cst_93 {dimension_numbers = #tpu.dot_dimension_numbers<[1], [0], [0], [1], [0, 0, 1, 1], [], []>} : vector<1x8xf32>, vector<8x128xf32>, vector<1x128xf32> -> vector<1x128xf32>
    %c0_94 = arith.constant 0 : index
    %c0_95 = arith.constant 0 : index
    %c0_96 = arith.constant 0 : index
    %107 = vector.load %arg10[%c0_94, %c0_95, %c0_96] : memref<3x1x128xf32, #tpu.memory_space<vmem>>, vector<1x1x128xf32>
    %108 = vector.shape_cast %107 : vector<1x1x128xf32> to vector<1x128xf32>
    %109 = arith.addf %106, %108 : vector<1x128xf32>
    %110 = arith.negf %109 : vector<1x128xf32>
    %111 = math.exp %110 : vector<1x128xf32>
    %cst_97 = arith.constant 1.000000e+00 : f32
    %112 = vector.broadcast %cst_97 : f32 to vector<1x128xf32>
    %113 = arith.addf %112, %111 : vector<1x128xf32>
    %114 = arith.divf %112, %113 : vector<1x128xf32>
    %cst_98 = arith.constant 0.899999976 : f32
    %115 = vector.broadcast %cst_98 : f32 to vector<1x128xf32>
    %116 = arith.mulf %115, %114 : vector<1x128xf32>
    %cst_99 = arith.constant 1.000000e+00 : f32
    %117 = vector.broadcast %cst_99 : f32 to vector<1x128xf32>
    %118 = arith.addf %117, %116 : vector<1x128xf32>
    %c0_100 = arith.constant 0 : index
    %c0_101 = arith.constant 0 : index
    %119 = vector.load %arg15[%c0_100, %c0_101] : memref<256x128xf32, #tpu.memory_space<vmem>>, vector<256x128xf32>
    %cst_102 = arith.constant dense<0.000000e+00> : vector<128xf32>
    %120 = vector.multi_reduction <add>, %119, %cst_102 [0] : vector<256x128xf32> to vector<128xf32>
    %121 = vector.shape_cast %120 : vector<128xf32> to vector<1x128xf32>
    %cst_103 = arith.constant 3.906250e-03 : f32
    %122 = vector.broadcast %cst_103 : f32 to vector<1x128xf32>
    %123 = arith.mulf %121, %122 : vector<1x128xf32>
    %c1_104 = arith.constant 1 : index
    %c0_105 = arith.constant 0 : index
    %c0_106 = arith.constant 0 : index
    %124 = vector.load %arg7[%c1_104, %c0_105, %c0_106] : memref<3x128x8xf32, #tpu.memory_space<vmem>>, vector<1x128x8xf32>
    %125 = vector.shape_cast %124 : vector<1x128x8xf32> to vector<128x8xf32>
    %cst_107 = arith.constant dense<0.000000e+00> : vector<1x8xf32>
    %126 = tpu.matmul %123, %125, %cst_107 {dimension_numbers = #tpu.dot_dimension_numbers<[1], [0], [0], [1], [0, 0, 1, 1], [], []>} : vector<1x128xf32>, vector<128x8xf32>, vector<1x8xf32> -> vector<1x8xf32>
    %c1_108 = arith.constant 1 : index
    %c0_109 = arith.constant 0 : index
    %c0_110 = arith.constant 0 : index
    %127 = vector.load %arg8[%c1_108, %c0_109, %c0_110] : memref<3x1x8xf32, #tpu.memory_space<vmem>>, vector<1x1x8xf32>
    %128 = vector.shape_cast %127 : vector<1x1x8xf32> to vector<1x8xf32>
    %129 = arith.addf %126, %128 : vector<1x8xf32>
    %cst_111 = arith.constant 0.000000e+00 : f32
    %130 = vector.broadcast %cst_111 : f32 to vector<1x8xf32>
    %131 = arith.maximumf %129, %130 : vector<1x8xf32>
    %c1_112 = arith.constant 1 : index
    %c0_113 = arith.constant 0 : index
    %c0_114 = arith.constant 0 : index
    %132 = vector.load %arg9[%c1_112, %c0_113, %c0_114] : memref<3x8x128xf32, #tpu.memory_space<vmem>>, vector<1x8x128xf32>
    %133 = vector.shape_cast %132 : vector<1x8x128xf32> to vector<8x128xf32>
    %cst_115 = arith.constant dense<0.000000e+00> : vector<1x128xf32>
    %134 = tpu.matmul %131, %133, %cst_115 {dimension_numbers = #tpu.dot_dimension_numbers<[1], [0], [0], [1], [0, 0, 1, 1], [], []>} : vector<1x8xf32>, vector<8x128xf32>, vector<1x128xf32> -> vector<1x128xf32>
    %c1_116 = arith.constant 1 : index
    %c0_117 = arith.constant 0 : index
    %c0_118 = arith.constant 0 : index
    %135 = vector.load %arg10[%c1_116, %c0_117, %c0_118] : memref<3x1x128xf32, #tpu.memory_space<vmem>>, vector<1x1x128xf32>
    %136 = vector.shape_cast %135 : vector<1x1x128xf32> to vector<1x128xf32>
    %137 = arith.addf %134, %136 : vector<1x128xf32>
    %138 = arith.negf %137 : vector<1x128xf32>
    %139 = math.exp %138 : vector<1x128xf32>
    %cst_119 = arith.constant 1.000000e+00 : f32
    %140 = vector.broadcast %cst_119 : f32 to vector<1x128xf32>
    %141 = arith.addf %140, %139 : vector<1x128xf32>
    %142 = arith.divf %140, %141 : vector<1x128xf32>
    %cst_120 = arith.constant 0.899999976 : f32
    %143 = vector.broadcast %cst_120 : f32 to vector<1x128xf32>
    %144 = arith.mulf %143, %142 : vector<1x128xf32>
    %cst_121 = arith.constant 1.000000e+00 : f32
    %145 = vector.broadcast %cst_121 : f32 to vector<1x128xf32>
    %146 = arith.addf %145, %144 : vector<1x128xf32>
    %c0_122 = arith.constant 0 : index
    %c128_123 = arith.constant 128 : index
    %147 = vector.load %arg14[%c0_122, %c128_123] : memref<256x256xf32, #tpu.memory_space<vmem>>, vector<256x128xf32>
    %cst_124 = arith.constant dense<0.000000e+00> : vector<128xf32>
    %148 = vector.multi_reduction <add>, %147, %cst_124 [0] : vector<256x128xf32> to vector<128xf32>
    %149 = vector.shape_cast %148 : vector<128xf32> to vector<1x128xf32>
    %cst_125 = arith.constant 3.906250e-03 : f32
    %150 = vector.broadcast %cst_125 : f32 to vector<1x128xf32>
    %151 = arith.mulf %149, %150 : vector<1x128xf32>
    %c2_126 = arith.constant 2 : index
    %c0_127 = arith.constant 0 : index
    %c0_128 = arith.constant 0 : index
    %152 = vector.load %arg7[%c2_126, %c0_127, %c0_128] : memref<3x128x8xf32, #tpu.memory_space<vmem>>, vector<1x128x8xf32>
    %153 = vector.shape_cast %152 : vector<1x128x8xf32> to vector<128x8xf32>
    %cst_129 = arith.constant dense<0.000000e+00> : vector<1x8xf32>
    %154 = tpu.matmul %151, %153, %cst_129 {dimension_numbers = #tpu.dot_dimension_numbers<[1], [0], [0], [1], [0, 0, 1, 1], [], []>} : vector<1x128xf32>, vector<128x8xf32>, vector<1x8xf32> -> vector<1x8xf32>
    %c2_130 = arith.constant 2 : index
    %c0_131 = arith.constant 0 : index
    %c0_132 = arith.constant 0 : index
    %155 = vector.load %arg8[%c2_130, %c0_131, %c0_132] : memref<3x1x8xf32, #tpu.memory_space<vmem>>, vector<1x1x8xf32>
    %156 = vector.shape_cast %155 : vector<1x1x8xf32> to vector<1x8xf32>
    %157 = arith.addf %154, %156 : vector<1x8xf32>
    %cst_133 = arith.constant 0.000000e+00 : f32
    %158 = vector.broadcast %cst_133 : f32 to vector<1x8xf32>
    %159 = arith.maximumf %157, %158 : vector<1x8xf32>
    %c2_134 = arith.constant 2 : index
    %c0_135 = arith.constant 0 : index
    %c0_136 = arith.constant 0 : index
    %160 = vector.load %arg9[%c2_134, %c0_135, %c0_136] : memref<3x8x128xf32, #tpu.memory_space<vmem>>, vector<1x8x128xf32>
    %161 = vector.shape_cast %160 : vector<1x8x128xf32> to vector<8x128xf32>
    %cst_137 = arith.constant dense<0.000000e+00> : vector<1x128xf32>
    %162 = tpu.matmul %159, %161, %cst_137 {dimension_numbers = #tpu.dot_dimension_numbers<[1], [0], [0], [1], [0, 0, 1, 1], [], []>} : vector<1x8xf32>, vector<8x128xf32>, vector<1x128xf32> -> vector<1x128xf32>
    %c2_138 = arith.constant 2 : index
    %c0_139 = arith.constant 0 : index
    %c0_140 = arith.constant 0 : index
    %163 = vector.load %arg10[%c2_138, %c0_139, %c0_140] : memref<3x1x128xf32, #tpu.memory_space<vmem>>, vector<1x1x128xf32>
    %164 = vector.shape_cast %163 : vector<1x1x128xf32> to vector<1x128xf32>
    %165 = arith.addf %162, %164 : vector<1x128xf32>
    %166 = arith.negf %165 : vector<1x128xf32>
    %167 = math.exp %166 : vector<1x128xf32>
    %cst_141 = arith.constant 1.000000e+00 : f32
    %168 = vector.broadcast %cst_141 : f32 to vector<1x128xf32>
    %169 = arith.addf %168, %167 : vector<1x128xf32>
    %170 = arith.divf %168, %169 : vector<1x128xf32>
    %cst_142 = arith.constant 0.899999976 : f32
    %171 = vector.broadcast %cst_142 : f32 to vector<1x128xf32>
    %172 = arith.mulf %171, %170 : vector<1x128xf32>
    %cst_143 = arith.constant 1.000000e+00 : f32
    %173 = vector.broadcast %cst_143 : f32 to vector<1x128xf32>
    %174 = arith.addf %173, %172 : vector<1x128xf32>
    %c0_144 = arith.constant 0 : index
    %c0_145 = arith.constant 0 : index
    %175 = vector.load %arg14[%c0_144, %c0_145] : memref<256x256xf32, #tpu.memory_space<vmem>>, vector<256x128xf32>
    %176 = vector.broadcast %118 : vector<1x128xf32> to vector<256x128xf32>
    %177 = arith.mulf %175, %176 : vector<256x128xf32>
    %c0_146 = arith.constant 0 : index
    %c0_147 = arith.constant 0 : index
    %178 = vector.load %arg15[%c0_146, %c0_147] : memref<256x128xf32, #tpu.memory_space<vmem>>, vector<256x128xf32>
    %179 = vector.broadcast %146 : vector<1x128xf32> to vector<256x128xf32>
    %180 = arith.mulf %178, %179 : vector<256x128xf32>
    %181 = arith.subf %177, %180 : vector<256x128xf32>
    %182 = arith.negf %181 : vector<256x128xf32>
    %183 = math.exp %182 : vector<256x128xf32>
    %cst_148 = arith.constant 1.000000e+00 : f32
    %184 = vector.broadcast %cst_148 : f32 to vector<256x128xf32>
    %185 = arith.addf %184, %183 : vector<256x128xf32>
    %186 = arith.divf %184, %185 : vector<256x128xf32>
    %c0_149 = arith.constant 0 : index
    %c128_150 = arith.constant 128 : index
    %187 = vector.load %arg14[%c0_149, %c128_150] : memref<256x256xf32, #tpu.memory_space<vmem>>, vector<256x128xf32>
    %188 = vector.broadcast %174 : vector<1x128xf32> to vector<256x128xf32>
    %189 = arith.mulf %187, %188 : vector<256x128xf32>
    %190 = arith.mulf %189, %186 : vector<256x128xf32>
    %191 = vector.shape_cast %190 : vector<256x128xf32> to vector<16x16x128xf32>
    %c0_151 = arith.constant 0 : index
    %c0_152 = arith.constant 0 : index
    %c0_153 = arith.constant 0 : index
    %c0_154 = arith.constant 0 : index
    %192 = vector.load %arg11[%c0_151, %c0_152, %c0_153, %c0_154] : memref<1x16x16x128xf32, #tpu.memory_space<vmem>>, vector<1x16x16x128xf32>
    %193 = vector.shape_cast %192 : vector<1x16x16x128xf32> to vector<16x16x128xf32>
    %194 = vector.shape_cast %191 : vector<16x16x128xf32> to vector<1x16x16x128xf32>
    tpu.vector_store %arg11[%c0_151, %c0_152, %c0_153, %c0_154], %194 {strides = array<i32>} : memref<1x16x16x128xf32, #tpu.memory_space<vmem>>, vector<1x16x16x128xf32>,
    return
  }
  func.func @transform_0(%arg0: i32) -> (i32, i32, i32, i32) {
    %c0_i32 = arith.constant 0 : i32
    %c0_i32_0 = arith.constant 0 : i32
    %c0_i32_1 = arith.constant 0 : i32
    %c0_i32_2 = arith.constant 0 : i32
    return %arg0, %c0_i32, %c0_i32_0, %c0_i32_1 : i32, i32, i32, i32
  }
  func.func @transform_1(%arg0: i32) -> (i32, i32, i32, i32) {
    %c0_i32 = arith.constant 0 : i32
    %c0_i32_0 = arith.constant 0 : i32
    %c0_i32_1 = arith.constant 0 : i32
    %c0_i32_2 = arith.constant 0 : i32
    return %arg0, %c0_i32, %c0_i32_0, %c0_i32_1 : i32, i32, i32, i32
  }
  func.func @transform_2(%arg0: i32) -> (i32, i32, i32) {
    %c0_i32 = arith.constant 0 : i32
    %c0_i32_0 = arith.constant 0 : i32
    %c0_i32_1 = arith.constant 0 : i32
    %c0_i32_2 = arith.constant 0 : i32
    return %c0_i32, %c0_i32_0, %c0_i32_1 : i32, i32, i32
  }
  func.func @transform_3(%arg0: i32) -> (i32, i32, i32) {
    %c0_i32 = arith.constant 0 : i32
    %c0_i32_0 = arith.constant 0 : i32
    %c0_i32_1 = arith.constant 0 : i32
    %c0_i32_2 = arith.constant 0 : i32
    return %c0_i32, %c0_i32_0, %c0_i32_1 : i32, i32, i32
  }
  func.func @transform_4(%arg0: i32) -> (i32, i32, i32) {
    %c0_i32 = arith.constant 0 : i32
    %c0_i32_0 = arith.constant 0 : i32
    %c0_i32_1 = arith.constant 0 : i32
    %c0_i32_2 = arith.constant 0 : i32
    return %c0_i32, %c0_i32_0, %c0_i32_1 : i32, i32, i32
  }
  func.func @transform_5(%arg0: i32) -> (i32, i32, i32) {
    %c0_i32 = arith.constant 0 : i32
    %c0_i32_0 = arith.constant 0 : i32
    %c0_i32_1 = arith.constant 0 : i32
    %c0_i32_2 = arith.constant 0 : i32
    return %c0_i32, %c0_i32_0, %c0_i32_1 : i32, i32, i32
  }
  func.func @transform_6(%arg0: i32) -> (i32, i32, i32) {
    %c0_i32 = arith.constant 0 : i32
    %c0_i32_0 = arith.constant 0 : i32
    %c0_i32_1 = arith.constant 0 : i32
    %c0_i32_2 = arith.constant 0 : i32
    return %c0_i32, %c0_i32_0, %c0_i32_1 : i32, i32, i32
  }
  func.func @transform_7(%arg0: i32) -> (i32, i32, i32) {
    %c0_i32 = arith.constant 0 : i32
    %c0_i32_0 = arith.constant 0 : i32
    %c0_i32_1 = arith.constant 0 : i32
    %c0_i32_2 = arith.constant 0 : i32
    return %c0_i32, %c0_i32_0, %c0_i32_1 : i32, i32, i32
  }
  func.func @transform_8(%arg0: i32) -> (i32, i32, i32) {
    %c0_i32 = arith.constant 0 : i32
    %c0_i32_0 = arith.constant 0 : i32
    %c0_i32_1 = arith.constant 0 : i32
    %c0_i32_2 = arith.constant 0 : i32
    return %c0_i32, %c0_i32_0, %c0_i32_1 : i32, i32, i32
  }
  func.func @transform_9(%arg0: i32) -> (i32, i32, i32) {
    %c0_i32 = arith.constant 0 : i32
    %c0_i32_0 = arith.constant 0 : i32
    %c0_i32_1 = arith.constant 0 : i32
    %c0_i32_2 = arith.constant 0 : i32
    return %c0_i32, %c0_i32_0, %c0_i32_1 : i32, i32, i32
  }
  func.func @transform_10(%arg0: i32) -> (i32, i32, i32, i32) {
    %c0_i32 = arith.constant 0 : i32
    %c0_i32_0 = arith.constant 0 : i32
    %c0_i32_1 = arith.constant 0 : i32
    %c0_i32_2 = arith.constant 0 : i32
    return %arg0, %c0_i32, %c0_i32_0, %c0_i32_1 : i32, i32, i32, i32
  }
}

</mosaic_0001>

<llo_original>
// kernel: _lambda_.1
$region0: #{_lambda_.1}
  #allocation0 [shape = 'u32[]', space=smem, size = 0x4, offset = 0x4, fixed_abs, tag = 'smem constant byte address 0x4 - core index']
  #allocation1 [shape = 'u32[144,128]{1,0:T(1,128)}', space=vmem, size = 0x12000, scoped, tag = 'internal scratch']
  #allocation2 [shape = 'bf16[288,384]{1,0:T(16,128)(2,1)}', space=vmem, size = 0x36000, scoped, tag = 'scratch operand']
  #allocation3 [shape = 'bf16[288,384]{1,0:T(16,128)(2,1)}', space=vmem, size = 0x36000, scoped, tag = 'scratch operand']
  #allocation4 [shape = 'f32[256,256]{1,0:T(8,128)}', space=vmem, size = 0x40000, scoped, tag = 'scratch operand']
  #allocation5 [shape = 'f32[256,128]{1,0:T(8,128)}', space=vmem, size = 0x20000, scoped, tag = 'scratch operand']
  %s0 = inlined_call_operand.vmem [shape: bf16[2,16,16,128], index: 0, kind: input, shape index: {}]
  %s1 = inlined_call_operand.vmem [shape: bf16[2,16,16,128], index: 1, kind: input, shape index: {}]
  %s2 = inlined_call_operand.vmem [shape: bf16[3,384,256], index: 2, kind: input, shape index: {}]
  %s3 = inlined_call_operand.vmem [shape: bf16[3,384,256], index: 3, kind: input, shape index: {}]
  %s4 = inlined_call_operand.vmem [shape: f32[3,1,128], index: 4, kind: input, shape index: {}]
  %s5 = inlined_call_operand.vmem [shape: f32[3,1,128], index: 5, kind: input, shape index: {}]
  %s6 = inlined_call_operand.vmem [shape: f32[3,128,8], index: 6, kind: input, shape index: {}]
  %s7 = inlined_call_operand.vmem [shape: f32[3,1,8], index: 7, kind: input, shape index: {}]
  %s8 = inlined_call_operand.vmem [shape: f32[3,8,128], index: 8, kind: input, shape index: {}]
  %s9 = inlined_call_operand.vmem [shape: f32[3,1,128], index: 9, kind: input, shape index: {}]
  %s10 = inlined_call_operand.hbm [shape: f32[2,16,16,128], index: 10, kind: output, shape index: {}]
  %s11 = sld [smem:[#allocation0]]
  $region73: #{_lambda_.1} parent=0
    _
  %s13 = ssub.s32 1, %s11
  %s14 = scalar_select 0, %s13, %s11
  $region1: #{_lambda_.1} parent=0
    #allocation6 [shape = 'u8[262144]{0}', space=vmem, size = 0x40000, scoped, tag = 'output window, operand 0']
    #allocation7 [shape = 's32[2]{0}', space=sflag, size = 0x8, scoped, tag = 'scoped memory for _lambda_.1']
    %15 = vsyncpa [#allocation7], 0
    %s16 = scalar_lea.sflag [#allocation7], 1
    %17 = vsyncpa %s16, 0
    loop: start=0, step=1, limit=4
    $region2: #{_lambda_.1} parent=1 // loop_pre_header
      _
    $region3: #{_lambda_.1} parent=1 // loop_header
      %s19 = sphi 0, %s23
      %p20 = scmp.ge.s32.totalorder %s19, 4
      %s29 = sphi 0, %s31
      %s32 = sphi 0, %s29
      %s33 = sphi 0, %s32
      %s49 = sphi 0, %s33
      %s55 = sphi 0, %s57
      %s58 = sphi 0, %s55
      %s59 = sphi 0, %s58
      %s75 = sphi 0, %s59
      %s79 = sphi 0, %s79
      %s81 = sphi 0, %s79
      %s82 = sphi 0, %s81
      %s96 = sphi 0, %s82
      %s100 = sphi 0, %s100
      %s102 = sphi 0, %s100
      %s103 = sphi 0, %s102
      %s117 = sphi 0, %s103
      %s121 = sphi 0, %s121
      %s123 = sphi 0, %s121
      %s124 = sphi 0, %s123
      %s138 = sphi 0, %s124
      %s142 = sphi 0, %s142
      %s144 = sphi 0, %s142
      %s145 = sphi 0, %s144
      %s159 = sphi 0, %s145
      %s163 = sphi 0, %s163
      %s165 = sphi 0, %s163
      %s166 = sphi 0, %s165
      %s180 = sphi 0, %s166
      %s184 = sphi 0, %s184
      %s186 = sphi 0, %s184
      %s187 = sphi 0, %s186
      %s201 = sphi 0, %s187
      %s205 = sphi 0, %s205
      %s207 = sphi 0, %s205
      %s208 = sphi 0, %s207
      %s222 = sphi 0, %s208
      %s226 = sphi 0, %s226
      %s228 = sphi 0, %s226
      %s229 = sphi 0, %s228
      %s243 = sphi 0, %s229
      %s249 = sphi 0, %s251
      %s252 = sphi 0, %s249
      %s253 = sphi 0, %s252
      %s269 = sphi 0, %s253
    $region4: #{_lambda_.1} parent=1 // loop_header_branch
      %22 = sbr.rel (%p20) target = $region8
    $region5: #{_lambda_.1} parent=1 // loop_body
      %s24 = ssub.s32 %s19, 1
      %s25 = ssub.s32 %s19, 2
      %s26 = sadd.s32 %s19, 1
      %s27 = ssub.s32 %s19, %s26
      %p28 = scmp.eq.s32.totalorder %s27, 0
      %s30 = sadd.s32 %s29, 1
      %s31 = scalar_select %p28, %s29, %s30
      %p34 = pneg %p28
      %p35 = scmp.eq.s32.totalorder %s19, 1
      %p36 = por %p34, %p35
      %p37 = scmp.ne.s32.totalorder %s29, %s32
      %p38 = scmp.eq.s32.totalorder %s19, 0
      %p39 = por %p37, %p38
      %p40 = scmp.ne.s32.totalorder %s29, %s32
      %p41 = scmp.eq.s32.totalorder %s24, 1
      %p42 = por %p40, %p41
      %p43 = scmp.ne.s32.totalorder %s32, %s33
      %p44 = scmp.eq.s32.totalorder %s24, 0
      %p45 = por %p43, %p44
      %p46 = scmp.ne.s32.totalorder %s32, %s33
      %p47 = scmp.eq.s32.totalorder %s25, 1
      %p48 = por %p46, %p47
      %p50 = scmp.ne.s32.totalorder %s33, %s49
      %p51 = scmp.eq.s32.totalorder %s25, 0
      %p52 = por %p50, %p51
      %s53 = ssub.s32 %s19, %s26
      %p54 = scmp.eq.s32.totalorder %s53, 0
      %s56 = sadd.s32 %s55, 1
      %s57 = scalar_select %p54, %s55, %s56
      %p60 = pneg %p54
      %p61 = scmp.eq.s32.totalorder %s19, 1
      %p62 = por %p60, %p61
      %p63 = scmp.ne.s32.totalorder %s55, %s58
      %p64 = scmp.eq.s32.totalorder %s19, 0
      %p65 = por %p63, %p64
      %p66 = scmp.ne.s32.totalorder %s55, %s58
      %p67 = scmp.eq.s32.totalorder %s24, 1
      %p68 = por %p66, %p67
      %p69 = scmp.ne.s32.totalorder %s58, %s59
      %p70 = scmp.eq.s32.totalorder %s24, 0
      %p71 = por %p69, %p70
      %p72 = scmp.ne.s32.totalorder %s58, %s59
      %p73 = scmp.eq.s32.totalorder %s25, 1
      %p74 = por %p72, %p73
      %p76 = scmp.ne.s32.totalorder %s59, %s75
      %p77 = scmp.eq.s32.totalorder %s25, 0
      %p78 = por %p76, %p77
      %s80 = sadd.s32 %s79, 1
      %p83 = scmp.eq.s32.totalorder %s19, 1
      %p84 = scmp.ne.s32.totalorder %s79, %s81
      %p85 = scmp.eq.s32.totalorder %s19, 0
      %p86 = por %p84, %p85
      %p87 = scmp.ne.s32.totalorder %s79, %s81
      %p88 = scmp.eq.s32.totalorder %s24, 1
      %p89 = por %p87, %p88
      %p90 = scmp.ne.s32.totalorder %s81, %s82
      %p91 = scmp.eq.s32.totalorder %s24, 0
      %p92 = por %p90, %p91
      %p93 = scmp.ne.s32.totalorder %s81, %s82
      %p94 = scmp.eq.s32.totalorder %s25, 1
      %p95 = por %p93, %p94
      %p97 = scmp.ne.s32.totalorder %s82, %s96
      %p98 = scmp.eq.s32.totalorder %s25, 0
      %p99 = por %p97, %p98
      %s101 = sadd.s32 %s100, 1
      %p104 = scmp.eq.s32.totalorder %s19, 1
      %p105 = scmp.ne.s32.totalorder %s100, %s102
      %p106 = scmp.eq.s32.totalorder %s19, 0
      %p107 = por %p105, %p106
      %p108 = scmp.ne.s32.totalorder %s100, %s102
      %p109 = scmp.eq.s32.totalorder %s24, 1
      %p110 = por %p108, %p109
      %p111 = scmp.ne.s32.totalorder %s102, %s103
      %p112 = scmp.eq.s32.totalorder %s24, 0
      %p113 = por %p111, %p112
      %p114 = scmp.ne.s32.totalorder %s102, %s103
      %p115 = scmp.eq.s32.totalorder %s25, 1
      %p116 = por %p114, %p115
      %p118 = scmp.ne.s32.totalorder %s103, %s117
      %p119 = scmp.eq.s32.totalorder %s25, 0
      %p120 = por %p118, %p119
      %s122 = sadd.s32 %s121, 1
      %p125 = scmp.eq.s32.totalorder %s19, 1
      %p126 = scmp.ne.s32.totalorder %s121, %s123
      %p127 = scmp.eq.s32.totalorder %s19, 0
      %p128 = por %p126, %p127
      %p129 = scmp.ne.s32.totalorder %s121, %s123
      %p130 = scmp.eq.s32.totalorder %s24, 1
      %p131 = por %p129, %p130
      %p132 = scmp.ne.s32.totalorder %s123, %s124
      %p133 = scmp.eq.s32.totalorder %s24, 0
      %p134 = por %p132, %p133
      %p135 = scmp.ne.s32.totalorder %s123, %s124
      %p136 = scmp.eq.s32.totalorder %s25, 1
      %p137 = por %p135, %p136
      %p139 = scmp.ne.s32.totalorder %s124, %s138
      %p140 = scmp.eq.s32.totalorder %s25, 0
      %p141 = por %p139, %p140
      %s143 = sadd.s32 %s142, 1
      %p146 = scmp.eq.s32.totalorder %s19, 1
      %p147 = scmp.ne.s32.totalorder %s142, %s144
      %p148 = scmp.eq.s32.totalorder %s19, 0
      %p149 = por %p147, %p148
      %p150 = scmp.ne.s32.totalorder %s142, %s144
      %p151 = scmp.eq.s32.totalorder %s24, 1
      %p152 = por %p150, %p151
      %p153 = scmp.ne.s32.totalorder %s144, %s145
      %p154 = scmp.eq.s32.totalorder %s24, 0
      %p155 = por %p153, %p154
      %p156 = scmp.ne.s32.totalorder %s144, %s145
      %p157 = scmp.eq.s32.totalorder %s25, 1
      %p158 = por %p156, %p157
      %p160 = scmp.ne.s32.totalorder %s145, %s159
      %p161 = scmp.eq.s32.totalorder %s25, 0
      %p162 = por %p160, %p161
      %s164 = sadd.s32 %s163, 1
      %p167 = scmp.eq.s32.totalorder %s19, 1
      %p168 = scmp.ne.s32.totalorder %s163, %s165
      %p169 = scmp.eq.s32.totalorder %s19, 0
      %p170 = por %p168, %p169
      %p171 = scmp.ne.s32.totalorder %s163, %s165
      %p172 = scmp.eq.s32.totalorder %s24, 1
      %p173 = por %p171, %p172
      %p174 = scmp.ne.s32.totalorder %s165, %s166
      %p175 = scmp.eq.s32.totalorder %s24, 0
      %p176 = por %p174, %p175
      %p177 = scmp.ne.s32.totalorder %s165, %s166
      %p178 = scmp.eq.s32.totalorder %s25, 1
      %p179 = por %p177, %p178
      %p181 = scmp.ne.s32.totalorder %s166, %s180
      %p182 = scmp.eq.s32.totalorder %s25, 0
      %p183 = por %p181, %p182
      %s185 = sadd.s32 %s184, 1
      %p188 = scmp.eq.s32.totalorder %s19, 1
      %p189 = scmp.ne.s32.totalorder %s184, %s186
      %p190 = scmp.eq.s32.totalorder %s19, 0
      %p191 = por %p189, %p190
      %p192 = scmp.ne.s32.totalorder %s184, %s186
      %p193 = scmp.eq.s32.totalorder %s24, 1
      %p194 = por %p192, %p193
      %p195 = scmp.ne.s32.totalorder %s186, %s187
      %p196 = scmp.eq.s32.totalorder %s24, 0
      %p197 = por %p195, %p196
      %p198 = scmp.ne.s32.totalorder %s186, %s187
      %p199 = scmp.eq.s32.totalorder %s25, 1
      %p200 = por %p198, %p199
      %p202 = scmp.ne.s32.totalorder %s187, %s201
      %p203 = scmp.eq.s32.totalorder %s25, 0
      %p204 = por %p202, %p203
      %s206 = sadd.s32 %s205, 1
      %p209 = scmp.eq.s32.totalorder %s19, 1
      %p210 = scmp.ne.s32.totalorder %s205, %s207
      %p211 = scmp.eq.s32.totalorder %s19, 0
      %p212 = por %p210, %p211
      %p213 = scmp.ne.s32.totalorder %s205, %s207
      %p214 = scmp.eq.s32.totalorder %s24, 1
      %p215 = por %p213, %p214
      %p216 = scmp.ne.s32.totalorder %s207, %s208
      %p217 = scmp.eq.s32.totalorder %s24, 0
      %p218 = por %p216, %p217
      %p219 = scmp.ne.s32.totalorder %s207, %s208
      %p220 = scmp.eq.s32.totalorder %s25, 1
      %p221 = por %p219, %p220
      %p223 = scmp.ne.s32.totalorder %s208, %s222
      %p224 = scmp.eq.s32.totalorder %s25, 0
      %p225 = por %p223, %p224
      %s227 = sadd.s32 %s226, 1
      %p230 = scmp.eq.s32.totalorder %s19, 1
      %p231 = scmp.ne.s32.totalorder %s226, %s228
      %p232 = scmp.eq.s32.totalorder %s19, 0
      %p233 = por %p231, %p232
      %p234 = scmp.ne.s32.totalorder %s226, %s228
      %p235 = scmp.eq.s32.totalorder %s24, 1
      %p236 = por %p234, %p235
      %p237 = scmp.ne.s32.totalorder %s228, %s229
      %p238 = scmp.eq.s32.totalorder %s24, 0
      %p239 = por %p237, %p238
      %p240 = scmp.ne.s32.totalorder %s228, %s229
      %p241 = scmp.eq.s32.totalorder %s25, 1
      %p242 = por %p240, %p241
      %p244 = scmp.ne.s32.totalorder %s229, %s243
      %p245 = scmp.eq.s32.totalorder %s25, 0
      %p246 = por %p244, %p245
      %s247 = ssub.s32 %s19, %s26
      %p248 = scmp.eq.s32.totalorder %s247, 0
      %s250 = sadd.s32 %s249, 1
      %s251 = scalar_select %p248, %s249, %s250
      %p254 = pneg %p248
      %p255 = scmp.eq.s32.totalorder %s19, 1
      %p256 = por %p254, %p255
      %p257 = scmp.ne.s32.totalorder %s249, %s252
      %p258 = scmp.eq.s32.totalorder %s19, 0
      %p259 = por %p257, %p258
      %p260 = scmp.ne.s32.totalorder %s249, %s252
      %p261 = scmp.eq.s32.totalorder %s24, 1
      %p262 = por %p260, %p261
      %p263 = scmp.ne.s32.totalorder %s252, %s253
      %p264 = scmp.eq.s32.totalorder %s24, 0
      %p265 = por %p263, %p264
      %p266 = scmp.ne.s32.totalorder %s252, %s253
      %p267 = scmp.eq.s32.totalorder %s25, 1
      %p268 = por %p266, %p267
      %p270 = scmp.ne.s32.totalorder %s253, %s269
      %p271 = scmp.eq.s32.totalorder %s25, 0
      %p272 = por %p270, %p271
      %p273 = scmp.le.s32.totalorder 1, %s19
      %p274 = scmp.lt.s32.totalorder %s19, 3
      %p275 = pnand %p273, %p274
      %p276 = pneg %p275
      // Predicated region
      $region9: #{_lambda_.1} parent=5 // pred_check
        _
      $region10: #{_lambda_.1} parent=5 // pred_check_branch
        %278 = sbr.rel (%p275) target = $region12
      $region11: #{_lambda_.1} parent=5 // pred_region
        %s279 = ssub.s32 %s19, 1
        // Predicated region
        $region13: #{_lambda_.1} parent=11 // pred_check
          %p280 = pneg %p92
        $region14: #{_lambda_.1} parent=11 // pred_check_branch
          %282 = sbr.rel (%p280) target = $region16
        $region15: #{_lambda_.1} parent=11 // pred_region
          _
        $region16: #{_lambda_.1} parent=11 // pred_fallthru
          _
        // Predicated region
        $region17: #{_lambda_.1} parent=11 // pred_check
          %p283 = pneg %p113
        $region18: #{_lambda_.1} parent=11 // pred_check_branch
          %285 = sbr.rel (%p283) target = $region20
        $region19: #{_lambda_.1} parent=11 // pred_region
          _
        $region20: #{_lambda_.1} parent=11 // pred_fallthru
          _
        // Predicated region
        $region21: #{_lambda_.1} parent=11 // pred_check
          %p286 = pneg %p134
        $region22: #{_lambda_.1} parent=11 // pred_check_branch
          %288 = sbr.rel (%p286) target = $region24
        $region23: #{_lambda_.1} parent=11 // pred_region
          _
        $region24: #{_lambda_.1} parent=11 // pred_fallthru
          _
        // Predicated region
        $region25: #{_lambda_.1} parent=11 // pred_check
          %p289 = pneg %p155
        $region26: #{_lambda_.1} parent=11 // pred_check_branch
          %291 = sbr.rel (%p289) target = $region28
        $region27: #{_lambda_.1} parent=11 // pred_region
          _
        $region28: #{_lambda_.1} parent=11 // pred_fallthru
          _
        // Predicated region
        $region29: #{_lambda_.1} parent=11 // pred_check
          %p292 = pneg %p176
        $region30: #{_lambda_.1} parent=11 // pred_check_branch
          %294 = sbr.rel (%p292) target = $region32
        $region31: #{_lambda_.1} parent=11 // pred_region
          _
        $region32: #{_lambda_.1} parent=11 // pred_fallthru
          _
        // Predicated region
        $region33: #{_lambda_.1} parent=11 // pred_check
          %p295 = pneg %p197
        $region34: #{_lambda_.1} parent=11 // pred_check_branch
          %297 = sbr.rel (%p295) target = $region36
        $region35: #{_lambda_.1} parent=11 // pred_region
          _
        $region36: #{_lambda_.1} parent=11 // pred_fallthru
          _
        // Predicated region
        $region37: #{_lambda_.1} parent=11 // pred_check
          %p298 = pneg %p218
        $region38: #{_lambda_.1} parent=11 // pred_check_branch
          %300 = sbr.rel (%p298) target = $region40
        $region39: #{_lambda_.1} parent=11 // pred_region
          _
        $region40: #{_lambda_.1} parent=11 // pred_fallthru
          _
        // Predicated region
        $region41: #{_lambda_.1} parent=11 // pred_check
          %p301 = pneg %p239
        $region42: #{_lambda_.1} parent=11 // pred_check_branch
          %303 = sbr.rel (%p301) target = $region44
        $region43: #{_lambda_.1} parent=11 // pred_region
          _
        $region44: #{_lambda_.1} parent=11 // pred_fallthru
          _
      $region12: #{_lambda_.1} parent=5 // pred_fallthru
        _
      %p304 = scmp.lt.s32.totalorder %s19, 2
      // Predicated region
      $region45: #{_lambda_.1} parent=5 // pred_check
        %p305 = pneg %p304
      $region46: #{_lambda_.1} parent=5 // pred_check_branch
        %307 = sbr.rel (%p305) target = $region48
      $region47: #{_lambda_.1} parent=5 // pred_region
        // Predicated region
        $region49: #{_lambda_.1} parent=47 // pred_check
          %p308 = pneg %p39
        $region50: #{_lambda_.1} parent=47 // pred_check_branch
          %310 = sbr.rel (%p308) target = $region52
        $region51: #{_lambda_.1} parent=47 // pred_region
          %p311 = scmp.lt.s32.totalorder %s19, 1
          %s312 = scalar_select %p311, %s19, 1
          %s313 = smul.addr %s312, 32
          %s314 = smul.addr %s313, 4
          %s315 = scalar_lea.vmem %s0, %s314
        $region52: #{_lambda_.1} parent=47 // pred_fallthru
          _
        // Predicated region
        $region53: #{_lambda_.1} parent=47 // pred_check
          %p316 = pneg %p65
        $region54: #{_lambda_.1} parent=47 // pred_check_branch
          %318 = sbr.rel (%p316) target = $region56
        $region55: #{_lambda_.1} parent=47 // pred_region
          %p319 = scmp.lt.s32.totalorder %s19, 1
          %s320 = scalar_select %p319, %s19, 1
          %s321 = smul.addr %s320, 32
          %s322 = smul.addr %s321, 4
          %s323 = scalar_lea.vmem %s1, %s322
        $region56: #{_lambda_.1} parent=47 // pred_fallthru
          _
      $region48: #{_lambda_.1} parent=5 // pred_fallthru
        _
      %p324 = scmp.le.s32.totalorder 1, %s19
      %p325 = scmp.lt.s32.totalorder %s19, 3
      %p326 = pnand %p324, %p325
      %p327 = pneg %p326
      // Predicated region
      $region57: #{_lambda_.1} parent=5 // pred_check
        _
      $region58: #{_lambda_.1} parent=5 // pred_check_branch
        %329 = sbr.rel (%p326) target = $region60
      $region59: #{_lambda_.1} parent=5 // pred_region
        %s330 = ssub.s32 %s19, 1
        %p331 = scmp.lt.s32.totalorder %s24, 1
        %s332 = scalar_select %p331, %s24, 1
        %s333 = smul.addr %s332, 32
        %s334 = smul.addr %s333, 4
        %s335 = scalar_lea.vmem %s0, %s334
        %p336 = pneg %p45
        %p337 = pneg %p42
        %p338 = scmp.lt.s32.totalorder %s24, 1
        %s339 = scalar_select %p338, %s24, 1
        %s340 = smul.addr %s339, 32
        %s341 = smul.addr %s340, 4
        %s342 = scalar_lea.vmem %s1, %s341
        %p343 = pneg %p71
        %p344 = pneg %p68
        %p345 = pneg %p92
        %p346 = pneg %p89
        %p347 = pneg %p113
        %p348 = pneg %p110
        %p349 = pneg %p134
        %p350 = pneg %p131
        %p351 = pneg %p155
        %p352 = pneg %p152
        %p353 = pneg %p176
        %p354 = pneg %p173
        %p355 = pneg %p197
        %p356 = pneg %p194
        %p357 = pneg %p218
        %p358 = pneg %p215
        %p359 = pneg %p239
        %p360 = pneg %p236
        %p361 = pneg %p265
        %p362 = pneg %p262
        %s363 = sand.u32 %s252, 1
        %s364 = scalar_lea.sflag [#allocation7], %s363
        %s365 = sand.u32 %s252, 1
        %s366 = smul.addr %s365, 256
        %s367 = scalar_lea.vmem [#allocation6], %s366
        %p368 = scmp.lt.s32.totalorder %s24, 1
        %s369 = scalar_select %p368, %s24, 1
        %s370 = smul.addr %s369, 32
        %s371 = smul.addr %s370, 4
        %s372 = scalar_lea.vmem %s0, %s371
        %p373 = scmp.lt.s32.totalorder %s24, 1
        %s374 = scalar_select %p373, %s24, 1
        %s375 = smul.addr %s374, 32
        %s376 = smul.addr %s375, 4
        %s377 = scalar_lea.vmem %s1, %s376
        %v379 = vld [vmem:[%s372] sm:$0xf]
        %v380 = vld [vmem:[%s372 + $0x4] sm:$0xf]
        %v381 = vld [vmem:[%s372 + $0x8] sm:$0xf]
        %v382 = vld [vmem:[%s372 + $0xc] sm:$0xf]
        %v383 = vld [vmem:[%s372 + $0x10] sm:$0xf]
        %v384 = vld [vmem:[%s372 + $0x14] sm:$0xf]
        %v385 = vld [vmem:[%s372 + $0x18] sm:$0xf]
        %v386 = vld [vmem:[%s372 + $0x1c] sm:$0xf]
        %v387 = vld [vmem:[%s372 + $0x20] sm:$0xf]
        %v388 = vld [vmem:[%s372 + $0x24] sm:$0xf]
        %v389 = vld [vmem:[%s372 + $0x28] sm:$0xf]
        %v390 = vld [vmem:[%s372 + $0x2c] sm:$0xf]
        %v391 = vld [vmem:[%s372 + $0x30] sm:$0xf]
        %v392 = vld [vmem:[%s372 + $0x34] sm:$0xf]
        %v393 = vld [vmem:[%s372 + $0x38] sm:$0xf]
        %v394 = vld [vmem:[%s372 + $0x3c] sm:$0xf]
        %v395 = vld [vmem:[%s372 + $0x40] sm:$0xf]
        %v396 = vld [vmem:[%s372 + $0x44] sm:$0xf]
        %v397 = vld [vmem:[%s372 + $0x48] sm:$0xf]
        %v398 = vld [vmem:[%s372 + $0x4c] sm:$0xf]
        %v399 = vld [vmem:[%s372 + $0x50] sm:$0xf]
        %v400 = vld [vmem:[%s372 + $0x54] sm:$0xf]
        %v401 = vld [vmem:[%s372 + $0x58] sm:$0xf]
        %v402 = vld [vmem:[%s372 + $0x5c] sm:$0xf]
        %v403 = vld [vmem:[%s372 + $0x60] sm:$0xf]
        %v404 = vld [vmem:[%s372 + $0x64] sm:$0xf]
        %v405 = vld [vmem:[%s372 + $0x68] sm:$0xf]
        %v406 = vld [vmem:[%s372 + $0x6c] sm:$0xf]
        %v407 = vld [vmem:[%s372 + $0x70] sm:$0xf]
        %v408 = vld [vmem:[%s372 + $0x74] sm:$0xf]
        %v409 = vld [vmem:[%s372 + $0x78] sm:$0xf]
        %v410 = vld [vmem:[%s372 + $0x7c] sm:$0xf]
        %v443 = vunpack.c.l.b16 %v379
        %v444 = vunpack.c.l.b16 %v380
        %v445 = vunpack.c.l.b16 %v381
        %v446 = vunpack.c.l.b16 %v382
        %v447 = vunpack.c.l.b16 %v383
        %v448 = vunpack.c.l.b16 %v384
        %v449 = vunpack.c.l.b16 %v385
        %v450 = vunpack.c.l.b16 %v386
        %v451 = vunpack.c.l.b16 %v387
        %v452 = vunpack.c.l.b16 %v388
        %v453 = vunpack.c.l.b16 %v389
        %v454 = vunpack.c.l.b16 %v390
        %v455 = vunpack.c.l.b16 %v391
        %v456 = vunpack.c.l.b16 %v392
        %v457 = vunpack.c.l.b16 %v393
        %v458 = vunpack.c.l.b16 %v394
        %v459 = vunpack.c.l.b16 %v395
        %v460 = vunpack.c.l.b16 %v396
        %v461 = vunpack.c.l.b16 %v397
        %v462 = vunpack.c.l.b16 %v398
        %v463 = vunpack.c.l.b16 %v399
        %v464 = vunpack.c.l.b16 %v400
        %v465 = vunpack.c.l.b16 %v401
        %v466 = vunpack.c.l.b16 %v402
        %v467 = vunpack.c.l.b16 %v403
        %v468 = vunpack.c.l.b16 %v404
        %v469 = vunpack.c.l.b16 %v405
        %v470 = vunpack.c.l.b16 %v406
        %v471 = vunpack.c.l.b16 %v407
        %v472 = vunpack.c.l.b16 %v408
        %v473 = vunpack.c.l.b16 %v409
        %v474 = vunpack.c.l.b16 %v410
        %v475 = vpack.c.b16 %v444, %v443
        %v476 = vpack.c.b16 %v446, %v445
        %v477 = vpack.c.b16 %v448, %v447
        %v478 = vpack.c.b16 %v450, %v449
        %v479 = vpack.c.b16 %v452, %v451
        %v480 = vpack.c.b16 %v454, %v453
        %v481 = vpack.c.b16 %v456, %v455
        %v482 = vpack.c.b16 %v458, %v457
        %v483 = vpack.c.b16 %v460, %v459
        %v484 = vpack.c.b16 %v462, %v461
        %v485 = vpack.c.b16 %v464, %v463
        %v486 = vpack.c.b16 %v466, %v465
        %v487 = vpack.c.b16 %v468, %v467
        %v488 = vpack.c.b16 %v470, %v469
        %v489 = vpack.c.b16 %v472, %v471
        %v490 = vpack.c.b16 %v474, %v473
        %v492 = vshrl.u32 %v475, 16
        %v494 = vrot.slane %v492, 7
        %v495 = vshll.u32 %v475, 16
        %v497 = vor.u32 %v494, %v495
        %v499 = vshrl.u32 %v476, 16
        %v501 = vrot.slane %v499, 7
        %v502 = vshll.u32 %v476, 16
        %v504 = vor.u32 %v501, %v502
        %v506 = vshrl.u32 %v477, 16
        %v508 = vrot.slane %v506, 7
        %v509 = vshll.u32 %v477, 16
        %v511 = vor.u32 %v508, %v509
        %v513 = vshrl.u32 %v478, 16
        %v515 = vrot.slane %v513, 7
        %v516 = vshll.u32 %v478, 16
        %v518 = vor.u32 %v515, %v516
        %v520 = vshrl.u32 %v479, 16
        %v522 = vrot.slane %v520, 7
        %v523 = vshll.u32 %v479, 16
        %v525 = vor.u32 %v522, %v523
        %v527 = vshrl.u32 %v480, 16
        %v529 = vrot.slane %v527, 7
        %v530 = vshll.u32 %v480, 16
        %v532 = vor.u32 %v529, %v530
        %v534 = vshrl.u32 %v481, 16
        %v536 = vrot.slane %v534, 7
        %v537 = vshll.u32 %v481, 16
        %v539 = vor.u32 %v536, %v537
        %v541 = vshrl.u32 %v482, 16
        %v543 = vrot.slane %v541, 7
        %v544 = vshll.u32 %v482, 16
        %v546 = vor.u32 %v543, %v544
        %v548 = vshrl.u32 %v483, 16
        %v550 = vrot.slane %v548, 7
        %v551 = vshll.u32 %v483, 16
        %v553 = vor.u32 %v550, %v551
        %v555 = vshrl.u32 %v484, 16
        %v557 = vrot.slane %v555, 7
        %v558 = vshll.u32 %v484, 16
        %v560 = vor.u32 %v557, %v558
        %v562 = vshrl.u32 %v485, 16
        %v564 = vrot.slane %v562, 7
        %v565 = vshll.u32 %v485, 16
        %v567 = vor.u32 %v564, %v565
        %v569 = vshrl.u32 %v486, 16
        %v571 = vrot.slane %v569, 7
        %v572 = vshll.u32 %v486, 16
        %v574 = vor.u32 %v571, %v572
        %v576 = vshrl.u32 %v487, 16
        %v578 = vrot.slane %v576, 7
        %v579 = vshll.u32 %v487, 16
        %v581 = vor.u32 %v578, %v579
        %v583 = vshrl.u32 %v488, 16
        %v585 = vrot.slane %v583, 7
        %v586 = vshll.u32 %v488, 16
        %v588 = vor.u32 %v585, %v586
        %v590 = vshrl.u32 %v489, 16
        %v592 = vrot.slane %v590, 7
        %v593 = vshll.u32 %v489, 16
        %v595 = vor.u32 %v592, %v593
        %v597 = vshrl.u32 %v490, 16
        %v599 = vrot.slane %v597, 7
        %v600 = vshll.u32 %v490, 16
        %v602 = vor.u32 %v599, %v600
        %vm619 = vcmask 1040384
        %vm620 = vsmask.f32 256
        %vm621 = vmand %vm619, %vm620
        %v622 = vsel %vm621, 0, %v497
        %v623 = vsel %vm621, 0, %v504
        %v624 = vsel %vm621, 0, %v511
        %v625 = vsel %vm621, 0, %v518
        %v626 = vsel %vm621, 0, %v525
        %v627 = vsel %vm621, 0, %v532
        %v628 = vsel %vm621, 0, %v539
        %v629 = vsel %vm621, 0, %v546
        %v630 = vsel %vm621, 0, %v553
        %v631 = vsel %vm621, 0, %v560
        %v632 = vsel %vm621, 0, %v567
        %v633 = vsel %vm621, 0, %v574
        %v634 = vsel %vm621, 0, %v581
        %v635 = vsel %vm621, 0, %v588
        %v636 = vsel %vm621, 0, %v595
        %v637 = vsel %vm621, 0, %v602
        %v638 = vrot.slane %v495, 1
        %v639 = vor.u32 %v492, %v638
        %v640 = vrot.slane %v502, 1
        %v641 = vor.u32 %v499, %v640
        %v642 = vrot.slane %v509, 1
        %v643 = vor.u32 %v506, %v642
        %v644 = vrot.slane %v516, 1
        %v645 = vor.u32 %v513, %v644
        %v646 = vrot.slane %v523, 1
        %v647 = vor.u32 %v520, %v646
        %v648 = vrot.slane %v530, 1
        %v649 = vor.u32 %v527, %v648
        %v650 = vrot.slane %v537, 1
        %v651 = vor.u32 %v534, %v650
        %v652 = vrot.slane %v544, 1
        %v653 = vor.u32 %v541, %v652
        %v654 = vrot.slane %v551, 1
        %v655 = vor.u32 %v548, %v654
        %v656 = vrot.slane %v558, 1
        %v657 = vor.u32 %v555, %v656
        %v658 = vrot.slane %v565, 1
        %v659 = vor.u32 %v562, %v658
        %v660 = vrot.slane %v572, 1
        %v661 = vor.u32 %v569, %v660
        %v662 = vrot.slane %v579, 1
        %v663 = vor.u32 %v576, %v662
        %v664 = vrot.slane %v586, 1
        %v665 = vor.u32 %v583, %v664
        %v666 = vrot.slane %v593, 1
        %v667 = vor.u32 %v590, %v666
        %v668 = vrot.slane %v600, 1
        %v669 = vor.u32 %v597, %v668
        %vm686 = vcmask 1047552
        %vm687 = vsmask.f32 7424
        %vm688 = vmand %vm686, %vm687
        %v689 = vsel %vm688, %v639, 0
        %v690 = vsel %vm688, %v641, 0
        %v691 = vsel %vm688, %v643, 0
        %v692 = vsel %vm688, %v645, 0
        %v693 = vsel %vm688, %v647, 0
        %v694 = vsel %vm688, %v649, 0
        %v695 = vsel %vm688, %v651, 0
        %v696 = vsel %vm688, %v653, 0
        %v697 = vsel %vm688, %v655, 0
        %v698 = vsel %vm688, %v657, 0
        %v699 = vsel %vm688, %v659, 0
        %v700 = vsel %vm688, %v661, 0
        %v701 = vsel %vm688, %v663, 0
        %v702 = vsel %vm688, %v665, 0
        %v703 = vsel %vm688, %v667, 0
        %v704 = vsel %vm688, %v669, 0
        %721 = vst [vmem:[#allocation2] sm:$0xff] 0
        %722 = vst [vmem:[#allocation2 + $0x8] sm:$0xff] 0
        %723 = vst [vmem:[#allocation2 + $0x10] sm:$0xff] 0
        %724 = vst [vmem:[#allocation2 + $0x198] sm:$0xff] 0
        %725 = vst [vmem:[#allocation2 + $0x1a0] sm:$0xff] 0
        %726 = vst [vmem:[#allocation2 + $0x1a8] sm:$0xff] 0
        %727 = vst [vmem:[#allocation2 + $0x18] sm:$0xff] %v622
        %728 = vst [vmem:[#allocation2 + $0x20] sm:$0xff] %v475
        %729 = vst [vmem:[#allocation2 + $0x28] sm:$0xff] %v689
        %730 = vst [vmem:[#allocation2 + $0x30] sm:$0xff] %v623
        %731 = vst [vmem:[#allocation2 + $0x38] sm:$0xff] %v476
        %732 = vst [vmem:[#allocation2 + $0x40] sm:$0xff] %v690
        %733 = vst [vmem:[#allocation2 + $0x48] sm:$0xff] %v624
        %734 = vst [vmem:[#allocation2 + $0x50] sm:$0xff] %v477
        %735 = vst [vmem:[#allocation2 + $0x58] sm:$0xff] %v691
        %736 = vst [vmem:[#allocation2 + $0x60] sm:$0xff] %v625
        %737 = vst [vmem:[#allocation2 + $0x68] sm:$0xff] %v478
        %738 = vst [vmem:[#allocation2 + $0x70] sm:$0xff] %v692
        %739 = vst [vmem:[#allocation2 + $0x78] sm:$0xff] %v626
        %740 = vst [vmem:[#allocation2 + $0x80] sm:$0xff] %v479
        %741 = vst [vmem:[#allocation2 + $0x88] sm:$0xff] %v693
        %742 = vst [vmem:[#allocation2 + $0x90] sm:$0xff] %v627
        %743 = vst [vmem:[#allocation2 + $0x98] sm:$0xff] %v480
        %744 = vst [vmem:[#allocation2 + $0xa0] sm:$0xff] %v694
        %745 = vst [vmem:[#allocation2 + $0xa8] sm:$0xff] %v628
        %746 = vst [vmem:[#allocation2 + $0xb0] sm:$0xff] %v481
        %747 = vst [vmem:[#allocation2 + $0xb8] sm:$0xff] %v695
        %748 = vst [vmem:[#allocation2 + $0xc0] sm:$0xff] %v629
        %749 = vst [vmem:[#allocation2 + $0xc8] sm:$0xff] %v482
        %750 = vst [vmem:[#allocation2 + $0xd0] sm:$0xff] %v696
        %751 = vst [vmem:[#allocation2 + $0xd8] sm:$0xff] %v630
        %752 = vst [vmem:[#allocation2 + $0xe0] sm:$0xff] %v483
        %753 = vst [vmem:[#allocation2 + $0xe8] sm:$0xff] %v697
        %754 = vst [vmem:[#allocation2 + $0xf0] sm:$0xff] %v631
        %755 = vst [vmem:[#allocation2 + $0xf8] sm:$0xff] %v484
        %756 = vst [vmem:[#allocation2 + $0x100] sm:$0xff] %v698
        %757 = vst [vmem:[#allocation2 + $0x108] sm:$0xff] %v632
        %758 = vst [vmem:[#allocation2 + $0x110] sm:$0xff] %v485
        %759 = vst [vmem:[#allocation2 + $0x118] sm:$0xff] %v699
        %760 = vst [vmem:[#allocation2 + $0x120] sm:$0xff] %v633
        %761 = vst [vmem:[#allocation2 + $0x128] sm:$0xff] %v486
        %762 = vst [vmem:[#allocation2 + $0x130] sm:$0xff] %v700
        %763 = vst [vmem:[#allocation2 + $0x138] sm:$0xff] %v634
        %764 = vst [vmem:[#allocation2 + $0x140] sm:$0xff] %v487
        %765 = vst [vmem:[#allocation2 + $0x148] sm:$0xff] %v701
        %766 = vst [vmem:[#allocation2 + $0x150] sm:$0xff] %v635
        %767 = vst [vmem:[#allocation2 + $0x158] sm:$0xff] %v488
        %768 = vst [vmem:[#allocation2 + $0x160] sm:$0xff] %v702
        %769 = vst [vmem:[#allocation2 + $0x168] sm:$0xff] %v636
        %770 = vst [vmem:[#allocation2 + $0x170] sm:$0xff] %v489
        %771 = vst [vmem:[#allocation2 + $0x178] sm:$0xff] %v703
        %772 = vst [vmem:[#allocation2 + $0x180] sm:$0xff] %v637
        %773 = vst [vmem:[#allocation2 + $0x188] sm:$0xff] %v490
        %774 = vst [vmem:[#allocation2 + $0x190] sm:$0xff] %v704
        %v775 = vld [vmem:[%s377] sm:$0xf]
        %v776 = vld [vmem:[%s377 + $0x4] sm:$0xf]
        %v777 = vld [vmem:[%s377 + $0x8] sm:$0xf]
        %v778 = vld [vmem:[%s377 + $0xc] sm:$0xf]
        %v779 = vld [vmem:[%s377 + $0x10] sm:$0xf]
        %v780 = vld [vmem:[%s377 + $0x14] sm:$0xf]
        %v781 = vld [vmem:[%s377 + $0x18] sm:$0xf]
        %v782 = vld [vmem:[%s377 + $0x1c] sm:$0xf]
        %v783 = vld [vmem:[%s377 + $0x20] sm:$0xf]
        %v784 = vld [vmem:[%s377 + $0x24] sm:$0xf]
        %v785 = vld [vmem:[%s377 + $0x28] sm:$0xf]
        %v786 = vld [vmem:[%s377 + $0x2c] sm:$0xf]
        %v787 = vld [vmem:[%s377 + $0x30] sm:$0xf]
        %v788 = vld [vmem:[%s377 + $0x34] sm:$0xf]
        %v789 = vld [vmem:[%s377 + $0x38] sm:$0xf]
        %v790 = vld [vmem:[%s377 + $0x3c] sm:$0xf]
        %v791 = vld [vmem:[%s377 + $0x40] sm:$0xf]
        %v792 = vld [vmem:[%s377 + $0x44] sm:$0xf]
        %v793 = vld [vmem:[%s377 + $0x48] sm:$0xf]
        %v794 = vld [vmem:[%s377 + $0x4c] sm:$0xf]
        %v795 = vld [vmem:[%s377 + $0x50] sm:$0xf]
        %v796 = vld [vmem:[%s377 + $0x54] sm:$0xf]
        %v797 = vld [vmem:[%s377 + $0x58] sm:$0xf]
        %v798 = vld [vmem:[%s377 + $0x5c] sm:$0xf]
        %v799 = vld [vmem:[%s377 + $0x60] sm:$0xf]
        %v800 = vld [vmem:[%s377 + $0x64] sm:$0xf]
        %v801 = vld [vmem:[%s377 + $0x68] sm:$0xf]
        %v802 = vld [vmem:[%s377 + $0x6c] sm:$0xf]
        %v803 = vld [vmem:[%s377 + $0x70] sm:$0xf]
        %v804 = vld [vmem:[%s377 + $0x74] sm:$0xf]
        %v805 = vld [vmem:[%s377 + $0x78] sm:$0xf]
        %v806 = vld [vmem:[%s377 + $0x7c] sm:$0xf]
        %v839 = vunpack.c.l.b16 %v775
        %v840 = vunpack.c.l.b16 %v776
        %v841 = vunpack.c.l.b16 %v777
        %v842 = vunpack.c.l.b16 %v778
        %v843 = vunpack.c.l.b16 %v779
        %v844 = vunpack.c.l.b16 %v780
        %v845 = vunpack.c.l.b16 %v781
        %v846 = vunpack.c.l.b16 %v782
        %v847 = vunpack.c.l.b16 %v783
        %v848 = vunpack.c.l.b16 %v784
        %v849 = vunpack.c.l.b16 %v785
        %v850 = vunpack.c.l.b16 %v786
        %v851 = vunpack.c.l.b16 %v787
        %v852 = vunpack.c.l.b16 %v788
        %v853 = vunpack.c.l.b16 %v789
        %v854 = vunpack.c.l.b16 %v790
        %v855 = vunpack.c.l.b16 %v791
        %v856 = vunpack.c.l.b16 %v792
        %v857 = vunpack.c.l.b16 %v793
        %v858 = vunpack.c.l.b16 %v794
        %v859 = vunpack.c.l.b16 %v795
        %v860 = vunpack.c.l.b16 %v796
        %v861 = vunpack.c.l.b16 %v797
        %v862 = vunpack.c.l.b16 %v798
        %v863 = vunpack.c.l.b16 %v799
        %v864 = vunpack.c.l.b16 %v800
        %v865 = vunpack.c.l.b16 %v801
        %v866 = vunpack.c.l.b16 %v802
        %v867 = vunpack.c.l.b16 %v803
        %v868 = vunpack.c.l.b16 %v804
        %v869 = vunpack.c.l.b16 %v805
        %v870 = vunpack.c.l.b16 %v806
        %v871 = vpack.c.b16 %v840, %v839
        %v872 = vpack.c.b16 %v842, %v841
        %v873 = vpack.c.b16 %v844, %v843
        %v874 = vpack.c.b16 %v846, %v845
        %v875 = vpack.c.b16 %v848, %v847
        %v876 = vpack.c.b16 %v850, %v849
        %v877 = vpack.c.b16 %v852, %v851
        %v878 = vpack.c.b16 %v854, %v853
        %v879 = vpack.c.b16 %v856, %v855
        %v880 = vpack.c.b16 %v858, %v857
        %v881 = vpack.c.b16 %v860, %v859
        %v882 = vpack.c.b16 %v862, %v861
        %v883 = vpack.c.b16 %v864, %v863
        %v884 = vpack.c.b16 %v866, %v865
        %v885 = vpack.c.b16 %v868, %v867
        %v886 = vpack.c.b16 %v870, %v869
        %v888 = vshrl.u32 %v871, 16
        %v890 = vrot.slane %v888, 7
        %v891 = vshll.u32 %v871, 16
        %v893 = vor.u32 %v890, %v891
        %v895 = vshrl.u32 %v872, 16
        %v897 = vrot.slane %v895, 7
        %v898 = vshll.u32 %v872, 16
        %v900 = vor.u32 %v897, %v898
        %v902 = vshrl.u32 %v873, 16
        %v904 = vrot.slane %v902, 7
        %v905 = vshll.u32 %v873, 16
        %v907 = vor.u32 %v904, %v905
        %v909 = vshrl.u32 %v874, 16
        %v911 = vrot.slane %v909, 7
        %v912 = vshll.u32 %v874, 16
        %v914 = vor.u32 %v911, %v912
        %v916 = vshrl.u32 %v875, 16
        %v918 = vrot.slane %v916, 7
        %v919 = vshll.u32 %v875, 16
        %v921 = vor.u32 %v918, %v919
        %v923 = vshrl.u32 %v876, 16
        %v925 = vrot.slane %v923, 7
        %v926 = vshll.u32 %v876, 16
        %v928 = vor.u32 %v925, %v926
        %v930 = vshrl.u32 %v877, 16
        %v932 = vrot.slane %v930, 7
        %v933 = vshll.u32 %v877, 16
        %v935 = vor.u32 %v932, %v933
        %v937 = vshrl.u32 %v878, 16
        %v939 = vrot.slane %v937, 7
        %v940 = vshll.u32 %v878, 16
        %v942 = vor.u32 %v939, %v940
        %v944 = vshrl.u32 %v879, 16
        %v946 = vrot.slane %v944, 7
        %v947 = vshll.u32 %v879, 16
        %v949 = vor.u32 %v946, %v947
        %v951 = vshrl.u32 %v880, 16
        %v953 = vrot.slane %v951, 7
        %v954 = vshll.u32 %v880, 16
        %v956 = vor.u32 %v953, %v954
        %v958 = vshrl.u32 %v881, 16
        %v960 = vrot.slane %v958, 7
        %v961 = vshll.u32 %v881, 16
        %v963 = vor.u32 %v960, %v961
        %v965 = vshrl.u32 %v882, 16
        %v967 = vrot.slane %v965, 7
        %v968 = vshll.u32 %v882, 16
        %v970 = vor.u32 %v967, %v968
        %v972 = vshrl.u32 %v883, 16
        %v974 = vrot.slane %v972, 7
        %v975 = vshll.u32 %v883, 16
        %v977 = vor.u32 %v974, %v975
        %v979 = vshrl.u32 %v884, 16
        %v981 = vrot.slane %v979, 7
        %v982 = vshll.u32 %v884, 16
        %v984 = vor.u32 %v981, %v982
        %v986 = vshrl.u32 %v885, 16
        %v988 = vrot.slane %v986, 7
        %v989 = vshll.u32 %v885, 16
        %v991 = vor.u32 %v988, %v989
        %v993 = vshrl.u32 %v886, 16
        %v995 = vrot.slane %v993, 7
        %v996 = vshll.u32 %v886, 16
        %v998 = vor.u32 %v995, %v996
        %v1015 = vsel %vm621, 0, %v893
        %v1016 = vsel %vm621, 0, %v900
        %v1017 = vsel %vm621, 0, %v907
        %v1018 = vsel %vm621, 0, %v914
        %v1019 = vsel %vm621, 0, %v921
        %v1020 = vsel %vm621, 0, %v928
        %v1021 = vsel %vm621, 0, %v935
        %v1022 = vsel %vm621, 0, %v942
        %v1023 = vsel %vm621, 0, %v949
        %v1024 = vsel %vm621, 0, %v956
        %v1025 = vsel %vm621, 0, %v963
        %v1026 = vsel %vm621, 0, %v970
        %v1027 = vsel %vm621, 0, %v977
        %v1028 = vsel %vm621, 0, %v984
        %v1029 = vsel %vm621, 0, %v991
        %v1030 = vsel %vm621, 0, %v998
        %v1031 = vrot.slane %v891, 1
        %v1032 = vor.u32 %v888, %v1031
        %v1033 = vrot.slane %v898, 1
        %v1034 = vor.u32 %v895, %v1033
        %v1035 = vrot.slane %v905, 1
        %v1036 = vor.u32 %v902, %v1035
        %v1037 = vrot.slane %v912, 1
        %v1038 = vor.u32 %v909, %v1037
        %v1039 = vrot.slane %v919, 1
        %v1040 = vor.u32 %v916, %v1039
        %v1041 = vrot.slane %v926, 1
        %v1042 = vor.u32 %v923, %v1041
        %v1043 = vrot.slane %v933, 1
        %v1044 = vor.u32 %v930, %v1043
        %v1045 = vrot.slane %v940, 1
        %v1046 = vor.u32 %v937, %v1045
        %v1047 = vrot.slane %v947, 1
        %v1048 = vor.u32 %v944, %v1047
        %v1049 = vrot.slane %v954, 1
        %v1050 = vor.u32 %v951, %v1049
        %v1051 = vrot.slane %v961, 1
        %v1052 = vor.u32 %v958, %v1051
        %v1053 = vrot.slane %v968, 1
        %v1054 = vor.u32 %v965, %v1053
        %v1055 = vrot.slane %v975, 1
        %v1056 = vor.u32 %v972, %v1055
        %v1057 = vrot.slane %v982, 1
        %v1058 = vor.u32 %v979, %v1057
        %v1059 = vrot.slane %v989, 1
        %v1060 = vor.u32 %v986, %v1059
        %v1061 = vrot.slane %v996, 1
        %v1062 = vor.u32 %v993, %v1061
        %v1079 = vsel %vm688, %v1032, 0
        %v1080 = vsel %vm688, %v1034, 0
        %v1081 = vsel %vm688, %v1036, 0
        %v1082 = vsel %vm688, %v1038, 0
        %v1083 = vsel %vm688, %v1040, 0
        %v1084 = vsel %vm688, %v1042, 0
        %v1085 = vsel %vm688, %v1044, 0
        %v1086 = vsel %vm688, %v1046, 0
        %v1087 = vsel %vm688, %v1048, 0
        %v1088 = vsel %vm688, %v1050, 0
        %v1089 = vsel %vm688, %v1052, 0
        %v1090 = vsel %vm688, %v1054, 0
        %v1091 = vsel %vm688, %v1056, 0
        %v1092 = vsel %vm688, %v1058, 0
        %v1093 = vsel %vm688, %v1060, 0
        %v1094 = vsel %vm688, %v1062, 0
        %1111 = vst [vmem:[#allocation3] sm:$0xff] 0
        %1112 = vst [vmem:[#allocation3 + $0x8] sm:$0xff] 0
        %1113 = vst [vmem:[#allocation3 + $0x10] sm:$0xff] 0
        %1114 = vst [vmem:[#allocation3 + $0x198] sm:$0xff] 0
        %1115 = vst [vmem:[#allocation3 + $0x1a0] sm:$0xff] 0
        %1116 = vst [vmem:[#allocation3 + $0x1a8] sm:$0xff] 0
        %1117 = vst [vmem:[#allocation3 + $0x18] sm:$0xff] %v1015
        %1118 = vst [vmem:[#allocation3 + $0x20] sm:$0xff] %v871
        %1119 = vst [vmem:[#allocation3 + $0x28] sm:$0xff] %v1079
        %1120 = vst [vmem:[#allocation3 + $0x30] sm:$0xff] %v1016
        %1121 = vst [vmem:[#allocation3 + $0x38] sm:$0xff] %v872
        %1122 = vst [vmem:[#allocation3 + $0x40] sm:$0xff] %v1080
        %1123 = vst [vmem:[#allocation3 + $0x48] sm:$0xff] %v1017
        %1124 = vst [vmem:[#allocation3 + $0x50] sm:$0xff] %v873
        %1125 = vst [vmem:[#allocation3 + $0x58] sm:$0xff] %v1081
        %1126 = vst [vmem:[#allocation3 + $0x60] sm:$0xff] %v1018
        %1127 = vst [vmem:[#allocation3 + $0x68] sm:$0xff] %v874
        %1128 = vst [vmem:[#allocation3 + $0x70] sm:$0xff] %v1082
        %1129 = vst [vmem:[#allocation3 + $0x78] sm:$0xff] %v1019
        %1130 = vst [vmem:[#allocation3 + $0x80] sm:$0xff] %v875
        %1131 = vst [vmem:[#allocation3 + $0x88] sm:$0xff] %v1083
        %1132 = vst [vmem:[#allocation3 + $0x90] sm:$0xff] %v1020
        %1133 = vst [vmem:[#allocation3 + $0x98] sm:$0xff] %v876
        %1134 = vst [vmem:[#allocation3 + $0xa0] sm:$0xff] %v1084
        %1135 = vst [vmem:[#allocation3 + $0xa8] sm:$0xff] %v1021
        %1136 = vst [vmem:[#allocation3 + $0xb0] sm:$0xff] %v877
        %1137 = vst [vmem:[#allocation3 + $0xb8] sm:$0xff] %v1085
        %1138 = vst [vmem:[#allocation3 + $0xc0] sm:$0xff] %v1022
        %1139 = vst [vmem:[#allocation3 + $0xc8] sm:$0xff] %v878
        %1140 = vst [vmem:[#allocation3 + $0xd0] sm:$0xff] %v1086
        %1141 = vst [vmem:[#allocation3 + $0xd8] sm:$0xff] %v1023
        %1142 = vst [vmem:[#allocation3 + $0xe0] sm:$0xff] %v879
        %1143 = vst [vmem:[#allocation3 + $0xe8] sm:$0xff] %v1087
        %1144 = vst [vmem:[#allocation3 + $0xf0] sm:$0xff] %v1024
        %1145 = vst [vmem:[#allocation3 + $0xf8] sm:$0xff] %v880
        %1146 = vst [vmem:[#allocation3 + $0x100] sm:$0xff] %v1088
        %1147 = vst [vmem:[#allocation3 + $0x108] sm:$0xff] %v1025
        %1148 = vst [vmem:[#allocation3 + $0x110] sm:$0xff] %v881
        %1149 = vst [vmem:[#allocation3 + $0x118] sm:$0xff] %v1089
        %1150 = vst [vmem:[#allocation3 + $0x120] sm:$0xff] %v1026
        %1151 = vst [vmem:[#allocation3 + $0x128] sm:$0xff] %v882
        %1152 = vst [vmem:[#allocation3 + $0x130] sm:$0xff] %v1090
        %1153 = vst [vmem:[#allocation3 + $0x138] sm:$0xff] %v1027
        %1154 = vst [vmem:[#allocation3 + $0x140] sm:$0xff] %v883
        %1155 = vst [vmem:[#allocation3 + $0x148] sm:$0xff] %v1091
        %1156 = vst [vmem:[#allocation3 + $0x150] sm:$0xff] %v1028
        %1157 = vst [vmem:[#allocation3 + $0x158] sm:$0xff] %v884
        %1158 = vst [vmem:[#allocation3 + $0x160] sm:$0xff] %v1092
        %1159 = vst [vmem:[#allocation3 + $0x168] sm:$0xff] %v1029
        %1160 = vst [vmem:[#allocation3 + $0x170] sm:$0xff] %v885
        %1161 = vst [vmem:[#allocation3 + $0x178] sm:$0xff] %v1093
        %1162 = vst [vmem:[#allocation3 + $0x180] sm:$0xff] %v1030
        %1163 = vst [vmem:[#allocation3 + $0x188] sm:$0xff] %v886
        %1164 = vst [vmem:[#allocation3 + $0x190] sm:$0xff] %v1094
        %v1165 = vld [vmem:[#allocation2] sm:$0xff]
        %v1166 = vld [vmem:[#allocation2 + $0x8] sm:$0xff]
        %v1167 = vld [vmem:[#allocation2 + $0x10] sm:$0xff]
        %v1168 = vld [vmem:[#allocation2 + $0x18] sm:$0xff]
        %v1169 = vld [vmem:[#allocation2 + $0x20] sm:$0xff]
        %v1170 = vld [vmem:[#allocation2 + $0x28] sm:$0xff]
        %v1171 = vld [vmem:[#allocation2 + $0x30] sm:$0xff]
        %v1172 = vld [vmem:[#allocation2 + $0x38] sm:$0xff]
        %v1173 = vld [vmem:[#allocation2 + $0x40] sm:$0xff]
        %v1174 = vld [vmem:[#allocation2 + $0x48] sm:$0xff]
        %v1175 = vld [vmem:[#allocation2 + $0x50] sm:$0xff]
        %v1176 = vld [vmem:[#allocation2 + $0x58] sm:$0xff]
        %v1177 = vld [vmem:[#allocation2 + $0x60] sm:$0xff]
        %v1178 = vld [vmem:[#allocation2 + $0x68] sm:$0xff]
        %v1179 = vld [vmem:[#allocation2 + $0x70] sm:$0xff]
        %v1180 = vld [vmem:[#allocation2 + $0x78] sm:$0xff]
        %v1181 = vld [vmem:[#allocation2 + $0x80] sm:$0xff]
        %v1182 = vld [vmem:[#allocation2 + $0x88] sm:$0xff]
        %v1183 = vld [vmem:[#allocation2 + $0x90] sm:$0xff]
        %v1184 = vld [vmem:[#allocation2 + $0x98] sm:$0xff]
        %v1185 = vld [vmem:[#allocation2 + $0xa0] sm:$0xff]
        %v1186 = vld [vmem:[#allocation2 + $0xa8] sm:$0xff]
        %v1187 = vld [vmem:[#allocation2 + $0xb0] sm:$0xff]
        %v1188 = vld [vmem:[#allocation2 + $0xb8] sm:$0xff]
        %v1189 = vld [vmem:[#allocation2 + $0xc0] sm:$0xff]
        %v1190 = vld [vmem:[#allocation2 + $0xc8] sm:$0xff]
        %v1191 = vld [vmem:[#allocation2 + $0xd0] sm:$0xff]
        %v1192 = vld [vmem:[#allocation2 + $0xd8] sm:$0xff]
        %v1193 = vld [vmem:[#allocation2 + $0xe0] sm:$0xff]
        %v1194 = vld [vmem:[#allocation2 + $0xe8] sm:$0xff]
        %v1195 = vld [vmem:[#allocation2 + $0xf0] sm:$0xff]
        %v1196 = vld [vmem:[#allocation2 + $0xf8] sm:$0xff]
        %v1197 = vld [vmem:[#allocation2 + $0x100] sm:$0xff]
        %v1198 = vld [vmem:[#allocation2 + $0x108] sm:$0xff]
        %v1199 = vld [vmem:[#allocation2 + $0x110] sm:$0xff]
        %v1200 = vld [vmem:[#allocation2 + $0x118] sm:$0xff]
        %v1201 = vld [vmem:[#allocation2 + $0x120] sm:$0xff]
        %v1202 = vld [vmem:[#allocation2 + $0x128] sm:$0xff]
        %v1203 = vld [vmem:[#allocation2 + $0x130] sm:$0xff]
        %v1204 = vld [vmem:[#allocation2 + $0x138] sm:$0xff]
        %v1205 = vld [vmem:[#allocation2 + $0x140] sm:$0xff]
        %v1206 = vld [vmem:[#allocation2 + $0x148] sm:$0xff]
        %v1207 = vld [vmem:[#allocation2 + $0x150] sm:$0xff]
        %v1208 = vld [vmem:[#allocation2 + $0x158] sm:$0xff]
        %v1209 = vld [vmem:[#allocation2 + $0x160] sm:$0xff]
        %v1210 = vld [vmem:[#allocation2 + $0x168] sm:$0xff]
        %v1211 = vld [vmem:[#allocation2 + $0x170] sm:$0xff]
        %v1212 = vld [vmem:[#allocation2 + $0x178] sm:$0xff]
        %v1213 = vld [vmem:[%s2] sm:$0xff]
        %v1214 = vld [vmem:[%s2 + $0x8] sm:$0xff]
        %v1215 = vld [vmem:[%s2 + $0x10] sm:$0xff]
        %v1216 = vld [vmem:[%s2 + $0x18] sm:$0xff]
        %v1217 = vld [vmem:[%s2 + $0x20] sm:$0xff]
        %v1218 = vld [vmem:[%s2 + $0x28] sm:$0xff]
        %v1219 = vld [vmem:[%s2 + $0x30] sm:$0xff]
        %v1220 = vld [vmem:[%s2 + $0x38] sm:$0xff]
        %v1221 = vld [vmem:[%s2 + $0x40] sm:$0xff]
        %v1222 = vld [vmem:[%s2 + $0x48] sm:$0xff]
        %v1223 = vld [vmem:[%s2 + $0x50] sm:$0xff]
        %v1224 = vld [vmem:[%s2 + $0x58] sm:$0xff]
        %v1225 = vld [vmem:[%s2 + $0x60] sm:$0xff]
        %v1226 = vld [vmem:[%s2 + $0x68] sm:$0xff]
        %v1227 = vld [vmem:[%s2 + $0x70] sm:$0xff]
        %v1228 = vld [vmem:[%s2 + $0x78] sm:$0xff]
        %v1229 = vld [vmem:[%s2 + $0x80] sm:$0xff]
        %v1230 = vld [vmem:[%s2 + $0x88] sm:$0xff]
        %v1231 = vld [vmem:[%s2 + $0x90] sm:$0xff]
        %v1232 = vld [vmem:[%s2 + $0x98] sm:$0xff]
        %v1233 = vld [vmem:[%s2 + $0xa0] sm:$0xff]
        %v1234 = vld [vmem:[%s2 + $0xa8] sm:$0xff]
        %v1235 = vld [vmem:[%s2 + $0xb0] sm:$0xff]
        %v1236 = vld [vmem:[%s2 + $0xb8] sm:$0xff]
        %v1237 = vld [vmem:[%s2 + $0xc0] sm:$0xff]
        %v1238 = vld [vmem:[%s2 + $0xc8] sm:$0xff]
        %v1239 = vld [vmem:[%s2 + $0xd0] sm:$0xff]
        %v1240 = vld [vmem:[%s2 + $0xd8] sm:$0xff]
        %v1241 = vld [vmem:[%s2 + $0xe0] sm:$0xff]
        %v1242 = vld [vmem:[%s2 + $0xe8] sm:$0xff]
        %v1243 = vld [vmem:[%s2 + $0xf0] sm:$0xff]
        %v1244 = vld [vmem:[%s2 + $0xf8] sm:$0xff]
        %v1245 = vld [vmem:[%s2 + $0x100] sm:$0xff]
        %v1246 = vld [vmem:[%s2 + $0x108] sm:$0xff]
        %v1247 = vld [vmem:[%s2 + $0x110] sm:$0xff]
        %v1248 = vld [vmem:[%s2 + $0x118] sm:$0xff]
        %v1249 = vld [vmem:[%s2 + $0x120] sm:$0xff]
        %v1250 = vld [vmem:[%s2 + $0x128] sm:$0xff]
        %v1251 = vld [vmem:[%s2 + $0x130] sm:$0xff]
        %v1252 = vld [vmem:[%s2 + $0x138] sm:$0xff]
        %v1253 = vld [vmem:[%s2 + $0x140] sm:$0xff]
        %v1254 = vld [vmem:[%s2 + $0x148] sm:$0xff]
        %v1255 = vld [vmem:[%s2 + $0x150] sm:$0xff]
        %v1256 = vld [vmem:[%s2 + $0x158] sm:$0xff]
        %v1257 = vld [vmem:[%s2 + $0x160] sm:$0xff]
        %v1258 = vld [vmem:[%s2 + $0x168] sm:$0xff]
        %v1259 = vld [vmem:[%s2 + $0x170] sm:$0xff]
        %v1260 = vld [vmem:[%s2 + $0x178] sm:$0xff]
        %v1261 = vld [vmem:[#allocation2 + $0x180] sm:$0xff]
        %v1262 = vld [vmem:[#allocation2 + $0x188] sm:$0xff]
        %v1263 = vld [vmem:[#allocation2 + $0x190] sm:$0xff]
        %s1264 = scalar_lea.vmem %s2, 384
        %v1265 = vld [vmem:[%s1264] sm:$0xff]
        %v1266 = vld [vmem:[%s1264 + $0x8] sm:$0xff]
        %v1267 = vld [vmem:[%s1264 + $0x10] sm:$0xff]
        %v1268 = vld [vmem:[%s1264 + $0x18] sm:$0xff]
        %v1269 = vld [vmem:[%s1264 + $0x20] sm:$0xff]
        %v1270 = vld [vmem:[%s1264 + $0x28] sm:$0xff]
        %v1271 = vld [vmem:[%s1264 + $0x30] sm:$0xff]
        %v1272 = vld [vmem:[%s1264 + $0x38] sm:$0xff]
        %v1273 = vld [vmem:[%s1264 + $0x40] sm:$0xff]
        %v1274 = vld [vmem:[%s1264 + $0x48] sm:$0xff]
        %v1275 = vld [vmem:[%s1264 + $0x50] sm:$0xff]
        %v1276 = vld [vmem:[%s1264 + $0x58] sm:$0xff]
        %v1277 = vld [vmem:[%s1264 + $0x60] sm:$0xff]
        %v1278 = vld [vmem:[%s1264 + $0x68] sm:$0xff]
        %v1279 = vld [vmem:[%s1264 + $0x70] sm:$0xff]
        %v1280 = vld [vmem:[%s1264 + $0x78] sm:$0xff]
        %v1281 = vld [vmem:[%s1264 + $0x80] sm:$0xff]
        %v1282 = vld [vmem:[%s1264 + $0x88] sm:$0xff]
        %v1283 = vld [vmem:[%s1264 + $0x90] sm:$0xff]
        %v1284 = vld [vmem:[%s1264 + $0x98] sm:$0xff]
        %v1285 = vld [vmem:[%s1264 + $0xa0] sm:$0xff]
        %v1286 = vld [vmem:[%s1264 + $0xa8] sm:$0xff]
        %v1287 = vld [vmem:[%s1264 + $0xb0] sm:$0xff]
        %v1288 = vld [vmem:[%s1264 + $0xb8] sm:$0xff]
        %v1289 = vld [vmem:[%s1264 + $0xc0] sm:$0xff]
        %v1290 = vld [vmem:[%s1264 + $0xc8] sm:$0xff]
        %v1291 = vld [vmem:[%s1264 + $0xd0] sm:$0xff]
        %v1292 = vld [vmem:[%s1264 + $0xd8] sm:$0xff]
        %v1293 = vld [vmem:[%s1264 + $0xe0] sm:$0xff]
        %v1294 = vld [vmem:[%s1264 + $0xe8] sm:$0xff]
        %v1295 = vld [vmem:[%s1264 + $0xf0] sm:$0xff]
        %v1296 = vld [vmem:[%s1264 + $0xf8] sm:$0xff]
        %v1297 = vld [vmem:[%s1264 + $0x100] sm:$0xff]
        %v1298 = vld [vmem:[%s1264 + $0x108] sm:$0xff]
        %v1299 = vld [vmem:[%s1264 + $0x110] sm:$0xff]
        %v1300 = vld [vmem:[%s1264 + $0x118] sm:$0xff]
        %v1301 = vld [vmem:[%s1264 + $0x120] sm:$0xff]
        %v1302 = vld [vmem:[%s1264 + $0x128] sm:$0xff]
        %v1303 = vld [vmem:[%s1264 + $0x130] sm:$0xff]
        %v1304 = vld [vmem:[%s1264 + $0x138] sm:$0xff]
        %v1305 = vld [vmem:[%s1264 + $0x140] sm:$0xff]
        %v1306 = vld [vmem:[%s1264 + $0x148] sm:$0xff]
        %v1307 = vld [vmem:[%s1264 + $0x150] sm:$0xff]
        %v1308 = vld [vmem:[%s1264 + $0x158] sm:$0xff]
        %v1309 = vld [vmem:[%s1264 + $0x160] sm:$0xff]
        %v1310 = vld [vmem:[%s1264 + $0x168] sm:$0xff]
        %v1311 = vld [vmem:[%s1264 + $0x170] sm:$0xff]
        %v1312 = vld [vmem:[%s1264 + $0x178] sm:$0xff]
        %v1361 = vunpack.c.l.b16 %v1265
        %v1362 = vunpack.c.h.b16 %v1265
        %v1363 = vunpack.c.l.b16 %v1266
        %v1364 = vunpack.c.h.b16 %v1266
        %v1365 = vunpack.c.l.b16 %v1267
        %v1366 = vunpack.c.h.b16 %v1267
        %v1367 = vunpack.c.l.b16 %v1268
        %v1368 = vunpack.c.h.b16 %v1268
        %v1369 = vunpack.c.l.b16 %v1269
        %v1370 = vunpack.c.h.b16 %v1269
        %v1371 = vunpack.c.l.b16 %v1270
        %v1372 = vunpack.c.h.b16 %v1270
        %v1373 = vunpack.c.l.b16 %v1271
        %v1374 = vunpack.c.h.b16 %v1271
        %v1375 = vunpack.c.l.b16 %v1272
        %v1376 = vunpack.c.h.b16 %v1272
        %v1377 = vunpack.c.l.b16 %v1273
        %v1378 = vunpack.c.h.b16 %v1273
        %v1379 = vunpack.c.l.b16 %v1274
        %v1380 = vunpack.c.h.b16 %v1274
        %v1381 = vunpack.c.l.b16 %v1275
        %v1382 = vunpack.c.h.b16 %v1275
        %v1383 = vunpack.c.l.b16 %v1276
        %v1384 = vunpack.c.h.b16 %v1276
        %v1385 = vunpack.c.l.b16 %v1277
        %v1386 = vunpack.c.h.b16 %v1277
        %v1387 = vunpack.c.l.b16 %v1278
        %v1388 = vunpack.c.h.b16 %v1278
        %v1389 = vunpack.c.l.b16 %v1279
        %v1390 = vunpack.c.h.b16 %v1279
        %v1391 = vunpack.c.l.b16 %v1280
        %v1392 = vunpack.c.h.b16 %v1280
        %v1393 = vunpack.c.l.b16 %v1281
        %v1394 = vunpack.c.h.b16 %v1281
        %v1395 = vunpack.c.l.b16 %v1282
        %v1396 = vunpack.c.h.b16 %v1282
        %v1397 = vunpack.c.l.b16 %v1283
        %v1398 = vunpack.c.h.b16 %v1283
        %v1399 = vunpack.c.l.b16 %v1284
        %v1400 = vunpack.c.h.b16 %v1284
        %v1401 = vunpack.c.l.b16 %v1285
        %v1402 = vunpack.c.h.b16 %v1285
        %v1403 = vunpack.c.l.b16 %v1286
        %v1404 = vunpack.c.h.b16 %v1286
        %v1405 = vunpack.c.l.b16 %v1287
        %v1406 = vunpack.c.h.b16 %v1287
        %v1407 = vunpack.c.l.b16 %v1288
        %v1408 = vunpack.c.h.b16 %v1288
        %v1409 = vunpack.c.l.b16 %v1289
        %v1410 = vunpack.c.h.b16 %v1289
        %v1411 = vunpack.c.l.b16 %v1290
        %v1412 = vunpack.c.h.b16 %v1290
        %v1413 = vunpack.c.l.b16 %v1291
        %v1414 = vunpack.c.h.b16 %v1291
        %v1415 = vunpack.c.l.b16 %v1292
        %v1416 = vunpack.c.h.b16 %v1292
        %v1417 = vunpack.c.l.b16 %v1293
        %v1418 = vunpack.c.h.b16 %v1293
        %v1419 = vunpack.c.l.b16 %v1294
        %v1420 = vunpack.c.h.b16 %v1294
        %v1421 = vunpack.c.l.b16 %v1295
        %v1422 = vunpack.c.h.b16 %v1295
        %v1423 = vunpack.c.l.b16 %v1296
        %v1424 = vunpack.c.h.b16 %v1296
        %v1425 = vunpack.c.l.b16 %v1297
        %v1426 = vunpack.c.h.b16 %v1297
        %v1427 = vunpack.c.l.b16 %v1298
        %v1428 = vunpack.c.h.b16 %v1298
        %v1429 = vunpack.c.l.b16 %v1299
        %v1430 = vunpack.c.h.b16 %v1299
        %v1431 = vunpack.c.l.b16 %v1300
        %v1432 = vunpack.c.h.b16 %v1300
        %v1433 = vunpack.c.l.b16 %v1301
        %v1434 = vunpack.c.h.b16 %v1301
        %v1435 = vunpack.c.l.b16 %v1302
        %v1436 = vunpack.c.h.b16 %v1302
        %v1437 = vunpack.c.l.b16 %v1303
        %v1438 = vunpack.c.h.b16 %v1303
        %v1439 = vunpack.c.l.b16 %v1304
        %v1440 = vunpack.c.h.b16 %v1304
        %v1441 = vunpack.c.l.b16 %v1305
        %v1442 = vunpack.c.h.b16 %v1305
        %v1443 = vunpack.c.l.b16 %v1306
        %v1444 = vunpack.c.h.b16 %v1306
        %v1445 = vunpack.c.l.b16 %v1307
        %v1446 = vunpack.c.h.b16 %v1307
        %v1447 = vunpack.c.l.b16 %v1308
        %v1448 = vunpack.c.h.b16 %v1308
        %v1449 = vunpack.c.l.b16 %v1309
        %v1450 = vunpack.c.h.b16 %v1309
        %v1451 = vunpack.c.l.b16 %v1310
        %v1452 = vunpack.c.h.b16 %v1310
        %v1453 = vunpack.c.l.b16 %v1311
        %v1454 = vunpack.c.h.b16 %v1311
        %v1455 = vunpack.c.l.b16 %v1312
        %v1456 = vunpack.c.h.b16 %v1312
        %v1457 = vpack.c.b16 %v1363, %v1361
        %v1458 = vpack.c.b16 %v1364, %v1362
        %v1459 = vpack.c.b16 %v1367, %v1365
        %v1460 = vpack.c.b16 %v1368, %v1366
        %v1461 = vpack.c.b16 %v1371, %v1369
        %v1462 = vpack.c.b16 %v1372, %v1370
        %v1463 = vpack.c.b16 %v1375, %v1373
        %v1464 = vpack.c.b16 %v1376, %v1374
        %v1465 = vpack.c.b16 %v1379, %v1377
        %v1466 = vpack.c.b16 %v1380, %v1378
        %v1467 = vpack.c.b16 %v1383, %v1381
        %v1468 = vpack.c.b16 %v1384, %v1382
        %v1469 = vpack.c.b16 %v1387, %v1385
        %v1470 = vpack.c.b16 %v1388, %v1386
        %v1471 = vpack.c.b16 %v1391, %v1389
        %v1472 = vpack.c.b16 %v1392, %v1390
        %v1473 = vpack.c.b16 %v1395, %v1393
        %v1474 = vpack.c.b16 %v1396, %v1394
        %v1475 = vpack.c.b16 %v1399, %v1397
        %v1476 = vpack.c.b16 %v1400, %v1398
        %v1477 = vpack.c.b16 %v1403, %v1401
        %v1478 = vpack.c.b16 %v1404, %v1402
        %v1479 = vpack.c.b16 %v1407, %v1405
        %v1480 = vpack.c.b16 %v1408, %v1406
        %v1481 = vpack.c.b16 %v1411, %v1409
        %v1482 = vpack.c.b16 %v1412, %v1410
        %v1483 = vpack.c.b16 %v1415, %v1413
        %v1484 = vpack.c.b16 %v1416, %v1414
        %v1485 = vpack.c.b16 %v1419, %v1417
        %v1486 = vpack.c.b16 %v1420, %v1418
        %v1487 = vpack.c.b16 %v1423, %v1421
        %v1488 = vpack.c.b16 %v1424, %v1422
        %v1489 = vpack.c.b16 %v1427, %v1425
        %v1490 = vpack.c.b16 %v1428, %v1426
        %v1491 = vpack.c.b16 %v1431, %v1429
        %v1492 = vpack.c.b16 %v1432, %v1430
        %v1493 = vpack.c.b16 %v1435, %v1433
        %v1494 = vpack.c.b16 %v1436, %v1434
        %v1495 = vpack.c.b16 %v1439, %v1437
        %v1496 = vpack.c.b16 %v1440, %v1438
        %v1497 = vpack.c.b16 %v1443, %v1441
        %v1498 = vpack.c.b16 %v1444, %v1442
        %v1499 = vpack.c.b16 %v1447, %v1445
        %v1500 = vpack.c.b16 %v1448, %v1446
        %v1501 = vpack.c.b16 %v1451, %v1449
        %v1502 = vpack.c.b16 %v1452, %v1450
        %v1503 = vpack.c.b16 %v1455, %v1453
        %v1504 = vpack.c.b16 %v1456, %v1454
        %1553 = vmatprep.subr.bf16.mxu0 %v1458
        %1554 = vmatpush1.bf16.msra.mxu0 %v1457
        %1555 = vmatprep.subr.bf16.mxu0 %v1460
        %1556 = vmatpush1.bf16.msra.mxu0 %v1459
        %1557 = vmatprep.subr.bf16.mxu0 %v1462
        %1558 = vmatpush1.bf16.msra.mxu0 %v1461
        %1559 = vmatprep.subr.bf16.mxu0 %v1464
        %1560 = vmatpush1.bf16.msra.mxu0 %v1463
        %1561 = vmatprep.subr.bf16.mxu0 %v1466
        %1562 = vmatpush1.bf16.msra.mxu0 %v1465
        %1563 = vmatprep.subr.bf16.mxu0 %v1468
        %1564 = vmatpush1.bf16.msra.mxu0 %v1467
        %1565 = vmatprep.subr.bf16.mxu0 %v1470
        %1566 = vmatpush1.bf16.msra.mxu0 %v1469
        %1567 = vmatprep.subr.bf16.mxu0 %v1472
        %1568 = vmatpush1.bf16.msra.mxu0 %v1471
        %1569 = vmatprep.subr.bf16.mxu0 %v1474
        %1570 = vmatpush1.bf16.msra.mxu0 %v1473
        %1571 = vmatprep.subr.bf16.mxu0 %v1476
        %1572 = vmatpush1.bf16.msra.mxu0 %v1475
        %1573 = vmatprep.subr.bf16.mxu0 %v1478
        %1574 = vmatpush1.bf16.msra.mxu0 %v1477
        %1575 = vmatprep.subr.bf16.mxu0 %v1480
        %1576 = vmatpush1.bf16.msra.mxu0 %v1479
        %1577 = vmatprep.subr.bf16.mxu0 %v1482
        %1578 = vmatpush1.bf16.msra.mxu0 %v1481
        %1579 = vmatprep.subr.bf16.mxu0 %v1484
        %1580 = vmatpush1.bf16.msra.mxu0 %v1483
        %1581 = vmatprep.subr.bf16.mxu0 %v1486
        %1582 = vmatpush1.bf16.msra.mxu0 %v1485
        %1583 = vmatprep.subr.bf16.mxu0 %v1488
        %1584 = vmatpush1.bf16.msra.mxu0 %v1487
        %1585 = vmatprep.mubr.bf16.mxu0 %v1169
        %1586 = vmatmul.mubr.bf16.gmra.mrb[0].mxu0 %v1168
        %v1587 = vpop.f32.mrb[0].mxu0
        %v1588 = vadd.f32 0.0, %v1587
        %v1589 = vpop.f32.mrb[0].mxu0
        %v1590 = vadd.f32 0.0, %v1589
        %v1591 = vpop.f32.mrb[0].mxu0
        %v1592 = vadd.f32 0.0, %v1591
        %v1593 = vpop.f32.mrb[0].mxu0
        %v1594 = vadd.f32 0.0, %v1593
        %1595 = vmatprep.mubr.bf16.mxu0 %v1172
        %1596 = vmatmul.mubr.bf16.gmra.mrb[0].mxu0 %v1171
        %v1597 = vpop.f32.mrb[0].mxu0
        %v1598 = vadd.f32 0.0, %v1597
        %v1599 = vpop.f32.mrb[0].mxu0
        %v1600 = vadd.f32 0.0, %v1599
        %v1601 = vpop.f32.mrb[0].mxu0
        %v1602 = vadd.f32 0.0, %v1601
        %v1603 = vpop.f32.mrb[0].mxu0
        %v1604 = vadd.f32 0.0, %v1603
        %1605 = vmatprep.mubr.bf16.mxu0 %v1175
        %1606 = vmatmul.mubr.bf16.gmra.mrb[0].mxu0 %v1174
        %v1607 = vpop.f32.mrb[0].mxu0
        %v1608 = vadd.f32 0.0, %v1607
        %v1609 = vpop.f32.mrb[0].mxu0
        %v1610 = vadd.f32 0.0, %v1609
        %v1611 = vpop.f32.mrb[0].mxu0
        %v1612 = vadd.f32 0.0, %v1611
        %v1613 = vpop.f32.mrb[0].mxu0
        %v1614 = vadd.f32 0.0, %v1613
        %1615 = vmatprep.mubr.bf16.mxu0 %v1178
        %1616 = vmatmul.mubr.bf16.gmra.mrb[0].mxu0 %v1177
        %v1617 = vpop.f32.mrb[0].mxu0
        %v1618 = vadd.f32 0.0, %v1617
        %v1619 = vpop.f32.mrb[0].mxu0
        %v1620 = vadd.f32 0.0, %v1619
        %v1621 = vpop.f32.mrb[0].mxu0
        %v1622 = vadd.f32 0.0, %v1621
        %v1623 = vpop.f32.mrb[0].mxu0
        %v1624 = vadd.f32 0.0, %v1623
        %1625 = vmatprep.mubr.bf16.mxu0 %v1181
        %1626 = vmatmul.mubr.bf16.gmra.mrb[0].mxu0 %v1180
        %v1627 = vpop.f32.mrb[0].mxu0
        %v1628 = vadd.f32 0.0, %v1627
        %v1629 = vpop.f32.mrb[0].mxu0
        %v1630 = vadd.f32 0.0, %v1629
        %v1631 = vpop.f32.mrb[0].mxu0
        %v1632 = vadd.f32 0.0, %v1631
        %v1633 = vpop.f32.mrb[0].mxu0
        %v1634 = vadd.f32 0.0, %v1633
        %1635 = vmatprep.mubr.bf16.mxu0 %v1184
        %1636 = vmatmul.mubr.bf16.gmra.mrb[0].mxu0 %v1183
        %v1637 = vpop.f32.mrb[0].mxu0
        %v1638 = vadd.f32 0.0, %v1637
        %v1639 = vpop.f32.mrb[0].mxu0
        %v1640 = vadd.f32 0.0, %v1639
        %v1641 = vpop.f32.mrb[0].mxu0
        %v1642 = vadd.f32 0.0, %v1641
        %v1643 = vpop.f32.mrb[0].mxu0
        %v1644 = vadd.f32 0.0, %v1643
        %1645 = vmatprep.mubr.bf16.mxu0 %v1187
        %1646 = vmatmul.mubr.bf16.gmra.mrb[0].mxu0 %v1186
        %v1647 = vpop.f32.mrb[0].mxu0
        %v1648 = vadd.f32 0.0, %v1647
        %v1649 = vpop.f32.mrb[0].mxu0
        %v1650 = vadd.f32 0.0, %v1649
        %v1651 = vpop.f32.mrb[0].mxu0
        %v1652 = vadd.f32 0.0, %v1651
        %v1653 = vpop.f32.mrb[0].mxu0
        %v1654 = vadd.f32 0.0, %v1653
        %1655 = vmatprep.mubr.bf16.mxu0 %v1190
        %1656 = vmatmul.mubr.bf16.gmra.mrb[0].mxu0 %v1189
        %v1657 = vpop.f32.mrb[0].mxu0
        %v1658 = vadd.f32 0.0, %v1657
        %v1659 = vpop.f32.mrb[0].mxu0
        %v1660 = vadd.f32 0.0, %v1659
        %v1661 = vpop.f32.mrb[0].mxu0
        %v1662 = vadd.f32 0.0, %v1661
        %v1663 = vpop.f32.mrb[0].mxu0
        %v1664 = vadd.f32 0.0, %v1663
        %1665 = vmatprep.mubr.bf16.mxu0 %v1193
        %1666 = vmatmul.mubr.bf16.gmra.mrb[0].mxu0 %v1192
        %v1667 = vpop.f32.mrb[0].mxu0
        %v1668 = vadd.f32 0.0, %v1667
        %v1669 = vpop.f32.mrb[0].mxu0
        %v1670 = vadd.f32 0.0, %v1669
        %v1671 = vpop.f32.mrb[0].mxu0
        %v1672 = vadd.f32 0.0, %v1671
        %v1673 = vpop.f32.mrb[0].mxu0
        %v1674 = vadd.f32 0.0, %v1673
        %1675 = vmatprep.mubr.bf16.mxu0 %v1196
        %1676 = vmatmul.mubr.bf16.gmra.mrb[0].mxu0 %v1195
        %v1677 = vpop.f32.mrb[0].mxu0
        %v1678 = vadd.f32 0.0, %v1677
        %v1679 = vpop.f32.mrb[0].mxu0
        %v1680 = vadd.f32 0.0, %v1679
        %v1681 = vpop.f32.mrb[0].mxu0
        %v1682 = vadd.f32 0.0, %v1681
        %v1683 = vpop.f32.mrb[0].mxu0
        %v1684 = vadd.f32 0.0, %v1683
        %1685 = vmatprep.mubr.bf16.mxu0 %v1199
        %1686 = vmatmul.mubr.bf16.gmra.mrb[0].mxu0 %v1198
        %v1687 = vpop.f32.mrb[0].mxu0
        %v1688 = vadd.f32 0.0, %v1687
        %v1689 = vpop.f32.mrb[0].mxu0
        %v1690 = vadd.f32 0.0, %v1689
        %v1691 = vpop.f32.mrb[0].mxu0
        %v1692 = vadd.f32 0.0, %v1691
        %v1693 = vpop.f32.mrb[0].mxu0
        %v1694 = vadd.f32 0.0, %v1693
        %1695 = vmatprep.mubr.bf16.mxu0 %v1202
        %1696 = vmatmul.mubr.bf16.gmra.mrb[0].mxu0 %v1201
        %v1697 = vpop.f32.mrb[0].mxu0
        %v1698 = vadd.f32 0.0, %v1697
        %v1699 = vpop.f32.mrb[0].mxu0
        %v1700 = vadd.f32 0.0, %v1699
        %v1701 = vpop.f32.mrb[0].mxu0
        %v1702 = vadd.f32 0.0, %v1701
        %v1703 = vpop.f32.mrb[0].mxu0
        %v1704 = vadd.f32 0.0, %v1703
        %1705 = vmatprep.mubr.bf16.mxu0 %v1205
        %1706 = vmatmul.mubr.bf16.gmra.mrb[0].mxu0 %v1204
        %v1707 = vpop.f32.mrb[0].mxu0
        %v1708 = vadd.f32 0.0, %v1707
        %v1709 = vpop.f32.mrb[0].mxu0
        %v1710 = vadd.f32 0.0, %v1709
        %v1711 = vpop.f32.mrb[0].mxu0
        %v1712 = vadd.f32 0.0, %v1711
        %v1713 = vpop.f32.mrb[0].mxu0
        %v1714 = vadd.f32 0.0, %v1713
        %1715 = vmatprep.mubr.bf16.mxu0 %v1208
        %1716 = vmatmul.mubr.bf16.gmra.mrb[0].mxu0 %v1207
        %v1717 = vpop.f32.mrb[0].mxu0
        %v1718 = vadd.f32 0.0, %v1717
        %v1719 = vpop.f32.mrb[0].mxu0
        %v1720 = vadd.f32 0.0, %v1719
        %v1721 = vpop.f32.mrb[0].mxu0
        %v1722 = vadd.f32 0.0, %v1721
        %v1723 = vpop.f32.mrb[0].mxu0
        %v1724 = vadd.f32 0.0, %v1723
        %1725 = vmatprep.mubr.bf16.mxu0 %v1211
        %1726 = vmatmul.mubr.bf16.gmra.mrb[0].mxu0 %v1210
        %v1727 = vpop.f32.mrb[0].mxu0
        %v1728 = vadd.f32 0.0, %v1727
        %v1729 = vpop.f32.mrb[0].mxu0
        %v1730 = vadd.f32 0.0, %v1729
        %v1731 = vpop.f32.mrb[0].mxu0
        %v1732 = vadd.f32 0.0, %v1731
        %v1733 = vpop.f32.mrb[0].mxu0
        %v1734 = vadd.f32 0.0, %v1733
        %1735 = vmatprep.mubr.bf16.mxu0 %v1262
        %1736 = vmatmul.mubr.bf16.gmra.mrb[0].mxu0 %v1261
        %v1737 = vpop.f32.mrb[0].mxu0
        %v1738 = vadd.f32 0.0, %v1737
        %v1739 = vpop.f32.mrb[0].mxu0
        %v1740 = vadd.f32 0.0, %v1739
        %v1741 = vpop.f32.mrb[0].mxu0
        %v1742 = vadd.f32 0.0, %v1741
        %v1743 = vpop.f32.mrb[0].mxu0
        %v1744 = vadd.f32 0.0, %v1743
        %1745 = vdwg.mxu0
        %1746 = vmatprep.subr.bf16.mxu0 %v1490
        %1747 = vmatpush1.bf16.msra.mxu0 %v1489
        %1748 = vmatprep.subr.bf16.mxu0 %v1492
        %1749 = vmatpush1.bf16.msra.mxu0 %v1491
        %1750 = vmatprep.subr.bf16.mxu0 %v1494
        %1751 = vmatpush1.bf16.msra.mxu0 %v1493
        %1752 = vmatprep.subr.bf16.mxu0 %v1496
        %1753 = vmatpush1.bf16.msra.mxu0 %v1495
        %1754 = vmatprep.subr.bf16.mxu0 %v1498
        %1755 = vmatpush1.bf16.msra.mxu0 %v1497
        %1756 = vmatprep.subr.bf16.mxu0 %v1500
        %1757 = vmatpush1.bf16.msra.mxu0 %v1499
        %1758 = vmatprep.subr.bf16.mxu0 %v1502
        %1759 = vmatpush1.bf16.msra.mxu0 %v1501
        %1760 = vmatprep.subr.bf16.mxu0 %v1504
        %1761 = vmatpush1.bf16.msra.mxu0 %v1503
        %1762 = vmatprep.subr.bf16.mxu0 0
        %1763 = vmatpush1.bf16.msra.mxu0 0
        %1764 = vmatprep.subr.bf16.mxu0 0
        %1765 = vmatpush1.bf16.msra.mxu0 0
        %1766 = vmatprep.subr.bf16.mxu0 0
        %1767 = vmatpush1.bf16.msra.mxu0 0
        %1768 = vmatprep.subr.bf16.mxu0 0
        %1769 = vmatpush1.bf16.msra.mxu0 0
        %1770 = vmatprep.subr.bf16.mxu0 0
        %1771 = vmatpush1.bf16.msra.mxu0 0
        %1772 = vmatprep.subr.bf16.mxu0 0
        %1773 = vmatpush1.bf16.msra.mxu0 0
        %1774 = vmatprep.subr.bf16.mxu0 0
        %1775 = vmatpush1.bf16.msra.mxu0 0
        %1776 = vmatprep.subr.bf16.mxu0 0
        %1777 = vmatpush1.bf16.msra.mxu0 0
        %1778 = vmatprep.mubr.bf16.mxu0 0
        %1779 = vmatmul.mubr.bf16.gmra.mrb[0].mxu0 %v1170
        %v1780 = vpop.f32.mrb[0].mxu0
        %v1781 = vadd.f32 %v1588, %v1780
        %v1782 = vpop.f32.mrb[0].mxu0
        %v1783 = vadd.f32 %v1590, %v1782
        %v1784 = vpop.f32.mrb[0].mxu0
        %v1785 = vadd.f32 %v1592, %v1784
        %v1786 = vpop.f32.mrb[0].mxu0
        %v1787 = vadd.f32 %v1594, %v1786
        %1788 = vmatprep.mubr.bf16.mxu0 0
        %1789 = vmatmul.mubr.bf16.gmra.mrb[0].mxu0 %v1173
        %v1790 = vpop.f32.mrb[0].mxu0
        %v1791 = vadd.f32 %v1598, %v1790
        %v1792 = vpop.f32.mrb[0].mxu0
        %v1793 = vadd.f32 %v1600, %v1792
        %v1794 = vpop.f32.mrb[0].mxu0
        %v1795 = vadd.f32 %v1602, %v1794
        %v1796 = vpop.f32.mrb[0].mxu0
        %v1797 = vadd.f32 %v1604, %v1796
        %1798 = vmatprep.mubr.bf16.mxu0 0
        %1799 = vmatmul.mubr.bf16.gmra.mrb[0].mxu0 %v1176
        %v1800 = vpop.f32.mrb[0].mxu0
        %v1801 = vadd.f32 %v1608, %v1800
        %v1802 = vpop.f32.mrb[0].mxu0
        %v1803 = vadd.f32 %v1610, %v1802
        %v1804 = vpop.f32.mrb[0].mxu0
        %v1805 = vadd.f32 %v1612, %v1804
        %v1806 = vpop.f32.mrb[0].mxu0
        %v1807 = vadd.f32 %v1614, %v1806
        %1808 = vmatprep.mubr.bf16.mxu0 0
        %1809 = vmatmul.mubr.bf16.gmra.mrb[0].mxu0 %v1179
        %v1810 = vpop.f32.mrb[0].mxu0
        %v1811 = vadd.f32 %v1618, %v1810
        %v1812 = vpop.f32.mrb[0].mxu0
        %v1813 = vadd.f32 %v1620, %v1812
        %v1814 = vpop.f32.mrb[0].mxu0
        %v1815 = vadd.f32 %v1622, %v1814
        %v1816 = vpop.f32.mrb[0].mxu0
        %v1817 = vadd.f32 %v1624, %v1816
        %1818 = vmatprep.mubr.bf16.mxu0 0
        %1819 = vmatmul.mubr.bf16.gmra.mrb[0].mxu0 %v1182
        %v1820 = vpop.f32.mrb[0].mxu0
        %v1821 = vadd.f32 %v1628, %v1820
        %v1822 = vpop.f32.mrb[0].mxu0
        %v1823 = vadd.f32 %v1630, %v1822
        %v1824 = vpop.f32.mrb[0].mxu0
        %v1825 = vadd.f32 %v1632, %v1824
        %v1826 = vpop.f32.mrb[0].mxu0
        %v1827 = vadd.f32 %v1634, %v1826
        %1828 = vmatprep.mubr.bf16.mxu0 0
        %1829 = vmatmul.mubr.bf16.gmra.mrb[0].mxu0 %v1185
        %v1830 = vpop.f32.mrb[0].mxu0
        %v1831 = vadd.f32 %v1638, %v1830
        %v1832 = vpop.f32.mrb[0].mxu0
        %v1833 = vadd.f32 %v1640, %v1832
        %v1834 = vpop.f32.mrb[0].mxu0
        %v1835 = vadd.f32 %v1642, %v1834
        %v1836 = vpop.f32.mrb[0].mxu0
        %v1837 = vadd.f32 %v1644, %v1836
        %1838 = vmatprep.mubr.bf16.mxu0 0
        %1839 = vmatmul.mubr.bf16.gmra.mrb[0].mxu0 %v1188
        %v1840 = vpop.f32.mrb[0].mxu0
        %v1841 = vadd.f32 %v1648, %v1840
        %v1842 = vpop.f32.mrb[0].mxu0
        %v1843 = vadd.f32 %v1650, %v1842
        %v1844 = vpop.f32.mrb[0].mxu0
        %v1845 = vadd.f32 %v1652, %v1844
        %v1846 = vpop.f32.mrb[0].mxu0
        %v1847 = vadd.f32 %v1654, %v1846
        %1848 = vmatprep.mubr.bf16.mxu0 0
        %1849 = vmatmul.mubr.bf16.gmra.mrb[0].mxu0 %v1191
        %v1850 = vpop.f32.mrb[0].mxu0
        %v1851 = vadd.f32 %v1658, %v1850
        %v1852 = vpop.f32.mrb[0].mxu0
        %v1853 = vadd.f32 %v1660, %v1852
        %v1854 = vpop.f32.mrb[0].mxu0
        %v1855 = vadd.f32 %v1662, %v1854
        %v1856 = vpop.f32.mrb[0].mxu0
        %v1857 = vadd.f32 %v1664, %v1856
        %1858 = vmatprep.mubr.bf16.mxu0 0
        %1859 = vmatmul.mubr.bf16.gmra.mrb[0].mxu0 %v1194
        %v1860 = vpop.f32.mrb[0].mxu0
        %v1861 = vadd.f32 %v1668, %v1860
        %v1862 = vpop.f32.mrb[0].mxu0
        %v1863 = vadd.f32 %v1670, %v1862
        %v1864 = vpop.f32.mrb[0].mxu0
        %v1865 = vadd.f32 %v1672, %v1864
        %v1866 = vpop.f32.mrb[0].mxu0
        %v1867 = vadd.f32 %v1674, %v1866
        %1868 = vmatprep.mubr.bf16.mxu0 0
        %1869 = vmatmul.mubr.bf16.gmra.mrb[0].mxu0 %v1197
        %v1870 = vpop.f32.mrb[0].mxu0
        %v1871 = vadd.f32 %v1678, %v1870
        %v1872 = vpop.f32.mrb[0].mxu0
        %v1873 = vadd.f32 %v1680, %v1872
        %v1874 = vpop.f32.mrb[0].mxu0
        %v1875 = vadd.f32 %v1682, %v1874
        %v1876 = vpop.f32.mrb[0].mxu0
        %v1877 = vadd.f32 %v1684, %v1876
        %1878 = vmatprep.mubr.bf16.mxu0 0
        %1879 = vmatmul.mubr.bf16.gmra.mrb[0].mxu0 %v1200
        %v1880 = vpop.f32.mrb[0].mxu0
        %v1881 = vadd.f32 %v1688, %v1880
        %v1882 = vpop.f32.mrb[0].mxu0
        %v1883 = vadd.f32 %v1690, %v1882
        %v1884 = vpop.f32.mrb[0].mxu0
        %v1885 = vadd.f32 %v1692, %v1884
        %v1886 = vpop.f32.mrb[0].mxu0
        %v1887 = vadd.f32 %v1694, %v1886
        %1888 = vmatprep.mubr.bf16.mxu0 0
        %1889 = vmatmul.mubr.bf16.gmra.mrb[0].mxu0 %v1203
        %v1890 = vpop.f32.mrb[0].mxu0
        %v1891 = vadd.f32 %v1698, %v1890
        %v1892 = vpop.f32.mrb[0].mxu0
        %v1893 = vadd.f32 %v1700, %v1892
        %v1894 = vpop.f32.mrb[0].mxu0
        %v1895 = vadd.f32 %v1702, %v1894
        %v1896 = vpop.f32.mrb[0].mxu0
        %v1897 = vadd.f32 %v1704, %v1896
        %1898 = vmatprep.mubr.bf16.mxu0 0
        %1899 = vmatmul.mubr.bf16.gmra.mrb[0].mxu0 %v1206
        %v1900 = vpop.f32.mrb[0].mxu0
        %v1901 = vadd.f32 %v1708, %v1900
        %v1902 = vpop.f32.mrb[0].mxu0
        %v1903 = vadd.f32 %v1710, %v1902
        %v1904 = vpop.f32.mrb[0].mxu0
        %v1905 = vadd.f32 %v1712, %v1904
        %v1906 = vpop.f32.mrb[0].mxu0
        %v1907 = vadd.f32 %v1714, %v1906
        %1908 = vmatprep.mubr.bf16.mxu0 0
        %1909 = vmatmul.mubr.bf16.gmra.mrb[0].mxu0 %v1209
        %v1910 = vpop.f32.mrb[0].mxu0
        %v1911 = vadd.f32 %v1718, %v1910
        %v1912 = vpop.f32.mrb[0].mxu0
        %v1913 = vadd.f32 %v1720, %v1912
        %v1914 = vpop.f32.mrb[0].mxu0
        %v1915 = vadd.f32 %v1722, %v1914
        %v1916 = vpop.f32.mrb[0].mxu0
        %v1917 = vadd.f32 %v1724, %v1916
        %1918 = vmatprep.mubr.bf16.mxu0 0
        %1919 = vmatmul.mubr.bf16.gmra.mrb[0].mxu0 %v1212
        %v1920 = vpop.f32.mrb[0].mxu0
        %v1921 = vadd.f32 %v1728, %v1920
        %v1922 = vpop.f32.mrb[0].mxu0
        %v1923 = vadd.f32 %v1730, %v1922
        %v1924 = vpop.f32.mrb[0].mxu0
        %v1925 = vadd.f32 %v1732, %v1924
        %v1926 = vpop.f32.mrb[0].mxu0
        %v1927 = vadd.f32 %v1734, %v1926
        %1928 = vmatprep.mubr.bf16.mxu0 0
        %1929 = vmatmul.mubr.bf16.gmra.mrb[0].mxu0 %v1263
        %v1930 = vpop.f32.mrb[0].mxu0
        %v1931 = vadd.f32 %v1738, %v1930
        %v1932 = vpop.f32.mrb[0].mxu0
        %v1933 = vadd.f32 %v1740, %v1932
        %v1934 = vpop.f32.mrb[0].mxu0
        %v1935 = vadd.f32 %v1742, %v1934
        %v1936 = vpop.f32.mrb[0].mxu0
        %v1937 = vadd.f32 %v1744, %v1936
        %1938 = vdwg.mxu0
        %v1987 = vunpack.c.l.b16 %v1213
        %v1988 = vunpack.c.h.b16 %v1213
        %v1989 = vunpack.c.l.b16 %v1214
        %v1990 = vunpack.c.h.b16 %v1214
        %v1991 = vunpack.c.l.b16 %v1215
        %v1992 = vunpack.c.h.b16 %v1215
        %v1993 = vunpack.c.l.b16 %v1216
        %v1994 = vunpack.c.h.b16 %v1216
        %v1995 = vunpack.c.l.b16 %v1217
        %v1996 = vunpack.c.h.b16 %v1217
        %v1997 = vunpack.c.l.b16 %v1218
        %v1998 = vunpack.c.h.b16 %v1218
        %v1999 = vunpack.c.l.b16 %v1219
        %v2000 = vunpack.c.h.b16 %v1219
        %v2001 = vunpack.c.l.b16 %v1220
        %v2002 = vunpack.c.h.b16 %v1220
        %v2003 = vunpack.c.l.b16 %v1221
        %v2004 = vunpack.c.h.b16 %v1221
        %v2005 = vunpack.c.l.b16 %v1222
        %v2006 = vunpack.c.h.b16 %v1222
        %v2007 = vunpack.c.l.b16 %v1223
        %v2008 = vunpack.c.h.b16 %v1223
        %v2009 = vunpack.c.l.b16 %v1224
        %v2010 = vunpack.c.h.b16 %v1224
        %v2011 = vunpack.c.l.b16 %v1225
        %v2012 = vunpack.c.h.b16 %v1225
        %v2013 = vunpack.c.l.b16 %v1226
        %v2014 = vunpack.c.h.b16 %v1226
        %v2015 = vunpack.c.l.b16 %v1227
        %v2016 = vunpack.c.h.b16 %v1227
        %v2017 = vunpack.c.l.b16 %v1228
        %v2018 = vunpack.c.h.b16 %v1228
        %v2019 = vunpack.c.l.b16 %v1229
        %v2020 = vunpack.c.h.b16 %v1229
        %v2021 = vunpack.c.l.b16 %v1230
        %v2022 = vunpack.c.h.b16 %v1230
        %v2023 = vunpack.c.l.b16 %v1231
        %v2024 = vunpack.c.h.b16 %v1231
        %v2025 = vunpack.c.l.b16 %v1232
        %v2026 = vunpack.c.h.b16 %v1232
        %v2027 = vunpack.c.l.b16 %v1233
        %v2028 = vunpack.c.h.b16 %v1233
        %v2029 = vunpack.c.l.b16 %v1234
        %v2030 = vunpack.c.h.b16 %v1234
        %v2031 = vunpack.c.l.b16 %v1235
        %v2032 = vunpack.c.h.b16 %v1235
        %v2033 = vunpack.c.l.b16 %v1236
        %v2034 = vunpack.c.h.b16 %v1236
        %v2035 = vunpack.c.l.b16 %v1237
        %v2036 = vunpack.c.h.b16 %v1237
        %v2037 = vunpack.c.l.b16 %v1238
        %v2038 = vunpack.c.h.b16 %v1238
        %v2039 = vunpack.c.l.b16 %v1239
        %v2040 = vunpack.c.h.b16 %v1239
        %v2041 = vunpack.c.l.b16 %v1240
        %v2042 = vunpack.c.h.b16 %v1240
        %v2043 = vunpack.c.l.b16 %v1241
        %v2044 = vunpack.c.h.b16 %v1241
        %v2045 = vunpack.c.l.b16 %v1242
        %v2046 = vunpack.c.h.b16 %v1242
        %v2047 = vunpack.c.l.b16 %v1243
        %v2048 = vunpack.c.h.b16 %v1243
        %v2049 = vunpack.c.l.b16 %v1244
        %v2050 = vunpack.c.h.b16 %v1244
        %v2051 = vunpack.c.l.b16 %v1245
        %v2052 = vunpack.c.h.b16 %v1245
        %v2053 = vunpack.c.l.b16 %v1246
        %v2054 = vunpack.c.h.b16 %v1246
        %v2055 = vunpack.c.l.b16 %v1247
        %v2056 = vunpack.c.h.b16 %v1247
        %v2057 = vunpack.c.l.b16 %v1248
        %v2058 = vunpack.c.h.b16 %v1248
        %v2059 = vunpack.c.l.b16 %v1249
        %v2060 = vunpack.c.h.b16 %v1249
        %v2061 = vunpack.c.l.b16 %v1250
        %v2062 = vunpack.c.h.b16 %v1250
        %v2063 = vunpack.c.l.b16 %v1251
        %v2064 = vunpack.c.h.b16 %v1251
        %v2065 = vunpack.c.l.b16 %v1252
        %v2066 = vunpack.c.h.b16 %v1252
        %v2067 = vunpack.c.l.b16 %v1253
        %v2068 = vunpack.c.h.b16 %v1253
        %v2069 = vunpack.c.l.b16 %v1254
        %v2070 = vunpack.c.h.b16 %v1254
        %v2071 = vunpack.c.l.b16 %v1255
        %v2072 = vunpack.c.h.b16 %v1255
        %v2073 = vunpack.c.l.b16 %v1256
        %v2074 = vunpack.c.h.b16 %v1256
        %v2075 = vunpack.c.l.b16 %v1257
        %v2076 = vunpack.c.h.b16 %v1257
        %v2077 = vunpack.c.l.b16 %v1258
        %v2078 = vunpack.c.h.b16 %v1258
        %v2079 = vunpack.c.l.b16 %v1259
        %v2080 = vunpack.c.h.b16 %v1259
        %v2081 = vunpack.c.l.b16 %v1260
        %v2082 = vunpack.c.h.b16 %v1260
        %v2083 = vpack.c.b16 %v1989, %v1987
        %v2084 = vpack.c.b16 %v1990, %v1988
        %v2085 = vpack.c.b16 %v1993, %v1991
        %v2086 = vpack.c.b16 %v1994, %v1992
        %v2087 = vpack.c.b16 %v1997, %v1995
        %v2088 = vpack.c.b16 %v1998, %v1996
        %v2089 = vpack.c.b16 %v2001, %v1999
        %v2090 = vpack.c.b16 %v2002, %v2000
        %v2091 = vpack.c.b16 %v2005, %v2003
        %v2092 = vpack.c.b16 %v2006, %v2004
        %v2093 = vpack.c.b16 %v2009, %v2007
        %v2094 = vpack.c.b16 %v2010, %v2008
        %v2095 = vpack.c.b16 %v2013, %v2011
        %v2096 = vpack.c.b16 %v2014, %v2012
        %v2097 = vpack.c.b16 %v2017, %v2015
        %v2098 = vpack.c.b16 %v2018, %v2016
        %v2099 = vpack.c.b16 %v2021, %v2019
        %v2100 = vpack.c.b16 %v2022, %v2020
        %v2101 = vpack.c.b16 %v2025, %v2023
        %v2102 = vpack.c.b16 %v2026, %v2024
        %v2103 = vpack.c.b16 %v2029, %v2027
        %v2104 = vpack.c.b16 %v2030, %v2028
        %v2105 = vpack.c.b16 %v2033, %v2031
        %v2106 = vpack.c.b16 %v2034, %v2032
        %v2107 = vpack.c.b16 %v2037, %v2035
        %v2108 = vpack.c.b16 %v2038, %v2036
        %v2109 = vpack.c.b16 %v2041, %v2039
        %v2110 = vpack.c.b16 %v2042, %v2040
        %v2111 = vpack.c.b16 %v2045, %v2043
        %v2112 = vpack.c.b16 %v2046, %v2044
        %v2113 = vpack.c.b16 %v2049, %v2047
        %v2114 = vpack.c.b16 %v2050, %v2048
        %v2115 = vpack.c.b16 %v2053, %v2051
        %v2116 = vpack.c.b16 %v2054, %v2052
        %v2117 = vpack.c.b16 %v2057, %v2055
        %v2118 = vpack.c.b16 %v2058, %v2056
        %v2119 = vpack.c.b16 %v2061, %v2059
        %v2120 = vpack.c.b16 %v2062, %v2060
        %v2121 = vpack.c.b16 %v2065, %v2063
        %v2122 = vpack.c.b16 %v2066, %v2064
        %v2123 = vpack.c.b16 %v2069, %v2067
        %v2124 = vpack.c.b16 %v2070, %v2068
        %v2125 = vpack.c.b16 %v2073, %v2071
        %v2126 = vpack.c.b16 %v2074, %v2072
        %v2127 = vpack.c.b16 %v2077, %v2075
        %v2128 = vpack.c.b16 %v2078, %v2076
        %v2129 = vpack.c.b16 %v2081, %v2079
        %v2130 = vpack.c.b16 %v2082, %v2080
        %2179 = vmatprep.subr.bf16.mxu0 %v2084
        %2180 = vmatpush1.bf16.msra.mxu0 %v2083
        %2181 = vmatprep.subr.bf16.mxu0 %v2086
        %2182 = vmatpush1.bf16.msra.mxu0 %v2085
        %2183 = vmatprep.subr.bf16.mxu0 %v2088
        %2184 = vmatpush1.bf16.msra.mxu0 %v2087
        %2185 = vmatprep.subr.bf16.mxu0 %v2090
        %2186 = vmatpush1.bf16.msra.mxu0 %v2089
        %2187 = vmatprep.subr.bf16.mxu0 %v2092
        %2188 = vmatpush1.bf16.msra.mxu0 %v2091
        %2189 = vmatprep.subr.bf16.mxu0 %v2094
        %2190 = vmatpush1.bf16.msra.mxu0 %v2093
        %2191 = vmatprep.subr.bf16.mxu0 %v2096
        %2192 = vmatpush1.bf16.msra.mxu0 %v2095
        %2193 = vmatprep.subr.bf16.mxu0 %v2098
        %2194 = vmatpush1.bf16.msra.mxu0 %v2097
        %2195 = vmatprep.subr.bf16.mxu0 %v2100
        %2196 = vmatpush1.bf16.msra.mxu0 %v2099
        %2197 = vmatprep.subr.bf16.mxu0 %v2102
        %2198 = vmatpush1.bf16.msra.mxu0 %v2101
        %2199 = vmatprep.subr.bf16.mxu0 %v2104
        %2200 = vmatpush1.bf16.msra.mxu0 %v2103
        %2201 = vmatprep.subr.bf16.mxu0 %v2106
        %2202 = vmatpush1.bf16.msra.mxu0 %v2105
        %2203 = vmatprep.subr.bf16.mxu0 %v2108
        %2204 = vmatpush1.bf16.msra.mxu0 %v2107
        %2205 = vmatprep.subr.bf16.mxu0 %v2110
        %2206 = vmatpush1.bf16.msra.mxu0 %v2109
        %2207 = vmatprep.subr.bf16.mxu0 %v2112
        %2208 = vmatpush1.bf16.msra.mxu0 %v2111
        %2209 = vmatprep.subr.bf16.mxu0 %v2114
        %2210 = vmatpush1.bf16.msra.mxu0 %v2113
        %2211 = vmatprep.mubr.bf16.mxu0 %v1166
        %2212 = vmatmul.mubr.bf16.gmra.mrb[0].mxu0 %v1165
        %v2213 = vpop.f32.mrb[0].mxu0
        %v2214 = vadd.f32 %v1781, %v2213
        %v2215 = vpop.f32.mrb[0].mxu0
        %v2216 = vadd.f32 %v1783, %v2215
        %v2217 = vpop.f32.mrb[0].mxu0
        %v2218 = vadd.f32 %v1785, %v2217
        %v2219 = vpop.f32.mrb[0].mxu0
        %v2220 = vadd.f32 %v1787, %v2219
        %2221 = vmatprep.mubr.bf16.mxu0 %v1169
        %2222 = vmatmul.mubr.bf16.gmra.mrb[0].mxu0 %v1168
        %v2223 = vpop.f32.mrb[0].mxu0
        %v2224 = vadd.f32 %v1791, %v2223
        %v2225 = vpop.f32.mrb[0].mxu0
        %v2226 = vadd.f32 %v1793, %v2225
        %v2227 = vpop.f32.mrb[0].mxu0
        %v2228 = vadd.f32 %v1795, %v2227
        %v2229 = vpop.f32.mrb[0].mxu0
        %v2230 = vadd.f32 %v1797, %v2229
        %2231 = vmatprep.mubr.bf16.mxu0 %v1172
        %2232 = vmatmul.mubr.bf16.gmra.mrb[0].mxu0 %v1171
        %v2233 = vpop.f32.mrb[0].mxu0
        %v2234 = vadd.f32 %v1801, %v2233
        %v2235 = vpop.f32.mrb[0].mxu0
        %v2236 = vadd.f32 %v1803, %v2235
        %v2237 = vpop.f32.mrb[0].mxu0
        %v2238 = vadd.f32 %v1805, %v2237
        %v2239 = vpop.f32.mrb[0].mxu0
        %v2240 = vadd.f32 %v1807, %v2239
        %2241 = vmatprep.mubr.bf16.mxu0 %v1175
        %2242 = vmatmul.mubr.bf16.gmra.mrb[0].mxu0 %v1174
        %v2243 = vpop.f32.mrb[0].mxu0
        %v2244 = vadd.f32 %v1811, %v2243
        %v2245 = vpop.f32.mrb[0].mxu0
        %v2246 = vadd.f32 %v1813, %v2245
        %v2247 = vpop.f32.mrb[0].mxu0
        %v2248 = vadd.f32 %v1815, %v2247
        %v2249 = vpop.f32.mrb[0].mxu0
        %v2250 = vadd.f32 %v1817, %v2249
        %2251 = vmatprep.mubr.bf16.mxu0 %v1178
        %2252 = vmatmul.mubr.bf16.gmra.mrb[0].mxu0 %v1177
        %v2253 = vpop.f32.mrb[0].mxu0
        %v2254 = vadd.f32 %v1821, %v2253
        %v2255 = vpop.f32.mrb[0].mxu0
        %v2256 = vadd.f32 %v1823, %v2255
        %v2257 = vpop.f32.mrb[0].mxu0
        %v2258 = vadd.f32 %v1825, %v2257
        %v2259 = vpop.f32.mrb[0].mxu0
        %v2260 = vadd.f32 %v1827, %v2259
        %2261 = vmatprep.mubr.bf16.mxu0 %v1181
        %2262 = vmatmul.mubr.bf16.gmra.mrb[0].mxu0 %v1180
        %v2263 = vpop.f32.mrb[0].mxu0
        %v2264 = vadd.f32 %v1831, %v2263
        %v2265 = vpop.f32.mrb[0].mxu0
        %v2266 = vadd.f32 %v1833, %v2265
        %v2267 = vpop.f32.mrb[0].mxu0
        %v2268 = vadd.f32 %v1835, %v2267
        %v2269 = vpop.f32.mrb[0].mxu0
        %v2270 = vadd.f32 %v1837, %v2269
        %2271 = vmatprep.mubr.bf16.mxu0 %v1184
        %2272 = vmatmul.mubr.bf16.gmra.mrb[0].mxu0 %v1183
        %v2273 = vpop.f32.mrb[0].mxu0
        %v2274 = vadd.f32 %v1841, %v2273
        %v2275 = vpop.f32.mrb[0].mxu0
        %v2276 = vadd.f32 %v1843, %v2275
        %v2277 = vpop.f32.mrb[0].mxu0
        %v2278 = vadd.f32 %v1845, %v2277
        %v2279 = vpop.f32.mrb[0].mxu0
        %v2280 = vadd.f32 %v1847, %v2279
        %2281 = vmatprep.mubr.bf16.mxu0 %v1187
        %2282 = vmatmul.mubr.bf16.gmra.mrb[0].mxu0 %v1186
        %v2283 = vpop.f32.mrb[0].mxu0
        %v2284 = vadd.f32 %v1851, %v2283
        %v2285 = vpop.f32.mrb[0].mxu0
        %v2286 = vadd.f32 %v1853, %v2285
        %v2287 = vpop.f32.mrb[0].mxu0
        %v2288 = vadd.f32 %v1855, %v2287
        %v2289 = vpop.f32.mrb[0].mxu0
        %v2290 = vadd.f32 %v1857, %v2289
        %2291 = vmatprep.mubr.bf16.mxu0 %v1190
        %2292 = vmatmul.mubr.bf16.gmra.mrb[0].mxu0 %v1189
        %v2293 = vpop.f32.mrb[0].mxu0
        %v2294 = vadd.f32 %v1861, %v2293
        %v2295 = vpop.f32.mrb[0].mxu0
        %v2296 = vadd.f32 %v1863, %v2295
        %v2297 = vpop.f32.mrb[0].mxu0
        %v2298 = vadd.f32 %v1865, %v2297
        %v2299 = vpop.f32.mrb[0].mxu0
        %v2300 = vadd.f32 %v1867, %v2299
        %2301 = vmatprep.mubr.bf16.mxu0 %v1193
        %2302 = vmatmul.mubr.bf16.gmra.mrb[0].mxu0 %v1192
        %v2303 = vpop.f32.mrb[0].mxu0
        %v2304 = vadd.f32 %v1871, %v2303
        %v2305 = vpop.f32.mrb[0].mxu0
        %v2306 = vadd.f32 %v1873, %v2305
        %v2307 = vpop.f32.mrb[0].mxu0
        %v2308 = vadd.f32 %v1875, %v2307
        %v2309 = vpop.f32.mrb[0].mxu0
        %v2310 = vadd.f32 %v1877, %v2309
        %2311 = vmatprep.mubr.bf16.mxu0 %v1196
        %2312 = vmatmul.mubr.bf16.gmra.mrb[0].mxu0 %v1195
        %v2313 = vpop.f32.mrb[0].mxu0
        %v2314 = vadd.f32 %v1881, %v2313
        %v2315 = vpop.f32.mrb[0].mxu0
        %v2316 = vadd.f32 %v1883, %v2315
        %v2317 = vpop.f32.mrb[0].mxu0
        %v2318 = vadd.f32 %v1885, %v2317
        %v2319 = vpop.f32.mrb[0].mxu0
        %v2320 = vadd.f32 %v1887, %v2319
        %2321 = vmatprep.mubr.bf16.mxu0 %v1199
        %2322 = vmatmul.mubr.bf16.gmra.mrb[0].mxu0 %v1198
        %v2323 = vpop.f32.mrb[0].mxu0
        %v2324 = vadd.f32 %v1891, %v2323
        %v2325 = vpop.f32.mrb[0].mxu0
        %v2326 = vadd.f32 %v1893, %v2325
        %v2327 = vpop.f32.mrb[0].mxu0
        %v2328 = vadd.f32 %v1895, %v2327
        %v2329 = vpop.f32.mrb[0].mxu0
        %v2330 = vadd.f32 %v1897, %v2329
        %2331 = vmatprep.mubr.bf16.mxu0 %v1202
        %2332 = vmatmul.mubr.bf16.gmra.mrb[0].mxu0 %v1201
        %v2333 = vpop.f32.mrb[0].mxu0
        %v2334 = vadd.f32 %v1901, %v2333
        %v2335 = vpop.f32.mrb[0].mxu0
        %v2336 = vadd.f32 %v1903, %v2335
        %v2337 = vpop.f32.mrb[0].mxu0
        %v2338 = vadd.f32 %v1905, %v2337
        %v2339 = vpop.f32.mrb[0].mxu0
        %v2340 = vadd.f32 %v1907, %v2339
        %2341 = vmatprep.mubr.bf16.mxu0 %v1205
        %2342 = vmatmul.mubr.bf16.gmra.mrb[0].mxu0 %v1204
        %v2343 = vpop.f32.mrb[0].mxu0
        %v2344 = vadd.f32 %v1911, %v2343
        %v2345 = vpop.f32.mrb[0].mxu0
        %v2346 = vadd.f32 %v1913, %v2345
        %v2347 = vpop.f32.mrb[0].mxu0
        %v2348 = vadd.f32 %v1915, %v2347
        %v2349 = vpop.f32.mrb[0].mxu0
        %v2350 = vadd.f32 %v1917, %v2349
        %2351 = vmatprep.mubr.bf16.mxu0 %v1208
        %2352 = vmatmul.mubr.bf16.gmra.mrb[0].mxu0 %v1207
        %v2353 = vpop.f32.mrb[0].mxu0
        %v2354 = vadd.f32 %v1921, %v2353
        %v2355 = vpop.f32.mrb[0].mxu0
        %v2356 = vadd.f32 %v1923, %v2355
        %v2357 = vpop.f32.mrb[0].mxu0
        %v2358 = vadd.f32 %v1925, %v2357
        %v2359 = vpop.f32.mrb[0].mxu0
        %v2360 = vadd.f32 %v1927, %v2359
        %2361 = vmatprep.mubr.bf16.mxu0 %v1211
        %2362 = vmatmul.mubr.bf16.gmra.mrb[0].mxu0 %v1210
        %v2363 = vpop.f32.mrb[0].mxu0
        %v2364 = vadd.f32 %v1931, %v2363
        %v2365 = vpop.f32.mrb[0].mxu0
        %v2366 = vadd.f32 %v1933, %v2365
        %v2367 = vpop.f32.mrb[0].mxu0
        %v2368 = vadd.f32 %v1935, %v2367
        %v2369 = vpop.f32.mrb[0].mxu0
        %v2370 = vadd.f32 %v1937, %v2369
        %2371 = vdwg.mxu0
        %2372 = vmatprep.subr.bf16.mxu0 %v2116
        %2373 = vmatpush1.bf16.msra.mxu0 %v2115
        %2374 = vmatprep.subr.bf16.mxu0 %v2118
        %2375 = vmatpush1.bf16.msra.mxu0 %v2117
        %2376 = vmatprep.subr.bf16.mxu0 %v2120
        %2377 = vmatpush1.bf16.msra.mxu0 %v2119
        %2378 = vmatprep.subr.bf16.mxu0 %v2122
        %2379 = vmatpush1.bf16.msra.mxu0 %v2121
        %2380 = vmatprep.subr.bf16.mxu0 %v2124
        %2381 = vmatpush1.bf16.msra.mxu0 %v2123
        %2382 = vmatprep.subr.bf16.mxu0 %v2126
        %2383 = vmatpush1.bf16.msra.mxu0 %v2125
        %2384 = vmatprep.subr.bf16.mxu0 %v2128
        %2385 = vmatpush1.bf16.msra.mxu0 %v2127
        %2386 = vmatprep.subr.bf16.mxu0 %v2130
        %2387 = vmatpush1.bf16.msra.mxu0 %v2129
        %2388 = vmatprep.subr.bf16.mxu0 0
        %2389 = vmatpush1.bf16.msra.mxu0 0
        %2390 = vmatprep.subr.bf16.mxu0 0
        %2391 = vmatpush1.bf16.msra.mxu0 0
        %2392 = vmatprep.subr.bf16.mxu0 0
        %2393 = vmatpush1.bf16.msra.mxu0 0
        %2394 = vmatprep.subr.bf16.mxu0 0
        %2395 = vmatpush1.bf16.msra.mxu0 0
        %2396 = vmatprep.subr.bf16.mxu0 0
        %2397 = vmatpush1.bf16.msra.mxu0 0
        %2398 = vmatprep.subr.bf16.mxu0 0
        %2399 = vmatpush1.bf16.msra.mxu0 0
        %2400 = vmatprep.subr.bf16.mxu0 0
        %2401 = vmatpush1.bf16.msra.mxu0 0
        %2402 = vmatprep.subr.bf16.mxu0 0
        %2403 = vmatpush1.bf16.msra.mxu0 0
        %2404 = vmatprep.mubr.bf16.mxu0 0
        %2405 = vmatmul.mubr.bf16.gmra.mrb[0].mxu0 %v1167
        %v2406 = vpop.f32.mrb[0].mxu0
        %v2407 = vadd.f32 %v2214, %v2406
        %v2408 = vpop.f32.mrb[0].mxu0
        %v2409 = vadd.f32 %v2216, %v2408
        %v2410 = vpop.f32.mrb[0].mxu0
        %v2411 = vadd.f32 %v2218, %v2410
        %v2412 = vpop.f32.mrb[0].mxu0
        %v2413 = vadd.f32 %v2220, %v2412
        %2414 = vmatprep.mubr.bf16.mxu0 0
        %2415 = vmatmul.mubr.bf16.gmra.mrb[0].mxu0 %v1170
        %v2416 = vpop.f32.mrb[0].mxu0
        %v2417 = vadd.f32 %v2224, %v2416
        %v2418 = vpop.f32.mrb[0].mxu0
        %v2419 = vadd.f32 %v2226, %v2418
        %v2420 = vpop.f32.mrb[0].mxu0
        %v2421 = vadd.f32 %v2228, %v2420
        %v2422 = vpop.f32.mrb[0].mxu0
        %v2423 = vadd.f32 %v2230, %v2422
        %2424 = vmatprep.mubr.bf16.mxu0 0
        %2425 = vmatmul.mubr.bf16.gmra.mrb[0].mxu0 %v1173
        %v2426 = vpop.f32.mrb[0].mxu0
        %v2427 = vadd.f32 %v2234, %v2426
        %v2428 = vpop.f32.mrb[0].mxu0
        %v2429 = vadd.f32 %v2236, %v2428
        %v2430 = vpop.f32.mrb[0].mxu0
        %v2431 = vadd.f32 %v2238, %v2430
        %v2432 = vpop.f32.mrb[0].mxu0
        %v2433 = vadd.f32 %v2240, %v2432
        %2434 = vmatprep.mubr.bf16.mxu0 0
        %2435 = vmatmul.mubr.bf16.gmra.mrb[0].mxu0 %v1176
        %v2436 = vpop.f32.mrb[0].mxu0
        %v2437 = vadd.f32 %v2244, %v2436
        %v2438 = vpop.f32.mrb[0].mxu0
        %v2439 = vadd.f32 %v2246, %v2438
        %v2440 = vpop.f32.mrb[0].mxu0
        %v2441 = vadd.f32 %v2248, %v2440
        %v2442 = vpop.f32.mrb[0].mxu0
        %v2443 = vadd.f32 %v2250, %v2442
        %2444 = vmatprep.mubr.bf16.mxu0 0
        %2445 = vmatmul.mubr.bf16.gmra.mrb[0].mxu0 %v1179
        %v2446 = vpop.f32.mrb[0].mxu0
        %v2447 = vadd.f32 %v2254, %v2446
        %v2448 = vpop.f32.mrb[0].mxu0
        %v2449 = vadd.f32 %v2256, %v2448
        %v2450 = vpop.f32.mrb[0].mxu0
        %v2451 = vadd.f32 %v2258, %v2450
        %v2452 = vpop.f32.mrb[0].mxu0
        %v2453 = vadd.f32 %v2260, %v2452
        %2454 = vmatprep.mubr.bf16.mxu0 0
        %2455 = vmatmul.mubr.bf16.gmra.mrb[0].mxu0 %v1182
        %v2456 = vpop.f32.mrb[0].mxu0
        %v2457 = vadd.f32 %v2264, %v2456
        %v2458 = vpop.f32.mrb[0].mxu0
        %v2459 = vadd.f32 %v2266, %v2458
        %v2460 = vpop.f32.mrb[0].mxu0
        %v2461 = vadd.f32 %v2268, %v2460
        %v2462 = vpop.f32.mrb[0].mxu0
        %v2463 = vadd.f32 %v2270, %v2462
        %2464 = vmatprep.mubr.bf16.mxu0 0
        %2465 = vmatmul.mubr.bf16.gmra.mrb[0].mxu0 %v1185
        %v2466 = vpop.f32.mrb[0].mxu0
        %v2467 = vadd.f32 %v2274, %v2466
        %v2468 = vpop.f32.mrb[0].mxu0
        %v2469 = vadd.f32 %v2276, %v2468
        %v2470 = vpop.f32.mrb[0].mxu0
        %v2471 = vadd.f32 %v2278, %v2470
        %v2472 = vpop.f32.mrb[0].mxu0
        %v2473 = vadd.f32 %v2280, %v2472
        %2474 = vmatprep.mubr.bf16.mxu0 0
        %2475 = vmatmul.mubr.bf16.gmra.mrb[0].mxu0 %v1188
        %v2476 = vpop.f32.mrb[0].mxu0
        %v2477 = vadd.f32 %v2284, %v2476
        %v2478 = vpop.f32.mrb[0].mxu0
        %v2479 = vadd.f32 %v2286, %v2478
        %v2480 = vpop.f32.mrb[0].mxu0
        %v2481 = vadd.f32 %v2288, %v2480
        %v2482 = vpop.f32.mrb[0].mxu0
        %v2483 = vadd.f32 %v2290, %v2482
        %2484 = vmatprep.mubr.bf16.mxu0 0
        %2485 = vmatmul.mubr.bf16.gmra.mrb[0].mxu0 %v1191
        %v2486 = vpop.f32.mrb[0].mxu0
        %v2487 = vadd.f32 %v2294, %v2486
        %v2488 = vpop.f32.mrb[0].mxu0
        %v2489 = vadd.f32 %v2296, %v2488
        %v2490 = vpop.f32.mrb[0].mxu0
        %v2491 = vadd.f32 %v2298, %v2490
        %v2492 = vpop.f32.mrb[0].mxu0
        %v2493 = vadd.f32 %v2300, %v2492
        %2494 = vmatprep.mubr.bf16.mxu0 0
        %2495 = vmatmul.mubr.bf16.gmra.mrb[0].mxu0 %v1194
        %v2496 = vpop.f32.mrb[0].mxu0
        %v2497 = vadd.f32 %v2304, %v2496
        %v2498 = vpop.f32.mrb[0].mxu0
        %v2499 = vadd.f32 %v2306, %v2498
        %v2500 = vpop.f32.mrb[0].mxu0
        %v2501 = vadd.f32 %v2308, %v2500
        %v2502 = vpop.f32.mrb[0].mxu0
        %v2503 = vadd.f32 %v2310, %v2502
        %2504 = vmatprep.mubr.bf16.mxu0 0
        %2505 = vmatmul.mubr.bf16.gmra.mrb[0].mxu0 %v1197
        %v2506 = vpop.f32.mrb[0].mxu0
        %v2507 = vadd.f32 %v2314, %v2506
        %v2508 = vpop.f32.mrb[0].mxu0
        %v2509 = vadd.f32 %v2316, %v2508
        %v2510 = vpop.f32.mrb[0].mxu0
        %v2511 = vadd.f32 %v2318, %v2510
        %v2512 = vpop.f32.mrb[0].mxu0
        %v2513 = vadd.f32 %v2320, %v2512
        %2514 = vmatprep.mubr.bf16.mxu0 0
        %2515 = vmatmul.mubr.bf16.gmra.mrb[0].mxu0 %v1200
        %v2516 = vpop.f32.mrb[0].mxu0
        %v2517 = vadd.f32 %v2324, %v2516
        %v2518 = vpop.f32.mrb[0].mxu0
        %v2519 = vadd.f32 %v2326, %v2518
        %v2520 = vpop.f32.mrb[0].mxu0
        %v2521 = vadd.f32 %v2328, %v2520
        %v2522 = vpop.f32.mrb[0].mxu0
        %v2523 = vadd.f32 %v2330, %v2522
        %2524 = vmatprep.mubr.bf16.mxu0 0
        %2525 = vmatmul.mubr.bf16.gmra.mrb[0].mxu0 %v1203
        %v2526 = vpop.f32.mrb[0].mxu0
        %v2527 = vadd.f32 %v2334, %v2526
        %v2528 = vpop.f32.mrb[0].mxu0
        %v2529 = vadd.f32 %v2336, %v2528
        %v2530 = vpop.f32.mrb[0].mxu0
        %v2531 = vadd.f32 %v2338, %v2530
        %v2532 = vpop.f32.mrb[0].mxu0
        %v2533 = vadd.f32 %v2340, %v2532
        %2534 = vmatprep.mubr.bf16.mxu0 0
        %2535 = vmatmul.mubr.bf16.gmra.mrb[0].mxu0 %v1206
        %v2536 = vpop.f32.mrb[0].mxu0
        %v2537 = vadd.f32 %v2344, %v2536
        %v2538 = vpop.f32.mrb[0].mxu0
        %v2539 = vadd.f32 %v2346, %v2538
        %v2540 = vpop.f32.mrb[0].mxu0
        %v2541 = vadd.f32 %v2348, %v2540
        %v2542 = vpop.f32.mrb[0].mxu0
        %v2543 = vadd.f32 %v2350, %v2542
        %2544 = vmatprep.mubr.bf16.mxu0 0
        %2545 = vmatmul.mubr.bf16.gmra.mrb[0].mxu0 %v1209
        %v2546 = vpop.f32.mrb[0].mxu0
        %v2547 = vadd.f32 %v2354, %v2546
        %v2548 = vpop.f32.mrb[0].mxu0
        %v2549 = vadd.f32 %v2356, %v2548
        %v2550 = vpop.f32.mrb[0].mxu0
        %v2551 = vadd.f32 %v2358, %v2550
        %v2552 = vpop.f32.mrb[0].mxu0
        %v2553 = vadd.f32 %v2360, %v2552
        %2554 = vmatprep.mubr.bf16.mxu0 0
        %2555 = vmatmul.mubr.bf16.gmra.mrb[0].mxu0 %v1212
        %v2556 = vpop.f32.mrb[0].mxu0
        %v2557 = vadd.f32 %v2364, %v2556
        %v2558 = vpop.f32.mrb[0].mxu0
        %v2559 = vadd.f32 %v2366, %v2558
        %v2560 = vpop.f32.mrb[0].mxu0
        %v2561 = vadd.f32 %v2368, %v2560
        %v2562 = vpop.f32.mrb[0].mxu0
        %v2563 = vadd.f32 %v2370, %v2562
        %2564 = vdwg.mxu0
        %v2565 = vld [vmem:[#allocation2 + $0x30] sm:$0xff]
        %v2566 = vld [vmem:[#allocation2 + $0x38] sm:$0xff]
        %v2567 = vld [vmem:[#allocation2 + $0x40] sm:$0xff]
        %v2568 = vld [vmem:[#allocation2 + $0x48] sm:$0xff]
        %v2569 = vld [vmem:[#allocation2 + $0x50] sm:$0xff]
        %v2570 = vld [vmem:[#allocation2 + $0x58] sm:$0xff]
        %v2571 = vld [vmem:[#allocation2 + $0x60] sm:$0xff]
        %v2572 = vld [vmem:[#allocation2 + $0x68] sm:$0xff]
        %v2573 = vld [vmem:[#allocation2 + $0x70] sm:$0xff]
        %v2574 = vld [vmem:[#allocation2 + $0x78] sm:$0xff]
        %v2575 = vld [vmem:[#allocation2 + $0x80] sm:$0xff]
        %v2576 = vld [vmem:[#allocation2 + $0x88] sm:$0xff]
        %v2577 = vld [vmem:[#allocation2 + $0x90] sm:$0xff]
        %v2578 = vld [vmem:[#allocation2 + $0x98] sm:$0xff]
        %v2579 = vld [vmem:[#allocation2 + $0xa0] sm:$0xff]
        %v2580 = vld [vmem:[#allocation2 + $0xa8] sm:$0xff]
        %v2581 = vld [vmem:[#allocation2 + $0xb0] sm:$0xff]
        %v2582 = vld [vmem:[#allocation2 + $0xb8] sm:$0xff]
        %v2583 = vld [vmem:[#allocation2 + $0xc0] sm:$0xff]
        %v2584 = vld [vmem:[#allocation2 + $0xc8] sm:$0xff]
        %v2585 = vld [vmem:[#allocation2 + $0xd0] sm:$0xff]
        %v2586 = vld [vmem:[#allocation2 + $0xd8] sm:$0xff]
        %v2587 = vld [vmem:[#allocation2 + $0xe0] sm:$0xff]
        %v2588 = vld [vmem:[#allocation2 + $0xe8] sm:$0xff]
        %v2589 = vld [vmem:[#allocation2 + $0xf0] sm:$0xff]
        %v2590 = vld [vmem:[#allocation2 + $0xf8] sm:$0xff]
        %v2591 = vld [vmem:[#allocation2 + $0x100] sm:$0xff]
        %v2592 = vld [vmem:[#allocation2 + $0x108] sm:$0xff]
        %v2593 = vld [vmem:[#allocation2 + $0x110] sm:$0xff]
        %v2594 = vld [vmem:[#allocation2 + $0x118] sm:$0xff]
        %v2595 = vld [vmem:[#allocation2 + $0x120] sm:$0xff]
        %v2596 = vld [vmem:[#allocation2 + $0x128] sm:$0xff]
        %v2597 = vld [vmem:[#allocation2 + $0x130] sm:$0xff]
        %v2598 = vld [vmem:[#allocation2 + $0x138] sm:$0xff]
        %v2599 = vld [vmem:[#allocation2 + $0x140] sm:$0xff]
        %v2600 = vld [vmem:[#allocation2 + $0x148] sm:$0xff]
        %v2601 = vld [vmem:[#allocation2 + $0x150] sm:$0xff]
        %v2602 = vld [vmem:[#allocation2 + $0x158] sm:$0xff]
        %v2603 = vld [vmem:[#allocation2 + $0x160] sm:$0xff]
        %v2604 = vld [vmem:[#allocation2 + $0x168] sm:$0xff]
        %v2605 = vld [vmem:[#allocation2 + $0x170] sm:$0xff]
        %v2606 = vld [vmem:[#allocation2 + $0x178] sm:$0xff]
        %v2607 = vld [vmem:[#allocation2 + $0x180] sm:$0xff]
        %v2608 = vld [vmem:[#allocation2 + $0x188] sm:$0xff]
        %v2609 = vld [vmem:[#allocation2 + $0x190] sm:$0xff]
        %v2610 = vld [vmem:[#allocation2 + $0x198] sm:$0xff]
        %v2611 = vld [vmem:[#allocation2 + $0x1a0] sm:$0xff]
        %v2612 = vld [vmem:[#allocation2 + $0x1a8] sm:$0xff]
        %s2613 = scalar_lea.vmem %s2, 768
        %v2614 = vld [vmem:[%s2613] sm:$0xff]
        %v2615 = vld [vmem:[%s2613 + $0x8] sm:$0xff]
        %v2616 = vld [vmem:[%s2613 + $0x10] sm:$0xff]
        %v2617 = vld [vmem:[%s2613 + $0x18] sm:$0xff]
        %v2618 = vld [vmem:[%s2613 + $0x20] sm:$0xff]
        %v2619 = vld [vmem:[%s2613 + $0x28] sm:$0xff]
        %v2620 = vld [vmem:[%s2613 + $0x30] sm:$0xff]
        %v2621 = vld [vmem:[%s2613 + $0x38] sm:$0xff]
        %v2622 = vld [vmem:[%s2613 + $0x40] sm:$0xff]
        %v2623 = vld [vmem:[%s2613 + $0x48] sm:$0xff]
        %v2624 = vld [vmem:[%s2613 + $0x50] sm:$0xff]
        %v2625 = vld [vmem:[%s2613 + $0x58] sm:$0xff]
        %v2626 = vld [vmem:[%s2613 + $0x60] sm:$0xff]
        %v2627 = vld [vmem:[%s2613 + $0x68] sm:$0xff]
        %v2628 = vld [vmem:[%s2613 + $0x70] sm:$0xff]
        %v2629 = vld [vmem:[%s2613 + $0x78] sm:$0xff]
        %v2630 = vld [vmem:[%s2613 + $0x80] sm:$0xff]
        %v2631 = vld [vmem:[%s2613 + $0x88] sm:$0xff]
        %v2632 = vld [vmem:[%s2613 + $0x90] sm:$0xff]
        %v2633 = vld [vmem:[%s2613 + $0x98] sm:$0xff]
        %v2634 = vld [vmem:[%s2613 + $0xa0] sm:$0xff]
        %v2635 = vld [vmem:[%s2613 + $0xa8] sm:$0xff]
        %v2636 = vld [vmem:[%s2613 + $0xb0] sm:$0xff]
        %v2637 = vld [vmem:[%s2613 + $0xb8] sm:$0xff]
        %v2638 = vld [vmem:[%s2613 + $0xc0] sm:$0xff]
        %v2639 = vld [vmem:[%s2613 + $0xc8] sm:$0xff]
        %v2640 = vld [vmem:[%s2613 + $0xd0] sm:$0xff]
        %v2641 = vld [vmem:[%s2613 + $0xd8] sm:$0xff]
        %v2642 = vld [vmem:[%s2613 + $0xe0] sm:$0xff]
        %v2643 = vld [vmem:[%s2613 + $0xe8] sm:$0xff]
        %v2644 = vld [vmem:[%s2613 + $0xf0] sm:$0xff]
        %v2645 = vld [vmem:[%s2613 + $0xf8] sm:$0xff]
        %v2646 = vld [vmem:[%s2613 + $0x100] sm:$0xff]
        %v2647 = vld [vmem:[%s2613 + $0x108] sm:$0xff]
        %v2648 = vld [vmem:[%s2613 + $0x110] sm:$0xff]
        %v2649 = vld [vmem:[%s2613 + $0x118] sm:$0xff]
        %v2650 = vld [vmem:[%s2613 + $0x120] sm:$0xff]
        %v2651 = vld [vmem:[%s2613 + $0x128] sm:$0xff]
        %v2652 = vld [vmem:[%s2613 + $0x130] sm:$0xff]
        %v2653 = vld [vmem:[%s2613 + $0x138] sm:$0xff]
        %v2654 = vld [vmem:[%s2613 + $0x140] sm:$0xff]
        %v2655 = vld [vmem:[%s2613 + $0x148] sm:$0xff]
        %v2656 = vld [vmem:[%s2613 + $0x150] sm:$0xff]
        %v2657 = vld [vmem:[%s2613 + $0x158] sm:$0xff]
        %v2658 = vld [vmem:[%s2613 + $0x160] sm:$0xff]
        %v2659 = vld [vmem:[%s2613 + $0x168] sm:$0xff]
        %v2660 = vld [vmem:[%s2613 + $0x170] sm:$0xff]
        %v2661 = vld [vmem:[%s2613 + $0x178] sm:$0xff]
        %v2710 = vunpack.c.l.b16 %v2614
        %v2711 = vunpack.c.h.b16 %v2614
        %v2712 = vunpack.c.l.b16 %v2615
        %v2713 = vunpack.c.h.b16 %v2615
        %v2714 = vunpack.c.l.b16 %v2616
        %v2715 = vunpack.c.h.b16 %v2616
        %v2716 = vunpack.c.l.b16 %v2617
        %v2717 = vunpack.c.h.b16 %v2617
        %v2718 = vunpack.c.l.b16 %v2618
        %v2719 = vunpack.c.h.b16 %v2618
        %v2720 = vunpack.c.l.b16 %v2619
        %v2721 = vunpack.c.h.b16 %v2619
        %v2722 = vunpack.c.l.b16 %v2620
        %v2723 = vunpack.c.h.b16 %v2620
        %v2724 = vunpack.c.l.b16 %v2621
        %v2725 = vunpack.c.h.b16 %v2621
        %v2726 = vunpack.c.l.b16 %v2622
        %v2727 = vunpack.c.h.b16 %v2622
        %v2728 = vunpack.c.l.b16 %v2623
        %v2729 = vunpack.c.h.b16 %v2623
        %v2730 = vunpack.c.l.b16 %v2624
        %v2731 = vunpack.c.h.b16 %v2624
        %v2732 = vunpack.c.l.b16 %v2625
        %v2733 = vunpack.c.h.b16 %v2625
        %v2734 = vunpack.c.l.b16 %v2626
        %v2735 = vunpack.c.h.b16 %v2626
        %v2736 = vunpack.c.l.b16 %v2627
        %v2737 = vunpack.c.h.b16 %v2627
        %v2738 = vunpack.c.l.b16 %v2628
        %v2739 = vunpack.c.h.b16 %v2628
        %v2740 = vunpack.c.l.b16 %v2629
        %v2741 = vunpack.c.h.b16 %v2629
        %v2742 = vunpack.c.l.b16 %v2630
        %v2743 = vunpack.c.h.b16 %v2630
        %v2744 = vunpack.c.l.b16 %v2631
        %v2745 = vunpack.c.h.b16 %v2631
        %v2746 = vunpack.c.l.b16 %v2632
        %v2747 = vunpack.c.h.b16 %v2632
        %v2748 = vunpack.c.l.b16 %v2633
        %v2749 = vunpack.c.h.b16 %v2633
        %v2750 = vunpack.c.l.b16 %v2634
        %v2751 = vunpack.c.h.b16 %v2634
        %v2752 = vunpack.c.l.b16 %v2635
        %v2753 = vunpack.c.h.b16 %v2635
        %v2754 = vunpack.c.l.b16 %v2636
        %v2755 = vunpack.c.h.b16 %v2636
        %v2756 = vunpack.c.l.b16 %v2637
        %v2757 = vunpack.c.h.b16 %v2637
        %v2758 = vunpack.c.l.b16 %v2638
        %v2759 = vunpack.c.h.b16 %v2638
        %v2760 = vunpack.c.l.b16 %v2639
        %v2761 = vunpack.c.h.b16 %v2639
        %v2762 = vunpack.c.l.b16 %v2640
        %v2763 = vunpack.c.h.b16 %v2640
        %v2764 = vunpack.c.l.b16 %v2641
        %v2765 = vunpack.c.h.b16 %v2641
        %v2766 = vunpack.c.l.b16 %v2642
        %v2767 = vunpack.c.h.b16 %v2642
        %v2768 = vunpack.c.l.b16 %v2643
        %v2769 = vunpack.c.h.b16 %v2643
        %v2770 = vunpack.c.l.b16 %v2644
        %v2771 = vunpack.c.h.b16 %v2644
        %v2772 = vunpack.c.l.b16 %v2645
        %v2773 = vunpack.c.h.b16 %v2645
        %v2774 = vunpack.c.l.b16 %v2646
        %v2775 = vunpack.c.h.b16 %v2646
        %v2776 = vunpack.c.l.b16 %v2647
        %v2777 = vunpack.c.h.b16 %v2647
        %v2778 = vunpack.c.l.b16 %v2648
        %v2779 = vunpack.c.h.b16 %v2648
        %v2780 = vunpack.c.l.b16 %v2649
        %v2781 = vunpack.c.h.b16 %v2649
        %v2782 = vunpack.c.l.b16 %v2650
        %v2783 = vunpack.c.h.b16 %v2650
        %v2784 = vunpack.c.l.b16 %v2651
        %v2785 = vunpack.c.h.b16 %v2651
        %v2786 = vunpack.c.l.b16 %v2652
        %v2787 = vunpack.c.h.b16 %v2652
        %v2788 = vunpack.c.l.b16 %v2653
        %v2789 = vunpack.c.h.b16 %v2653
        %v2790 = vunpack.c.l.b16 %v2654
        %v2791 = vunpack.c.h.b16 %v2654
        %v2792 = vunpack.c.l.b16 %v2655
        %v2793 = vunpack.c.h.b16 %v2655
        %v2794 = vunpack.c.l.b16 %v2656
        %v2795 = vunpack.c.h.b16 %v2656
        %v2796 = vunpack.c.l.b16 %v2657
        %v2797 = vunpack.c.h.b16 %v2657
        %v2798 = vunpack.c.l.b16 %v2658
        %v2799 = vunpack.c.h.b16 %v2658
        %v2800 = vunpack.c.l.b16 %v2659
        %v2801 = vunpack.c.h.b16 %v2659
        %v2802 = vunpack.c.l.b16 %v2660
        %v2803 = vunpack.c.h.b16 %v2660
        %v2804 = vunpack.c.l.b16 %v2661
        %v2805 = vunpack.c.h.b16 %v2661
        %v2806 = vpack.c.b16 %v2712, %v2710
        %v2807 = vpack.c.b16 %v2713, %v2711
        %v2808 = vpack.c.b16 %v2716, %v2714
        %v2809 = vpack.c.b16 %v2717, %v2715
        %v2810 = vpack.c.b16 %v2720, %v2718
        %v2811 = vpack.c.b16 %v2721, %v2719
        %v2812 = vpack.c.b16 %v2724, %v2722
        %v2813 = vpack.c.b16 %v2725, %v2723
        %v2814 = vpack.c.b16 %v2728, %v2726
        %v2815 = vpack.c.b16 %v2729, %v2727
        %v2816 = vpack.c.b16 %v2732, %v2730
        %v2817 = vpack.c.b16 %v2733, %v2731
        %v2818 = vpack.c.b16 %v2736, %v2734
        %v2819 = vpack.c.b16 %v2737, %v2735
        %v2820 = vpack.c.b16 %v2740, %v2738
        %v2821 = vpack.c.b16 %v2741, %v2739
        %v2822 = vpack.c.b16 %v2744, %v2742
        %v2823 = vpack.c.b16 %v2745, %v2743
        %v2824 = vpack.c.b16 %v2748, %v2746
        %v2825 = vpack.c.b16 %v2749, %v2747
        %v2826 = vpack.c.b16 %v2752, %v2750
        %v2827 = vpack.c.b16 %v2753, %v2751
        %v2828 = vpack.c.b16 %v2756, %v2754
        %v2829 = vpack.c.b16 %v2757, %v2755
        %v2830 = vpack.c.b16 %v2760, %v2758
        %v2831 = vpack.c.b16 %v2761, %v2759
        %v2832 = vpack.c.b16 %v2764, %v2762
        %v2833 = vpack.c.b16 %v2765, %v2763
        %v2834 = vpack.c.b16 %v2768, %v2766
        %v2835 = vpack.c.b16 %v2769, %v2767
        %v2836 = vpack.c.b16 %v2772, %v2770
        %v2837 = vpack.c.b16 %v2773, %v2771
        %v2838 = vpack.c.b16 %v2776, %v2774
        %v2839 = vpack.c.b16 %v2777, %v2775
        %v2840 = vpack.c.b16 %v2780, %v2778
        %v2841 = vpack.c.b16 %v2781, %v2779
        %v2842 = vpack.c.b16 %v2784, %v2782
        %v2843 = vpack.c.b16 %v2785, %v2783
        %v2844 = vpack.c.b16 %v2788, %v2786
        %v2845 = vpack.c.b16 %v2789, %v2787
        %v2846 = vpack.c.b16 %v2792, %v2790
        %v2847 = vpack.c.b16 %v2793, %v2791
        %v2848 = vpack.c.b16 %v2796, %v2794
        %v2849 = vpack.c.b16 %v2797, %v2795
        %v2850 = vpack.c.b16 %v2800, %v2798
        %v2851 = vpack.c.b16 %v2801, %v2799
        %v2852 = vpack.c.b16 %v2804, %v2802
        %v2853 = vpack.c.b16 %v2805, %v2803
        %2902 = vmatprep.subr.bf16.mxu0 %v2807
        %2903 = vmatpush1.bf16.msra.mxu0 %v2806
        %2904 = vmatprep.subr.bf16.mxu0 %v2809
        %2905 = vmatpush1.bf16.msra.mxu0 %v2808
        %2906 = vmatprep.subr.bf16.mxu0 %v2811
        %2907 = vmatpush1.bf16.msra.mxu0 %v2810
        %2908 = vmatprep.subr.bf16.mxu0 %v2813
        %2909 = vmatpush1.bf16.msra.mxu0 %v2812
        %2910 = vmatprep.subr.bf16.mxu0 %v2815
        %2911 = vmatpush1.bf16.msra.mxu0 %v2814
        %2912 = vmatprep.subr.bf16.mxu0 %v2817
        %2913 = vmatpush1.bf16.msra.mxu0 %v2816
        %2914 = vmatprep.subr.bf16.mxu0 %v2819
        %2915 = vmatpush1.bf16.msra.mxu0 %v2818
        %2916 = vmatprep.subr.bf16.mxu0 %v2821
        %2917 = vmatpush1.bf16.msra.mxu0 %v2820
        %2918 = vmatprep.subr.bf16.mxu0 %v2823
        %2919 = vmatpush1.bf16.msra.mxu0 %v2822
        %2920 = vmatprep.subr.bf16.mxu0 %v2825
        %2921 = vmatpush1.bf16.msra.mxu0 %v2824
        %2922 = vmatprep.subr.bf16.mxu0 %v2827
        %2923 = vmatpush1.bf16.msra.mxu0 %v2826
        %2924 = vmatprep.subr.bf16.mxu0 %v2829
        %2925 = vmatpush1.bf16.msra.mxu0 %v2828
        %2926 = vmatprep.subr.bf16.mxu0 %v2831
        %2927 = vmatpush1.bf16.msra.mxu0 %v2830
        %2928 = vmatprep.subr.bf16.mxu0 %v2833
        %2929 = vmatpush1.bf16.msra.mxu0 %v2832
        %2930 = vmatprep.subr.bf16.mxu0 %v2835
        %2931 = vmatpush1.bf16.msra.mxu0 %v2834
        %2932 = vmatprep.subr.bf16.mxu0 %v2837
        %2933 = vmatpush1.bf16.msra.mxu0 %v2836
        %2934 = vmatprep.mubr.bf16.mxu0 %v2566
        %2935 = vmatmul.mubr.bf16.gmra.mrb[0].mxu0 %v2565
        %v2936 = vpop.f32.mrb[0].mxu0
        %v2937 = vadd.f32 0.0, %v2936
        %v2938 = vpop.f32.mrb[0].mxu0
        %v2939 = vadd.f32 0.0, %v2938
        %v2940 = vpop.f32.mrb[0].mxu0
        %v2941 = vadd.f32 0.0, %v2940
        %v2942 = vpop.f32.mrb[0].mxu0
        %v2943 = vadd.f32 0.0, %v2942
        %2944 = vmatprep.mubr.bf16.mxu0 %v2569
        %2945 = vmatmul.mubr.bf16.gmra.mrb[0].mxu0 %v2568
        %v2946 = vpop.f32.mrb[0].mxu0
        %v2947 = vadd.f32 0.0, %v2946
        %v2948 = vpop.f32.mrb[0].mxu0
        %v2949 = vadd.f32 0.0, %v2948
        %v2950 = vpop.f32.mrb[0].mxu0
        %v2951 = vadd.f32 0.0, %v2950
        %v2952 = vpop.f32.mrb[0].mxu0
        %v2953 = vadd.f32 0.0, %v2952
        %2954 = vmatprep.mubr.bf16.mxu0 %v2572
        %2955 = vmatmul.mubr.bf16.gmra.mrb[0].mxu0 %v2571
        %v2956 = vpop.f32.mrb[0].mxu0
        %v2957 = vadd.f32 0.0, %v2956
        %v2958 = vpop.f32.mrb[0].mxu0
        %v2959 = vadd.f32 0.0, %v2958
        %v2960 = vpop.f32.mrb[0].mxu0
        %v2961 = vadd.f32 0.0, %v2960
        %v2962 = vpop.f32.mrb[0].mxu0
        %v2963 = vadd.f32 0.0, %v2962
        %2964 = vmatprep.mubr.bf16.mxu0 %v2575
        %2965 = vmatmul.mubr.bf16.gmra.mrb[0].mxu0 %v2574
        %v2966 = vpop.f32.mrb[0].mxu0
        %v2967 = vadd.f32 0.0, %v2966
        %v2968 = vpop.f32.mrb[0].mxu0
        %v2969 = vadd.f32 0.0, %v2968
        %v2970 = vpop.f32.mrb[0].mxu0
        %v2971 = vadd.f32 0.0, %v2970
        %v2972 = vpop.f32.mrb[0].mxu0
        %v2973 = vadd.f32 0.0, %v2972
        %2974 = vmatprep.mubr.bf16.mxu0 %v2578
        %2975 = vmatmul.mubr.bf16.gmra.mrb[0].mxu0 %v2577
        %v2976 = vpop.f32.mrb[0].mxu0
        %v2977 = vadd.f32 0.0, %v2976
        %v2978 = vpop.f32.mrb[0].mxu0
        %v2979 = vadd.f32 0.0, %v2978
        %v2980 = vpop.f32.mrb[0].mxu0
        %v2981 = vadd.f32 0.0, %v2980
        %v2982 = vpop.f32.mrb[0].mxu0
        %v2983 = vadd.f32 0.0, %v2982
        %2984 = vmatprep.mubr.bf16.mxu0 %v2581
        %2985 = vmatmul.mubr.bf16.gmra.mrb[0].mxu0 %v2580
        %v2986 = vpop.f32.mrb[0].mxu0
        %v2987 = vadd.f32 0.0, %v2986
        %v2988 = vpop.f32.mrb[0].mxu0
        %v2989 = vadd.f32 0.0, %v2988
        %v2990 = vpop.f32.mrb[0].mxu0
        %v2991 = vadd.f32 0.0, %v2990
        %v2992 = vpop.f32.mrb[0].mxu0
        %v2993 = vadd.f32 0.0, %v2992
        %2994 = vmatprep.mubr.bf16.mxu0 %v2584
        %2995 = vmatmul.mubr.bf16.gmra.mrb[0].mxu0 %v2583
        %v2996 = vpop.f32.mrb[0].mxu0
        %v2997 = vadd.f32 0.0, %v2996
        %v2998 = vpop.f32.mrb[0].mxu0
        %v2999 = vadd.f32 0.0, %v2998
        %v3000 = vpop.f32.mrb[0].mxu0
        %v3001 = vadd.f32 0.0, %v3000
        %v3002 = vpop.f32.mrb[0].mxu0
        %v3003 = vadd.f32 0.0, %v3002
        %3004 = vmatprep.mubr.bf16.mxu0 %v2587
        %3005 = vmatmul.mubr.bf16.gmra.mrb[0].mxu0 %v2586
        %v3006 = vpop.f32.mrb[0].mxu0
        %v3007 = vadd.f32 0.0, %v3006
        %v3008 = vpop.f32.mrb[0].mxu0
        %v3009 = vadd.f32 0.0, %v3008
        %v3010 = vpop.f32.mrb[0].mxu0
        %v3011 = vadd.f32 0.0, %v3010
        %v3012 = vpop.f32.mrb[0].mxu0
        %v3013 = vadd.f32 0.0, %v3012
        %3014 = vmatprep.mubr.bf16.mxu0 %v2590
        %3015 = vmatmul.mubr.bf16.gmra.mrb[0].mxu0 %v2589
        %v3016 = vpop.f32.mrb[0].mxu0
        %v3017 = vadd.f32 0.0, %v3016
        %v3018 = vpop.f32.mrb[0].mxu0
        %v3019 = vadd.f32 0.0, %v3018
        %v3020 = vpop.f32.mrb[0].mxu0
        %v3021 = vadd.f32 0.0, %v3020
        %v3022 = vpop.f32.mrb[0].mxu0
        %v3023 = vadd.f32 0.0, %v3022
        %3024 = vmatprep.mubr.bf16.mxu0 %v2593
        %3025 = vmatmul.mubr.bf16.gmra.mrb[0].mxu0 %v2592
        %v3026 = vpop.f32.mrb[0].mxu0
        %v3027 = vadd.f32 0.0, %v3026
        %v3028 = vpop.f32.mrb[0].mxu0
        %v3029 = vadd.f32 0.0, %v3028
        %v3030 = vpop.f32.mrb[0].mxu0
        %v3031 = vadd.f32 0.0, %v3030
        %v3032 = vpop.f32.mrb[0].mxu0
        %v3033 = vadd.f32 0.0, %v3032
        %3034 = vmatprep.mubr.bf16.mxu0 %v2596
        %3035 = vmatmul.mubr.bf16.gmra.mrb[0].mxu0 %v2595
        %v3036 = vpop.f32.mrb[0].mxu0
        %v3037 = vadd.f32 0.0, %v3036
        %v3038 = vpop.f32.mrb[0].mxu0
        %v3039 = vadd.f32 0.0, %v3038
        %v3040 = vpop.f32.mrb[0].mxu0
        %v3041 = vadd.f32 0.0, %v3040
        %v3042 = vpop.f32.mrb[0].mxu0
        %v3043 = vadd.f32 0.0, %v3042
        %3044 = vmatprep.mubr.bf16.mxu0 %v2599
        %3045 = vmatmul.mubr.bf16.gmra.mrb[0].mxu0 %v2598
        %v3046 = vpop.f32.mrb[0].mxu0
        %v3047 = vadd.f32 0.0, %v3046
        %v3048 = vpop.f32.mrb[0].mxu0
        %v3049 = vadd.f32 0.0, %v3048
        %v3050 = vpop.f32.mrb[0].mxu0
        %v3051 = vadd.f32 0.0, %v3050
        %v3052 = vpop.f32.mrb[0].mxu0
        %v3053 = vadd.f32 0.0, %v3052
        %3054 = vmatprep.mubr.bf16.mxu0 %v2602
        %3055 = vmatmul.mubr.bf16.gmra.mrb[0].mxu0 %v2601
        %v3056 = vpop.f32.mrb[0].mxu0
        %v3057 = vadd.f32 0.0, %v3056
        %v3058 = vpop.f32.mrb[0].mxu0
        %v3059 = vadd.f32 0.0, %v3058
        %v3060 = vpop.f32.mrb[0].mxu0
        %v3061 = vadd.f32 0.0, %v3060
        %v3062 = vpop.f32.mrb[0].mxu0
        %v3063 = vadd.f32 0.0, %v3062
        %3064 = vmatprep.mubr.bf16.mxu0 %v2605
        %3065 = vmatmul.mubr.bf16.gmra.mrb[0].mxu0 %v2604
        %v3066 = vpop.f32.mrb[0].mxu0
        %v3067 = vadd.f32 0.0, %v3066
        %v3068 = vpop.f32.mrb[0].mxu0
        %v3069 = vadd.f32 0.0, %v3068
        %v3070 = vpop.f32.mrb[0].mxu0
        %v3071 = vadd.f32 0.0, %v3070
        %v3072 = vpop.f32.mrb[0].mxu0
        %v3073 = vadd.f32 0.0, %v3072
        %3074 = vmatprep.mubr.bf16.mxu0 %v2608
        %3075 = vmatmul.mubr.bf16.gmra.mrb[0].mxu0 %v2607
        %v3076 = vpop.f32.mrb[0].mxu0
        %v3077 = vadd.f32 0.0, %v3076
        %v3078 = vpop.f32.mrb[0].mxu0
        %v3079 = vadd.f32 0.0, %v3078
        %v3080 = vpop.f32.mrb[0].mxu0
        %v3081 = vadd.f32 0.0, %v3080
        %v3082 = vpop.f32.mrb[0].mxu0
        %v3083 = vadd.f32 0.0, %v3082
        %3084 = vmatprep.mubr.bf16.mxu0 %v2611
        %3085 = vmatmul.mubr.bf16.gmra.mrb[0].mxu0 %v2610
        %v3086 = vpop.f32.mrb[0].mxu0
        %v3087 = vadd.f32 0.0, %v3086
        %v3088 = vpop.f32.mrb[0].mxu0
        %v3089 = vadd.f32 0.0, %v3088
        %v3090 = vpop.f32.mrb[0].mxu0
        %v3091 = vadd.f32 0.0, %v3090
        %v3092 = vpop.f32.mrb[0].mxu0
        %v3093 = vadd.f32 0.0, %v3092
        %3094 = vdwg.mxu0
        %3095 = vmatprep.subr.bf16.mxu0 %v2839
        %3096 = vmatpush1.bf16.msra.mxu0 %v2838
        %3097 = vmatprep.subr.bf16.mxu0 %v2841
        %3098 = vmatpush1.bf16.msra.mxu0 %v2840
        %3099 = vmatprep.subr.bf16.mxu0 %v2843
        %3100 = vmatpush1.bf16.msra.mxu0 %v2842
        %3101 = vmatprep.subr.bf16.mxu0 %v2845
        %3102 = vmatpush1.bf16.msra.mxu0 %v2844
        %3103 = vmatprep.subr.bf16.mxu0 %v2847
        %3104 = vmatpush1.bf16.msra.mxu0 %v2846
        %3105 = vmatprep.subr.bf16.mxu0 %v2849
        %3106 = vmatpush1.bf16.msra.mxu0 %v2848
        %3107 = vmatprep.subr.bf16.mxu0 %v2851
        %3108 = vmatpush1.bf16.msra.mxu0 %v2850
        %3109 = vmatprep.subr.bf16.mxu0 %v2853
        %3110 = vmatpush1.bf16.msra.mxu0 %v2852
        %3111 = vmatprep.subr.bf16.mxu0 0
        %3112 = vmatpush1.bf16.msra.mxu0 0
        %3113 = vmatprep.subr.bf16.mxu0 0
        %3114 = vmatpush1.bf16.msra.mxu0 0
        %3115 = vmatprep.subr.bf16.mxu0 0
        %3116 = vmatpush1.bf16.msra.mxu0 0
        %3117 = vmatprep.subr.bf16.mxu0 0
        %3118 = vmatpush1.bf16.msra.mxu0 0
        %3119 = vmatprep.subr.bf16.mxu0 0
        %3120 = vmatpush1.bf16.msra.mxu0 0
        %3121 = vmatprep.subr.bf16.mxu0 0
        %3122 = vmatpush1.bf16.msra.mxu0 0
        %3123 = vmatprep.subr.bf16.mxu0 0
        %3124 = vmatpush1.bf16.msra.mxu0 0
        %3125 = vmatprep.subr.bf16.mxu0 0
        %3126 = vmatpush1.bf16.msra.mxu0 0
        %3127 = vmatprep.mubr.bf16.mxu0 0
        %3128 = vmatmul.mubr.bf16.gmra.mrb[0].mxu0 %v2567
        %v3129 = vpop.f32.mrb[0].mxu0
        %v3130 = vadd.f32 %v2937, %v3129
        %v3131 = vpop.f32.mrb[0].mxu0
        %v3132 = vadd.f32 %v2939, %v3131
        %v3133 = vpop.f32.mrb[0].mxu0
        %v3134 = vadd.f32 %v2941, %v3133
        %v3135 = vpop.f32.mrb[0].mxu0
        %v3136 = vadd.f32 %v2943, %v3135
        %3137 = vmatprep.mubr.bf16.mxu0 0
        %3138 = vmatmul.mubr.bf16.gmra.mrb[0].mxu0 %v2570
        %v3139 = vpop.f32.mrb[0].mxu0
        %v3140 = vadd.f32 %v2947, %v3139
        %v3141 = vpop.f32.mrb[0].mxu0
        %v3142 = vadd.f32 %v2949, %v3141
        %v3143 = vpop.f32.mrb[0].mxu0
        %v3144 = vadd.f32 %v2951, %v3143
        %v3145 = vpop.f32.mrb[0].mxu0
        %v3146 = vadd.f32 %v2953, %v3145
        %3147 = vmatprep.mubr.bf16.mxu0 0
        %3148 = vmatmul.mubr.bf16.gmra.mrb[0].mxu0 %v2573
        %v3149 = vpop.f32.mrb[0].mxu0
        %v3150 = vadd.f32 %v2957, %v3149
        %v3151 = vpop.f32.mrb[0].mxu0
        %v3152 = vadd.f32 %v2959, %v3151
        %v3153 = vpop.f32.mrb[0].mxu0
        %v3154 = vadd.f32 %v2961, %v3153
        %v3155 = vpop.f32.mrb[0].mxu0
        %v3156 = vadd.f32 %v2963, %v3155
        %3157 = vmatprep.mubr.bf16.mxu0 0
        %3158 = vmatmul.mubr.bf16.gmra.mrb[0].mxu0 %v2576
        %v3159 = vpop.f32.mrb[0].mxu0
        %v3160 = vadd.f32 %v2967, %v3159
        %v3161 = vpop.f32.mrb[0].mxu0
        %v3162 = vadd.f32 %v2969, %v3161
        %v3163 = vpop.f32.mrb[0].mxu0
        %v3164 = vadd.f32 %v2971, %v3163
        %v3165 = vpop.f32.mrb[0].mxu0
        %v3166 = vadd.f32 %v2973, %v3165
        %3167 = vmatprep.mubr.bf16.mxu0 0
        %3168 = vmatmul.mubr.bf16.gmra.mrb[0].mxu0 %v2579
        %v3169 = vpop.f32.mrb[0].mxu0
        %v3170 = vadd.f32 %v2977, %v3169
        %v3171 = vpop.f32.mrb[0].mxu0
        %v3172 = vadd.f32 %v2979, %v3171
        %v3173 = vpop.f32.mrb[0].mxu0
        %v3174 = vadd.f32 %v2981, %v3173
        %v3175 = vpop.f32.mrb[0].mxu0
        %v3176 = vadd.f32 %v2983, %v3175
        %3177 = vmatprep.mubr.bf16.mxu0 0
        %3178 = vmatmul.mubr.bf16.gmra.mrb[0].mxu0 %v2582
        %v3179 = vpop.f32.mrb[0].mxu0
        %v3180 = vadd.f32 %v2987, %v3179
        %v3181 = vpop.f32.mrb[0].mxu0
        %v3182 = vadd.f32 %v2989, %v3181
        %v3183 = vpop.f32.mrb[0].mxu0
        %v3184 = vadd.f32 %v2991, %v3183
        %v3185 = vpop.f32.mrb[0].mxu0
        %v3186 = vadd.f32 %v2993, %v3185
        %3187 = vmatprep.mubr.bf16.mxu0 0
        %3188 = vmatmul.mubr.bf16.gmra.mrb[0].mxu0 %v2585
        %v3189 = vpop.f32.mrb[0].mxu0
        %v3190 = vadd.f32 %v2997, %v3189
        %v3191 = vpop.f32.mrb[0].mxu0
        %v3192 = vadd.f32 %v2999, %v3191
        %v3193 = vpop.f32.mrb[0].mxu0
        %v3194 = vadd.f32 %v3001, %v3193
        %v3195 = vpop.f32.mrb[0].mxu0
        %v3196 = vadd.f32 %v3003, %v3195
        %3197 = vmatprep.mubr.bf16.mxu0 0
        %3198 = vmatmul.mubr.bf16.gmra.mrb[0].mxu0 %v2588
        %v3199 = vpop.f32.mrb[0].mxu0
        %v3200 = vadd.f32 %v3007, %v3199
        %v3201 = vpop.f32.mrb[0].mxu0
        %v3202 = vadd.f32 %v3009, %v3201
        %v3203 = vpop.f32.mrb[0].mxu0
        %v3204 = vadd.f32 %v3011, %v3203
        %v3205 = vpop.f32.mrb[0].mxu0
        %v3206 = vadd.f32 %v3013, %v3205
        %3207 = vmatprep.mubr.bf16.mxu0 0
        %3208 = vmatmul.mubr.bf16.gmra.mrb[0].mxu0 %v2591
        %v3209 = vpop.f32.mrb[0].mxu0
        %v3210 = vadd.f32 %v3017, %v3209
        %v3211 = vpop.f32.mrb[0].mxu0
        %v3212 = vadd.f32 %v3019, %v3211
        %v3213 = vpop.f32.mrb[0].mxu0
        %v3214 = vadd.f32 %v3021, %v3213
        %v3215 = vpop.f32.mrb[0].mxu0
        %v3216 = vadd.f32 %v3023, %v3215
        %3217 = vmatprep.mubr.bf16.mxu0 0
        %3218 = vmatmul.mubr.bf16.gmra.mrb[0].mxu0 %v2594
        %v3219 = vpop.f32.mrb[0].mxu0
        %v3220 = vadd.f32 %v3027, %v3219
        %v3221 = vpop.f32.mrb[0].mxu0
        %v3222 = vadd.f32 %v3029, %v3221
        %v3223 = vpop.f32.mrb[0].mxu0
        %v3224 = vadd.f32 %v3031, %v3223
        %v3225 = vpop.f32.mrb[0].mxu0
        %v3226 = vadd.f32 %v3033, %v3225
        %3227 = vmatprep.mubr.bf16.mxu0 0
        %3228 = vmatmul.mubr.bf16.gmra.mrb[0].mxu0 %v2597
        %v3229 = vpop.f32.mrb[0].mxu0
        %v3230 = vadd.f32 %v3037, %v3229
        %v3231 = vpop.f32.mrb[0].mxu0
        %v3232 = vadd.f32 %v3039, %v3231
        %v3233 = vpop.f32.mrb[0].mxu0
        %v3234 = vadd.f32 %v3041, %v3233
        %v3235 = vpop.f32.mrb[0].mxu0
        %v3236 = vadd.f32 %v3043, %v3235
        %3237 = vmatprep.mubr.bf16.mxu0 0
        %3238 = vmatmul.mubr.bf16.gmra.mrb[0].mxu0 %v2600
        %v3239 = vpop.f32.mrb[0].mxu0
        %v3240 = vadd.f32 %v3047, %v3239
        %v3241 = vpop.f32.mrb[0].mxu0
        %v3242 = vadd.f32 %v3049, %v3241
        %v3243 = vpop.f32.mrb[0].mxu0
        %v3244 = vadd.f32 %v3051, %v3243
        %v3245 = vpop.f32.mrb[0].mxu0
        %v3246 = vadd.f32 %v3053, %v3245
        %3247 = vmatprep.mubr.bf16.mxu0 0
        %3248 = vmatmul.mubr.bf16.gmra.mrb[0].mxu0 %v2603
        %v3249 = vpop.f32.mrb[0].mxu0
        %v3250 = vadd.f32 %v3057, %v3249
        %v3251 = vpop.f32.mrb[0].mxu0
        %v3252 = vadd.f32 %v3059, %v3251
        %v3253 = vpop.f32.mrb[0].mxu0
        %v3254 = vadd.f32 %v3061, %v3253
        %v3255 = vpop.f32.mrb[0].mxu0
        %v3256 = vadd.f32 %v3063, %v3255
        %3257 = vmatprep.mubr.bf16.mxu0 0
        %3258 = vmatmul.mubr.bf16.gmra.mrb[0].mxu0 %v2606
        %v3259 = vpop.f32.mrb[0].mxu0
        %v3260 = vadd.f32 %v3067, %v3259
        %v3261 = vpop.f32.mrb[0].mxu0
        %v3262 = vadd.f32 %v3069, %v3261
        %v3263 = vpop.f32.mrb[0].mxu0
        %v3264 = vadd.f32 %v3071, %v3263
        %v3265 = vpop.f32.mrb[0].mxu0
        %v3266 = vadd.f32 %v3073, %v3265
        %3267 = vmatprep.mubr.bf16.mxu0 0
        %3268 = vmatmul.mubr.bf16.gmra.mrb[0].mxu0 %v2609
        %v3269 = vpop.f32.mrb[0].mxu0
        %v3270 = vadd.f32 %v3077, %v3269
        %v3271 = vpop.f32.mrb[0].mxu0
        %v3272 = vadd.f32 %v3079, %v3271
        %v3273 = vpop.f32.mrb[0].mxu0
        %v3274 = vadd.f32 %v3081, %v3273
        %v3275 = vpop.f32.mrb[0].mxu0
        %v3276 = vadd.f32 %v3083, %v3275
        %3277 = vmatprep.mubr.bf16.mxu0 0
        %3278 = vmatmul.mubr.bf16.gmra.mrb[0].mxu0 %v2612
        %v3279 = vpop.f32.mrb[0].mxu0
        %v3280 = vadd.f32 %v3087, %v3279
        %v3281 = vpop.f32.mrb[0].mxu0
        %v3282 = vadd.f32 %v3089, %v3281
        %v3283 = vpop.f32.mrb[0].mxu0
        %v3284 = vadd.f32 %v3091, %v3283
        %v3285 = vpop.f32.mrb[0].mxu0
        %v3286 = vadd.f32 %v3093, %v3285
        %3287 = vdwg.mxu0
        %v3288 = vadd.f32 %v2407, %v3130
        %v3289 = vadd.f32 %v2409, %v3132
        %v3290 = vadd.f32 %v2411, %v3134
        %v3291 = vadd.f32 %v2413, %v3136
        %v3292 = vadd.f32 %v2417, %v3140
        %v3293 = vadd.f32 %v2419, %v3142
        %v3294 = vadd.f32 %v2421, %v3144
        %v3295 = vadd.f32 %v2423, %v3146
        %v3296 = vadd.f32 %v2427, %v3150
        %v3297 = vadd.f32 %v2429, %v3152
        %v3298 = vadd.f32 %v2431, %v3154
        %v3299 = vadd.f32 %v2433, %v3156
        %v3300 = vadd.f32 %v2437, %v3160
        %v3301 = vadd.f32 %v2439, %v3162
        %v3302 = vadd.f32 %v2441, %v3164
        %v3303 = vadd.f32 %v2443, %v3166
        %v3304 = vadd.f32 %v2447, %v3170
        %v3305 = vadd.f32 %v2449, %v3172
        %v3306 = vadd.f32 %v2451, %v3174
        %v3307 = vadd.f32 %v2453, %v3176
        %v3308 = vadd.f32 %v2457, %v3180
        %v3309 = vadd.f32 %v2459, %v3182
        %v3310 = vadd.f32 %v2461, %v3184
        %v3311 = vadd.f32 %v2463, %v3186
        %v3312 = vadd.f32 %v2467, %v3190
        %v3313 = vadd.f32 %v2469, %v3192
        %v3314 = vadd.f32 %v2471, %v3194
        %v3315 = vadd.f32 %v2473, %v3196
        %v3316 = vadd.f32 %v2477, %v3200
        %v3317 = vadd.f32 %v2479, %v3202
        %v3318 = vadd.f32 %v2481, %v3204
        %v3319 = vadd.f32 %v2483, %v3206
        %v3320 = vadd.f32 %v2487, %v3210
        %v3321 = vadd.f32 %v2489, %v3212
        %v3322 = vadd.f32 %v2491, %v3214
        %v3323 = vadd.f32 %v2493, %v3216
        %v3324 = vadd.f32 %v2497, %v3220
        %v3325 = vadd.f32 %v2499, %v3222
        %v3326 = vadd.f32 %v2501, %v3224
        %v3327 = vadd.f32 %v2503, %v3226
        %v3328 = vadd.f32 %v2507, %v3230
        %v3329 = vadd.f32 %v2509, %v3232
        %v3330 = vadd.f32 %v2511, %v3234
        %v3331 = vadd.f32 %v2513, %v3236
        %v3332 = vadd.f32 %v2517, %v3240
        %v3333 = vadd.f32 %v2519, %v3242
        %v3334 = vadd.f32 %v2521, %v3244
        %v3335 = vadd.f32 %v2523, %v3246
        %v3336 = vadd.f32 %v2527, %v3250
        %v3337 = vadd.f32 %v2529, %v3252
        %v3338 = vadd.f32 %v2531, %v3254
        %v3339 = vadd.f32 %v2533, %v3256
        %v3340 = vadd.f32 %v2537, %v3260
        %v3341 = vadd.f32 %v2539, %v3262
        %v3342 = vadd.f32 %v2541, %v3264
        %v3343 = vadd.f32 %v2543, %v3266
        %v3344 = vadd.f32 %v2547, %v3270
        %v3345 = vadd.f32 %v2549, %v3272
        %v3346 = vadd.f32 %v2551, %v3274
        %v3347 = vadd.f32 %v2553, %v3276
        %v3348 = vadd.f32 %v2557, %v3280
        %v3349 = vadd.f32 %v2559, %v3282
        %v3350 = vadd.f32 %v2561, %v3284
        %v3351 = vadd.f32 %v2563, %v3286
        %v3352 = vld [vmem:[#allocation3] sm:$0xff]
        %v3353 = vld [vmem:[#allocation3 + $0x8] sm:$0xff]
        %v3354 = vld [vmem:[#allocation3 + $0x10] sm:$0xff]
        %v3355 = vld [vmem:[#allocation3 + $0x18] sm:$0xff]
        %v3356 = vld [vmem:[#allocation3 + $0x20] sm:$0xff]
        %v3357 = vld [vmem:[#allocation3 + $0x28] sm:$0xff]
        %v3358 = vld [vmem:[#allocation3 + $0x30] sm:$0xff]
        %v3359 = vld [vmem:[#allocation3 + $0x38] sm:$0xff]
        %v3360 = vld [vmem:[#allocation3 + $0x40] sm:$0xff]
        %v3361 = vld [vmem:[#allocation3 + $0x48] sm:$0xff]
        %v3362 = vld [vmem:[#allocation3 + $0x50] sm:$0xff]
        %v3363 = vld [vmem:[#allocation3 + $0x58] sm:$0xff]
        %v3364 = vld [vmem:[#allocation3 + $0x60] sm:$0xff]
        %v3365 = vld [vmem:[#allocation3 + $0x68] sm:$0xff]
        %v3366 = vld [vmem:[#allocation3 + $0x70] sm:$0xff]
        %v3367 = vld [vmem:[#allocation3 + $0x78] sm:$0xff]
        %v3368 = vld [vmem:[#allocation3 + $0x80] sm:$0xff]
        %v3369 = vld [vmem:[#allocation3 + $0x88] sm:$0xff]
        %v3370 = vld [vmem:[#allocation3 + $0x90] sm:$0xff]
        %v3371 = vld [vmem:[#allocation3 + $0x98] sm:$0xff]
        %v3372 = vld [vmem:[#allocation3 + $0xa0] sm:$0xff]
        %v3373 = vld [vmem:[#allocation3 + $0xa8] sm:$0xff]
        %v3374 = vld [vmem:[#allocation3 + $0xb0] sm:$0xff]
        %v3375 = vld [vmem:[#allocation3 + $0xb8] sm:$0xff]
        %v3376 = vld [vmem:[#allocation3 + $0xc0] sm:$0xff]
        %v3377 = vld [vmem:[#allocation3 + $0xc8] sm:$0xff]
        %v3378 = vld [vmem:[#allocation3 + $0xd0] sm:$0xff]
        %v3379 = vld [vmem:[#allocation3 + $0xd8] sm:$0xff]
        %v3380 = vld [vmem:[#allocation3 + $0xe0] sm:$0xff]
        %v3381 = vld [vmem:[#allocation3 + $0xe8] sm:$0xff]
        %v3382 = vld [vmem:[#allocation3 + $0xf0] sm:$0xff]
        %v3383 = vld [vmem:[#allocation3 + $0xf8] sm:$0xff]
        %v3384 = vld [vmem:[#allocation3 + $0x100] sm:$0xff]
        %v3385 = vld [vmem:[#allocation3 + $0x108] sm:$0xff]
        %v3386 = vld [vmem:[#allocation3 + $0x110] sm:$0xff]
        %v3387 = vld [vmem:[#allocation3 + $0x118] sm:$0xff]
        %v3388 = vld [vmem:[#allocation3 + $0x120] sm:$0xff]
        %v3389 = vld [vmem:[#allocation3 + $0x128] sm:$0xff]
        %v3390 = vld [vmem:[#allocation3 + $0x130] sm:$0xff]
        %v3391 = vld [vmem:[#allocation3 + $0x138] sm:$0xff]
        %v3392 = vld [vmem:[#allocation3 + $0x140] sm:$0xff]
        %v3393 = vld [vmem:[#allocation3 + $0x148] sm:$0xff]
        %v3394 = vld [vmem:[#allocation3 + $0x150] sm:$0xff]
        %v3395 = vld [vmem:[#allocation3 + $0x158] sm:$0xff]
        %v3396 = vld [vmem:[#allocation3 + $0x160] sm:$0xff]
        %v3397 = vld [vmem:[#allocation3 + $0x168] sm:$0xff]
        %v3398 = vld [vmem:[#allocation3 + $0x170] sm:$0xff]
        %v3399 = vld [vmem:[#allocation3 + $0x178] sm:$0xff]
        %v3400 = vld [vmem:[%s3] sm:$0xff]
        %v3401 = vld [vmem:[%s3 + $0x8] sm:$0xff]
        %v3402 = vld [vmem:[%s3 + $0x10] sm:$0xff]
        %v3403 = vld [vmem:[%s3 + $0x18] sm:$0xff]
        %v3404 = vld [vmem:[%s3 + $0x20] sm:$0xff]
        %v3405 = vld [vmem:[%s3 + $0x28] sm:$0xff]
        %v3406 = vld [vmem:[%s3 + $0x30] sm:$0xff]
        %v3407 = vld [vmem:[%s3 + $0x38] sm:$0xff]
        %v3408 = vld [vmem:[%s3 + $0x40] sm:$0xff]
        %v3409 = vld [vmem:[%s3 + $0x48] sm:$0xff]
        %v3410 = vld [vmem:[%s3 + $0x50] sm:$0xff]
        %v3411 = vld [vmem:[%s3 + $0x58] sm:$0xff]
        %v3412 = vld [vmem:[%s3 + $0x60] sm:$0xff]
        %v3413 = vld [vmem:[%s3 + $0x68] sm:$0xff]
        %v3414 = vld [vmem:[%s3 + $0x70] sm:$0xff]
        %v3415 = vld [vmem:[%s3 + $0x78] sm:$0xff]
        %v3416 = vld [vmem:[%s3 + $0x80] sm:$0xff]
        %v3417 = vld [vmem:[%s3 + $0x88] sm:$0xff]
        %v3418 = vld [vmem:[%s3 + $0x90] sm:$0xff]
        %v3419 = vld [vmem:[%s3 + $0x98] sm:$0xff]
        %v3420 = vld [vmem:[%s3 + $0xa0] sm:$0xff]
        %v3421 = vld [vmem:[%s3 + $0xa8] sm:$0xff]
        %v3422 = vld [vmem:[%s3 + $0xb0] sm:$0xff]
        %v3423 = vld [vmem:[%s3 + $0xb8] sm:$0xff]
        %v3424 = vld [vmem:[%s3 + $0xc0] sm:$0xff]
        %v3425 = vld [vmem:[%s3 + $0xc8] sm:$0xff]
        %v3426 = vld [vmem:[%s3 + $0xd0] sm:$0xff]
        %v3427 = vld [vmem:[%s3 + $0xd8] sm:$0xff]
        %v3428 = vld [vmem:[%s3 + $0xe0] sm:$0xff]
        %v3429 = vld [vmem:[%s3 + $0xe8] sm:$0xff]
        %v3430 = vld [vmem:[%s3 + $0xf0] sm:$0xff]
        %v3431 = vld [vmem:[%s3 + $0xf8] sm:$0xff]
        %v3432 = vld [vmem:[%s3 + $0x100] sm:$0xff]
        %v3433 = vld [vmem:[%s3 + $0x108] sm:$0xff]
        %v3434 = vld [vmem:[%s3 + $0x110] sm:$0xff]
        %v3435 = vld [vmem:[%s3 + $0x118] sm:$0xff]
        %v3436 = vld [vmem:[%s3 + $0x120] sm:$0xff]
        %v3437 = vld [vmem:[%s3 + $0x128] sm:$0xff]
        %v3438 = vld [vmem:[%s3 + $0x130] sm:$0xff]
        %v3439 = vld [vmem:[%s3 + $0x138] sm:$0xff]
        %v3440 = vld [vmem:[%s3 + $0x140] sm:$0xff]
        %v3441 = vld [vmem:[%s3 + $0x148] sm:$0xff]
        %v3442 = vld [vmem:[%s3 + $0x150] sm:$0xff]
        %v3443 = vld [vmem:[%s3 + $0x158] sm:$0xff]
        %v3444 = vld [vmem:[%s3 + $0x160] sm:$0xff]
        %v3445 = vld [vmem:[%s3 + $0x168] sm:$0xff]
        %v3446 = vld [vmem:[%s3 + $0x170] sm:$0xff]
        %v3447 = vld [vmem:[%s3 + $0x178] sm:$0xff]
        %v3448 = vld [vmem:[#allocation3 + $0x180] sm:$0xff]
        %v3449 = vld [vmem:[#allocation3 + $0x188] sm:$0xff]
        %v3450 = vld [vmem:[#allocation3 + $0x190] sm:$0xff]
        %s3451 = scalar_lea.vmem %s3, 384
        %v3452 = vld [vmem:[%s3451] sm:$0xff]
        %v3453 = vld [vmem:[%s3451 + $0x8] sm:$0xff]
        %v3454 = vld [vmem:[%s3451 + $0x10] sm:$0xff]
        %v3455 = vld [vmem:[%s3451 + $0x18] sm:$0xff]
        %v3456 = vld [vmem:[%s3451 + $0x20] sm:$0xff]
        %v3457 = vld [vmem:[%s3451 + $0x28] sm:$0xff]
        %v3458 = vld [vmem:[%s3451 + $0x30] sm:$0xff]
        %v3459 = vld [vmem:[%s3451 + $0x38] sm:$0xff]
        %v3460 = vld [vmem:[%s3451 + $0x40] sm:$0xff]
        %v3461 = vld [vmem:[%s3451 + $0x48] sm:$0xff]
        %v3462 = vld [vmem:[%s3451 + $0x50] sm:$0xff]
        %v3463 = vld [vmem:[%s3451 + $0x58] sm:$0xff]
        %v3464 = vld [vmem:[%s3451 + $0x60] sm:$0xff]
        %v3465 = vld [vmem:[%s3451 + $0x68] sm:$0xff]
        %v3466 = vld [vmem:[%s3451 + $0x70] sm:$0xff]
        %v3467 = vld [vmem:[%s3451 + $0x78] sm:$0xff]
        %v3468 = vld [vmem:[%s3451 + $0x80] sm:$0xff]
        %v3469 = vld [vmem:[%s3451 + $0x88] sm:$0xff]
        %v3470 = vld [vmem:[%s3451 + $0x90] sm:$0xff]
        %v3471 = vld [vmem:[%s3451 + $0x98] sm:$0xff]
        %v3472 = vld [vmem:[%s3451 + $0xa0] sm:$0xff]
        %v3473 = vld [vmem:[%s3451 + $0xa8] sm:$0xff]
        %v3474 = vld [vmem:[%s3451 + $0xb0] sm:$0xff]
        %v3475 = vld [vmem:[%s3451 + $0xb8] sm:$0xff]
        %v3476 = vld [vmem:[%s3451 + $0xc0] sm:$0xff]
        %v3477 = vld [vmem:[%s3451 + $0xc8] sm:$0xff]
        %v3478 = vld [vmem:[%s3451 + $0xd0] sm:$0xff]
        %v3479 = vld [vmem:[%s3451 + $0xd8] sm:$0xff]
        %v3480 = vld [vmem:[%s3451 + $0xe0] sm:$0xff]
        %v3481 = vld [vmem:[%s3451 + $0xe8] sm:$0xff]
        %v3482 = vld [vmem:[%s3451 + $0xf0] sm:$0xff]
        %v3483 = vld [vmem:[%s3451 + $0xf8] sm:$0xff]
        %v3484 = vld [vmem:[%s3451 + $0x100] sm:$0xff]
        %v3485 = vld [vmem:[%s3451 + $0x108] sm:$0xff]
        %v3486 = vld [vmem:[%s3451 + $0x110] sm:$0xff]
        %v3487 = vld [vmem:[%s3451 + $0x118] sm:$0xff]
        %v3488 = vld [vmem:[%s3451 + $0x120] sm:$0xff]
        %v3489 = vld [vmem:[%s3451 + $0x128] sm:$0xff]
        %v3490 = vld [vmem:[%s3451 + $0x130] sm:$0xff]
        %v3491 = vld [vmem:[%s3451 + $0x138] sm:$0xff]
        %v3492 = vld [vmem:[%s3451 + $0x140] sm:$0xff]
        %v3493 = vld [vmem:[%s3451 + $0x148] sm:$0xff]
        %v3494 = vld [vmem:[%s3451 + $0x150] sm:$0xff]
        %v3495 = vld [vmem:[%s3451 + $0x158] sm:$0xff]
        %v3496 = vld [vmem:[%s3451 + $0x160] sm:$0xff]
        %v3497 = vld [vmem:[%s3451 + $0x168] sm:$0xff]
        %v3498 = vld [vmem:[%s3451 + $0x170] sm:$0xff]
        %v3499 = vld [vmem:[%s3451 + $0x178] sm:$0xff]
        %v3548 = vunpack.c.l.b16 %v3452
        %v3549 = vunpack.c.h.b16 %v3452
        %v3550 = vunpack.c.l.b16 %v3453
        %v3551 = vunpack.c.h.b16 %v3453
        %v3552 = vunpack.c.l.b16 %v3454
        %v3553 = vunpack.c.h.b16 %v3454
        %v3554 = vunpack.c.l.b16 %v3455
        %v3555 = vunpack.c.h.b16 %v3455
        %v3556 = vunpack.c.l.b16 %v3456
        %v3557 = vunpack.c.h.b16 %v3456
        %v3558 = vunpack.c.l.b16 %v3457
        %v3559 = vunpack.c.h.b16 %v3457
        %v3560 = vunpack.c.l.b16 %v3458
        %v3561 = vunpack.c.h.b16 %v3458
        %v3562 = vunpack.c.l.b16 %v3459
        %v3563 = vunpack.c.h.b16 %v3459
        %v3564 = vunpack.c.l.b16 %v3460
        %v3565 = vunpack.c.h.b16 %v3460
        %v3566 = vunpack.c.l.b16 %v3461
        %v3567 = vunpack.c.h.b16 %v3461
        %v3568 = vunpack.c.l.b16 %v3462
        %v3569 = vunpack.c.h.b16 %v3462
        %v3570 = vunpack.c.l.b16 %v3463
        %v3571 = vunpack.c.h.b16 %v3463
        %v3572 = vunpack.c.l.b16 %v3464
        %v3573 = vunpack.c.h.b16 %v3464
        %v3574 = vunpack.c.l.b16 %v3465
        %v3575 = vunpack.c.h.b16 %v3465
        %v3576 = vunpack.c.l.b16 %v3466
        %v3577 = vunpack.c.h.b16 %v3466
        %v3578 = vunpack.c.l.b16 %v3467
        %v3579 = vunpack.c.h.b16 %v3467
        %v3580 = vunpack.c.l.b16 %v3468
        %v3581 = vunpack.c.h.b16 %v3468
        %v3582 = vunpack.c.l.b16 %v3469
        %v3583 = vunpack.c.h.b16 %v3469
        %v3584 = vunpack.c.l.b16 %v3470
        %v3585 = vunpack.c.h.b16 %v3470
        %v3586 = vunpack.c.l.b16 %v3471
        %v3587 = vunpack.c.h.b16 %v3471
        %v3588 = vunpack.c.l.b16 %v3472
        %v3589 = vunpack.c.h.b16 %v3472
        %v3590 = vunpack.c.l.b16 %v3473
        %v3591 = vunpack.c.h.b16 %v3473
        %v3592 = vunpack.c.l.b16 %v3474
        %v3593 = vunpack.c.h.b16 %v3474
        %v3594 = vunpack.c.l.b16 %v3475
        %v3595 = vunpack.c.h.b16 %v3475
        %v3596 = vunpack.c.l.b16 %v3476
        %v3597 = vunpack.c.h.b16 %v3476
        %v3598 = vunpack.c.l.b16 %v3477
        %v3599 = vunpack.c.h.b16 %v3477
        %v3600 = vunpack.c.l.b16 %v3478
        %v3601 = vunpack.c.h.b16 %v3478
        %v3602 = vunpack.c.l.b16 %v3479
        %v3603 = vunpack.c.h.b16 %v3479
        %v3604 = vunpack.c.l.b16 %v3480
        %v3605 = vunpack.c.h.b16 %v3480
        %v3606 = vunpack.c.l.b16 %v3481
        %v3607 = vunpack.c.h.b16 %v3481
        %v3608 = vunpack.c.l.b16 %v3482
        %v3609 = vunpack.c.h.b16 %v3482
        %v3610 = vunpack.c.l.b16 %v3483
        %v3611 = vunpack.c.h.b16 %v3483
        %v3612 = vunpack.c.l.b16 %v3484
        %v3613 = vunpack.c.h.b16 %v3484
        %v3614 = vunpack.c.l.b16 %v3485
        %v3615 = vunpack.c.h.b16 %v3485
        %v3616 = vunpack.c.l.b16 %v3486
        %v3617 = vunpack.c.h.b16 %v3486
        %v3618 = vunpack.c.l.b16 %v3487
        %v3619 = vunpack.c.h.b16 %v3487
        %v3620 = vunpack.c.l.b16 %v3488
        %v3621 = vunpack.c.h.b16 %v3488
        %v3622 = vunpack.c.l.b16 %v3489
        %v3623 = vunpack.c.h.b16 %v3489
        %v3624 = vunpack.c.l.b16 %v3490
        %v3625 = vunpack.c.h.b16 %v3490
        %v3626 = vunpack.c.l.b16 %v3491
        %v3627 = vunpack.c.h.b16 %v3491
        %v3628 = vunpack.c.l.b16 %v3492
        %v3629 = vunpack.c.h.b16 %v3492
        %v3630 = vunpack.c.l.b16 %v3493
        %v3631 = vunpack.c.h.b16 %v3493
        %v3632 = vunpack.c.l.b16 %v3494
        %v3633 = vunpack.c.h.b16 %v3494
        %v3634 = vunpack.c.l.b16 %v3495
        %v3635 = vunpack.c.h.b16 %v3495
        %v3636 = vunpack.c.l.b16 %v3496
        %v3637 = vunpack.c.h.b16 %v3496
        %v3638 = vunpack.c.l.b16 %v3497
        %v3639 = vunpack.c.h.b16 %v3497
        %v3640 = vunpack.c.l.b16 %v3498
        %v3641 = vunpack.c.h.b16 %v3498
        %v3642 = vunpack.c.l.b16 %v3499
        %v3643 = vunpack.c.h.b16 %v3499
        %v3644 = vpack.c.b16 %v3550, %v3548
        %v3645 = vpack.c.b16 %v3551, %v3549
        %v3646 = vpack.c.b16 %v3554, %v3552
        %v3647 = vpack.c.b16 %v3555, %v3553
        %v3648 = vpack.c.b16 %v3558, %v3556
        %v3649 = vpack.c.b16 %v3559, %v3557
        %v3650 = vpack.c.b16 %v3562, %v3560
        %v3651 = vpack.c.b16 %v3563, %v3561
        %v3652 = vpack.c.b16 %v3566, %v3564
        %v3653 = vpack.c.b16 %v3567, %v3565
        %v3654 = vpack.c.b16 %v3570, %v3568
        %v3655 = vpack.c.b16 %v3571, %v3569
        %v3656 = vpack.c.b16 %v3574, %v3572
        %v3657 = vpack.c.b16 %v3575, %v3573
        %v3658 = vpack.c.b16 %v3578, %v3576
        %v3659 = vpack.c.b16 %v3579, %v3577
        %v3660 = vpack.c.b16 %v3582, %v3580
        %v3661 = vpack.c.b16 %v3583, %v3581
        %v3662 = vpack.c.b16 %v3586, %v3584
        %v3663 = vpack.c.b16 %v3587, %v3585
        %v3664 = vpack.c.b16 %v3590, %v3588
        %v3665 = vpack.c.b16 %v3591, %v3589
        %v3666 = vpack.c.b16 %v3594, %v3592
        %v3667 = vpack.c.b16 %v3595, %v3593
        %v3668 = vpack.c.b16 %v3598, %v3596
        %v3669 = vpack.c.b16 %v3599, %v3597
        %v3670 = vpack.c.b16 %v3602, %v3600
        %v3671 = vpack.c.b16 %v3603, %v3601
        %v3672 = vpack.c.b16 %v3606, %v3604
        %v3673 = vpack.c.b16 %v3607, %v3605
        %v3674 = vpack.c.b16 %v3610, %v3608
        %v3675 = vpack.c.b16 %v3611, %v3609
        %v3676 = vpack.c.b16 %v3614, %v3612
        %v3677 = vpack.c.b16 %v3615, %v3613
        %v3678 = vpack.c.b16 %v3618, %v3616
        %v3679 = vpack.c.b16 %v3619, %v3617
        %v3680 = vpack.c.b16 %v3622, %v3620
        %v3681 = vpack.c.b16 %v3623, %v3621
        %v3682 = vpack.c.b16 %v3626, %v3624
        %v3683 = vpack.c.b16 %v3627, %v3625
        %v3684 = vpack.c.b16 %v3630, %v3628
        %v3685 = vpack.c.b16 %v3631, %v3629
        %v3686 = vpack.c.b16 %v3634, %v3632
        %v3687 = vpack.c.b16 %v3635, %v3633
        %v3688 = vpack.c.b16 %v3638, %v3636
        %v3689 = vpack.c.b16 %v3639, %v3637
        %v3690 = vpack.c.b16 %v3642, %v3640
        %v3691 = vpack.c.b16 %v3643, %v3641
        %3740 = vmatprep.subr.bf16.mxu0 %v3645
        %3741 = vmatpush1.bf16.msra.mxu0 %v3644
        %3742 = vmatprep.subr.bf16.mxu0 %v3647
        %3743 = vmatpush1.bf16.msra.mxu0 %v3646
        %3744 = vmatprep.subr.bf16.mxu0 %v3649
        %3745 = vmatpush1.bf16.msra.mxu0 %v3648
        %3746 = vmatprep.subr.bf16.mxu0 %v3651
        %3747 = vmatpush1.bf16.msra.mxu0 %v3650
        %3748 = vmatprep.subr.bf16.mxu0 %v3653
        %3749 = vmatpush1.bf16.msra.mxu0 %v3652
        %3750 = vmatprep.subr.bf16.mxu0 %v3655
        %3751 = vmatpush1.bf16.msra.mxu0 %v3654
        %3752 = vmatprep.subr.bf16.mxu0 %v3657
        %3753 = vmatpush1.bf16.msra.mxu0 %v3656
        %3754 = vmatprep.subr.bf16.mxu0 %v3659
        %3755 = vmatpush1.bf16.msra.mxu0 %v3658
        %3756 = vmatprep.subr.bf16.mxu0 %v3661
        %3757 = vmatpush1.bf16.msra.mxu0 %v3660
        %3758 = vmatprep.subr.bf16.mxu0 %v3663
        %3759 = vmatpush1.bf16.msra.mxu0 %v3662
        %3760 = vmatprep.subr.bf16.mxu0 %v3665
        %3761 = vmatpush1.bf16.msra.mxu0 %v3664
        %3762 = vmatprep.subr.bf16.mxu0 %v3667
        %3763 = vmatpush1.bf16.msra.mxu0 %v3666
        %3764 = vmatprep.subr.bf16.mxu0 %v3669
        %3765 = vmatpush1.bf16.msra.mxu0 %v3668
        %3766 = vmatprep.subr.bf16.mxu0 %v3671
        %3767 = vmatpush1.bf16.msra.mxu0 %v3670
        %3768 = vmatprep.subr.bf16.mxu0 %v3673
        %3769 = vmatpush1.bf16.msra.mxu0 %v3672
        %3770 = vmatprep.subr.bf16.mxu0 %v3675
        %3771 = vmatpush1.bf16.msra.mxu0 %v3674
        %3772 = vmatprep.mubr.bf16.mxu0 %v3356
        %3773 = vmatmul.mubr.bf16.gmra.mrb[0].mxu0 %v3355
        %v3774 = vpop.f32.mrb[0].mxu0
        %v3775 = vadd.f32 0.0, %v3774
        %v3776 = vpop.f32.mrb[0].mxu0
        %v3777 = vadd.f32 0.0, %v3776
        %v3778 = vpop.f32.mrb[0].mxu0
        %v3779 = vadd.f32 0.0, %v3778
        %v3780 = vpop.f32.mrb[0].mxu0
        %v3781 = vadd.f32 0.0, %v3780
        %3782 = vmatprep.mubr.bf16.mxu0 %v3359
        %3783 = vmatmul.mubr.bf16.gmra.mrb[0].mxu0 %v3358
        %v3784 = vpop.f32.mrb[0].mxu0
        %v3785 = vadd.f32 0.0, %v3784
        %v3786 = vpop.f32.mrb[0].mxu0
        %v3787 = vadd.f32 0.0, %v3786
        %v3788 = vpop.f32.mrb[0].mxu0
        %v3789 = vadd.f32 0.0, %v3788
        %v3790 = vpop.f32.mrb[0].mxu0
        %v3791 = vadd.f32 0.0, %v3790
        %3792 = vmatprep.mubr.bf16.mxu0 %v3362
        %3793 = vmatmul.mubr.bf16.gmra.mrb[0].mxu0 %v3361
        %v3794 = vpop.f32.mrb[0].mxu0
        %v3795 = vadd.f32 0.0, %v3794
        %v3796 = vpop.f32.mrb[0].mxu0
        %v3797 = vadd.f32 0.0, %v3796
        %v3798 = vpop.f32.mrb[0].mxu0
        %v3799 = vadd.f32 0.0, %v3798
        %v3800 = vpop.f32.mrb[0].mxu0
        %v3801 = vadd.f32 0.0, %v3800
        %3802 = vmatprep.mubr.bf16.mxu0 %v3365
        %3803 = vmatmul.mubr.bf16.gmra.mrb[0].mxu0 %v3364
        %v3804 = vpop.f32.mrb[0].mxu0
        %v3805 = vadd.f32 0.0, %v3804
        %v3806 = vpop.f32.mrb[0].mxu0
        %v3807 = vadd.f32 0.0, %v3806
        %v3808 = vpop.f32.mrb[0].mxu0
        %v3809 = vadd.f32 0.0, %v3808
        %v3810 = vpop.f32.mrb[0].mxu0
        %v3811 = vadd.f32 0.0, %v3810
        %3812 = vmatprep.mubr.bf16.mxu0 %v3368
        %3813 = vmatmul.mubr.bf16.gmra.mrb[0].mxu0 %v3367
        %v3814 = vpop.f32.mrb[0].mxu0
        %v3815 = vadd.f32 0.0, %v3814
        %v3816 = vpop.f32.mrb[0].mxu0
        %v3817 = vadd.f32 0.0, %v3816
        %v3818 = vpop.f32.mrb[0].mxu0
        %v3819 = vadd.f32 0.0, %v3818
        %v3820 = vpop.f32.mrb[0].mxu0
        %v3821 = vadd.f32 0.0, %v3820
        %3822 = vmatprep.mubr.bf16.mxu0 %v3371
        %3823 = vmatmul.mubr.bf16.gmra.mrb[0].mxu0 %v3370
        %v3824 = vpop.f32.mrb[0].mxu0
        %v3825 = vadd.f32 0.0, %v3824
        %v3826 = vpop.f32.mrb[0].mxu0
        %v3827 = vadd.f32 0.0, %v3826
        %v3828 = vpop.f32.mrb[0].mxu0
        %v3829 = vadd.f32 0.0, %v3828
        %v3830 = vpop.f32.mrb[0].mxu0
        %v3831 = vadd.f32 0.0, %v3830
        %3832 = vmatprep.mubr.bf16.mxu0 %v3374
        %3833 = vmatmul.mubr.bf16.gmra.mrb[0].mxu0 %v3373
        %v3834 = vpop.f32.mrb[0].mxu0
        %v3835 = vadd.f32 0.0, %v3834
        %v3836 = vpop.f32.mrb[0].mxu0
        %v3837 = vadd.f32 0.0, %v3836
        %v3838 = vpop.f32.mrb[0].mxu0
        %v3839 = vadd.f32 0.0, %v3838
        %v3840 = vpop.f32.mrb[0].mxu0
        %v3841 = vadd.f32 0.0, %v3840
        %3842 = vmatprep.mubr.bf16.mxu0 %v3377
        %3843 = vmatmul.mubr.bf16.gmra.mrb[0].mxu0 %v3376
        %v3844 = vpop.f32.mrb[0].mxu0
        %v3845 = vadd.f32 0.0, %v3844
        %v3846 = vpop.f32.mrb[0].mxu0
        %v3847 = vadd.f32 0.0, %v3846
        %v3848 = vpop.f32.mrb[0].mxu0
        %v3849 = vadd.f32 0.0, %v3848
        %v3850 = vpop.f32.mrb[0].mxu0
        %v3851 = vadd.f32 0.0, %v3850
        %3852 = vmatprep.mubr.bf16.mxu0 %v3380
        %3853 = vmatmul.mubr.bf16.gmra.mrb[0].mxu0 %v3379
        %v3854 = vpop.f32.mrb[0].mxu0
        %v3855 = vadd.f32 0.0, %v3854
        %v3856 = vpop.f32.mrb[0].mxu0
        %v3857 = vadd.f32 0.0, %v3856
        %v3858 = vpop.f32.mrb[0].mxu0
        %v3859 = vadd.f32 0.0, %v3858
        %v3860 = vpop.f32.mrb[0].mxu0
        %v3861 = vadd.f32 0.0, %v3860
        %3862 = vmatprep.mubr.bf16.mxu0 %v3383
        %3863 = vmatmul.mubr.bf16.gmra.mrb[0].mxu0 %v3382
        %v3864 = vpop.f32.mrb[0].mxu0
        %v3865 = vadd.f32 0.0, %v3864
        %v3866 = vpop.f32.mrb[0].mxu0
        %v3867 = vadd.f32 0.0, %v3866
        %v3868 = vpop.f32.mrb[0].mxu0
        %v3869 = vadd.f32 0.0, %v3868
        %v3870 = vpop.f32.mrb[0].mxu0
        %v3871 = vadd.f32 0.0, %v3870
        %3872 = vmatprep.mubr.bf16.mxu0 %v3386
        %3873 = vmatmul.mubr.bf16.gmra.mrb[0].mxu0 %v3385
        %v3874 = vpop.f32.mrb[0].mxu0
        %v3875 = vadd.f32 0.0, %v3874
        %v3876 = vpop.f32.mrb[0].mxu0
        %v3877 = vadd.f32 0.0, %v3876
        %v3878 = vpop.f32.mrb[0].mxu0
        %v3879 = vadd.f32 0.0, %v3878
        %v3880 = vpop.f32.mrb[0].mxu0
        %v3881 = vadd.f32 0.0, %v3880
        %3882 = vmatprep.mubr.bf16.mxu0 %v3389
        %3883 = vmatmul.mubr.bf16.gmra.mrb[0].mxu0 %v3388
        %v3884 = vpop.f32.mrb[0].mxu0
        %v3885 = vadd.f32 0.0, %v3884
        %v3886 = vpop.f32.mrb[0].mxu0
        %v3887 = vadd.f32 0.0, %v3886
        %v3888 = vpop.f32.mrb[0].mxu0
        %v3889 = vadd.f32 0.0, %v3888
        %v3890 = vpop.f32.mrb[0].mxu0
        %v3891 = vadd.f32 0.0, %v3890
        %3892 = vmatprep.mubr.bf16.mxu0 %v3392
        %3893 = vmatmul.mubr.bf16.gmra.mrb[0].mxu0 %v3391
        %v3894 = vpop.f32.mrb[0].mxu0
        %v3895 = vadd.f32 0.0, %v3894
        %v3896 = vpop.f32.mrb[0].mxu0
        %v3897 = vadd.f32 0.0, %v3896
        %v3898 = vpop.f32.mrb[0].mxu0
        %v3899 = vadd.f32 0.0, %v3898
        %v3900 = vpop.f32.mrb[0].mxu0
        %v3901 = vadd.f32 0.0, %v3900
        %3902 = vmatprep.mubr.bf16.mxu0 %v3395
        %3903 = vmatmul.mubr.bf16.gmra.mrb[0].mxu0 %v3394
        %v3904 = vpop.f32.mrb[0].mxu0
        %v3905 = vadd.f32 0.0, %v3904
        %v3906 = vpop.f32.mrb[0].mxu0
        %v3907 = vadd.f32 0.0, %v3906
        %v3908 = vpop.f32.mrb[0].mxu0
        %v3909 = vadd.f32 0.0, %v3908
        %v3910 = vpop.f32.mrb[0].mxu0
        %v3911 = vadd.f32 0.0, %v3910
        %3912 = vmatprep.mubr.bf16.mxu0 %v3398
        %3913 = vmatmul.mubr.bf16.gmra.mrb[0].mxu0 %v3397
        %v3914 = vpop.f32.mrb[0].mxu0
        %v3915 = vadd.f32 0.0, %v3914
        %v3916 = vpop.f32.mrb[0].mxu0
        %v3917 = vadd.f32 0.0, %v3916
        %v3918 = vpop.f32.mrb[0].mxu0
        %v3919 = vadd.f32 0.0, %v3918
        %v3920 = vpop.f32.mrb[0].mxu0
        %v3921 = vadd.f32 0.0, %v3920
        %3922 = vmatprep.mubr.bf16.mxu0 %v3449
        %3923 = vmatmul.mubr.bf16.gmra.mrb[0].mxu0 %v3448
        %v3924 = vpop.f32.mrb[0].mxu0
        %v3925 = vadd.f32 0.0, %v3924
        %v3926 = vpop.f32.mrb[0].mxu0
        %v3927 = vadd.f32 0.0, %v3926
        %v3928 = vpop.f32.mrb[0].mxu0
        %v3929 = vadd.f32 0.0, %v3928
        %v3930 = vpop.f32.mrb[0].mxu0
        %v3931 = vadd.f32 0.0, %v3930
        %3932 = vdwg.mxu0
        %3933 = vmatprep.subr.bf16.mxu0 %v3677
        %3934 = vmatpush1.bf16.msra.mxu0 %v3676
        %3935 = vmatprep.subr.bf16.mxu0 %v3679
        %3936 = vmatpush1.bf16.msra.mxu0 %v3678
        %3937 = vmatprep.subr.bf16.mxu0 %v3681
        %3938 = vmatpush1.bf16.msra.mxu0 %v3680
        %3939 = vmatprep.subr.bf16.mxu0 %v3683
        %3940 = vmatpush1.bf16.msra.mxu0 %v3682
        %3941 = vmatprep.subr.bf16.mxu0 %v3685
        %3942 = vmatpush1.bf16.msra.mxu0 %v3684
        %3943 = vmatprep.subr.bf16.mxu0 %v3687
        %3944 = vmatpush1.bf16.msra.mxu0 %v3686
        %3945 = vmatprep.subr.bf16.mxu0 %v3689
        %3946 = vmatpush1.bf16.msra.mxu0 %v3688
        %3947 = vmatprep.subr.bf16.mxu0 %v3691
        %3948 = vmatpush1.bf16.msra.mxu0 %v3690
        %3949 = vmatprep.subr.bf16.mxu0 0
        %3950 = vmatpush1.bf16.msra.mxu0 0
        %3951 = vmatprep.subr.bf16.mxu0 0
        %3952 = vmatpush1.bf16.msra.mxu0 0
        %3953 = vmatprep.subr.bf16.mxu0 0
        %3954 = vmatpush1.bf16.msra.mxu0 0
        %3955 = vmatprep.subr.bf16.mxu0 0
        %3956 = vmatpush1.bf16.msra.mxu0 0
        %3957 = vmatprep.subr.bf16.mxu0 0
        %3958 = vmatpush1.bf16.msra.mxu0 0
        %3959 = vmatprep.subr.bf16.mxu0 0
        %3960 = vmatpush1.bf16.msra.mxu0 0
        %3961 = vmatprep.subr.bf16.mxu0 0
        %3962 = vmatpush1.bf16.msra.mxu0 0
        %3963 = vmatprep.subr.bf16.mxu0 0
        %3964 = vmatpush1.bf16.msra.mxu0 0
        %3965 = vmatprep.mubr.bf16.mxu0 0
        %3966 = vmatmul.mubr.bf16.gmra.mrb[0].mxu0 %v3357
        %v3967 = vpop.f32.mrb[0].mxu0
        %v3968 = vadd.f32 %v3775, %v3967
        %v3969 = vpop.f32.mrb[0].mxu0
        %v3970 = vadd.f32 %v3777, %v3969
        %v3971 = vpop.f32.mrb[0].mxu0
        %v3972 = vadd.f32 %v3779, %v3971
        %v3973 = vpop.f32.mrb[0].mxu0
        %v3974 = vadd.f32 %v3781, %v3973
        %3975 = vmatprep.mubr.bf16.mxu0 0
        %3976 = vmatmul.mubr.bf16.gmra.mrb[0].mxu0 %v3360
        %v3977 = vpop.f32.mrb[0].mxu0
        %v3978 = vadd.f32 %v3785, %v3977
        %v3979 = vpop.f32.mrb[0].mxu0
        %v3980 = vadd.f32 %v3787, %v3979
        %v3981 = vpop.f32.mrb[0].mxu0
        %v3982 = vadd.f32 %v3789, %v3981
        %v3983 = vpop.f32.mrb[0].mxu0
        %v3984 = vadd.f32 %v3791, %v3983
        %3985 = vmatprep.mubr.bf16.mxu0 0
        %3986 = vmatmul.mubr.bf16.gmra.mrb[0].mxu0 %v3363
        %v3987 = vpop.f32.mrb[0].mxu0
        %v3988 = vadd.f32 %v3795, %v3987
        %v3989 = vpop.f32.mrb[0].mxu0
        %v3990 = vadd.f32 %v3797, %v3989
        %v3991 = vpop.f32.mrb[0].mxu0
        %v3992 = vadd.f32 %v3799, %v3991
        %v3993 = vpop.f32.mrb[0].mxu0
        %v3994 = vadd.f32 %v3801, %v3993
        %3995 = vmatprep.mubr.bf16.mxu0 0
        %3996 = vmatmul.mubr.bf16.gmra.mrb[0].mxu0 %v3366
        %v3997 = vpop.f32.mrb[0].mxu0
        %v3998 = vadd.f32 %v3805, %v3997
        %v3999 = vpop.f32.mrb[0].mxu0
        %v4000 = vadd.f32 %v3807, %v3999
        %v4001 = vpop.f32.mrb[0].mxu0
        %v4002 = vadd.f32 %v3809, %v4001
        %v4003 = vpop.f32.mrb[0].mxu0
        %v4004 = vadd.f32 %v3811, %v4003
        %4005 = vmatprep.mubr.bf16.mxu0 0
        %4006 = vmatmul.mubr.bf16.gmra.mrb[0].mxu0 %v3369
        %v4007 = vpop.f32.mrb[0].mxu0
        %v4008 = vadd.f32 %v3815, %v4007
        %v4009 = vpop.f32.mrb[0].mxu0
        %v4010 = vadd.f32 %v3817, %v4009
        %v4011 = vpop.f32.mrb[0].mxu0
        %v4012 = vadd.f32 %v3819, %v4011
        %v4013 = vpop.f32.mrb[0].mxu0
        %v4014 = vadd.f32 %v3821, %v4013
        %4015 = vmatprep.mubr.bf16.mxu0 0
        %4016 = vmatmul.mubr.bf16.gmra.mrb[0].mxu0 %v3372
        %v4017 = vpop.f32.mrb[0].mxu0
        %v4018 = vadd.f32 %v3825, %v4017
        %v4019 = vpop.f32.mrb[0].mxu0
        %v4020 = vadd.f32 %v3827, %v4019
        %v4021 = vpop.f32.mrb[0].mxu0
        %v4022 = vadd.f32 %v3829, %v4021
        %v4023 = vpop.f32.mrb[0].mxu0
        %v4024 = vadd.f32 %v3831, %v4023
        %4025 = vmatprep.mubr.bf16.mxu0 0
        %4026 = vmatmul.mubr.bf16.gmra.mrb[0].mxu0 %v3375
        %v4027 = vpop.f32.mrb[0].mxu0
        %v4028 = vadd.f32 %v3835, %v4027
        %v4029 = vpop.f32.mrb[0].mxu0
        %v4030 = vadd.f32 %v3837, %v4029
        %v4031 = vpop.f32.mrb[0].mxu0
        %v4032 = vadd.f32 %v3839, %v4031
        %v4033 = vpop.f32.mrb[0].mxu0
        %v4034 = vadd.f32 %v3841, %v4033
        %4035 = vmatprep.mubr.bf16.mxu0 0
        %4036 = vmatmul.mubr.bf16.gmra.mrb[0].mxu0 %v3378
        %v4037 = vpop.f32.mrb[0].mxu0
        %v4038 = vadd.f32 %v3845, %v4037
        %v4039 = vpop.f32.mrb[0].mxu0
        %v4040 = vadd.f32 %v3847, %v4039
        %v4041 = vpop.f32.mrb[0].mxu0
        %v4042 = vadd.f32 %v3849, %v4041
        %v4043 = vpop.f32.mrb[0].mxu0
        %v4044 = vadd.f32 %v3851, %v4043
        %4045 = vmatprep.mubr.bf16.mxu0 0
        %4046 = vmatmul.mubr.bf16.gmra.mrb[0].mxu0 %v3381
        %v4047 = vpop.f32.mrb[0].mxu0
        %v4048 = vadd.f32 %v3855, %v4047
        %v4049 = vpop.f32.mrb[0].mxu0
        %v4050 = vadd.f32 %v3857, %v4049
        %v4051 = vpop.f32.mrb[0].mxu0
        %v4052 = vadd.f32 %v3859, %v4051
        %v4053 = vpop.f32.mrb[0].mxu0
        %v4054 = vadd.f32 %v3861, %v4053
        %4055 = vmatprep.mubr.bf16.mxu0 0
        %4056 = vmatmul.mubr.bf16.gmra.mrb[0].mxu0 %v3384
        %v4057 = vpop.f32.mrb[0].mxu0
        %v4058 = vadd.f32 %v3865, %v4057
        %v4059 = vpop.f32.mrb[0].mxu0
        %v4060 = vadd.f32 %v3867, %v4059
        %v4061 = vpop.f32.mrb[0].mxu0
        %v4062 = vadd.f32 %v3869, %v4061
        %v4063 = vpop.f32.mrb[0].mxu0
        %v4064 = vadd.f32 %v3871, %v4063
        %4065 = vmatprep.mubr.bf16.mxu0 0
        %4066 = vmatmul.mubr.bf16.gmra.mrb[0].mxu0 %v3387
        %v4067 = vpop.f32.mrb[0].mxu0
        %v4068 = vadd.f32 %v3875, %v4067
        %v4069 = vpop.f32.mrb[0].mxu0
        %v4070 = vadd.f32 %v3877, %v4069
        %v4071 = vpop.f32.mrb[0].mxu0
        %v4072 = vadd.f32 %v3879, %v4071
        %v4073 = vpop.f32.mrb[0].mxu0
        %v4074 = vadd.f32 %v3881, %v4073
        %4075 = vmatprep.mubr.bf16.mxu0 0
        %4076 = vmatmul.mubr.bf16.gmra.mrb[0].mxu0 %v3390
        %v4077 = vpop.f32.mrb[0].mxu0
        %v4078 = vadd.f32 %v3885, %v4077
        %v4079 = vpop.f32.mrb[0].mxu0
        %v4080 = vadd.f32 %v3887, %v4079
        %v4081 = vpop.f32.mrb[0].mxu0
        %v4082 = vadd.f32 %v3889, %v4081
        %v4083 = vpop.f32.mrb[0].mxu0
        %v4084 = vadd.f32 %v3891, %v4083
        %4085 = vmatprep.mubr.bf16.mxu0 0
        %4086 = vmatmul.mubr.bf16.gmra.mrb[0].mxu0 %v3393
        %v4087 = vpop.f32.mrb[0].mxu0
        %v4088 = vadd.f32 %v3895, %v4087
        %v4089 = vpop.f32.mrb[0].mxu0
        %v4090 = vadd.f32 %v3897, %v4089
        %v4091 = vpop.f32.mrb[0].mxu0
        %v4092 = vadd.f32 %v3899, %v4091
        %v4093 = vpop.f32.mrb[0].mxu0
        %v4094 = vadd.f32 %v3901, %v4093
        %4095 = vmatprep.mubr.bf16.mxu0 0
        %4096 = vmatmul.mubr.bf16.gmra.mrb[0].mxu0 %v3396
        %v4097 = vpop.f32.mrb[0].mxu0
        %v4098 = vadd.f32 %v3905, %v4097
        %v4099 = vpop.f32.mrb[0].mxu0
        %v4100 = vadd.f32 %v3907, %v4099
        %v4101 = vpop.f32.mrb[0].mxu0
        %v4102 = vadd.f32 %v3909, %v4101
        %v4103 = vpop.f32.mrb[0].mxu0
        %v4104 = vadd.f32 %v3911, %v4103
        %4105 = vmatprep.mubr.bf16.mxu0 0
        %4106 = vmatmul.mubr.bf16.gmra.mrb[0].mxu0 %v3399
        %v4107 = vpop.f32.mrb[0].mxu0
        %v4108 = vadd.f32 %v3915, %v4107
        %v4109 = vpop.f32.mrb[0].mxu0
        %v4110 = vadd.f32 %v3917, %v4109
        %v4111 = vpop.f32.mrb[0].mxu0
        %v4112 = vadd.f32 %v3919, %v4111
        %v4113 = vpop.f32.mrb[0].mxu0
        %v4114 = vadd.f32 %v3921, %v4113
        %4115 = vmatprep.mubr.bf16.mxu0 0
        %4116 = vmatmul.mubr.bf16.gmra.mrb[0].mxu0 %v3450
        %v4117 = vpop.f32.mrb[0].mxu0
        %v4118 = vadd.f32 %v3925, %v4117
        %v4119 = vpop.f32.mrb[0].mxu0
        %v4120 = vadd.f32 %v3927, %v4119
        %v4121 = vpop.f32.mrb[0].mxu0
        %v4122 = vadd.f32 %v3929, %v4121
        %v4123 = vpop.f32.mrb[0].mxu0
        %v4124 = vadd.f32 %v3931, %v4123
        %4125 = vdwg.mxu0
        %v4174 = vunpack.c.l.b16 %v3400
        %v4175 = vunpack.c.h.b16 %v3400
        %v4176 = vunpack.c.l.b16 %v3401
        %v4177 = vunpack.c.h.b16 %v3401
        %v4178 = vunpack.c.l.b16 %v3402
        %v4179 = vunpack.c.h.b16 %v3402
        %v4180 = vunpack.c.l.b16 %v3403
        %v4181 = vunpack.c.h.b16 %v3403
        %v4182 = vunpack.c.l.b16 %v3404
        %v4183 = vunpack.c.h.b16 %v3404
        %v4184 = vunpack.c.l.b16 %v3405
        %v4185 = vunpack.c.h.b16 %v3405
        %v4186 = vunpack.c.l.b16 %v3406
        %v4187 = vunpack.c.h.b16 %v3406
        %v4188 = vunpack.c.l.b16 %v3407
        %v4189 = vunpack.c.h.b16 %v3407
        %v4190 = vunpack.c.l.b16 %v3408
        %v4191 = vunpack.c.h.b16 %v3408
        %v4192 = vunpack.c.l.b16 %v3409
        %v4193 = vunpack.c.h.b16 %v3409
        %v4194 = vunpack.c.l.b16 %v3410
        %v4195 = vunpack.c.h.b16 %v3410
        %v4196 = vunpack.c.l.b16 %v3411
        %v4197 = vunpack.c.h.b16 %v3411
        %v4198 = vunpack.c.l.b16 %v3412
        %v4199 = vunpack.c.h.b16 %v3412
        %v4200 = vunpack.c.l.b16 %v3413
        %v4201 = vunpack.c.h.b16 %v3413
        %v4202 = vunpack.c.l.b16 %v3414
        %v4203 = vunpack.c.h.b16 %v3414
        %v4204 = vunpack.c.l.b16 %v3415
        %v4205 = vunpack.c.h.b16 %v3415
        %v4206 = vunpack.c.l.b16 %v3416
        %v4207 = vunpack.c.h.b16 %v3416
        %v4208 = vunpack.c.l.b16 %v3417
        %v4209 = vunpack.c.h.b16 %v3417
        %v4210 = vunpack.c.l.b16 %v3418
        %v4211 = vunpack.c.h.b16 %v3418
        %v4212 = vunpack.c.l.b16 %v3419
        %v4213 = vunpack.c.h.b16 %v3419
        %v4214 = vunpack.c.l.b16 %v3420
        %v4215 = vunpack.c.h.b16 %v3420
        %v4216 = vunpack.c.l.b16 %v3421
        %v4217 = vunpack.c.h.b16 %v3421
        %v4218 = vunpack.c.l.b16 %v3422
        %v4219 = vunpack.c.h.b16 %v3422
        %v4220 = vunpack.c.l.b16 %v3423
        %v4221 = vunpack.c.h.b16 %v3423
        %v4222 = vunpack.c.l.b16 %v3424
        %v4223 = vunpack.c.h.b16 %v3424
        %v4224 = vunpack.c.l.b16 %v3425
        %v4225 = vunpack.c.h.b16 %v3425
        %v4226 = vunpack.c.l.b16 %v3426
        %v4227 = vunpack.c.h.b16 %v3426
        %v4228 = vunpack.c.l.b16 %v3427
        %v4229 = vunpack.c.h.b16 %v3427
        %v4230 = vunpack.c.l.b16 %v3428
        %v4231 = vunpack.c.h.b16 %v3428
        %v4232 = vunpack.c.l.b16 %v3429
        %v4233 = vunpack.c.h.b16 %v3429
        %v4234 = vunpack.c.l.b16 %v3430
        %v4235 = vunpack.c.h.b16 %v3430
        %v4236 = vunpack.c.l.b16 %v3431
        %v4237 = vunpack.c.h.b16 %v3431
        %v4238 = vunpack.c.l.b16 %v3432
        %v4239 = vunpack.c.h.b16 %v3432
        %v4240 = vunpack.c.l.b16 %v3433
        %v4241 = vunpack.c.h.b16 %v3433
        %v4242 = vunpack.c.l.b16 %v3434
        %v4243 = vunpack.c.h.b16 %v3434
        %v4244 = vunpack.c.l.b16 %v3435
        %v4245 = vunpack.c.h.b16 %v3435
        %v4246 = vunpack.c.l.b16 %v3436
        %v4247 = vunpack.c.h.b16 %v3436
        %v4248 = vunpack.c.l.b16 %v3437
        %v4249 = vunpack.c.h.b16 %v3437
        %v4250 = vunpack.c.l.b16 %v3438
        %v4251 = vunpack.c.h.b16 %v3438
        %v4252 = vunpack.c.l.b16 %v3439
        %v4253 = vunpack.c.h.b16 %v3439
        %v4254 = vunpack.c.l.b16 %v3440
        %v4255 = vunpack.c.h.b16 %v3440
        %v4256 = vunpack.c.l.b16 %v3441
        %v4257 = vunpack.c.h.b16 %v3441
        %v4258 = vunpack.c.l.b16 %v3442
        %v4259 = vunpack.c.h.b16 %v3442
        %v4260 = vunpack.c.l.b16 %v3443
        %v4261 = vunpack.c.h.b16 %v3443
        %v4262 = vunpack.c.l.b16 %v3444
        %v4263 = vunpack.c.h.b16 %v3444
        %v4264 = vunpack.c.l.b16 %v3445
        %v4265 = vunpack.c.h.b16 %v3445
        %v4266 = vunpack.c.l.b16 %v3446
        %v4267 = vunpack.c.h.b16 %v3446
        %v4268 = vunpack.c.l.b16 %v3447
        %v4269 = vunpack.c.h.b16 %v3447
        %v4270 = vpack.c.b16 %v4176, %v4174
        %v4271 = vpack.c.b16 %v4177, %v4175
        %v4272 = vpack.c.b16 %v4180, %v4178
        %v4273 = vpack.c.b16 %v4181, %v4179
        %v4274 = vpack.c.b16 %v4184, %v4182
        %v4275 = vpack.c.b16 %v4185, %v4183
        %v4276 = vpack.c.b16 %v4188, %v4186
        %v4277 = vpack.c.b16 %v4189, %v4187
        %v4278 = vpack.c.b16 %v4192, %v4190
        %v4279 = vpack.c.b16 %v4193, %v4191
        %v4280 = vpack.c.b16 %v4196, %v4194
        %v4281 = vpack.c.b16 %v4197, %v4195
        %v4282 = vpack.c.b16 %v4200, %v4198
        %v4283 = vpack.c.b16 %v4201, %v4199
        %v4284 = vpack.c.b16 %v4204, %v4202
        %v4285 = vpack.c.b16 %v4205, %v4203
        %v4286 = vpack.c.b16 %v4208, %v4206
        %v4287 = vpack.c.b16 %v4209, %v4207
        %v4288 = vpack.c.b16 %v4212, %v4210
        %v4289 = vpack.c.b16 %v4213, %v4211
        %v4290 = vpack.c.b16 %v4216, %v4214
        %v4291 = vpack.c.b16 %v4217, %v4215
        %v4292 = vpack.c.b16 %v4220, %v4218
        %v4293 = vpack.c.b16 %v4221, %v4219
        %v4294 = vpack.c.b16 %v4224, %v4222
        %v4295 = vpack.c.b16 %v4225, %v4223
        %v4296 = vpack.c.b16 %v4228, %v4226
        %v4297 = vpack.c.b16 %v4229, %v4227
        %v4298 = vpack.c.b16 %v4232, %v4230
        %v4299 = vpack.c.b16 %v4233, %v4231
        %v4300 = vpack.c.b16 %v4236, %v4234
        %v4301 = vpack.c.b16 %v4237, %v4235
        %v4302 = vpack.c.b16 %v4240, %v4238
        %v4303 = vpack.c.b16 %v4241, %v4239
        %v4304 = vpack.c.b16 %v4244, %v4242
        %v4305 = vpack.c.b16 %v4245, %v4243
        %v4306 = vpack.c.b16 %v4248, %v4246
        %v4307 = vpack.c.b16 %v4249, %v4247
        %v4308 = vpack.c.b16 %v4252, %v4250
        %v4309 = vpack.c.b16 %v4253, %v4251
        %v4310 = vpack.c.b16 %v4256, %v4254
        %v4311 = vpack.c.b16 %v4257, %v4255
        %v4312 = vpack.c.b16 %v4260, %v4258
        %v4313 = vpack.c.b16 %v4261, %v4259
        %v4314 = vpack.c.b16 %v4264, %v4262
        %v4315 = vpack.c.b16 %v4265, %v4263
        %v4316 = vpack.c.b16 %v4268, %v4266
        %v4317 = vpack.c.b16 %v4269, %v4267
        %4366 = vmatprep.subr.bf16.mxu0 %v4271
        %4367 = vmatpush1.bf16.msra.mxu0 %v4270
        %4368 = vmatprep.subr.bf16.mxu0 %v4273
        %4369 = vmatpush1.bf16.msra.mxu0 %v4272
        %4370 = vmatprep.subr.bf16.mxu0 %v4275
        %4371 = vmatpush1.bf16.msra.mxu0 %v4274
        %4372 = vmatprep.subr.bf16.mxu0 %v4277
        %4373 = vmatpush1.bf16.msra.mxu0 %v4276
        %4374 = vmatprep.subr.bf16.mxu0 %v4279
        %4375 = vmatpush1.bf16.msra.mxu0 %v4278
        %4376 = vmatprep.subr.bf16.mxu0 %v4281
        %4377 = vmatpush1.bf16.msra.mxu0 %v4280
        %4378 = vmatprep.subr.bf16.mxu0 %v4283
        %4379 = vmatpush1.bf16.msra.mxu0 %v4282
        %4380 = vmatprep.subr.bf16.mxu0 %v4285
        %4381 = vmatpush1.bf16.msra.mxu0 %v4284
        %4382 = vmatprep.subr.bf16.mxu0 %v4287
        %4383 = vmatpush1.bf16.msra.mxu0 %v4286
        %4384 = vmatprep.subr.bf16.mxu0 %v4289
        %4385 = vmatpush1.bf16.msra.mxu0 %v4288
        %4386 = vmatprep.subr.bf16.mxu0 %v4291
        %4387 = vmatpush1.bf16.msra.mxu0 %v4290
        %4388 = vmatprep.subr.bf16.mxu0 %v4293
        %4389 = vmatpush1.bf16.msra.mxu0 %v4292
        %4390 = vmatprep.subr.bf16.mxu0 %v4295
        %4391 = vmatpush1.bf16.msra.mxu0 %v4294
        %4392 = vmatprep.subr.bf16.mxu0 %v4297
        %4393 = vmatpush1.bf16.msra.mxu0 %v4296
        %4394 = vmatprep.subr.bf16.mxu0 %v4299
        %4395 = vmatpush1.bf16.msra.mxu0 %v4298
        %4396 = vmatprep.subr.bf16.mxu0 %v4301
        %4397 = vmatpush1.bf16.msra.mxu0 %v4300
        %4398 = vmatprep.mubr.bf16.mxu0 %v3353
        %4399 = vmatmul.mubr.bf16.gmra.mrb[0].mxu0 %v3352
        %v4400 = vpop.f32.mrb[0].mxu0
        %v4401 = vadd.f32 %v3968, %v4400
        %v4402 = vpop.f32.mrb[0].mxu0
        %v4403 = vadd.f32 %v3970, %v4402
        %v4404 = vpop.f32.mrb[0].mxu0
        %v4405 = vadd.f32 %v3972, %v4404
        %v4406 = vpop.f32.mrb[0].mxu0
        %v4407 = vadd.f32 %v3974, %v4406
        %4408 = vmatprep.mubr.bf16.mxu0 %v3356
        %4409 = vmatmul.mubr.bf16.gmra.mrb[0].mxu0 %v3355
        %v4410 = vpop.f32.mrb[0].mxu0
        %v4411 = vadd.f32 %v3978, %v4410
        %v4412 = vpop.f32.mrb[0].mxu0
        %v4413 = vadd.f32 %v3980, %v4412
        %v4414 = vpop.f32.mrb[0].mxu0
        %v4415 = vadd.f32 %v3982, %v4414
        %v4416 = vpop.f32.mrb[0].mxu0
        %v4417 = vadd.f32 %v3984, %v4416
        %4418 = vmatprep.mubr.bf16.mxu0 %v3359
        %4419 = vmatmul.mubr.bf16.gmra.mrb[0].mxu0 %v3358
        %v4420 = vpop.f32.mrb[0].mxu0
        %v4421 = vadd.f32 %v3988, %v4420
        %v4422 = vpop.f32.mrb[0].mxu0
        %v4423 = vadd.f32 %v3990, %v4422
        %v4424 = vpop.f32.mrb[0].mxu0
        %v4425 = vadd.f32 %v3992, %v4424
        %v4426 = vpop.f32.mrb[0].mxu0
        %v4427 = vadd.f32 %v3994, %v4426
        %4428 = vmatprep.mubr.bf16.mxu0 %v3362
        %4429 = vmatmul.mubr.bf16.gmra.mrb[0].mxu0 %v3361
        %v4430 = vpop.f32.mrb[0].mxu0
        %v4431 = vadd.f32 %v3998, %v4430
        %v4432 = vpop.f32.mrb[0].mxu0
        %v4433 = vadd.f32 %v4000, %v4432
        %v4434 = vpop.f32.mrb[0].mxu0
        %v4435 = vadd.f32 %v4002, %v4434
        %v4436 = vpop.f32.mrb[0].mxu0
        %v4437 = vadd.f32 %v4004, %v4436
        %4438 = vmatprep.mubr.bf16.mxu0 %v3365
        %4439 = vmatmul.mubr.bf16.gmra.mrb[0].mxu0 %v3364
        %v4440 = vpop.f32.mrb[0].mxu0
        %v4441 = vadd.f32 %v4008, %v4440
        %v4442 = vpop.f32.mrb[0].mxu0
        %v4443 = vadd.f32 %v4010, %v4442
        %v4444 = vpop.f32.mrb[0].mxu0
        %v4445 = vadd.f32 %v4012, %v4444
        %v4446 = vpop.f32.mrb[0].mxu0
        %v4447 = vadd.f32 %v4014, %v4446
        %4448 = vmatprep.mubr.bf16.mxu0 %v3368
        %4449 = vmatmul.mubr.bf16.gmra.mrb[0].mxu0 %v3367
        %v4450 = vpop.f32.mrb[0].mxu0
        %v4451 = vadd.f32 %v4018, %v4450
        %v4452 = vpop.f32.mrb[0].mxu0
        %v4453 = vadd.f32 %v4020, %v4452
        %v4454 = vpop.f32.mrb[0].mxu0
        %v4455 = vadd.f32 %v4022, %v4454
        %v4456 = vpop.f32.mrb[0].mxu0
        %v4457 = vadd.f32 %v4024, %v4456
        %4458 = vmatprep.mubr.bf16.mxu0 %v3371
        %4459 = vmatmul.mubr.bf16.gmra.mrb[0].mxu0 %v3370
        %v4460 = vpop.f32.mrb[0].mxu0
        %v4461 = vadd.f32 %v4028, %v4460
        %v4462 = vpop.f32.mrb[0].mxu0
        %v4463 = vadd.f32 %v4030, %v4462
        %v4464 = vpop.f32.mrb[0].mxu0
        %v4465 = vadd.f32 %v4032, %v4464
        %v4466 = vpop.f32.mrb[0].mxu0
        %v4467 = vadd.f32 %v4034, %v4466
        %4468 = vmatprep.mubr.bf16.mxu0 %v3374
        %4469 = vmatmul.mubr.bf16.gmra.mrb[0].mxu0 %v3373
        %v4470 = vpop.f32.mrb[0].mxu0
        %v4471 = vadd.f32 %v4038, %v4470
        %v4472 = vpop.f32.mrb[0].mxu0
        %v4473 = vadd.f32 %v4040, %v4472
        %v4474 = vpop.f32.mrb[0].mxu0
        %v4475 = vadd.f32 %v4042, %v4474
        %v4476 = vpop.f32.mrb[0].mxu0
        %v4477 = vadd.f32 %v4044, %v4476
        %4478 = vmatprep.mubr.bf16.mxu0 %v3377
        %4479 = vmatmul.mubr.bf16.gmra.mrb[0].mxu0 %v3376
        %v4480 = vpop.f32.mrb[0].mxu0
        %v4481 = vadd.f32 %v4048, %v4480
        %v4482 = vpop.f32.mrb[0].mxu0
        %v4483 = vadd.f32 %v4050, %v4482
        %v4484 = vpop.f32.mrb[0].mxu0
        %v4485 = vadd.f32 %v4052, %v4484
        %v4486 = vpop.f32.mrb[0].mxu0
        %v4487 = vadd.f32 %v4054, %v4486
        %4488 = vmatprep.mubr.bf16.mxu0 %v3380
        %4489 = vmatmul.mubr.bf16.gmra.mrb[0].mxu0 %v3379
        %v4490 = vpop.f32.mrb[0].mxu0
        %v4491 = vadd.f32 %v4058, %v4490
        %v4492 = vpop.f32.mrb[0].mxu0
        %v4493 = vadd.f32 %v4060, %v4492
        %v4494 = vpop.f32.mrb[0].mxu0
        %v4495 = vadd.f32 %v4062, %v4494
        %v4496 = vpop.f32.mrb[0].mxu0
        %v4497 = vadd.f32 %v4064, %v4496
        %4498 = vmatprep.mubr.bf16.mxu0 %v3383
        %4499 = vmatmul.mubr.bf16.gmra.mrb[0].mxu0 %v3382
        %v4500 = vpop.f32.mrb[0].mxu0
        %v4501 = vadd.f32 %v4068, %v4500
        %v4502 = vpop.f32.mrb[0].mxu0
        %v4503 = vadd.f32 %v4070, %v4502
        %v4504 = vpop.f32.mrb[0].mxu0
        %v4505 = vadd.f32 %v4072, %v4504
        %v4506 = vpop.f32.mrb[0].mxu0
        %v4507 = vadd.f32 %v4074, %v4506
        %4508 = vmatprep.mubr.bf16.mxu0 %v3386
        %4509 = vmatmul.mubr.bf16.gmra.mrb[0].mxu0 %v3385
        %v4510 = vpop.f32.mrb[0].mxu0
        %v4511 = vadd.f32 %v4078, %v4510
        %v4512 = vpop.f32.mrb[0].mxu0
        %v4513 = vadd.f32 %v4080, %v4512
        %v4514 = vpop.f32.mrb[0].mxu0
        %v4515 = vadd.f32 %v4082, %v4514
        %v4516 = vpop.f32.mrb[0].mxu0
        %v4517 = vadd.f32 %v4084, %v4516
        %4518 = vmatprep.mubr.bf16.mxu0 %v3389
        %4519 = vmatmul.mubr.bf16.gmra.mrb[0].mxu0 %v3388
        %v4520 = vpop.f32.mrb[0].mxu0
        %v4521 = vadd.f32 %v4088, %v4520
        %v4522 = vpop.f32.mrb[0].mxu0
        %v4523 = vadd.f32 %v4090, %v4522
        %v4524 = vpop.f32.mrb[0].mxu0
        %v4525 = vadd.f32 %v4092, %v4524
        %v4526 = vpop.f32.mrb[0].mxu0
        %v4527 = vadd.f32 %v4094, %v4526
        %4528 = vmatprep.mubr.bf16.mxu0 %v3392
        %4529 = vmatmul.mubr.bf16.gmra.mrb[0].mxu0 %v3391
        %v4530 = vpop.f32.mrb[0].mxu0
        %v4531 = vadd.f32 %v4098, %v4530
        %v4532 = vpop.f32.mrb[0].mxu0
        %v4533 = vadd.f32 %v4100, %v4532
        %v4534 = vpop.f32.mrb[0].mxu0
        %v4535 = vadd.f32 %v4102, %v4534
        %v4536 = vpop.f32.mrb[0].mxu0
        %v4537 = vadd.f32 %v4104, %v4536
        %4538 = vmatprep.mubr.bf16.mxu0 %v3395
        %4539 = vmatmul.mubr.bf16.gmra.mrb[0].mxu0 %v3394
        %v4540 = vpop.f32.mrb[0].mxu0
        %v4541 = vadd.f32 %v4108, %v4540
        %v4542 = vpop.f32.mrb[0].mxu0
        %v4543 = vadd.f32 %v4110, %v4542
        %v4544 = vpop.f32.mrb[0].mxu0
        %v4545 = vadd.f32 %v4112, %v4544
        %v4546 = vpop.f32.mrb[0].mxu0
        %v4547 = vadd.f32 %v4114, %v4546
        %4548 = vmatprep.mubr.bf16.mxu0 %v3398
        %4549 = vmatmul.mubr.bf16.gmra.mrb[0].mxu0 %v3397
        %v4550 = vpop.f32.mrb[0].mxu0
        %v4551 = vadd.f32 %v4118, %v4550
        %v4552 = vpop.f32.mrb[0].mxu0
        %v4553 = vadd.f32 %v4120, %v4552
        %v4554 = vpop.f32.mrb[0].mxu0
        %v4555 = vadd.f32 %v4122, %v4554
        %v4556 = vpop.f32.mrb[0].mxu0
        %v4557 = vadd.f32 %v4124, %v4556
        %4558 = vdwg.mxu0
        %4559 = vmatprep.subr.bf16.mxu0 %v4303
        %4560 = vmatpush1.bf16.msra.mxu0 %v4302
        %4561 = vmatprep.subr.bf16.mxu0 %v4305
        %4562 = vmatpush1.bf16.msra.mxu0 %v4304
        %4563 = vmatprep.subr.bf16.mxu0 %v4307
        %4564 = vmatpush1.bf16.msra.mxu0 %v4306
        %4565 = vmatprep.subr.bf16.mxu0 %v4309
        %4566 = vmatpush1.bf16.msra.mxu0 %v4308
        %4567 = vmatprep.subr.bf16.mxu0 %v4311
        %4568 = vmatpush1.bf16.msra.mxu0 %v4310
        %4569 = vmatprep.subr.bf16.mxu0 %v4313
        %4570 = vmatpush1.bf16.msra.mxu0 %v4312
        %4571 = vmatprep.subr.bf16.mxu0 %v4315
        %4572 = vmatpush1.bf16.msra.mxu0 %v4314
        %4573 = vmatprep.subr.bf16.mxu0 %v4317
        %4574 = vmatpush1.bf16.msra.mxu0 %v4316
        %4575 = vmatprep.subr.bf16.mxu0 0
        %4576 = vmatpush1.bf16.msra.mxu0 0
        %4577 = vmatprep.subr.bf16.mxu0 0
        %4578 = vmatpush1.bf16.msra.mxu0 0
        %4579 = vmatprep.subr.bf16.mxu0 0
        %4580 = vmatpush1.bf16.msra.mxu0 0
        %4581 = vmatprep.subr.bf16.mxu0 0
        %4582 = vmatpush1.bf16.msra.mxu0 0
        %4583 = vmatprep.subr.bf16.mxu0 0
        %4584 = vmatpush1.bf16.msra.mxu0 0
        %4585 = vmatprep.subr.bf16.mxu0 0
        %4586 = vmatpush1.bf16.msra.mxu0 0
        %4587 = vmatprep.subr.bf16.mxu0 0
        %4588 = vmatpush1.bf16.msra.mxu0 0
        %4589 = vmatprep.subr.bf16.mxu0 0
        %4590 = vmatpush1.bf16.msra.mxu0 0
        %4591 = vmatprep.mubr.bf16.mxu0 0
        %4592 = vmatmul.mubr.bf16.gmra.mrb[0].mxu0 %v3354
        %v4593 = vpop.f32.mrb[0].mxu0
        %v4594 = vadd.f32 %v4401, %v4593
        %v4595 = vpop.f32.mrb[0].mxu0
        %v4596 = vadd.f32 %v4403, %v4595
        %v4597 = vpop.f32.mrb[0].mxu0
        %v4598 = vadd.f32 %v4405, %v4597
        %v4599 = vpop.f32.mrb[0].mxu0
        %v4600 = vadd.f32 %v4407, %v4599
        %4601 = vmatprep.mubr.bf16.mxu0 0
        %4602 = vmatmul.mubr.bf16.gmra.mrb[0].mxu0 %v3357
        %v4603 = vpop.f32.mrb[0].mxu0
        %v4604 = vadd.f32 %v4411, %v4603
        %v4605 = vpop.f32.mrb[0].mxu0
        %v4606 = vadd.f32 %v4413, %v4605
        %v4607 = vpop.f32.mrb[0].mxu0
        %v4608 = vadd.f32 %v4415, %v4607
        %v4609 = vpop.f32.mrb[0].mxu0
        %v4610 = vadd.f32 %v4417, %v4609
        %4611 = vmatprep.mubr.bf16.mxu0 0
        %4612 = vmatmul.mubr.bf16.gmra.mrb[0].mxu0 %v3360
        %v4613 = vpop.f32.mrb[0].mxu0
        %v4614 = vadd.f32 %v4421, %v4613
        %v4615 = vpop.f32.mrb[0].mxu0
        %v4616 = vadd.f32 %v4423, %v4615
        %v4617 = vpop.f32.mrb[0].mxu0
        %v4618 = vadd.f32 %v4425, %v4617
        %v4619 = vpop.f32.mrb[0].mxu0
        %v4620 = vadd.f32 %v4427, %v4619
        %4621 = vmatprep.mubr.bf16.mxu0 0
        %4622 = vmatmul.mubr.bf16.gmra.mrb[0].mxu0 %v3363
        %v4623 = vpop.f32.mrb[0].mxu0
        %v4624 = vadd.f32 %v4431, %v4623
        %v4625 = vpop.f32.mrb[0].mxu0
        %v4626 = vadd.f32 %v4433, %v4625
        %v4627 = vpop.f32.mrb[0].mxu0
        %v4628 = vadd.f32 %v4435, %v4627
        %v4629 = vpop.f32.mrb[0].mxu0
        %v4630 = vadd.f32 %v4437, %v4629
        %4631 = vmatprep.mubr.bf16.mxu0 0
        %4632 = vmatmul.mubr.bf16.gmra.mrb[0].mxu0 %v3366
        %v4633 = vpop.f32.mrb[0].mxu0
        %v4634 = vadd.f32 %v4441, %v4633
        %v4635 = vpop.f32.mrb[0].mxu0
        %v4636 = vadd.f32 %v4443, %v4635
        %v4637 = vpop.f32.mrb[0].mxu0
        %v4638 = vadd.f32 %v4445, %v4637
        %v4639 = vpop.f32.mrb[0].mxu0
        %v4640 = vadd.f32 %v4447, %v4639
        %4641 = vmatprep.mubr.bf16.mxu0 0
        %4642 = vmatmul.mubr.bf16.gmra.mrb[0].mxu0 %v3369
        %v4643 = vpop.f32.mrb[0].mxu0
        %v4644 = vadd.f32 %v4451, %v4643
        %v4645 = vpop.f32.mrb[0].mxu0
        %v4646 = vadd.f32 %v4453, %v4645
        %v4647 = vpop.f32.mrb[0].mxu0
        %v4648 = vadd.f32 %v4455, %v4647
        %v4649 = vpop.f32.mrb[0].mxu0
        %v4650 = vadd.f32 %v4457, %v4649
        %4651 = vmatprep.mubr.bf16.mxu0 0
        %4652 = vmatmul.mubr.bf16.gmra.mrb[0].mxu0 %v3372
        %v4653 = vpop.f32.mrb[0].mxu0
        %v4654 = vadd.f32 %v4461, %v4653
        %v4655 = vpop.f32.mrb[0].mxu0
        %v4656 = vadd.f32 %v4463, %v4655
        %v4657 = vpop.f32.mrb[0].mxu0
        %v4658 = vadd.f32 %v4465, %v4657
        %v4659 = vpop.f32.mrb[0].mxu0
        %v4660 = vadd.f32 %v4467, %v4659
        %4661 = vmatprep.mubr.bf16.mxu0 0
        %4662 = vmatmul.mubr.bf16.gmra.mrb[0].mxu0 %v3375
        %v4663 = vpop.f32.mrb[0].mxu0
        %v4664 = vadd.f32 %v4471, %v4663
        %v4665 = vpop.f32.mrb[0].mxu0
        %v4666 = vadd.f32 %v4473, %v4665
        %v4667 = vpop.f32.mrb[0].mxu0
        %v4668 = vadd.f32 %v4475, %v4667
        %v4669 = vpop.f32.mrb[0].mxu0
        %v4670 = vadd.f32 %v4477, %v4669
        %4671 = vmatprep.mubr.bf16.mxu0 0
        %4672 = vmatmul.mubr.bf16.gmra.mrb[0].mxu0 %v3378
        %v4673 = vpop.f32.mrb[0].mxu0
        %v4674 = vadd.f32 %v4481, %v4673
        %v4675 = vpop.f32.mrb[0].mxu0
        %v4676 = vadd.f32 %v4483, %v4675
        %v4677 = vpop.f32.mrb[0].mxu0
        %v4678 = vadd.f32 %v4485, %v4677
        %v4679 = vpop.f32.mrb[0].mxu0
        %v4680 = vadd.f32 %v4487, %v4679
        %4681 = vmatprep.mubr.bf16.mxu0 0
        %4682 = vmatmul.mubr.bf16.gmra.mrb[0].mxu0 %v3381
        %v4683 = vpop.f32.mrb[0].mxu0
        %v4684 = vadd.f32 %v4491, %v4683
        %v4685 = vpop.f32.mrb[0].mxu0
        %v4686 = vadd.f32 %v4493, %v4685
        %v4687 = vpop.f32.mrb[0].mxu0
        %v4688 = vadd.f32 %v4495, %v4687
        %v4689 = vpop.f32.mrb[0].mxu0
        %v4690 = vadd.f32 %v4497, %v4689
        %4691 = vmatprep.mubr.bf16.mxu0 0
        %4692 = vmatmul.mubr.bf16.gmra.mrb[0].mxu0 %v3384
        %v4693 = vpop.f32.mrb[0].mxu0
        %v4694 = vadd.f32 %v4501, %v4693
        %v4695 = vpop.f32.mrb[0].mxu0
        %v4696 = vadd.f32 %v4503, %v4695
        %v4697 = vpop.f32.mrb[0].mxu0
        %v4698 = vadd.f32 %v4505, %v4697
        %v4699 = vpop.f32.mrb[0].mxu0
        %v4700 = vadd.f32 %v4507, %v4699
        %4701 = vmatprep.mubr.bf16.mxu0 0
        %4702 = vmatmul.mubr.bf16.gmra.mrb[0].mxu0 %v3387
        %v4703 = vpop.f32.mrb[0].mxu0
        %v4704 = vadd.f32 %v4511, %v4703
        %v4705 = vpop.f32.mrb[0].mxu0
        %v4706 = vadd.f32 %v4513, %v4705
        %v4707 = vpop.f32.mrb[0].mxu0
        %v4708 = vadd.f32 %v4515, %v4707
        %v4709 = vpop.f32.mrb[0].mxu0
        %v4710 = vadd.f32 %v4517, %v4709
        %4711 = vmatprep.mubr.bf16.mxu0 0
        %4712 = vmatmul.mubr.bf16.gmra.mrb[0].mxu0 %v3390
        %v4713 = vpop.f32.mrb[0].mxu0
        %v4714 = vadd.f32 %v4521, %v4713
        %v4715 = vpop.f32.mrb[0].mxu0
        %v4716 = vadd.f32 %v4523, %v4715
        %v4717 = vpop.f32.mrb[0].mxu0
        %v4718 = vadd.f32 %v4525, %v4717
        %v4719 = vpop.f32.mrb[0].mxu0
        %v4720 = vadd.f32 %v4527, %v4719
        %4721 = vmatprep.mubr.bf16.mxu0 0
        %4722 = vmatmul.mubr.bf16.gmra.mrb[0].mxu0 %v3393
        %v4723 = vpop.f32.mrb[0].mxu0
        %v4724 = vadd.f32 %v4531, %v4723
        %v4725 = vpop.f32.mrb[0].mxu0
        %v4726 = vadd.f32 %v4533, %v4725
        %v4727 = vpop.f32.mrb[0].mxu0
        %v4728 = vadd.f32 %v4535, %v4727
        %v4729 = vpop.f32.mrb[0].mxu0
        %v4730 = vadd.f32 %v4537, %v4729
        %4731 = vmatprep.mubr.bf16.mxu0 0
        %4732 = vmatmul.mubr.bf16.gmra.mrb[0].mxu0 %v3396
        %v4733 = vpop.f32.mrb[0].mxu0
        %v4734 = vadd.f32 %v4541, %v4733
        %v4735 = vpop.f32.mrb[0].mxu0
        %v4736 = vadd.f32 %v4543, %v4735
        %v4737 = vpop.f32.mrb[0].mxu0
        %v4738 = vadd.f32 %v4545, %v4737
        %v4739 = vpop.f32.mrb[0].mxu0
        %v4740 = vadd.f32 %v4547, %v4739
        %4741 = vmatprep.mubr.bf16.mxu0 0
        %4742 = vmatmul.mubr.bf16.gmra.mrb[0].mxu0 %v3399
        %v4743 = vpop.f32.mrb[0].mxu0
        %v4744 = vadd.f32 %v4551, %v4743
        %v4745 = vpop.f32.mrb[0].mxu0
        %v4746 = vadd.f32 %v4553, %v4745
        %v4747 = vpop.f32.mrb[0].mxu0
        %v4748 = vadd.f32 %v4555, %v4747
        %v4749 = vpop.f32.mrb[0].mxu0
        %v4750 = vadd.f32 %v4557, %v4749
        %4751 = vdwg.mxu0
        %v4752 = vld [vmem:[#allocation3 + $0x30] sm:$0xff]
        %v4753 = vld [vmem:[#allocation3 + $0x38] sm:$0xff]
        %v4754 = vld [vmem:[#allocation3 + $0x40] sm:$0xff]
        %v4755 = vld [vmem:[#allocation3 + $0x48] sm:$0xff]
        %v4756 = vld [vmem:[#allocation3 + $0x50] sm:$0xff]
        %v4757 = vld [vmem:[#allocation3 + $0x58] sm:$0xff]
        %v4758 = vld [vmem:[#allocation3 + $0x60] sm:$0xff]
        %v4759 = vld [vmem:[#allocation3 + $0x68] sm:$0xff]
        %v4760 = vld [vmem:[#allocation3 + $0x70] sm:$0xff]
        %v4761 = vld [vmem:[#allocation3 + $0x78] sm:$0xff]
        %v4762 = vld [vmem:[#allocation3 + $0x80] sm:$0xff]
        %v4763 = vld [vmem:[#allocation3 + $0x88] sm:$0xff]
        %v4764 = vld [vmem:[#allocation3 + $0x90] sm:$0xff]
        %v4765 = vld [vmem:[#allocation3 + $0x98] sm:$0xff]
        %v4766 = vld [vmem:[#allocation3 + $0xa0] sm:$0xff]
        %v4767 = vld [vmem:[#allocation3 + $0xa8] sm:$0xff]
        %v4768 = vld [vmem:[#allocation3 + $0xb0] sm:$0xff]
        %v4769 = vld [vmem:[#allocation3 + $0xb8] sm:$0xff]
        %v4770 = vld [vmem:[#allocation3 + $0xc0] sm:$0xff]
        %v4771 = vld [vmem:[#allocation3 + $0xc8] sm:$0xff]
        %v4772 = vld [vmem:[#allocation3 + $0xd0] sm:$0xff]
        %v4773 = vld [vmem:[#allocation3 + $0xd8] sm:$0xff]
        %v4774 = vld [vmem:[#allocation3 + $0xe0] sm:$0xff]
        %v4775 = vld [vmem:[#allocation3 + $0xe8] sm:$0xff]
        %v4776 = vld [vmem:[#allocation3 + $0xf0] sm:$0xff]
        %v4777 = vld [vmem:[#allocation3 + $0xf8] sm:$0xff]
        %v4778 = vld [vmem:[#allocation3 + $0x100] sm:$0xff]
        %v4779 = vld [vmem:[#allocation3 + $0x108] sm:$0xff]
        %v4780 = vld [vmem:[#allocation3 + $0x110] sm:$0xff]
        %v4781 = vld [vmem:[#allocation3 + $0x118] sm:$0xff]
        %v4782 = vld [vmem:[#allocation3 + $0x120] sm:$0xff]
        %v4783 = vld [vmem:[#allocation3 + $0x128] sm:$0xff]
        %v4784 = vld [vmem:[#allocation3 + $0x130] sm:$0xff]
        %v4785 = vld [vmem:[#allocation3 + $0x138] sm:$0xff]
        %v4786 = vld [vmem:[#allocation3 + $0x140] sm:$0xff]
        %v4787 = vld [vmem:[#allocation3 + $0x148] sm:$0xff]
        %v4788 = vld [vmem:[#allocation3 + $0x150] sm:$0xff]
        %v4789 = vld [vmem:[#allocation3 + $0x158] sm:$0xff]
        %v4790 = vld [vmem:[#allocation3 + $0x160] sm:$0xff]
        %v4791 = vld [vmem:[#allocation3 + $0x168] sm:$0xff]
        %v4792 = vld [vmem:[#allocation3 + $0x170] sm:$0xff]
        %v4793 = vld [vmem:[#allocation3 + $0x178] sm:$0xff]
        %v4794 = vld [vmem:[#allocation3 + $0x180] sm:$0xff]
        %v4795 = vld [vmem:[#allocation3 + $0x188] sm:$0xff]
        %v4796 = vld [vmem:[#allocation3 + $0x190] sm:$0xff]
        %v4797 = vld [vmem:[#allocation3 + $0x198] sm:$0xff]
        %v4798 = vld [vmem:[#allocation3 + $0x1a0] sm:$0xff]
        %v4799 = vld [vmem:[#allocation3 + $0x1a8] sm:$0xff]
        %s4800 = scalar_lea.vmem %s3, 768
        %v4801 = vld [vmem:[%s4800] sm:$0xff]
        %v4802 = vld [vmem:[%s4800 + $0x8] sm:$0xff]
        %v4803 = vld [vmem:[%s4800 + $0x10] sm:$0xff]
        %v4804 = vld [vmem:[%s4800 + $0x18] sm:$0xff]
        %v4805 = vld [vmem:[%s4800 + $0x20] sm:$0xff]
        %v4806 = vld [vmem:[%s4800 + $0x28] sm:$0xff]
        %v4807 = vld [vmem:[%s4800 + $0x30] sm:$0xff]
        %v4808 = vld [vmem:[%s4800 + $0x38] sm:$0xff]
        %v4809 = vld [vmem:[%s4800 + $0x40] sm:$0xff]
        %v4810 = vld [vmem:[%s4800 + $0x48] sm:$0xff]
        %v4811 = vld [vmem:[%s4800 + $0x50] sm:$0xff]
        %v4812 = vld [vmem:[%s4800 + $0x58] sm:$0xff]
        %v4813 = vld [vmem:[%s4800 + $0x60] sm:$0xff]
        %v4814 = vld [vmem:[%s4800 + $0x68] sm:$0xff]
        %v4815 = vld [vmem:[%s4800 + $0x70] sm:$0xff]
        %v4816 = vld [vmem:[%s4800 + $0x78] sm:$0xff]
        %v4817 = vld [vmem:[%s4800 + $0x80] sm:$0xff]
        %v4818 = vld [vmem:[%s4800 + $0x88] sm:$0xff]
        %v4819 = vld [vmem:[%s4800 + $0x90] sm:$0xff]
        %v4820 = vld [vmem:[%s4800 + $0x98] sm:$0xff]
        %v4821 = vld [vmem:[%s4800 + $0xa0] sm:$0xff]
        %v4822 = vld [vmem:[%s4800 + $0xa8] sm:$0xff]
        %v4823 = vld [vmem:[%s4800 + $0xb0] sm:$0xff]
        %v4824 = vld [vmem:[%s4800 + $0xb8] sm:$0xff]
        %v4825 = vld [vmem:[%s4800 + $0xc0] sm:$0xff]
        %v4826 = vld [vmem:[%s4800 + $0xc8] sm:$0xff]
        %v4827 = vld [vmem:[%s4800 + $0xd0] sm:$0xff]
        %v4828 = vld [vmem:[%s4800 + $0xd8] sm:$0xff]
        %v4829 = vld [vmem:[%s4800 + $0xe0] sm:$0xff]
        %v4830 = vld [vmem:[%s4800 + $0xe8] sm:$0xff]
        %v4831 = vld [vmem:[%s4800 + $0xf0] sm:$0xff]
        %v4832 = vld [vmem:[%s4800 + $0xf8] sm:$0xff]
        %v4833 = vld [vmem:[%s4800 + $0x100] sm:$0xff]
        %v4834 = vld [vmem:[%s4800 + $0x108] sm:$0xff]
        %v4835 = vld [vmem:[%s4800 + $0x110] sm:$0xff]
        %v4836 = vld [vmem:[%s4800 + $0x118] sm:$0xff]
        %v4837 = vld [vmem:[%s4800 + $0x120] sm:$0xff]
        %v4838 = vld [vmem:[%s4800 + $0x128] sm:$0xff]
        %v4839 = vld [vmem:[%s4800 + $0x130] sm:$0xff]
        %v4840 = vld [vmem:[%s4800 + $0x138] sm:$0xff]
        %v4841 = vld [vmem:[%s4800 + $0x140] sm:$0xff]
        %v4842 = vld [vmem:[%s4800 + $0x148] sm:$0xff]
        %v4843 = vld [vmem:[%s4800 + $0x150] sm:$0xff]
        %v4844 = vld [vmem:[%s4800 + $0x158] sm:$0xff]
        %v4845 = vld [vmem:[%s4800 + $0x160] sm:$0xff]
        %v4846 = vld [vmem:[%s4800 + $0x168] sm:$0xff]
        %v4847 = vld [vmem:[%s4800 + $0x170] sm:$0xff]
        %v4848 = vld [vmem:[%s4800 + $0x178] sm:$0xff]
        %v4897 = vunpack.c.l.b16 %v4801
        %v4898 = vunpack.c.h.b16 %v4801
        %v4899 = vunpack.c.l.b16 %v4802
        %v4900 = vunpack.c.h.b16 %v4802
        %v4901 = vunpack.c.l.b16 %v4803
        %v4902 = vunpack.c.h.b16 %v4803
        %v4903 = vunpack.c.l.b16 %v4804
        %v4904 = vunpack.c.h.b16 %v4804
        %v4905 = vunpack.c.l.b16 %v4805
        %v4906 = vunpack.c.h.b16 %v4805
        %v4907 = vunpack.c.l.b16 %v4806
        %v4908 = vunpack.c.h.b16 %v4806
        %v4909 = vunpack.c.l.b16 %v4807
        %v4910 = vunpack.c.h.b16 %v4807
        %v4911 = vunpack.c.l.b16 %v4808
        %v4912 = vunpack.c.h.b16 %v4808
        %v4913 = vunpack.c.l.b16 %v4809
        %v4914 = vunpack.c.h.b16 %v4809
        %v4915 = vunpack.c.l.b16 %v4810
        %v4916 = vunpack.c.h.b16 %v4810
        %v4917 = vunpack.c.l.b16 %v4811
        %v4918 = vunpack.c.h.b16 %v4811
        %v4919 = vunpack.c.l.b16 %v4812
        %v4920 = vunpack.c.h.b16 %v4812
        %v4921 = vunpack.c.l.b16 %v4813
        %v4922 = vunpack.c.h.b16 %v4813
        %v4923 = vunpack.c.l.b16 %v4814
        %v4924 = vunpack.c.h.b16 %v4814
        %v4925 = vunpack.c.l.b16 %v4815
        %v4926 = vunpack.c.h.b16 %v4815
        %v4927 = vunpack.c.l.b16 %v4816
        %v4928 = vunpack.c.h.b16 %v4816
        %v4929 = vunpack.c.l.b16 %v4817
        %v4930 = vunpack.c.h.b16 %v4817
        %v4931 = vunpack.c.l.b16 %v4818
        %v4932 = vunpack.c.h.b16 %v4818
        %v4933 = vunpack.c.l.b16 %v4819
        %v4934 = vunpack.c.h.b16 %v4819
        %v4935 = vunpack.c.l.b16 %v4820
        %v4936 = vunpack.c.h.b16 %v4820
        %v4937 = vunpack.c.l.b16 %v4821
        %v4938 = vunpack.c.h.b16 %v4821
        %v4939 = vunpack.c.l.b16 %v4822
        %v4940 = vunpack.c.h.b16 %v4822
        %v4941 = vunpack.c.l.b16 %v4823
        %v4942 = vunpack.c.h.b16 %v4823
        %v4943 = vunpack.c.l.b16 %v4824
        %v4944 = vunpack.c.h.b16 %v4824
        %v4945 = vunpack.c.l.b16 %v4825
        %v4946 = vunpack.c.h.b16 %v4825
        %v4947 = vunpack.c.l.b16 %v4826
        %v4948 = vunpack.c.h.b16 %v4826
        %v4949 = vunpack.c.l.b16 %v4827
        %v4950 = vunpack.c.h.b16 %v4827
        %v4951 = vunpack.c.l.b16 %v4828
        %v4952 = vunpack.c.h.b16 %v4828
        %v4953 = vunpack.c.l.b16 %v4829
        %v4954 = vunpack.c.h.b16 %v4829
        %v4955 = vunpack.c.l.b16 %v4830
        %v4956 = vunpack.c.h.b16 %v4830
        %v4957 = vunpack.c.l.b16 %v4831
        %v4958 = vunpack.c.h.b16 %v4831
        %v4959 = vunpack.c.l.b16 %v4832
        %v4960 = vunpack.c.h.b16 %v4832
        %v4961 = vunpack.c.l.b16 %v4833
        %v4962 = vunpack.c.h.b16 %v4833
        %v4963 = vunpack.c.l.b16 %v4834
        %v4964 = vunpack.c.h.b16 %v4834
        %v4965 = vunpack.c.l.b16 %v4835
        %v4966 = vunpack.c.h.b16 %v4835
        %v4967 = vunpack.c.l.b16 %v4836
        %v4968 = vunpack.c.h.b16 %v4836
        %v4969 = vunpack.c.l.b16 %v4837
        %v4970 = vunpack.c.h.b16 %v4837
        %v4971 = vunpack.c.l.b16 %v4838
        %v4972 = vunpack.c.h.b16 %v4838
        %v4973 = vunpack.c.l.b16 %v4839
        %v4974 = vunpack.c.h.b16 %v4839
        %v4975 = vunpack.c.l.b16 %v4840
        %v4976 = vunpack.c.h.b16 %v4840
        %v4977 = vunpack.c.l.b16 %v4841
        %v4978 = vunpack.c.h.b16 %v4841
        %v4979 = vunpack.c.l.b16 %v4842
        %v4980 = vunpack.c.h.b16 %v4842
        %v4981 = vunpack.c.l.b16 %v4843
        %v4982 = vunpack.c.h.b16 %v4843
        %v4983 = vunpack.c.l.b16 %v4844
        %v4984 = vunpack.c.h.b16 %v4844
        %v4985 = vunpack.c.l.b16 %v4845
        %v4986 = vunpack.c.h.b16 %v4845
        %v4987 = vunpack.c.l.b16 %v4846
        %v4988 = vunpack.c.h.b16 %v4846
        %v4989 = vunpack.c.l.b16 %v4847
        %v4990 = vunpack.c.h.b16 %v4847
        %v4991 = vunpack.c.l.b16 %v4848
        %v4992 = vunpack.c.h.b16 %v4848
        %v4993 = vpack.c.b16 %v4899, %v4897
        %v4994 = vpack.c.b16 %v4900, %v4898
        %v4995 = vpack.c.b16 %v4903, %v4901
        %v4996 = vpack.c.b16 %v4904, %v4902
        %v4997 = vpack.c.b16 %v4907, %v4905
        %v4998 = vpack.c.b16 %v4908, %v4906
        %v4999 = vpack.c.b16 %v4911, %v4909
        %v5000 = vpack.c.b16 %v4912, %v4910
        %v5001 = vpack.c.b16 %v4915, %v4913
        %v5002 = vpack.c.b16 %v4916, %v4914
        %v5003 = vpack.c.b16 %v4919, %v4917
        %v5004 = vpack.c.b16 %v4920, %v4918
        %v5005 = vpack.c.b16 %v4923, %v4921
        %v5006 = vpack.c.b16 %v4924, %v4922
        %v5007 = vpack.c.b16 %v4927, %v4925
        %v5008 = vpack.c.b16 %v4928, %v4926
        %v5009 = vpack.c.b16 %v4931, %v4929
        %v5010 = vpack.c.b16 %v4932, %v4930
        %v5011 = vpack.c.b16 %v4935, %v4933
        %v5012 = vpack.c.b16 %v4936, %v4934
        %v5013 = vpack.c.b16 %v4939, %v4937
        %v5014 = vpack.c.b16 %v4940, %v4938
        %v5015 = vpack.c.b16 %v4943, %v4941
        %v5016 = vpack.c.b16 %v4944, %v4942
        %v5017 = vpack.c.b16 %v4947, %v4945
        %v5018 = vpack.c.b16 %v4948, %v4946
        %v5019 = vpack.c.b16 %v4951, %v4949
        %v5020 = vpack.c.b16 %v4952, %v4950
        %v5021 = vpack.c.b16 %v4955, %v4953
        %v5022 = vpack.c.b16 %v4956, %v4954
        %v5023 = vpack.c.b16 %v4959, %v4957
        %v5024 = vpack.c.b16 %v4960, %v4958
        %v5025 = vpack.c.b16 %v4963, %v4961
        %v5026 = vpack.c.b16 %v4964, %v4962
        %v5027 = vpack.c.b16 %v4967, %v4965
        %v5028 = vpack.c.b16 %v4968, %v4966
        %v5029 = vpack.c.b16 %v4971, %v4969
        %v5030 = vpack.c.b16 %v4972, %v4970
        %v5031 = vpack.c.b16 %v4975, %v4973
        %v5032 = vpack.c.b16 %v4976, %v4974
        %v5033 = vpack.c.b16 %v4979, %v4977
        %v5034 = vpack.c.b16 %v4980, %v4978
        %v5035 = vpack.c.b16 %v4983, %v4981
        %v5036 = vpack.c.b16 %v4984, %v4982
        %v5037 = vpack.c.b16 %v4987, %v4985
        %v5038 = vpack.c.b16 %v4988, %v4986
        %v5039 = vpack.c.b16 %v4991, %v4989
        %v5040 = vpack.c.b16 %v4992, %v4990
        %5089 = vmatprep.subr.bf16.mxu0 %v4994
        %5090 = vmatpush1.bf16.msra.mxu0 %v4993
        %5091 = vmatprep.subr.bf16.mxu0 %v4996
        %5092 = vmatpush1.bf16.msra.mxu0 %v4995
        %5093 = vmatprep.subr.bf16.mxu0 %v4998
        %5094 = vmatpush1.bf16.msra.mxu0 %v4997
        %5095 = vmatprep.subr.bf16.mxu0 %v5000
        %5096 = vmatpush1.bf16.msra.mxu0 %v4999
        %5097 = vmatprep.subr.bf16.mxu0 %v5002
        %5098 = vmatpush1.bf16.msra.mxu0 %v5001
        %5099 = vmatprep.subr.bf16.mxu0 %v5004
        %5100 = vmatpush1.bf16.msra.mxu0 %v5003
        %5101 = vmatprep.subr.bf16.mxu0 %v5006
        %5102 = vmatpush1.bf16.msra.mxu0 %v5005
        %5103 = vmatprep.subr.bf16.mxu0 %v5008
        %5104 = vmatpush1.bf16.msra.mxu0 %v5007
        %5105 = vmatprep.subr.bf16.mxu0 %v5010
        %5106 = vmatpush1.bf16.msra.mxu0 %v5009
        %5107 = vmatprep.subr.bf16.mxu0 %v5012
        %5108 = vmatpush1.bf16.msra.mxu0 %v5011
        %5109 = vmatprep.subr.bf16.mxu0 %v5014
        %5110 = vmatpush1.bf16.msra.mxu0 %v5013
        %5111 = vmatprep.subr.bf16.mxu0 %v5016
        %5112 = vmatpush1.bf16.msra.mxu0 %v5015
        %5113 = vmatprep.subr.bf16.mxu0 %v5018
        %5114 = vmatpush1.bf16.msra.mxu0 %v5017
        %5115 = vmatprep.subr.bf16.mxu0 %v5020
        %5116 = vmatpush1.bf16.msra.mxu0 %v5019
        %5117 = vmatprep.subr.bf16.mxu0 %v5022
        %5118 = vmatpush1.bf16.msra.mxu0 %v5021
        %5119 = vmatprep.subr.bf16.mxu0 %v5024
        %5120 = vmatpush1.bf16.msra.mxu0 %v5023
        %5121 = vmatprep.mubr.bf16.mxu0 %v4753
        %5122 = vmatmul.mubr.bf16.gmra.mrb[0].mxu0 %v4752
        %v5123 = vpop.f32.mrb[0].mxu0
        %v5124 = vadd.f32 0.0, %v5123
        %v5125 = vpop.f32.mrb[0].mxu0
        %v5126 = vadd.f32 0.0, %v5125
        %v5127 = vpop.f32.mrb[0].mxu0
        %v5128 = vadd.f32 0.0, %v5127
        %v5129 = vpop.f32.mrb[0].mxu0
        %v5130 = vadd.f32 0.0, %v5129
        %5131 = vmatprep.mubr.bf16.mxu0 %v4756
        %5132 = vmatmul.mubr.bf16.gmra.mrb[0].mxu0 %v4755
        %v5133 = vpop.f32.mrb[0].mxu0
        %v5134 = vadd.f32 0.0, %v5133
        %v5135 = vpop.f32.mrb[0].mxu0
        %v5136 = vadd.f32 0.0, %v5135
        %v5137 = vpop.f32.mrb[0].mxu0
        %v5138 = vadd.f32 0.0, %v5137
        %v5139 = vpop.f32.mrb[0].mxu0
        %v5140 = vadd.f32 0.0, %v5139
        %5141 = vmatprep.mubr.bf16.mxu0 %v4759
        %5142 = vmatmul.mubr.bf16.gmra.mrb[0].mxu0 %v4758
        %v5143 = vpop.f32.mrb[0].mxu0
        %v5144 = vadd.f32 0.0, %v5143
        %v5145 = vpop.f32.mrb[0].mxu0
        %v5146 = vadd.f32 0.0, %v5145
        %v5147 = vpop.f32.mrb[0].mxu0
        %v5148 = vadd.f32 0.0, %v5147
        %v5149 = vpop.f32.mrb[0].mxu0
        %v5150 = vadd.f32 0.0, %v5149
        %5151 = vmatprep.mubr.bf16.mxu0 %v4762
        %5152 = vmatmul.mubr.bf16.gmra.mrb[0].mxu0 %v4761
        %v5153 = vpop.f32.mrb[0].mxu0
        %v5154 = vadd.f32 0.0, %v5153
        %v5155 = vpop.f32.mrb[0].mxu0
        %v5156 = vadd.f32 0.0, %v5155
        %v5157 = vpop.f32.mrb[0].mxu0
        %v5158 = vadd.f32 0.0, %v5157
        %v5159 = vpop.f32.mrb[0].mxu0
        %v5160 = vadd.f32 0.0, %v5159
        %5161 = vmatprep.mubr.bf16.mxu0 %v4765
        %5162 = vmatmul.mubr.bf16.gmra.mrb[0].mxu0 %v4764
        %v5163 = vpop.f32.mrb[0].mxu0
        %v5164 = vadd.f32 0.0, %v5163
        %v5165 = vpop.f32.mrb[0].mxu0
        %v5166 = vadd.f32 0.0, %v5165
        %v5167 = vpop.f32.mrb[0].mxu0
        %v5168 = vadd.f32 0.0, %v5167
        %v5169 = vpop.f32.mrb[0].mxu0
        %v5170 = vadd.f32 0.0, %v5169
        %5171 = vmatprep.mubr.bf16.mxu0 %v4768
        %5172 = vmatmul.mubr.bf16.gmra.mrb[0].mxu0 %v4767
        %v5173 = vpop.f32.mrb[0].mxu0
        %v5174 = vadd.f32 0.0, %v5173
        %v5175 = vpop.f32.mrb[0].mxu0
        %v5176 = vadd.f32 0.0, %v5175
        %v5177 = vpop.f32.mrb[0].mxu0
        %v5178 = vadd.f32 0.0, %v5177
        %v5179 = vpop.f32.mrb[0].mxu0
        %v5180 = vadd.f32 0.0, %v5179
        %5181 = vmatprep.mubr.bf16.mxu0 %v4771
        %5182 = vmatmul.mubr.bf16.gmra.mrb[0].mxu0 %v4770
        %v5183 = vpop.f32.mrb[0].mxu0
        %v5184 = vadd.f32 0.0, %v5183
        %v5185 = vpop.f32.mrb[0].mxu0
        %v5186 = vadd.f32 0.0, %v5185
        %v5187 = vpop.f32.mrb[0].mxu0
        %v5188 = vadd.f32 0.0, %v5187
        %v5189 = vpop.f32.mrb[0].mxu0
        %v5190 = vadd.f32 0.0, %v5189
        %5191 = vmatprep.mubr.bf16.mxu0 %v4774
        %5192 = vmatmul.mubr.bf16.gmra.mrb[0].mxu0 %v4773
        %v5193 = vpop.f32.mrb[0].mxu0
        %v5194 = vadd.f32 0.0, %v5193
        %v5195 = vpop.f32.mrb[0].mxu0
        %v5196 = vadd.f32 0.0, %v5195
        %v5197 = vpop.f32.mrb[0].mxu0
        %v5198 = vadd.f32 0.0, %v5197
        %v5199 = vpop.f32.mrb[0].mxu0
        %v5200 = vadd.f32 0.0, %v5199
        %5201 = vmatprep.mubr.bf16.mxu0 %v4777
        %5202 = vmatmul.mubr.bf16.gmra.mrb[0].mxu0 %v4776
        %v5203 = vpop.f32.mrb[0].mxu0
        %v5204 = vadd.f32 0.0, %v5203
        %v5205 = vpop.f32.mrb[0].mxu0
        %v5206 = vadd.f32 0.0, %v5205
        %v5207 = vpop.f32.mrb[0].mxu0
        %v5208 = vadd.f32 0.0, %v5207
        %v5209 = vpop.f32.mrb[0].mxu0
        %v5210 = vadd.f32 0.0, %v5209
        %5211 = vmatprep.mubr.bf16.mxu0 %v4780
        %5212 = vmatmul.mubr.bf16.gmra.mrb[0].mxu0 %v4779
        %v5213 = vpop.f32.mrb[0].mxu0
        %v5214 = vadd.f32 0.0, %v5213
        %v5215 = vpop.f32.mrb[0].mxu0
        %v5216 = vadd.f32 0.0, %v5215
        %v5217 = vpop.f32.mrb[0].mxu0
        %v5218 = vadd.f32 0.0, %v5217
        %v5219 = vpop.f32.mrb[0].mxu0
        %v5220 = vadd.f32 0.0, %v5219
        %5221 = vmatprep.mubr.bf16.mxu0 %v4783
        %5222 = vmatmul.mubr.bf16.gmra.mrb[0].mxu0 %v4782
        %v5223 = vpop.f32.mrb[0].mxu0
        %v5224 = vadd.f32 0.0, %v5223
        %v5225 = vpop.f32.mrb[0].mxu0
        %v5226 = vadd.f32 0.0, %v5225
        %v5227 = vpop.f32.mrb[0].mxu0
        %v5228 = vadd.f32 0.0, %v5227
        %v5229 = vpop.f32.mrb[0].mxu0
        %v5230 = vadd.f32 0.0, %v5229
        %5231 = vmatprep.mubr.bf16.mxu0 %v4786
        %5232 = vmatmul.mubr.bf16.gmra.mrb[0].mxu0 %v4785
        %v5233 = vpop.f32.mrb[0].mxu0
        %v5234 = vadd.f32 0.0, %v5233
        %v5235 = vpop.f32.mrb[0].mxu0
        %v5236 = vadd.f32 0.0, %v5235
        %v5237 = vpop.f32.mrb[0].mxu0
        %v5238 = vadd.f32 0.0, %v5237
        %v5239 = vpop.f32.mrb[0].mxu0
        %v5240 = vadd.f32 0.0, %v5239
        %5241 = vmatprep.mubr.bf16.mxu0 %v4789
        %5242 = vmatmul.mubr.bf16.gmra.mrb[0].mxu0 %v4788
        %v5243 = vpop.f32.mrb[0].mxu0
        %v5244 = vadd.f32 0.0, %v5243
        %v5245 = vpop.f32.mrb[0].mxu0
        %v5246 = vadd.f32 0.0, %v5245
        %v5247 = vpop.f32.mrb[0].mxu0
        %v5248 = vadd.f32 0.0, %v5247
        %v5249 = vpop.f32.mrb[0].mxu0
        %v5250 = vadd.f32 0.0, %v5249
        %5251 = vmatprep.mubr.bf16.mxu0 %v4792
        %5252 = vmatmul.mubr.bf16.gmra.mrb[0].mxu0 %v4791
        %v5253 = vpop.f32.mrb[0].mxu0
        %v5254 = vadd.f32 0.0, %v5253
        %v5255 = vpop.f32.mrb[0].mxu0
        %v5256 = vadd.f32 0.0, %v5255
        %v5257 = vpop.f32.mrb[0].mxu0
        %v5258 = vadd.f32 0.0, %v5257
        %v5259 = vpop.f32.mrb[0].mxu0
        %v5260 = vadd.f32 0.0, %v5259
        %5261 = vmatprep.mubr.bf16.mxu0 %v4795
        %5262 = vmatmul.mubr.bf16.gmra.mrb[0].mxu0 %v4794
        %v5263 = vpop.f32.mrb[0].mxu0
        %v5264 = vadd.f32 0.0, %v5263
        %v5265 = vpop.f32.mrb[0].mxu0
        %v5266 = vadd.f32 0.0, %v5265
        %v5267 = vpop.f32.mrb[0].mxu0
        %v5268 = vadd.f32 0.0, %v5267
        %v5269 = vpop.f32.mrb[0].mxu0
        %v5270 = vadd.f32 0.0, %v5269
        %5271 = vmatprep.mubr.bf16.mxu0 %v4798
        %5272 = vmatmul.mubr.bf16.gmra.mrb[0].mxu0 %v4797
        %v5273 = vpop.f32.mrb[0].mxu0
        %v5274 = vadd.f32 0.0, %v5273
        %v5275 = vpop.f32.mrb[0].mxu0
        %v5276 = vadd.f32 0.0, %v5275
        %v5277 = vpop.f32.mrb[0].mxu0
        %v5278 = vadd.f32 0.0, %v5277
        %v5279 = vpop.f32.mrb[0].mxu0
        %v5280 = vadd.f32 0.0, %v5279
        %5281 = vdwg.mxu0
        %5282 = vmatprep.subr.bf16.mxu0 %v5026
        %5283 = vmatpush1.bf16.msra.mxu0 %v5025
        %5284 = vmatprep.subr.bf16.mxu0 %v5028
        %5285 = vmatpush1.bf16.msra.mxu0 %v5027
        %5286 = vmatprep.subr.bf16.mxu0 %v5030
        %5287 = vmatpush1.bf16.msra.mxu0 %v5029
        %5288 = vmatprep.subr.bf16.mxu0 %v5032
        %5289 = vmatpush1.bf16.msra.mxu0 %v5031
        %5290 = vmatprep.subr.bf16.mxu0 %v5034
        %5291 = vmatpush1.bf16.msra.mxu0 %v5033
        %5292 = vmatprep.subr.bf16.mxu0 %v5036
        %5293 = vmatpush1.bf16.msra.mxu0 %v5035
        %5294 = vmatprep.subr.bf16.mxu0 %v5038
        %5295 = vmatpush1.bf16.msra.mxu0 %v5037
        %5296 = vmatprep.subr.bf16.mxu0 %v5040
        %5297 = vmatpush1.bf16.msra.mxu0 %v5039
        %5298 = vmatprep.subr.bf16.mxu0 0
        %5299 = vmatpush1.bf16.msra.mxu0 0
        %5300 = vmatprep.subr.bf16.mxu0 0
        %5301 = vmatpush1.bf16.msra.mxu0 0
        %5302 = vmatprep.subr.bf16.mxu0 0
        %5303 = vmatpush1.bf16.msra.mxu0 0
        %5304 = vmatprep.subr.bf16.mxu0 0
        %5305 = vmatpush1.bf16.msra.mxu0 0
        %5306 = vmatprep.subr.bf16.mxu0 0
        %5307 = vmatpush1.bf16.msra.mxu0 0
        %5308 = vmatprep.subr.bf16.mxu0 0
        %5309 = vmatpush1.bf16.msra.mxu0 0
        %5310 = vmatprep.subr.bf16.mxu0 0
        %5311 = vmatpush1.bf16.msra.mxu0 0
        %5312 = vmatprep.subr.bf16.mxu0 0
        %5313 = vmatpush1.bf16.msra.mxu0 0
        %5314 = vmatprep.mubr.bf16.mxu0 0
        %5315 = vmatmul.mubr.bf16.gmra.mrb[0].mxu0 %v4754
        %v5316 = vpop.f32.mrb[0].mxu0
        %v5317 = vadd.f32 %v5124, %v5316
        %v5318 = vpop.f32.mrb[0].mxu0
        %v5319 = vadd.f32 %v5126, %v5318
        %v5320 = vpop.f32.mrb[0].mxu0
        %v5321 = vadd.f32 %v5128, %v5320
        %v5322 = vpop.f32.mrb[0].mxu0
        %v5323 = vadd.f32 %v5130, %v5322
        %5324 = vmatprep.mubr.bf16.mxu0 0
        %5325 = vmatmul.mubr.bf16.gmra.mrb[0].mxu0 %v4757
        %v5326 = vpop.f32.mrb[0].mxu0
        %v5327 = vadd.f32 %v5134, %v5326
        %v5328 = vpop.f32.mrb[0].mxu0
        %v5329 = vadd.f32 %v5136, %v5328
        %v5330 = vpop.f32.mrb[0].mxu0
        %v5331 = vadd.f32 %v5138, %v5330
        %v5332 = vpop.f32.mrb[0].mxu0
        %v5333 = vadd.f32 %v5140, %v5332
        %5334 = vmatprep.mubr.bf16.mxu0 0
        %5335 = vmatmul.mubr.bf16.gmra.mrb[0].mxu0 %v4760
        %v5336 = vpop.f32.mrb[0].mxu0
        %v5337 = vadd.f32 %v5144, %v5336
        %v5338 = vpop.f32.mrb[0].mxu0
        %v5339 = vadd.f32 %v5146, %v5338
        %v5340 = vpop.f32.mrb[0].mxu0
        %v5341 = vadd.f32 %v5148, %v5340
        %v5342 = vpop.f32.mrb[0].mxu0
        %v5343 = vadd.f32 %v5150, %v5342
        %5344 = vmatprep.mubr.bf16.mxu0 0
        %5345 = vmatmul.mubr.bf16.gmra.mrb[0].mxu0 %v4763
        %v5346 = vpop.f32.mrb[0].mxu0
        %v5347 = vadd.f32 %v5154, %v5346
        %v5348 = vpop.f32.mrb[0].mxu0
        %v5349 = vadd.f32 %v5156, %v5348
        %v5350 = vpop.f32.mrb[0].mxu0
        %v5351 = vadd.f32 %v5158, %v5350
        %v5352 = vpop.f32.mrb[0].mxu0
        %v5353 = vadd.f32 %v5160, %v5352
        %5354 = vmatprep.mubr.bf16.mxu0 0
        %5355 = vmatmul.mubr.bf16.gmra.mrb[0].mxu0 %v4766
        %v5356 = vpop.f32.mrb[0].mxu0
        %v5357 = vadd.f32 %v5164, %v5356
        %v5358 = vpop.f32.mrb[0].mxu0
        %v5359 = vadd.f32 %v5166, %v5358
        %v5360 = vpop.f32.mrb[0].mxu0
        %v5361 = vadd.f32 %v5168, %v5360
        %v5362 = vpop.f32.mrb[0].mxu0
        %v5363 = vadd.f32 %v5170, %v5362
        %5364 = vmatprep.mubr.bf16.mxu0 0
        %5365 = vmatmul.mubr.bf16.gmra.mrb[0].mxu0 %v4769
        %v5366 = vpop.f32.mrb[0].mxu0
        %v5367 = vadd.f32 %v5174, %v5366
        %v5368 = vpop.f32.mrb[0].mxu0
        %v5369 = vadd.f32 %v5176, %v5368
        %v5370 = vpop.f32.mrb[0].mxu0
        %v5371 = vadd.f32 %v5178, %v5370
        %v5372 = vpop.f32.mrb[0].mxu0
        %v5373 = vadd.f32 %v5180, %v5372
        %5374 = vmatprep.mubr.bf16.mxu0 0
        %5375 = vmatmul.mubr.bf16.gmra.mrb[0].mxu0 %v4772
        %v5376 = vpop.f32.mrb[0].mxu0
        %v5377 = vadd.f32 %v5184, %v5376
        %v5378 = vpop.f32.mrb[0].mxu0
        %v5379 = vadd.f32 %v5186, %v5378
        %v5380 = vpop.f32.mrb[0].mxu0
        %v5381 = vadd.f32 %v5188, %v5380
        %v5382 = vpop.f32.mrb[0].mxu0
        %v5383 = vadd.f32 %v5190, %v5382
        %5384 = vmatprep.mubr.bf16.mxu0 0
        %5385 = vmatmul.mubr.bf16.gmra.mrb[0].mxu0 %v4775
        %v5386 = vpop.f32.mrb[0].mxu0
        %v5387 = vadd.f32 %v5194, %v5386
        %v5388 = vpop.f32.mrb[0].mxu0
        %v5389 = vadd.f32 %v5196, %v5388
        %v5390 = vpop.f32.mrb[0].mxu0
        %v5391 = vadd.f32 %v5198, %v5390
        %v5392 = vpop.f32.mrb[0].mxu0
        %v5393 = vadd.f32 %v5200, %v5392
        %5394 = vmatprep.mubr.bf16.mxu0 0
        %5395 = vmatmul.mubr.bf16.gmra.mrb[0].mxu0 %v4778
        %v5396 = vpop.f32.mrb[0].mxu0
        %v5397 = vadd.f32 %v5204, %v5396
        %v5398 = vpop.f32.mrb[0].mxu0
        %v5399 = vadd.f32 %v5206, %v5398
        %v5400 = vpop.f32.mrb[0].mxu0
        %v5401 = vadd.f32 %v5208, %v5400
        %v5402 = vpop.f32.mrb[0].mxu0
        %v5403 = vadd.f32 %v5210, %v5402
        %5404 = vmatprep.mubr.bf16.mxu0 0
        %5405 = vmatmul.mubr.bf16.gmra.mrb[0].mxu0 %v4781
        %v5406 = vpop.f32.mrb[0].mxu0
        %v5407 = vadd.f32 %v5214, %v5406
        %v5408 = vpop.f32.mrb[0].mxu0
        %v5409 = vadd.f32 %v5216, %v5408
        %v5410 = vpop.f32.mrb[0].mxu0
        %v5411 = vadd.f32 %v5218, %v5410
        %v5412 = vpop.f32.mrb[0].mxu0
        %v5413 = vadd.f32 %v5220, %v5412
        %5414 = vmatprep.mubr.bf16.mxu0 0
        %5415 = vmatmul.mubr.bf16.gmra.mrb[0].mxu0 %v4784
        %v5416 = vpop.f32.mrb[0].mxu0
        %v5417 = vadd.f32 %v5224, %v5416
        %v5418 = vpop.f32.mrb[0].mxu0
        %v5419 = vadd.f32 %v5226, %v5418
        %v5420 = vpop.f32.mrb[0].mxu0
        %v5421 = vadd.f32 %v5228, %v5420
        %v5422 = vpop.f32.mrb[0].mxu0
        %v5423 = vadd.f32 %v5230, %v5422
        %5424 = vmatprep.mubr.bf16.mxu0 0
        %5425 = vmatmul.mubr.bf16.gmra.mrb[0].mxu0 %v4787
        %v5426 = vpop.f32.mrb[0].mxu0
        %v5427 = vadd.f32 %v5234, %v5426
        %v5428 = vpop.f32.mrb[0].mxu0
        %v5429 = vadd.f32 %v5236, %v5428
        %v5430 = vpop.f32.mrb[0].mxu0
        %v5431 = vadd.f32 %v5238, %v5430
        %v5432 = vpop.f32.mrb[0].mxu0
        %v5433 = vadd.f32 %v5240, %v5432
        %5434 = vmatprep.mubr.bf16.mxu0 0
        %5435 = vmatmul.mubr.bf16.gmra.mrb[0].mxu0 %v4790
        %v5436 = vpop.f32.mrb[0].mxu0
        %v5437 = vadd.f32 %v5244, %v5436
        %v5438 = vpop.f32.mrb[0].mxu0
        %v5439 = vadd.f32 %v5246, %v5438
        %v5440 = vpop.f32.mrb[0].mxu0
        %v5441 = vadd.f32 %v5248, %v5440
        %v5442 = vpop.f32.mrb[0].mxu0
        %v5443 = vadd.f32 %v5250, %v5442
        %5444 = vmatprep.mubr.bf16.mxu0 0
        %5445 = vmatmul.mubr.bf16.gmra.mrb[0].mxu0 %v4793
        %v5446 = vpop.f32.mrb[0].mxu0
        %v5447 = vadd.f32 %v5254, %v5446
        %v5448 = vpop.f32.mrb[0].mxu0
        %v5449 = vadd.f32 %v5256, %v5448
        %v5450 = vpop.f32.mrb[0].mxu0
        %v5451 = vadd.f32 %v5258, %v5450
        %v5452 = vpop.f32.mrb[0].mxu0
        %v5453 = vadd.f32 %v5260, %v5452
        %5454 = vmatprep.mubr.bf16.mxu0 0
        %5455 = vmatmul.mubr.bf16.gmra.mrb[0].mxu0 %v4796
        %v5456 = vpop.f32.mrb[0].mxu0
        %v5457 = vadd.f32 %v5264, %v5456
        %v5458 = vpop.f32.mrb[0].mxu0
        %v5459 = vadd.f32 %v5266, %v5458
        %v5460 = vpop.f32.mrb[0].mxu0
        %v5461 = vadd.f32 %v5268, %v5460
        %v5462 = vpop.f32.mrb[0].mxu0
        %v5463 = vadd.f32 %v5270, %v5462
        %5464 = vmatprep.mubr.bf16.mxu0 0
        %5465 = vmatmul.mubr.bf16.gmra.mrb[0].mxu0 %v4799
        %v5466 = vpop.f32.mrb[0].mxu0
        %v5467 = vadd.f32 %v5274, %v5466
        %v5468 = vpop.f32.mrb[0].mxu0
        %v5469 = vadd.f32 %v5276, %v5468
        %v5470 = vpop.f32.mrb[0].mxu0
        %v5471 = vadd.f32 %v5278, %v5470
        %v5472 = vpop.f32.mrb[0].mxu0
        %v5473 = vadd.f32 %v5280, %v5472
        %5474 = vdwg.mxu0
        %v5475 = vadd.f32 %v4594, %v5317
        %v5476 = vadd.f32 %v4596, %v5319
        %v5477 = vadd.f32 %v4598, %v5321
        %v5478 = vadd.f32 %v4600, %v5323
        %v5479 = vadd.f32 %v4604, %v5327
        %v5480 = vadd.f32 %v4606, %v5329
        %v5481 = vadd.f32 %v4608, %v5331
        %v5482 = vadd.f32 %v4610, %v5333
        %v5483 = vadd.f32 %v4614, %v5337
        %v5484 = vadd.f32 %v4616, %v5339
        %v5485 = vadd.f32 %v4618, %v5341
        %v5486 = vadd.f32 %v4620, %v5343
        %v5487 = vadd.f32 %v4624, %v5347
        %v5488 = vadd.f32 %v4626, %v5349
        %v5489 = vadd.f32 %v4628, %v5351
        %v5490 = vadd.f32 %v4630, %v5353
        %v5491 = vadd.f32 %v4634, %v5357
        %v5492 = vadd.f32 %v4636, %v5359
        %v5493 = vadd.f32 %v4638, %v5361
        %v5494 = vadd.f32 %v4640, %v5363
        %v5495 = vadd.f32 %v4644, %v5367
        %v5496 = vadd.f32 %v4646, %v5369
        %v5497 = vadd.f32 %v4648, %v5371
        %v5498 = vadd.f32 %v4650, %v5373
        %v5499 = vadd.f32 %v4654, %v5377
        %v5500 = vadd.f32 %v4656, %v5379
        %v5501 = vadd.f32 %v4658, %v5381
        %v5502 = vadd.f32 %v4660, %v5383
        %v5503 = vadd.f32 %v4664, %v5387
        %v5504 = vadd.f32 %v4666, %v5389
        %v5505 = vadd.f32 %v4668, %v5391
        %v5506 = vadd.f32 %v4670, %v5393
        %v5507 = vadd.f32 %v4674, %v5397
        %v5508 = vadd.f32 %v4676, %v5399
        %v5509 = vadd.f32 %v4678, %v5401
        %v5510 = vadd.f32 %v4680, %v5403
        %v5511 = vadd.f32 %v4684, %v5407
        %v5512 = vadd.f32 %v4686, %v5409
        %v5513 = vadd.f32 %v4688, %v5411
        %v5514 = vadd.f32 %v4690, %v5413
        %v5515 = vadd.f32 %v4694, %v5417
        %v5516 = vadd.f32 %v4696, %v5419
        %v5517 = vadd.f32 %v4698, %v5421
        %v5518 = vadd.f32 %v4700, %v5423
        %v5519 = vadd.f32 %v4704, %v5427
        %v5520 = vadd.f32 %v4706, %v5429
        %v5521 = vadd.f32 %v4708, %v5431
        %v5522 = vadd.f32 %v4710, %v5433
        %v5523 = vadd.f32 %v4714, %v5437
        %v5524 = vadd.f32 %v4716, %v5439
        %v5525 = vadd.f32 %v4718, %v5441
        %v5526 = vadd.f32 %v4720, %v5443
        %v5527 = vadd.f32 %v4724, %v5447
        %v5528 = vadd.f32 %v4726, %v5449
        %v5529 = vadd.f32 %v4728, %v5451
        %v5530 = vadd.f32 %v4730, %v5453
        %v5531 = vadd.f32 %v4734, %v5457
        %v5532 = vadd.f32 %v4736, %v5459
        %v5533 = vadd.f32 %v4738, %v5461
        %v5534 = vadd.f32 %v4740, %v5463
        %v5535 = vadd.f32 %v4744, %v5467
        %v5536 = vadd.f32 %v4746, %v5469
        %v5537 = vadd.f32 %v4748, %v5471
        %v5538 = vadd.f32 %v4750, %v5473
        %v5539 = vld [vmem:[%s4] sm:$0x1]
        %v5541 = vlaneseq
        %v5542 = vshrl.u32 %v5541, 7
        %v5543 = vsub.s32 0, %v5542
        %v5544 = vrot.slane %v5539, %v5543
        %v5546 = vmul.f32 %v3288, %v5544
        %v5547 = vmul.f32 %v3290, %v5544
        %v5548 = vmul.f32 %v3292, %v5544
        %v5549 = vmul.f32 %v3294, %v5544
        %v5550 = vmul.f32 %v3296, %v5544
        %v5551 = vmul.f32 %v3298, %v5544
        %v5552 = vmul.f32 %v3300, %v5544
        %v5553 = vmul.f32 %v3302, %v5544
        %v5554 = vmul.f32 %v3304, %v5544
        %v5555 = vmul.f32 %v3306, %v5544
        %v5556 = vmul.f32 %v3308, %v5544
        %v5557 = vmul.f32 %v3310, %v5544
        %v5558 = vmul.f32 %v3312, %v5544
        %v5559 = vmul.f32 %v3314, %v5544
        %v5560 = vmul.f32 %v3316, %v5544
        %v5561 = vmul.f32 %v3318, %v5544
        %v5562 = vmul.f32 %v3320, %v5544
        %v5563 = vmul.f32 %v3322, %v5544
        %v5564 = vmul.f32 %v3324, %v5544
        %v5565 = vmul.f32 %v3326, %v5544
        %v5566 = vmul.f32 %v3328, %v5544
        %v5567 = vmul.f32 %v3330, %v5544
        %v5568 = vmul.f32 %v3332, %v5544
        %v5569 = vmul.f32 %v3334, %v5544
        %v5570 = vmul.f32 %v3336, %v5544
        %v5571 = vmul.f32 %v3338, %v5544
        %v5572 = vmul.f32 %v3340, %v5544
        %v5573 = vmul.f32 %v3342, %v5544
        %v5574 = vmul.f32 %v3344, %v5544
        %v5575 = vmul.f32 %v3346, %v5544
        %v5576 = vmul.f32 %v3348, %v5544
        %v5577 = vmul.f32 %v3350, %v5544
        %v5578 = vld [vmem:[%s5] sm:$0x1]
        %v5580 = vlaneseq
        %v5581 = vshrl.u32 %v5580, 7
        %v5582 = vsub.s32 0, %v5581
        %v5583 = vrot.slane %v5578, %v5582
        %v5585 = vadd.f32 %v5546, %v5583
        %v5586 = vadd.f32 %v5547, %v5583
        %v5587 = vadd.f32 %v5548, %v5583
        %v5588 = vadd.f32 %v5549, %v5583
        %v5589 = vadd.f32 %v5550, %v5583
        %v5590 = vadd.f32 %v5551, %v5583
        %v5591 = vadd.f32 %v5552, %v5583
        %v5592 = vadd.f32 %v5553, %v5583
        %v5593 = vadd.f32 %v5554, %v5583
        %v5594 = vadd.f32 %v5555, %v5583
        %v5595 = vadd.f32 %v5556, %v5583
        %v5596 = vadd.f32 %v5557, %v5583
        %v5597 = vadd.f32 %v5558, %v5583
        %v5598 = vadd.f32 %v5559, %v5583
        %v5599 = vadd.f32 %v5560, %v5583
        %v5600 = vadd.f32 %v5561, %v5583
        %v5601 = vadd.f32 %v5562, %v5583
        %v5602 = vadd.f32 %v5563, %v5583
        %v5603 = vadd.f32 %v5564, %v5583
        %v5604 = vadd.f32 %v5565, %v5583
        %v5605 = vadd.f32 %v5566, %v5583
        %v5606 = vadd.f32 %v5567, %v5583
        %v5607 = vadd.f32 %v5568, %v5583
        %v5608 = vadd.f32 %v5569, %v5583
        %v5609 = vadd.f32 %v5570, %v5583
        %v5610 = vadd.f32 %v5571, %v5583
        %v5611 = vadd.f32 %v5572, %v5583
        %v5612 = vadd.f32 %v5573, %v5583
        %v5613 = vadd.f32 %v5574, %v5583
        %v5614 = vadd.f32 %v5575, %v5583
        %v5615 = vadd.f32 %v5576, %v5583
        %v5616 = vadd.f32 %v5577, %v5583
        %v5617 = vmax.f32 %v5585, 0.0
        %v5618 = vmax.f32 %v5586, 0.0
        %v5619 = vmax.f32 %v5587, 0.0
        %v5620 = vmax.f32 %v5588, 0.0
        %v5621 = vmax.f32 %v5589, 0.0
        %v5622 = vmax.f32 %v5590, 0.0
        %v5623 = vmax.f32 %v5591, 0.0
        %v5624 = vmax.f32 %v5592, 0.0
        %v5625 = vmax.f32 %v5593, 0.0
        %v5626 = vmax.f32 %v5594, 0.0
        %v5627 = vmax.f32 %v5595, 0.0
        %v5628 = vmax.f32 %v5596, 0.0
        %v5629 = vmax.f32 %v5597, 0.0
        %v5630 = vmax.f32 %v5598, 0.0
        %v5631 = vmax.f32 %v5599, 0.0
        %v5632 = vmax.f32 %v5600, 0.0
        %v5633 = vmax.f32 %v5601, 0.0
        %v5634 = vmax.f32 %v5602, 0.0
        %v5635 = vmax.f32 %v5603, 0.0
        %v5636 = vmax.f32 %v5604, 0.0
        %v5637 = vmax.f32 %v5605, 0.0
        %v5638 = vmax.f32 %v5606, 0.0
        %v5639 = vmax.f32 %v5607, 0.0
        %v5640 = vmax.f32 %v5608, 0.0
        %v5641 = vmax.f32 %v5609, 0.0
        %v5642 = vmax.f32 %v5610, 0.0
        %v5643 = vmax.f32 %v5611, 0.0
        %v5644 = vmax.f32 %v5612, 0.0
        %v5645 = vmax.f32 %v5613, 0.0
        %v5646 = vmax.f32 %v5614, 0.0
        %v5647 = vmax.f32 %v5615, 0.0
        %v5648 = vmax.f32 %v5616, 0.0
        %5649 = vst [vmem:[#allocation4] sm:$0xff] %v5617
        %5650 = vst [vmem:[#allocation4 + $0x10] sm:$0xff] %v5618
        %5651 = vst [vmem:[#allocation4 + $0x20] sm:$0xff] %v5619
        %5652 = vst [vmem:[#allocation4 + $0x30] sm:$0xff] %v5620
        %5653 = vst [vmem:[#allocation4 + $0x40] sm:$0xff] %v5621
        %5654 = vst [vmem:[#allocation4 + $0x50] sm:$0xff] %v5622
        %5655 = vst [vmem:[#allocation4 + $0x60] sm:$0xff] %v5623
        %5656 = vst [vmem:[#allocation4 + $0x70] sm:$0xff] %v5624
        %5657 = vst [vmem:[#allocation4 + $0x80] sm:$0xff] %v5625
        %5658 = vst [vmem:[#allocation4 + $0x90] sm:$0xff] %v5626
        %5659 = vst [vmem:[#allocation4 + $0xa0] sm:$0xff] %v5627
        %5660 = vst [vmem:[#allocation4 + $0xb0] sm:$0xff] %v5628
        %5661 = vst [vmem:[#allocation4 + $0xc0] sm:$0xff] %v5629
        %5662 = vst [vmem:[#allocation4 + $0xd0] sm:$0xff] %v5630
        %5663 = vst [vmem:[#allocation4 + $0xe0] sm:$0xff] %v5631
        %5664 = vst [vmem:[#allocation4 + $0xf0] sm:$0xff] %v5632
        %5665 = vst [vmem:[#allocation4 + $0x100] sm:$0xff] %v5633
        %5666 = vst [vmem:[#allocation4 + $0x110] sm:$0xff] %v5634
        %5667 = vst [vmem:[#allocation4 + $0x120] sm:$0xff] %v5635
        %5668 = vst [vmem:[#allocation4 + $0x130] sm:$0xff] %v5636
        %5669 = vst [vmem:[#allocation4 + $0x140] sm:$0xff] %v5637
        %5670 = vst [vmem:[#allocation4 + $0x150] sm:$0xff] %v5638
        %5671 = vst [vmem:[#allocation4 + $0x160] sm:$0xff] %v5639
        %5672 = vst [vmem:[#allocation4 + $0x170] sm:$0xff] %v5640
        %5673 = vst [vmem:[#allocation4 + $0x180] sm:$0xff] %v5641
        %5674 = vst [vmem:[#allocation4 + $0x190] sm:$0xff] %v5642
        %5675 = vst [vmem:[#allocation4 + $0x1a0] sm:$0xff] %v5643
        %5676 = vst [vmem:[#allocation4 + $0x1b0] sm:$0xff] %v5644
        %5677 = vst [vmem:[#allocation4 + $0x1c0] sm:$0xff] %v5645
        %5678 = vst [vmem:[#allocation4 + $0x1d0] sm:$0xff] %v5646
        %5679 = vst [vmem:[#allocation4 + $0x1e0] sm:$0xff] %v5647
        %5680 = vst [vmem:[#allocation4 + $0x1f0] sm:$0xff] %v5648
        %s5681 = scalar_lea.vmem %s4, 1
        %v5682 = vld [vmem:[%s5681] sm:$0x1]
        %v5684 = vlaneseq
        %v5685 = vshrl.u32 %v5684, 7
        %v5686 = vsub.s32 0, %v5685
        %v5687 = vrot.slane %v5682, %v5686
        %v5689 = vmul.f32 %v5475, %v5687
        %v5690 = vmul.f32 %v5477, %v5687
        %v5691 = vmul.f32 %v5479, %v5687
        %v5692 = vmul.f32 %v5481, %v5687
        %v5693 = vmul.f32 %v5483, %v5687
        %v5694 = vmul.f32 %v5485, %v5687
        %v5695 = vmul.f32 %v5487, %v5687
        %v5696 = vmul.f32 %v5489, %v5687
        %v5697 = vmul.f32 %v5491, %v5687
        %v5698 = vmul.f32 %v5493, %v5687
        %v5699 = vmul.f32 %v5495, %v5687
        %v5700 = vmul.f32 %v5497, %v5687
        %v5701 = vmul.f32 %v5499, %v5687
        %v5702 = vmul.f32 %v5501, %v5687
        %v5703 = vmul.f32 %v5503, %v5687
        %v5704 = vmul.f32 %v5505, %v5687
        %v5705 = vmul.f32 %v5507, %v5687
        %v5706 = vmul.f32 %v5509, %v5687
        %v5707 = vmul.f32 %v5511, %v5687
        %v5708 = vmul.f32 %v5513, %v5687
        %v5709 = vmul.f32 %v5515, %v5687
        %v5710 = vmul.f32 %v5517, %v5687
        %v5711 = vmul.f32 %v5519, %v5687
        %v5712 = vmul.f32 %v5521, %v5687
        %v5713 = vmul.f32 %v5523, %v5687
        %v5714 = vmul.f32 %v5525, %v5687
        %v5715 = vmul.f32 %v5527, %v5687
        %v5716 = vmul.f32 %v5529, %v5687
        %v5717 = vmul.f32 %v5531, %v5687
        %v5718 = vmul.f32 %v5533, %v5687
        %v5719 = vmul.f32 %v5535, %v5687
        %v5720 = vmul.f32 %v5537, %v5687
        %s5721 = scalar_lea.vmem %s5, 1
        %v5722 = vld [vmem:[%s5721] sm:$0x1]
        %v5724 = vlaneseq
        %v5725 = vshrl.u32 %v5724, 7
        %v5726 = vsub.s32 0, %v5725
        %v5727 = vrot.slane %v5722, %v5726
        %v5729 = vadd.f32 %v5689, %v5727
        %v5730 = vadd.f32 %v5690, %v5727
        %v5731 = vadd.f32 %v5691, %v5727
        %v5732 = vadd.f32 %v5692, %v5727
        %v5733 = vadd.f32 %v5693, %v5727
        %v5734 = vadd.f32 %v5694, %v5727
        %v5735 = vadd.f32 %v5695, %v5727
        %v5736 = vadd.f32 %v5696, %v5727
        %v5737 = vadd.f32 %v5697, %v5727
        %v5738 = vadd.f32 %v5698, %v5727
        %v5739 = vadd.f32 %v5699, %v5727
        %v5740 = vadd.f32 %v5700, %v5727
        %v5741 = vadd.f32 %v5701, %v5727
        %v5742 = vadd.f32 %v5702, %v5727
        %v5743 = vadd.f32 %v5703, %v5727
        %v5744 = vadd.f32 %v5704, %v5727
        %v5745 = vadd.f32 %v5705, %v5727
        %v5746 = vadd.f32 %v5706, %v5727
        %v5747 = vadd.f32 %v5707, %v5727
        %v5748 = vadd.f32 %v5708, %v5727
        %v5749 = vadd.f32 %v5709, %v5727
        %v5750 = vadd.f32 %v5710, %v5727
        %v5751 = vadd.f32 %v5711, %v5727
        %v5752 = vadd.f32 %v5712, %v5727
        %v5753 = vadd.f32 %v5713, %v5727
        %v5754 = vadd.f32 %v5714, %v5727
        %v5755 = vadd.f32 %v5715, %v5727
        %v5756 = vadd.f32 %v5716, %v5727
        %v5757 = vadd.f32 %v5717, %v5727
        %v5758 = vadd.f32 %v5718, %v5727
        %v5759 = vadd.f32 %v5719, %v5727
        %v5760 = vadd.f32 %v5720, %v5727
        %v5761 = vmax.f32 %v5729, 0.0
        %v5762 = vmax.f32 %v5730, 0.0
        %v5763 = vmax.f32 %v5731, 0.0
        %v5764 = vmax.f32 %v5732, 0.0
        %v5765 = vmax.f32 %v5733, 0.0
        %v5766 = vmax.f32 %v5734, 0.0
        %v5767 = vmax.f32 %v5735, 0.0
        %v5768 = vmax.f32 %v5736, 0.0
        %v5769 = vmax.f32 %v5737, 0.0
        %v5770 = vmax.f32 %v5738, 0.0
        %v5771 = vmax.f32 %v5739, 0.0
        %v5772 = vmax.f32 %v5740, 0.0
        %v5773 = vmax.f32 %v5741, 0.0
        %v5774 = vmax.f32 %v5742, 0.0
        %v5775 = vmax.f32 %v5743, 0.0
        %v5776 = vmax.f32 %v5744, 0.0
        %v5777 = vmax.f32 %v5745, 0.0
        %v5778 = vmax.f32 %v5746, 0.0
        %v5779 = vmax.f32 %v5747, 0.0
        %v5780 = vmax.f32 %v5748, 0.0
        %v5781 = vmax.f32 %v5749, 0.0
        %v5782 = vmax.f32 %v5750, 0.0
        %v5783 = vmax.f32 %v5751, 0.0
        %v5784 = vmax.f32 %v5752, 0.0
        %v5785 = vmax.f32 %v5753, 0.0
        %v5786 = vmax.f32 %v5754, 0.0
        %v5787 = vmax.f32 %v5755, 0.0
        %v5788 = vmax.f32 %v5756, 0.0
        %v5789 = vmax.f32 %v5757, 0.0
        %v5790 = vmax.f32 %v5758, 0.0
        %v5791 = vmax.f32 %v5759, 0.0
        %v5792 = vmax.f32 %v5760, 0.0
        %5793 = vst [vmem:[#allocation5] sm:$0xff] %v5761
        %5794 = vst [vmem:[#allocation5 + $0x8] sm:$0xff] %v5762
        %5795 = vst [vmem:[#allocation5 + $0x10] sm:$0xff] %v5763
        %5796 = vst [vmem:[#allocation5 + $0x18] sm:$0xff] %v5764
        %5797 = vst [vmem:[#allocation5 + $0x20] sm:$0xff] %v5765
        %5798 = vst [vmem:[#allocation5 + $0x28] sm:$0xff] %v5766
        %5799 = vst [vmem:[#allocation5 + $0x30] sm:$0xff] %v5767
        %5800 = vst [vmem:[#allocation5 + $0x38] sm:$0xff] %v5768
        %5801 = vst [vmem:[#allocation5 + $0x40] sm:$0xff] %v5769
        %5802 = vst [vmem:[#allocation5 + $0x48] sm:$0xff] %v5770
        %5803 = vst [vmem:[#allocation5 + $0x50] sm:$0xff] %v5771
        %5804 = vst [vmem:[#allocation5 + $0x58] sm:$0xff] %v5772
        %5805 = vst [vmem:[#allocation5 + $0x60] sm:$0xff] %v5773
        %5806 = vst [vmem:[#allocation5 + $0x68] sm:$0xff] %v5774
        %5807 = vst [vmem:[#allocation5 + $0x70] sm:$0xff] %v5775
        %5808 = vst [vmem:[#allocation5 + $0x78] sm:$0xff] %v5776
        %5809 = vst [vmem:[#allocation5 + $0x80] sm:$0xff] %v5777
        %5810 = vst [vmem:[#allocation5 + $0x88] sm:$0xff] %v5778
        %5811 = vst [vmem:[#allocation5 + $0x90] sm:$0xff] %v5779
        %5812 = vst [vmem:[#allocation5 + $0x98] sm:$0xff] %v5780
        %5813 = vst [vmem:[#allocation5 + $0xa0] sm:$0xff] %v5781
        %5814 = vst [vmem:[#allocation5 + $0xa8] sm:$0xff] %v5782
        %5815 = vst [vmem:[#allocation5 + $0xb0] sm:$0xff] %v5783
        %5816 = vst [vmem:[#allocation5 + $0xb8] sm:$0xff] %v5784
        %5817 = vst [vmem:[#allocation5 + $0xc0] sm:$0xff] %v5785
        %5818 = vst [vmem:[#allocation5 + $0xc8] sm:$0xff] %v5786
        %5819 = vst [vmem:[#allocation5 + $0xd0] sm:$0xff] %v5787
        %5820 = vst [vmem:[#allocation5 + $0xd8] sm:$0xff] %v5788
        %5821 = vst [vmem:[#allocation5 + $0xe0] sm:$0xff] %v5789
        %5822 = vst [vmem:[#allocation5 + $0xe8] sm:$0xff] %v5790
        %5823 = vst [vmem:[#allocation5 + $0xf0] sm:$0xff] %v5791
        %5824 = vst [vmem:[#allocation5 + $0xf8] sm:$0xff] %v5792
        %v5825 = vadd.f32 %v3289, %v5476
        %v5826 = vadd.f32 %v3291, %v5478
        %v5827 = vadd.f32 %v3293, %v5480
        %v5828 = vadd.f32 %v3295, %v5482
        %v5829 = vadd.f32 %v3297, %v5484
        %v5830 = vadd.f32 %v3299, %v5486
        %v5831 = vadd.f32 %v3301, %v5488
        %v5832 = vadd.f32 %v3303, %v5490
        %v5833 = vadd.f32 %v3305, %v5492
        %v5834 = vadd.f32 %v3307, %v5494
        %v5835 = vadd.f32 %v3309, %v5496
        %v5836 = vadd.f32 %v3311, %v5498
        %v5837 = vadd.f32 %v3313, %v5500
        %v5838 = vadd.f32 %v3315, %v5502
        %v5839 = vadd.f32 %v3317, %v5504
        %v5840 = vadd.f32 %v3319, %v5506
        %v5841 = vadd.f32 %v3321, %v5508
        %v5842 = vadd.f32 %v3323, %v5510
        %v5843 = vadd.f32 %v3325, %v5512
        %v5844 = vadd.f32 %v3327, %v5514
        %v5845 = vadd.f32 %v3329, %v5516
        %v5846 = vadd.f32 %v3331, %v5518
        %v5847 = vadd.f32 %v3333, %v5520
        %v5848 = vadd.f32 %v3335, %v5522
        %v5849 = vadd.f32 %v3337, %v5524
        %v5850 = vadd.f32 %v3339, %v5526
        %v5851 = vadd.f32 %v3341, %v5528
        %v5852 = vadd.f32 %v3343, %v5530
        %v5853 = vadd.f32 %v3345, %v5532
        %v5854 = vadd.f32 %v3347, %v5534
        %v5855 = vadd.f32 %v3349, %v5536
        %v5856 = vadd.f32 %v3351, %v5538
        %s5857 = scalar_lea.vmem %s4, 2
        %v5858 = vld [vmem:[%s5857] sm:$0x1]
        %v5860 = vlaneseq
        %v5861 = vshrl.u32 %v5860, 7
        %v5862 = vsub.s32 0, %v5861
        %v5863 = vrot.slane %v5858, %v5862
        %v5865 = vmul.f32 %v5825, %v5863
        %v5866 = vmul.f32 %v5826, %v5863
        %v5867 = vmul.f32 %v5827, %v5863
        %v5868 = vmul.f32 %v5828, %v5863
        %v5869 = vmul.f32 %v5829, %v5863
        %v5870 = vmul.f32 %v5830, %v5863
        %v5871 = vmul.f32 %v5831, %v5863
        %v5872 = vmul.f32 %v5832, %v5863
        %v5873 = vmul.f32 %v5833, %v5863
        %v5874 = vmul.f32 %v5834, %v5863
        %v5875 = vmul.f32 %v5835, %v5863
        %v5876 = vmul.f32 %v5836, %v5863
        %v5877 = vmul.f32 %v5837, %v5863
        %v5878 = vmul.f32 %v5838, %v5863
        %v5879 = vmul.f32 %v5839, %v5863
        %v5880 = vmul.f32 %v5840, %v5863
        %v5881 = vmul.f32 %v5841, %v5863
        %v5882 = vmul.f32 %v5842, %v5863
        %v5883 = vmul.f32 %v5843, %v5863
        %v5884 = vmul.f32 %v5844, %v5863
        %v5885 = vmul.f32 %v5845, %v5863
        %v5886 = vmul.f32 %v5846, %v5863
        %v5887 = vmul.f32 %v5847, %v5863
        %v5888 = vmul.f32 %v5848, %v5863
        %v5889 = vmul.f32 %v5849, %v5863
        %v5890 = vmul.f32 %v5850, %v5863
        %v5891 = vmul.f32 %v5851, %v5863
        %v5892 = vmul.f32 %v5852, %v5863
        %v5893 = vmul.f32 %v5853, %v5863
        %v5894 = vmul.f32 %v5854, %v5863
        %v5895 = vmul.f32 %v5855, %v5863
        %v5896 = vmul.f32 %v5856, %v5863
        %s5897 = scalar_lea.vmem %s5, 2
        %v5898 = vld [vmem:[%s5897] sm:$0x1]
        %v5900 = vlaneseq
        %v5901 = vshrl.u32 %v5900, 7
        %v5902 = vsub.s32 0, %v5901
        %v5903 = vrot.slane %v5898, %v5902
        %v5905 = vadd.f32 %v5865, %v5903
        %v5906 = vadd.f32 %v5866, %v5903
        %v5907 = vadd.f32 %v5867, %v5903
        %v5908 = vadd.f32 %v5868, %v5903
        %v5909 = vadd.f32 %v5869, %v5903
        %v5910 = vadd.f32 %v5870, %v5903
        %v5911 = vadd.f32 %v5871, %v5903
        %v5912 = vadd.f32 %v5872, %v5903
        %v5913 = vadd.f32 %v5873, %v5903
        %v5914 = vadd.f32 %v5874, %v5903
        %v5915 = vadd.f32 %v5875, %v5903
        %v5916 = vadd.f32 %v5876, %v5903
        %v5917 = vadd.f32 %v5877, %v5903
        %v5918 = vadd.f32 %v5878, %v5903
        %v5919 = vadd.f32 %v5879, %v5903
        %v5920 = vadd.f32 %v5880, %v5903
        %v5921 = vadd.f32 %v5881, %v5903
        %v5922 = vadd.f32 %v5882, %v5903
        %v5923 = vadd.f32 %v5883, %v5903
        %v5924 = vadd.f32 %v5884, %v5903
        %v5925 = vadd.f32 %v5885, %v5903
        %v5926 = vadd.f32 %v5886, %v5903
        %v5927 = vadd.f32 %v5887, %v5903
        %v5928 = vadd.f32 %v5888, %v5903
        %v5929 = vadd.f32 %v5889, %v5903
        %v5930 = vadd.f32 %v5890, %v5903
        %v5931 = vadd.f32 %v5891, %v5903
        %v5932 = vadd.f32 %v5892, %v5903
        %v5933 = vadd.f32 %v5893, %v5903
        %v5934 = vadd.f32 %v5894, %v5903
        %v5935 = vadd.f32 %v5895, %v5903
        %v5936 = vadd.f32 %v5896, %v5903
        %v5937 = vmax.f32 %v5905, 0.0
        %v5938 = vmax.f32 %v5906, 0.0
        %v5939 = vmax.f32 %v5907, 0.0
        %v5940 = vmax.f32 %v5908, 0.0
        %v5941 = vmax.f32 %v5909, 0.0
        %v5942 = vmax.f32 %v5910, 0.0
        %v5943 = vmax.f32 %v5911, 0.0
        %v5944 = vmax.f32 %v5912, 0.0
        %v5945 = vmax.f32 %v5913, 0.0
        %v5946 = vmax.f32 %v5914, 0.0
        %v5947 = vmax.f32 %v5915, 0.0
        %v5948 = vmax.f32 %v5916, 0.0
        %v5949 = vmax.f32 %v5917, 0.0
        %v5950 = vmax.f32 %v5918, 0.0
        %v5951 = vmax.f32 %v5919, 0.0
        %v5952 = vmax.f32 %v5920, 0.0
        %v5953 = vmax.f32 %v5921, 0.0
        %v5954 = vmax.f32 %v5922, 0.0
        %v5955 = vmax.f32 %v5923, 0.0
        %v5956 = vmax.f32 %v5924, 0.0
        %v5957 = vmax.f32 %v5925, 0.0
        %v5958 = vmax.f32 %v5926, 0.0
        %v5959 = vmax.f32 %v5927, 0.0
        %v5960 = vmax.f32 %v5928, 0.0
        %v5961 = vmax.f32 %v5929, 0.0
        %v5962 = vmax.f32 %v5930, 0.0
        %v5963 = vmax.f32 %v5931, 0.0
        %v5964 = vmax.f32 %v5932, 0.0
        %v5965 = vmax.f32 %v5933, 0.0
        %v5966 = vmax.f32 %v5934, 0.0
        %v5967 = vmax.f32 %v5935, 0.0
        %v5968 = vmax.f32 %v5936, 0.0
        %5969 = vst [vmem:[#allocation4 + $0x8] sm:$0xff] %v5937
        %5970 = vst [vmem:[#allocation4 + $0x18] sm:$0xff] %v5938
        %5971 = vst [vmem:[#allocation4 + $0x28] sm:$0xff] %v5939
        %5972 = vst [vmem:[#allocation4 + $0x38] sm:$0xff] %v5940
        %5973 = vst [vmem:[#allocation4 + $0x48] sm:$0xff] %v5941
        %5974 = vst [vmem:[#allocation4 + $0x58] sm:$0xff] %v5942
        %5975 = vst [vmem:[#allocation4 + $0x68] sm:$0xff] %v5943
        %5976 = vst [vmem:[#allocation4 + $0x78] sm:$0xff] %v5944
        %5977 = vst [vmem:[#allocation4 + $0x88] sm:$0xff] %v5945
        %5978 = vst [vmem:[#allocation4 + $0x98] sm:$0xff] %v5946
        %5979 = vst [vmem:[#allocation4 + $0xa8] sm:$0xff] %v5947
        %5980 = vst [vmem:[#allocation4 + $0xb8] sm:$0xff] %v5948
        %5981 = vst [vmem:[#allocation4 + $0xc8] sm:$0xff] %v5949
        %5982 = vst [vmem:[#allocation4 + $0xd8] sm:$0xff] %v5950
        %5983 = vst [vmem:[#allocation4 + $0xe8] sm:$0xff] %v5951
        %5984 = vst [vmem:[#allocation4 + $0xf8] sm:$0xff] %v5952
        %5985 = vst [vmem:[#allocation4 + $0x108] sm:$0xff] %v5953
        %5986 = vst [vmem:[#allocation4 + $0x118] sm:$0xff] %v5954
        %5987 = vst [vmem:[#allocation4 + $0x128] sm:$0xff] %v5955
        %5988 = vst [vmem:[#allocation4 + $0x138] sm:$0xff] %v5956
        %5989 = vst [vmem:[#allocation4 + $0x148] sm:$0xff] %v5957
        %5990 = vst [vmem:[#allocation4 + $0x158] sm:$0xff] %v5958
        %5991 = vst [vmem:[#allocation4 + $0x168] sm:$0xff] %v5959
        %5992 = vst [vmem:[#allocation4 + $0x178] sm:$0xff] %v5960
        %5993 = vst [vmem:[#allocation4 + $0x188] sm:$0xff] %v5961
        %5994 = vst [vmem:[#allocation4 + $0x198] sm:$0xff] %v5962
        %5995 = vst [vmem:[#allocation4 + $0x1a8] sm:$0xff] %v5963
        %5996 = vst [vmem:[#allocation4 + $0x1b8] sm:$0xff] %v5964
        %5997 = vst [vmem:[#allocation4 + $0x1c8] sm:$0xff] %v5965
        %5998 = vst [vmem:[#allocation4 + $0x1d8] sm:$0xff] %v5966
        %5999 = vst [vmem:[#allocation4 + $0x1e8] sm:$0xff] %v5967
        %6000 = vst [vmem:[#allocation4 + $0x1f8] sm:$0xff] %v5968
        %v6001 = vld [vmem:[#allocation4] sm:$0xff]
        %v6002 = vld [vmem:[#allocation4 + $0x10] sm:$0xff]
        %v6003 = vld [vmem:[#allocation4 + $0x20] sm:$0xff]
        %v6004 = vld [vmem:[#allocation4 + $0x30] sm:$0xff]
        %v6005 = vld [vmem:[#allocation4 + $0x40] sm:$0xff]
        %v6006 = vld [vmem:[#allocation4 + $0x50] sm:$0xff]
        %v6007 = vld [vmem:[#allocation4 + $0x60] sm:$0xff]
        %v6008 = vld [vmem:[#allocation4 + $0x70] sm:$0xff]
        %v6009 = vld [vmem:[#allocation4 + $0x80] sm:$0xff]
        %v6010 = vld [vmem:[#allocation4 + $0x90] sm:$0xff]
        %v6011 = vld [vmem:[#allocation4 + $0xa0] sm:$0xff]
        %v6012 = vld [vmem:[#allocation4 + $0xb0] sm:$0xff]
        %v6013 = vld [vmem:[#allocation4 + $0xc0] sm:$0xff]
        %v6014 = vld [vmem:[#allocation4 + $0xd0] sm:$0xff]
        %v6015 = vld [vmem:[#allocation4 + $0xe0] sm:$0xff]
        %v6016 = vld [vmem:[#allocation4 + $0xf0] sm:$0xff]
        %v6017 = vld [vmem:[#allocation4 + $0x100] sm:$0xff]
        %v6018 = vld [vmem:[#allocation4 + $0x110] sm:$0xff]
        %v6019 = vld [vmem:[#allocation4 + $0x120] sm:$0xff]
        %v6020 = vld [vmem:[#allocation4 + $0x130] sm:$0xff]
        %v6021 = vld [vmem:[#allocation4 + $0x140] sm:$0xff]
        %v6022 = vld [vmem:[#allocation4 + $0x150] sm:$0xff]
        %v6023 = vld [vmem:[#allocation4 + $0x160] sm:$0xff]
        %v6024 = vld [vmem:[#allocation4 + $0x170] sm:$0xff]
        %v6025 = vld [vmem:[#allocation4 + $0x180] sm:$0xff]
        %v6026 = vld [vmem:[#allocation4 + $0x190] sm:$0xff]
        %v6027 = vld [vmem:[#allocation4 + $0x1a0] sm:$0xff]
        %v6028 = vld [vmem:[#allocation4 + $0x1b0] sm:$0xff]
        %v6029 = vld [vmem:[#allocation4 + $0x1c0] sm:$0xff]
        %v6030 = vld [vmem:[#allocation4 + $0x1d0] sm:$0xff]
        %v6031 = vld [vmem:[#allocation4 + $0x1e0] sm:$0xff]
        %v6032 = vld [vmem:[#allocation4 + $0x1f0] sm:$0xff]
        %v6033 = vadd.f32 %v6001, %v6002
        %v6034 = vadd.f32 %v6033, %v6003
        %v6035 = vadd.f32 %v6034, %v6004
        %v6036 = vadd.f32 %v6035, %v6005
        %v6037 = vadd.f32 %v6036, %v6006
        %v6038 = vadd.f32 %v6037, %v6007
        %v6039 = vadd.f32 %v6038, %v6008
        %v6040 = vadd.f32 %v6039, %v6009
        %v6041 = vadd.f32 %v6040, %v6010
        %v6042 = vadd.f32 %v6041, %v6011
        %v6043 = vadd.f32 %v6042, %v6012
        %v6044 = vadd.f32 %v6043, %v6013
        %v6045 = vadd.f32 %v6044, %v6014
        %v6046 = vadd.f32 %v6045, %v6015
        %v6047 = vadd.f32 %v6046, %v6016
        %v6048 = vadd.f32 %v6047, %v6017
        %v6049 = vadd.f32 %v6048, %v6018
        %v6050 = vadd.f32 %v6049, %v6019
        %v6051 = vadd.f32 %v6050, %v6020
        %v6052 = vadd.f32 %v6051, %v6021
        %v6053 = vadd.f32 %v6052, %v6022
        %v6054 = vadd.f32 %v6053, %v6023
        %v6055 = vadd.f32 %v6054, %v6024
        %v6056 = vadd.f32 %v6055, %v6025
        %v6057 = vadd.f32 %v6056, %v6026
        %v6058 = vadd.f32 %v6057, %v6027
        %v6059 = vadd.f32 %v6058, %v6028
        %v6060 = vadd.f32 %v6059, %v6029
        %v6061 = vadd.f32 %v6060, %v6030
        %v6062 = vadd.f32 %v6061, %v6031
        %v6063 = vadd.f32 %v6062, %v6032
        %v6064 = vrot.slane %v6063, 4
        %v6065 = vadd.f32 %v6063, %v6064
        %v6066 = vrot.slane %v6065, 2
        %v6067 = vadd.f32 %v6065, %v6066
        %v6068 = vrot.slane %v6067, 1
        %v6069 = vadd.f32 %v6067, %v6068
        %v6070 = vmul.f32 %v6069, 0.00390625
        %v6071 = vld [vmem:[%s6] sm:$0xff]
        %v6072 = vld [vmem:[%s6 + $0x8] sm:$0xff]
        %v6073 = vld [vmem:[%s6 + $0x10] sm:$0xff]
        %v6074 = vld [vmem:[%s6 + $0x18] sm:$0xff]
        %v6075 = vld [vmem:[%s6 + $0x20] sm:$0xff]
        %v6076 = vld [vmem:[%s6 + $0x28] sm:$0xff]
        %v6077 = vld [vmem:[%s6 + $0x30] sm:$0xff]
        %v6078 = vld [vmem:[%s6 + $0x38] sm:$0xff]
        %v6079 = vld [vmem:[%s6 + $0x40] sm:$0xff]
        %v6080 = vld [vmem:[%s6 + $0x48] sm:$0xff]
        %v6081 = vld [vmem:[%s6 + $0x50] sm:$0xff]
        %v6082 = vld [vmem:[%s6 + $0x58] sm:$0xff]
        %v6083 = vld [vmem:[%s6 + $0x60] sm:$0xff]
        %v6084 = vld [vmem:[%s6 + $0x68] sm:$0xff]
        %v6085 = vld [vmem:[%s6 + $0x70] sm:$0xff]
        %v6086 = vld [vmem:[%s6 + $0x78] sm:$0xff]
        %v6087 = vld [vmem:[%s7] sm:$0x1]
        %6088 = vmatprep.subr.mxu0 0.0
        %6089 = vmatpush1.msra.mxu0 %v6071
        %6090 = vmatprep.subr.mxu0 0.0
        %6091 = vmatpush1.msra.mxu0 %v6072
        %6092 = vmatprep.subr.mxu0 0.0
        %6093 = vmatpush1.msra.mxu0 %v6073
        %6094 = vmatprep.subr.mxu0 0.0
        %6095 = vmatpush1.msra.mxu0 %v6074
        %6096 = vmatprep.subr.mxu0 0.0
        %6097 = vmatpush1.msra.mxu0 %v6075
        %6098 = vmatprep.subr.mxu0 0.0
        %6099 = vmatpush1.msra.mxu0 %v6076
        %6100 = vmatprep.subr.mxu0 0.0
        %6101 = vmatpush1.msra.mxu0 %v6077
        %6102 = vmatprep.subr.mxu0 0.0
        %6103 = vmatpush1.msra.mxu0 %v6078
        %6104 = vmatprep.subr.mxu0 0.0
        %6105 = vmatpush1.msra.mxu0 %v6079
        %6106 = vmatprep.subr.mxu0 0.0
        %6107 = vmatpush1.msra.mxu0 %v6080
        %6108 = vmatprep.subr.mxu0 0.0
        %6109 = vmatpush1.msra.mxu0 %v6081
        %6110 = vmatprep.subr.mxu0 0.0
        %6111 = vmatpush1.msra.mxu0 %v6082
        %6112 = vmatprep.subr.mxu0 0.0
        %6113 = vmatpush1.msra.mxu0 %v6083
        %6114 = vmatprep.subr.mxu0 0.0
        %6115 = vmatpush1.msra.mxu0 %v6084
        %6116 = vmatprep.subr.mxu0 0.0
        %6117 = vmatpush1.msra.mxu0 %v6085
        %6118 = vmatprep.subr.mxu0 0.0
        %6119 = vmatpush1.msra.mxu0 %v6086
        %6120 = vmatprep.subr.mxu0 0.0
        %6121 = vmatpush1.msra.mxu0 0.0
        %6122 = vmatprep.subr.mxu0 0.0
        %6123 = vmatpush1.msra.mxu0 0.0
        %6124 = vmatprep.subr.mxu0 0.0
        %6125 = vmatpush1.msra.mxu0 0.0
        %6126 = vmatprep.subr.mxu0 0.0
        %6127 = vmatpush1.msra.mxu0 0.0
        %6128 = vmatprep.subr.mxu0 0.0
        %6129 = vmatpush1.msra.mxu0 0.0
        %6130 = vmatprep.subr.mxu0 0.0
        %6131 = vmatpush1.msra.mxu0 0.0
        %6132 = vmatprep.subr.mxu0 0.0
        %6133 = vmatpush1.msra.mxu0 0.0
        %6134 = vmatprep.subr.mxu0 0.0
        %6135 = vmatpush1.msra.mxu0 0.0
        %6136 = vmatprep.subr.mxu0 0.0
        %6137 = vmatpush1.msra.mxu0 0.0
        %6138 = vmatprep.subr.mxu0 0.0
        %6139 = vmatpush1.msra.mxu0 0.0
        %6140 = vmatprep.subr.mxu0 0.0
        %6141 = vmatpush1.msra.mxu0 0.0
        %6142 = vmatprep.subr.mxu0 0.0
        %6143 = vmatpush1.msra.mxu0 0.0
        %6144 = vmatprep.subr.mxu0 0.0
        %6145 = vmatpush1.msra.mxu0 0.0
        %6146 = vmatprep.subr.mxu0 0.0
        %6147 = vmatpush1.msra.mxu0 0.0
        %6148 = vmatprep.subr.mxu0 0.0
        %6149 = vmatpush1.msra.mxu0 0.0
        %6150 = vmatprep.subr.mxu0 0.0
        %6151 = vmatpush1.msra.mxu0 0.0
        %6152 = vmatprep.mubr.f32.mxu0 0.0
        %6153 = vmatmul.mubr.f32.gmra.mrb[0].mxu0 %v6070
        %v6154 = vpop.f32.mrb[0].mxu0
        %v6155 = vadd.f32 %v6087, %v6154
        %v6156 = vpop.f32.mrb[0].mxu0
        %6157 = vdwg.mxu0
        %v6158 = vmax.f32 %v6155, 0.0
        %v6159 = vld [vmem:[%s8] sm:$0xff]
        %v6160 = vld [vmem:[%s9] sm:$0x1]
        %vm6161 = vcmask 64512
        %v6163 = vsel %vm6161, %v6158, 0
        %6165 = vmatprep.subr.mxu0 0.0
        %6166 = vmatpush1.msra.mxu0 %v6159
        %6167 = vmatprep.subr.mxu0 0.0
        %6168 = vmatpush1.msra.mxu0 0.0
        %6169 = vmatprep.subr.mxu0 0.0
        %6170 = vmatpush1.msra.mxu0 0.0
        %6171 = vmatprep.subr.mxu0 0.0
        %6172 = vmatpush1.msra.mxu0 0.0
        %6173 = vmatprep.subr.mxu0 0.0
        %6174 = vmatpush1.msra.mxu0 0.0
        %6175 = vmatprep.subr.mxu0 0.0
        %6176 = vmatpush1.msra.mxu0 0.0
        %6177 = vmatprep.subr.mxu0 0.0
        %6178 = vmatpush1.msra.mxu0 0.0
        %6179 = vmatprep.subr.mxu0 0.0
        %6180 = vmatpush1.msra.mxu0 0.0
        %6181 = vmatprep.subr.mxu0 0.0
        %6182 = vmatpush1.msra.mxu0 0.0
        %6183 = vmatprep.subr.mxu0 0.0
        %6184 = vmatpush1.msra.mxu0 0.0
        %6185 = vmatprep.subr.mxu0 0.0
        %6186 = vmatpush1.msra.mxu0 0.0
        %6187 = vmatprep.subr.mxu0 0.0
        %6188 = vmatpush1.msra.mxu0 0.0
        %6189 = vmatprep.subr.mxu0 0.0
        %6190 = vmatpush1.msra.mxu0 0.0
        %6191 = vmatprep.subr.mxu0 0.0
        %6192 = vmatpush1.msra.mxu0 0.0
        %6193 = vmatprep.subr.mxu0 0.0
        %6194 = vmatpush1.msra.mxu0 0.0
        %6195 = vmatprep.subr.mxu0 0.0
        %6196 = vmatpush1.msra.mxu0 0.0
        %6197 = vmatprep.subr.mxu0 0.0
        %6198 = vmatpush1.msra.mxu0 0.0
        %6199 = vmatprep.subr.mxu0 0.0
        %6200 = vmatpush1.msra.mxu0 0.0
        %6201 = vmatprep.subr.mxu0 0.0
        %6202 = vmatpush1.msra.mxu0 0.0
        %6203 = vmatprep.subr.mxu0 0.0
        %6204 = vmatpush1.msra.mxu0 0.0
        %6205 = vmatprep.subr.mxu0 0.0
        %6206 = vmatpush1.msra.mxu0 0.0
        %6207 = vmatprep.subr.mxu0 0.0
        %6208 = vmatpush1.msra.mxu0 0.0
        %6209 = vmatprep.subr.mxu0 0.0
        %6210 = vmatpush1.msra.mxu0 0.0
        %6211 = vmatprep.subr.mxu0 0.0
        %6212 = vmatpush1.msra.mxu0 0.0
        %6213 = vmatprep.subr.mxu0 0.0
        %6214 = vmatpush1.msra.mxu0 0.0
        %6215 = vmatprep.subr.mxu0 0.0
        %6216 = vmatpush1.msra.mxu0 0.0
        %6217 = vmatprep.subr.mxu0 0.0
        %6218 = vmatpush1.msra.mxu0 0.0
        %6219 = vmatprep.subr.mxu0 0.0
        %6220 = vmatpush1.msra.mxu0 0.0
        %6221 = vmatprep.subr.mxu0 0.0
        %6222 = vmatpush1.msra.mxu0 0.0
        %6223 = vmatprep.subr.mxu0 0.0
        %6224 = vmatpush1.msra.mxu0 0.0
        %6225 = vmatprep.subr.mxu0 0.0
        %6226 = vmatpush1.msra.mxu0 0.0
        %6227 = vmatprep.subr.mxu0 0.0
        %6228 = vmatpush1.msra.mxu0 0.0
        %6229 = vmatprep.mubr.f32.mxu0 0.0
        %6230 = vmatmul.mubr.f32.gmra.mrb[0].mxu0 %v6163
        %v6231 = vpop.f32.mrb[0].mxu0
        %v6232 = vadd.f32 %v6160, %v6231
        %v6233 = vpop.f32.mrb[0].mxu0
        %6234 = vdwg.mxu0
        %v6235 = vxor.u32 %v6232, 2147483648
        %v6236 = vmul.f32 %v6235, 1.442695
        %v6237 = vpow.pop %v6236
        %v6238 = vadd.f32 %v6237, 1.0
        %v6239 = vrcp.pop %v6238
        %v6240 = vmul.f32 1.0, %v6239
        %v6241 = vmul.f32 %v6240, 0.9
        %v6242 = vadd.f32 %v6241, 1.0
        %v6243 = vld [vmem:[#allocation5] sm:$0xff]
        %v6244 = vld [vmem:[#allocation5 + $0x8] sm:$0xff]
        %v6245 = vld [vmem:[#allocation5 + $0x10] sm:$0xff]
        %v6246 = vld [vmem:[#allocation5 + $0x18] sm:$0xff]
        %v6247 = vld [vmem:[#allocation5 + $0x20] sm:$0xff]
        %v6248 = vld [vmem:[#allocation5 + $0x28] sm:$0xff]
        %v6249 = vld [vmem:[#allocation5 + $0x30] sm:$0xff]
        %v6250 = vld [vmem:[#allocation5 + $0x38] sm:$0xff]
        %v6251 = vld [vmem:[#allocation5 + $0x40] sm:$0xff]
        %v6252 = vld [vmem:[#allocation5 + $0x48] sm:$0xff]
        %v6253 = vld [vmem:[#allocation5 + $0x50] sm:$0xff]
        %v6254 = vld [vmem:[#allocation5 + $0x58] sm:$0xff]
        %v6255 = vld [vmem:[#allocation5 + $0x60] sm:$0xff]
        %v6256 = vld [vmem:[#allocation5 + $0x68] sm:$0xff]
        %v6257 = vld [vmem:[#allocation5 + $0x70] sm:$0xff]
        %v6258 = vld [vmem:[#allocation5 + $0x78] sm:$0xff]
        %v6259 = vld [vmem:[#allocation5 + $0x80] sm:$0xff]
        %v6260 = vld [vmem:[#allocation5 + $0x88] sm:$0xff]
        %v6261 = vld [vmem:[#allocation5 + $0x90] sm:$0xff]
        %v6262 = vld [vmem:[#allocation5 + $0x98] sm:$0xff]
        %v6263 = vld [vmem:[#allocation5 + $0xa0] sm:$0xff]
        %v6264 = vld [vmem:[#allocation5 + $0xa8] sm:$0xff]
        %v6265 = vld [vmem:[#allocation5 + $0xb0] sm:$0xff]
        %v6266 = vld [vmem:[#allocation5 + $0xb8] sm:$0xff]
        %v6267 = vld [vmem:[#allocation5 + $0xc0] sm:$0xff]
        %v6268 = vld [vmem:[#allocation5 + $0xc8] sm:$0xff]
        %v6269 = vld [vmem:[#allocation5 + $0xd0] sm:$0xff]
        %v6270 = vld [vmem:[#allocation5 + $0xd8] sm:$0xff]
        %v6271 = vld [vmem:[#allocation5 + $0xe0] sm:$0xff]
        %v6272 = vld [vmem:[#allocation5 + $0xe8] sm:$0xff]
        %v6273 = vld [vmem:[#allocation5 + $0xf0] sm:$0xff]
        %v6274 = vld [vmem:[#allocation5 + $0xf8] sm:$0xff]
        %v6275 = vadd.f32 %v6243, %v6244
        %v6276 = vadd.f32 %v6275, %v6245
        %v6277 = vadd.f32 %v6276, %v6246
        %v6278 = vadd.f32 %v6277, %v6247
        %v6279 = vadd.f32 %v6278, %v6248
        %v6280 = vadd.f32 %v6279, %v6249
        %v6281 = vadd.f32 %v6280, %v6250
        %v6282 = vadd.f32 %v6281, %v6251
        %v6283 = vadd.f32 %v6282, %v6252
        %v6284 = vadd.f32 %v6283, %v6253
        %v6285 = vadd.f32 %v6284, %v6254
        %v6286 = vadd.f32 %v6285, %v6255
        %v6287 = vadd.f32 %v6286, %v6256
        %v6288 = vadd.f32 %v6287, %v6257
        %v6289 = vadd.f32 %v6288, %v6258
        %v6290 = vadd.f32 %v6289, %v6259
        %v6291 = vadd.f32 %v6290, %v6260
        %v6292 = vadd.f32 %v6291, %v6261
        %v6293 = vadd.f32 %v6292, %v6262
        %v6294 = vadd.f32 %v6293, %v6263
        %v6295 = vadd.f32 %v6294, %v6264
        %v6296 = vadd.f32 %v6295, %v6265
        %v6297 = vadd.f32 %v6296, %v6266
        %v6298 = vadd.f32 %v6297, %v6267
        %v6299 = vadd.f32 %v6298, %v6268
        %v6300 = vadd.f32 %v6299, %v6269
        %v6301 = vadd.f32 %v6300, %v6270
        %v6302 = vadd.f32 %v6301, %v6271
        %v6303 = vadd.f32 %v6302, %v6272
        %v6304 = vadd.f32 %v6303, %v6273
        %v6305 = vadd.f32 %v6304, %v6274
        %v6306 = vrot.slane %v6305, 4
        %v6307 = vadd.f32 %v6305, %v6306
        %v6308 = vrot.slane %v6307, 2
        %v6309 = vadd.f32 %v6307, %v6308
        %v6310 = vrot.slane %v6309, 1
        %v6311 = vadd.f32 %v6309, %v6310
        %v6312 = vmul.f32 %v6311, 0.00390625
        %s6313 = scalar_lea.vmem %s6, 128
        %v6314 = vld [vmem:[%s6313] sm:$0xff]
        %v6315 = vld [vmem:[%s6313 + $0x8] sm:$0xff]
        %v6316 = vld [vmem:[%s6313 + $0x10] sm:$0xff]
        %v6317 = vld [vmem:[%s6313 + $0x18] sm:$0xff]
        %v6318 = vld [vmem:[%s6313 + $0x20] sm:$0xff]
        %v6319 = vld [vmem:[%s6313 + $0x28] sm:$0xff]
        %v6320 = vld [vmem:[%s6313 + $0x30] sm:$0xff]
        %v6321 = vld [vmem:[%s6313 + $0x38] sm:$0xff]
        %v6322 = vld [vmem:[%s6313 + $0x40] sm:$0xff]
        %v6323 = vld [vmem:[%s6313 + $0x48] sm:$0xff]
        %v6324 = vld [vmem:[%s6313 + $0x50] sm:$0xff]
        %v6325 = vld [vmem:[%s6313 + $0x58] sm:$0xff]
        %v6326 = vld [vmem:[%s6313 + $0x60] sm:$0xff]
        %v6327 = vld [vmem:[%s6313 + $0x68] sm:$0xff]
        %v6328 = vld [vmem:[%s6313 + $0x70] sm:$0xff]
        %v6329 = vld [vmem:[%s6313 + $0x78] sm:$0xff]
        %s6330 = scalar_lea.vmem %s7, 1
        %v6331 = vld [vmem:[%s6330] sm:$0x1]
        %6332 = vmatprep.subr.mxu0 0.0
        %6333 = vmatpush1.msra.mxu0 %v6314
        %6334 = vmatprep.subr.mxu0 0.0
        %6335 = vmatpush1.msra.mxu0 %v6315
        %6336 = vmatprep.subr.mxu0 0.0
        %6337 = vmatpush1.msra.mxu0 %v6316
        %6338 = vmatprep.subr.mxu0 0.0
        %6339 = vmatpush1.msra.mxu0 %v6317
        %6340 = vmatprep.subr.mxu0 0.0
        %6341 = vmatpush1.msra.mxu0 %v6318
        %6342 = vmatprep.subr.mxu0 0.0
        %6343 = vmatpush1.msra.mxu0 %v6319
        %6344 = vmatprep.subr.mxu0 0.0
        %6345 = vmatpush1.msra.mxu0 %v6320
        %6346 = vmatprep.subr.mxu0 0.0
        %6347 = vmatpush1.msra.mxu0 %v6321
        %6348 = vmatprep.subr.mxu0 0.0
        %6349 = vmatpush1.msra.mxu0 %v6322
        %6350 = vmatprep.subr.mxu0 0.0
        %6351 = vmatpush1.msra.mxu0 %v6323
        %6352 = vmatprep.subr.mxu0 0.0
        %6353 = vmatpush1.msra.mxu0 %v6324
        %6354 = vmatprep.subr.mxu0 0.0
        %6355 = vmatpush1.msra.mxu0 %v6325
        %6356 = vmatprep.subr.mxu0 0.0
        %6357 = vmatpush1.msra.mxu0 %v6326
        %6358 = vmatprep.subr.mxu0 0.0
        %6359 = vmatpush1.msra.mxu0 %v6327
        %6360 = vmatprep.subr.mxu0 0.0
        %6361 = vmatpush1.msra.mxu0 %v6328
        %6362 = vmatprep.subr.mxu0 0.0
        %6363 = vmatpush1.msra.mxu0 %v6329
        %6364 = vmatprep.subr.mxu0 0.0
        %6365 = vmatpush1.msra.mxu0 0.0
        %6366 = vmatprep.subr.mxu0 0.0
        %6367 = vmatpush1.msra.mxu0 0.0
        %6368 = vmatprep.subr.mxu0 0.0
        %6369 = vmatpush1.msra.mxu0 0.0
        %6370 = vmatprep.subr.mxu0 0.0
        %6371 = vmatpush1.msra.mxu0 0.0
        %6372 = vmatprep.subr.mxu0 0.0
        %6373 = vmatpush1.msra.mxu0 0.0
        %6374 = vmatprep.subr.mxu0 0.0
        %6375 = vmatpush1.msra.mxu0 0.0
        %6376 = vmatprep.subr.mxu0 0.0
        %6377 = vmatpush1.msra.mxu0 0.0
        %6378 = vmatprep.subr.mxu0 0.0
        %6379 = vmatpush1.msra.mxu0 0.0
        %6380 = vmatprep.subr.mxu0 0.0
        %6381 = vmatpush1.msra.mxu0 0.0
        %6382 = vmatprep.subr.mxu0 0.0
        %6383 = vmatpush1.msra.mxu0 0.0
        %6384 = vmatprep.subr.mxu0 0.0
        %6385 = vmatpush1.msra.mxu0 0.0
        %6386 = vmatprep.subr.mxu0 0.0
        %6387 = vmatpush1.msra.mxu0 0.0
        %6388 = vmatprep.subr.mxu0 0.0
        %6389 = vmatpush1.msra.mxu0 0.0
        %6390 = vmatprep.subr.mxu0 0.0
        %6391 = vmatpush1.msra.mxu0 0.0
        %6392 = vmatprep.subr.mxu0 0.0
        %6393 = vmatpush1.msra.mxu0 0.0
        %6394 = vmatprep.subr.mxu0 0.0
        %6395 = vmatpush1.msra.mxu0 0.0
        %6396 = vmatprep.mubr.f32.mxu0 0.0
        %6397 = vmatmul.mubr.f32.gmra.mrb[0].mxu0 %v6312
        %v6398 = vpop.f32.mrb[0].mxu0
        %v6399 = vadd.f32 %v6331, %v6398
        %v6400 = vpop.f32.mrb[0].mxu0
        %6401 = vdwg.mxu0
        %v6402 = vmax.f32 %v6399, 0.0
        %s6403 = scalar_lea.vmem %s8, 8
        %v6404 = vld [vmem:[%s6403] sm:$0xff]
        %s6405 = scalar_lea.vmem %s9, 1
        %v6406 = vld [vmem:[%s6405] sm:$0x1]
        %v6408 = vsel %vm6161, %v6402, 0
        %6410 = vmatprep.subr.mxu0 0.0
        %6411 = vmatpush1.msra.mxu0 %v6404
        %6412 = vmatprep.subr.mxu0 0.0
        %6413 = vmatpush1.msra.mxu0 0.0
        %6414 = vmatprep.subr.mxu0 0.0
        %6415 = vmatpush1.msra.mxu0 0.0
        %6416 = vmatprep.subr.mxu0 0.0
        %6417 = vmatpush1.msra.mxu0 0.0
        %6418 = vmatprep.subr.mxu0 0.0
        %6419 = vmatpush1.msra.mxu0 0.0
        %6420 = vmatprep.subr.mxu0 0.0
        %6421 = vmatpush1.msra.mxu0 0.0
        %6422 = vmatprep.subr.mxu0 0.0
        %6423 = vmatpush1.msra.mxu0 0.0
        %6424 = vmatprep.subr.mxu0 0.0
        %6425 = vmatpush1.msra.mxu0 0.0
        %6426 = vmatprep.subr.mxu0 0.0
        %6427 = vmatpush1.msra.mxu0 0.0
        %6428 = vmatprep.subr.mxu0 0.0
        %6429 = vmatpush1.msra.mxu0 0.0
        %6430 = vmatprep.subr.mxu0 0.0
        %6431 = vmatpush1.msra.mxu0 0.0
        %6432 = vmatprep.subr.mxu0 0.0
        %6433 = vmatpush1.msra.mxu0 0.0
        %6434 = vmatprep.subr.mxu0 0.0
        %6435 = vmatpush1.msra.mxu0 0.0
        %6436 = vmatprep.subr.mxu0 0.0
        %6437 = vmatpush1.msra.mxu0 0.0
        %6438 = vmatprep.subr.mxu0 0.0
        %6439 = vmatpush1.msra.mxu0 0.0
        %6440 = vmatprep.subr.mxu0 0.0
        %6441 = vmatpush1.msra.mxu0 0.0
        %6442 = vmatprep.subr.mxu0 0.0
        %6443 = vmatpush1.msra.mxu0 0.0
        %6444 = vmatprep.subr.mxu0 0.0
        %6445 = vmatpush1.msra.mxu0 0.0
        %6446 = vmatprep.subr.mxu0 0.0
        %6447 = vmatpush1.msra.mxu0 0.0
        %6448 = vmatprep.subr.mxu0 0.0
        %6449 = vmatpush1.msra.mxu0 0.0
        %6450 = vmatprep.subr.mxu0 0.0
        %6451 = vmatpush1.msra.mxu0 0.0
        %6452 = vmatprep.subr.mxu0 0.0
        %6453 = vmatpush1.msra.mxu0 0.0
        %6454 = vmatprep.subr.mxu0 0.0
        %6455 = vmatpush1.msra.mxu0 0.0
        %6456 = vmatprep.subr.mxu0 0.0
        %6457 = vmatpush1.msra.mxu0 0.0
        %6458 = vmatprep.subr.mxu0 0.0
        %6459 = vmatpush1.msra.mxu0 0.0
        %6460 = vmatprep.subr.mxu0 0.0
        %6461 = vmatpush1.msra.mxu0 0.0
        %6462 = vmatprep.subr.mxu0 0.0
        %6463 = vmatpush1.msra.mxu0 0.0
        %6464 = vmatprep.subr.mxu0 0.0
        %6465 = vmatpush1.msra.mxu0 0.0
        %6466 = vmatprep.subr.mxu0 0.0
        %6467 = vmatpush1.msra.mxu0 0.0
        %6468 = vmatprep.subr.mxu0 0.0
        %6469 = vmatpush1.msra.mxu0 0.0
        %6470 = vmatprep.subr.mxu0 0.0
        %6471 = vmatpush1.msra.mxu0 0.0
        %6472 = vmatprep.subr.mxu0 0.0
        %6473 = vmatpush1.msra.mxu0 0.0
        %6474 = vmatprep.mubr.f32.mxu0 0.0
        %6475 = vmatmul.mubr.f32.gmra.mrb[0].mxu0 %v6408
        %v6476 = vpop.f32.mrb[0].mxu0
        %v6477 = vadd.f32 %v6406, %v6476
        %v6478 = vpop.f32.mrb[0].mxu0
        %6479 = vdwg.mxu0
        %v6480 = vxor.u32 %v6477, 2147483648
        %v6481 = vmul.f32 %v6480, 1.442695
        %v6482 = vpow.pop %v6481
        %v6483 = vadd.f32 %v6482, 1.0
        %v6484 = vrcp.pop %v6483
        %v6485 = vmul.f32 1.0, %v6484
        %v6486 = vmul.f32 %v6485, 0.9
        %v6487 = vadd.f32 %v6486, 1.0
        %v6488 = vld [vmem:[#allocation4 + $0x8] sm:$0xff]
        %v6489 = vld [vmem:[#allocation4 + $0x18] sm:$0xff]
        %v6490 = vld [vmem:[#allocation4 + $0x28] sm:$0xff]
        %v6491 = vld [vmem:[#allocation4 + $0x38] sm:$0xff]
        %v6492 = vld [vmem:[#allocation4 + $0x48] sm:$0xff]
        %v6493 = vld [vmem:[#allocation4 + $0x58] sm:$0xff]
        %v6494 = vld [vmem:[#allocation4 + $0x68] sm:$0xff]
        %v6495 = vld [vmem:[#allocation4 + $0x78] sm:$0xff]
        %v6496 = vld [vmem:[#allocation4 + $0x88] sm:$0xff]
        %v6497 = vld [vmem:[#allocation4 + $0x98] sm:$0xff]
        %v6498 = vld [vmem:[#allocation4 + $0xa8] sm:$0xff]
        %v6499 = vld [vmem:[#allocation4 + $0xb8] sm:$0xff]
        %v6500 = vld [vmem:[#allocation4 + $0xc8] sm:$0xff]
        %v6501 = vld [vmem:[#allocation4 + $0xd8] sm:$0xff]
        %v6502 = vld [vmem:[#allocation4 + $0xe8] sm:$0xff]
        %v6503 = vld [vmem:[#allocation4 + $0xf8] sm:$0xff]
        %v6504 = vld [vmem:[#allocation4 + $0x108] sm:$0xff]
        %v6505 = vld [vmem:[#allocation4 + $0x118] sm:$0xff]
        %v6506 = vld [vmem:[#allocation4 + $0x128] sm:$0xff]
        %v6507 = vld [vmem:[#allocation4 + $0x138] sm:$0xff]
        %v6508 = vld [vmem:[#allocation4 + $0x148] sm:$0xff]
        %v6509 = vld [vmem:[#allocation4 + $0x158] sm:$0xff]
        %v6510 = vld [vmem:[#allocation4 + $0x168] sm:$0xff]
        %v6511 = vld [vmem:[#allocation4 + $0x178] sm:$0xff]
        %v6512 = vld [vmem:[#allocation4 + $0x188] sm:$0xff]
        %v6513 = vld [vmem:[#allocation4 + $0x198] sm:$0xff]
        %v6514 = vld [vmem:[#allocation4 + $0x1a8] sm:$0xff]
        %v6515 = vld [vmem:[#allocation4 + $0x1b8] sm:$0xff]
        %v6516 = vld [vmem:[#allocation4 + $0x1c8] sm:$0xff]
        %v6517 = vld [vmem:[#allocation4 + $0x1d8] sm:$0xff]
        %v6518 = vld [vmem:[#allocation4 + $0x1e8] sm:$0xff]
        %v6519 = vld [vmem:[#allocation4 + $0x1f8] sm:$0xff]
        %v6520 = vadd.f32 %v6488, %v6489
        %v6521 = vadd.f32 %v6520, %v6490
        %v6522 = vadd.f32 %v6521, %v6491
        %v6523 = vadd.f32 %v6522, %v6492
        %v6524 = vadd.f32 %v6523, %v6493
        %v6525 = vadd.f32 %v6524, %v6494
        %v6526 = vadd.f32 %v6525, %v6495
        %v6527 = vadd.f32 %v6526, %v6496
        %v6528 = vadd.f32 %v6527, %v6497
        %v6529 = vadd.f32 %v6528, %v6498
        %v6530 = vadd.f32 %v6529, %v6499
        %v6531 = vadd.f32 %v6530, %v6500
        %v6532 = vadd.f32 %v6531, %v6501
        %v6533 = vadd.f32 %v6532, %v6502
        %v6534 = vadd.f32 %v6533, %v6503
        %v6535 = vadd.f32 %v6534, %v6504
        %v6536 = vadd.f32 %v6535, %v6505
        %v6537 = vadd.f32 %v6536, %v6506
        %v6538 = vadd.f32 %v6537, %v6507
        %v6539 = vadd.f32 %v6538, %v6508
        %v6540 = vadd.f32 %v6539, %v6509
        %v6541 = vadd.f32 %v6540, %v6510
        %v6542 = vadd.f32 %v6541, %v6511
        %v6543 = vadd.f32 %v6542, %v6512
        %v6544 = vadd.f32 %v6543, %v6513
        %v6545 = vadd.f32 %v6544, %v6514
        %v6546 = vadd.f32 %v6545, %v6515
        %v6547 = vadd.f32 %v6546, %v6516
        %v6548 = vadd.f32 %v6547, %v6517
        %v6549 = vadd.f32 %v6548, %v6518
        %v6550 = vadd.f32 %v6549, %v6519
        %v6551 = vrot.slane %v6550, 4
        %v6552 = vadd.f32 %v6550, %v6551
        %v6553 = vrot.slane %v6552, 2
        %v6554 = vadd.f32 %v6552, %v6553
        %v6555 = vrot.slane %v6554, 1
        %v6556 = vadd.f32 %v6554, %v6555
        %v6557 = vmul.f32 %v6556, 0.00390625
        %s6558 = scalar_lea.vmem %s6, 256
        %v6559 = vld [vmem:[%s6558] sm:$0xff]
        %v6560 = vld [vmem:[%s6558 + $0x8] sm:$0xff]
        %v6561 = vld [vmem:[%s6558 + $0x10] sm:$0xff]
        %v6562 = vld [vmem:[%s6558 + $0x18] sm:$0xff]
        %v6563 = vld [vmem:[%s6558 + $0x20] sm:$0xff]
        %v6564 = vld [vmem:[%s6558 + $0x28] sm:$0xff]
        %v6565 = vld [vmem:[%s6558 + $0x30] sm:$0xff]
        %v6566 = vld [vmem:[%s6558 + $0x38] sm:$0xff]
        %v6567 = vld [vmem:[%s6558 + $0x40] sm:$0xff]
        %v6568 = vld [vmem:[%s6558 + $0x48] sm:$0xff]
        %v6569 = vld [vmem:[%s6558 + $0x50] sm:$0xff]
        %v6570 = vld [vmem:[%s6558 + $0x58] sm:$0xff]
        %v6571 = vld [vmem:[%s6558 + $0x60] sm:$0xff]
        %v6572 = vld [vmem:[%s6558 + $0x68] sm:$0xff]
        %v6573 = vld [vmem:[%s6558 + $0x70] sm:$0xff]
        %v6574 = vld [vmem:[%s6558 + $0x78] sm:$0xff]
        %s6575 = scalar_lea.vmem %s7, 2
        %v6576 = vld [vmem:[%s6575] sm:$0x1]
        %6577 = vmatprep.subr.mxu0 0.0
        %6578 = vmatpush1.msra.mxu0 %v6559
        %6579 = vmatprep.subr.mxu0 0.0
        %6580 = vmatpush1.msra.mxu0 %v6560
        %6581 = vmatprep.subr.mxu0 0.0
        %6582 = vmatpush1.msra.mxu0 %v6561
        %6583 = vmatprep.subr.mxu0 0.0
        %6584 = vmatpush1.msra.mxu0 %v6562
        %6585 = vmatprep.subr.mxu0 0.0
        %6586 = vmatpush1.msra.mxu0 %v6563
        %6587 = vmatprep.subr.mxu0 0.0
        %6588 = vmatpush1.msra.mxu0 %v6564
        %6589 = vmatprep.subr.mxu0 0.0
        %6590 = vmatpush1.msra.mxu0 %v6565
        %6591 = vmatprep.subr.mxu0 0.0
        %6592 = vmatpush1.msra.mxu0 %v6566
        %6593 = vmatprep.subr.mxu0 0.0
        %6594 = vmatpush1.msra.mxu0 %v6567
        %6595 = vmatprep.subr.mxu0 0.0
        %6596 = vmatpush1.msra.mxu0 %v6568
        %6597 = vmatprep.subr.mxu0 0.0
        %6598 = vmatpush1.msra.mxu0 %v6569
        %6599 = vmatprep.subr.mxu0 0.0
        %6600 = vmatpush1.msra.mxu0 %v6570
        %6601 = vmatprep.subr.mxu0 0.0
        %6602 = vmatpush1.msra.mxu0 %v6571
        %6603 = vmatprep.subr.mxu0 0.0
        %6604 = vmatpush1.msra.mxu0 %v6572
        %6605 = vmatprep.subr.mxu0 0.0
        %6606 = vmatpush1.msra.mxu0 %v6573
        %6607 = vmatprep.subr.mxu0 0.0
        %6608 = vmatpush1.msra.mxu0 %v6574
        %6609 = vmatprep.subr.mxu0 0.0
        %6610 = vmatpush1.msra.mxu0 0.0
        %6611 = vmatprep.subr.mxu0 0.0
        %6612 = vmatpush1.msra.mxu0 0.0
        %6613 = vmatprep.subr.mxu0 0.0
        %6614 = vmatpush1.msra.mxu0 0.0
        %6615 = vmatprep.subr.mxu0 0.0
        %6616 = vmatpush1.msra.mxu0 0.0
        %6617 = vmatprep.subr.mxu0 0.0
        %6618 = vmatpush1.msra.mxu0 0.0
        %6619 = vmatprep.subr.mxu0 0.0
        %6620 = vmatpush1.msra.mxu0 0.0
        %6621 = vmatprep.subr.mxu0 0.0
        %6622 = vmatpush1.msra.mxu0 0.0
        %6623 = vmatprep.subr.mxu0 0.0
        %6624 = vmatpush1.msra.mxu0 0.0
        %6625 = vmatprep.subr.mxu0 0.0
        %6626 = vmatpush1.msra.mxu0 0.0
        %6627 = vmatprep.subr.mxu0 0.0
        %6628 = vmatpush1.msra.mxu0 0.0
        %6629 = vmatprep.subr.mxu0 0.0
        %6630 = vmatpush1.msra.mxu0 0.0
        %6631 = vmatprep.subr.mxu0 0.0
        %6632 = vmatpush1.msra.mxu0 0.0
        %6633 = vmatprep.subr.mxu0 0.0
        %6634 = vmatpush1.msra.mxu0 0.0
        %6635 = vmatprep.subr.mxu0 0.0
        %6636 = vmatpush1.msra.mxu0 0.0
        %6637 = vmatprep.subr.mxu0 0.0
        %6638 = vmatpush1.msra.mxu0 0.0
        %6639 = vmatprep.subr.mxu0 0.0
        %6640 = vmatpush1.msra.mxu0 0.0
        %6641 = vmatprep.mubr.f32.mxu0 0.0
        %6642 = vmatmul.mubr.f32.gmra.mrb[0].mxu0 %v6557
        %v6643 = vpop.f32.mrb[0].mxu0
        %v6644 = vadd.f32 %v6576, %v6643
        %v6645 = vpop.f32.mrb[0].mxu0
        %6646 = vdwg.mxu0
        %v6647 = vmax.f32 %v6644, 0.0
        %s6648 = scalar_lea.vmem %s8, 16
        %v6649 = vld [vmem:[%s6648] sm:$0xff]
        %s6650 = scalar_lea.vmem %s9, 2
        %v6651 = vld [vmem:[%s6650] sm:$0x1]
        %v6653 = vsel %vm6161, %v6647, 0
        %6655 = vmatprep.subr.mxu0 0.0
        %6656 = vmatpush1.msra.mxu0 %v6649
        %6657 = vmatprep.subr.mxu0 0.0
        %6658 = vmatpush1.msra.mxu0 0.0
        %6659 = vmatprep.subr.mxu0 0.0
        %6660 = vmatpush1.msra.mxu0 0.0
        %6661 = vmatprep.subr.mxu0 0.0
        %6662 = vmatpush1.msra.mxu0 0.0
        %6663 = vmatprep.subr.mxu0 0.0
        %6664 = vmatpush1.msra.mxu0 0.0
        %6665 = vmatprep.subr.mxu0 0.0
        %6666 = vmatpush1.msra.mxu0 0.0
        %6667 = vmatprep.subr.mxu0 0.0
        %6668 = vmatpush1.msra.mxu0 0.0
        %6669 = vmatprep.subr.mxu0 0.0
        %6670 = vmatpush1.msra.mxu0 0.0
        %6671 = vmatprep.subr.mxu0 0.0
        %6672 = vmatpush1.msra.mxu0 0.0
        %6673 = vmatprep.subr.mxu0 0.0
        %6674 = vmatpush1.msra.mxu0 0.0
        %6675 = vmatprep.subr.mxu0 0.0
        %6676 = vmatpush1.msra.mxu0 0.0
        %6677 = vmatprep.subr.mxu0 0.0
        %6678 = vmatpush1.msra.mxu0 0.0
        %6679 = vmatprep.subr.mxu0 0.0
        %6680 = vmatpush1.msra.mxu0 0.0
        %6681 = vmatprep.subr.mxu0 0.0
        %6682 = vmatpush1.msra.mxu0 0.0
        %6683 = vmatprep.subr.mxu0 0.0
        %6684 = vmatpush1.msra.mxu0 0.0
        %6685 = vmatprep.subr.mxu0 0.0
        %6686 = vmatpush1.msra.mxu0 0.0
        %6687 = vmatprep.subr.mxu0 0.0
        %6688 = vmatpush1.msra.mxu0 0.0
        %6689 = vmatprep.subr.mxu0 0.0
        %6690 = vmatpush1.msra.mxu0 0.0
        %6691 = vmatprep.subr.mxu0 0.0
        %6692 = vmatpush1.msra.mxu0 0.0
        %6693 = vmatprep.subr.mxu0 0.0
        %6694 = vmatpush1.msra.mxu0 0.0
        %6695 = vmatprep.subr.mxu0 0.0
        %6696 = vmatpush1.msra.mxu0 0.0
        %6697 = vmatprep.subr.mxu0 0.0
        %6698 = vmatpush1.msra.mxu0 0.0
        %6699 = vmatprep.subr.mxu0 0.0
        %6700 = vmatpush1.msra.mxu0 0.0
        %6701 = vmatprep.subr.mxu0 0.0
        %6702 = vmatpush1.msra.mxu0 0.0
        %6703 = vmatprep.subr.mxu0 0.0
        %6704 = vmatpush1.msra.mxu0 0.0
        %6705 = vmatprep.subr.mxu0 0.0
        %6706 = vmatpush1.msra.mxu0 0.0
        %6707 = vmatprep.subr.mxu0 0.0
        %6708 = vmatpush1.msra.mxu0 0.0
        %6709 = vmatprep.subr.mxu0 0.0
        %6710 = vmatpush1.msra.mxu0 0.0
        %6711 = vmatprep.subr.mxu0 0.0
        %6712 = vmatpush1.msra.mxu0 0.0
        %6713 = vmatprep.subr.mxu0 0.0
        %6714 = vmatpush1.msra.mxu0 0.0
        %6715 = vmatprep.subr.mxu0 0.0
        %6716 = vmatpush1.msra.mxu0 0.0
        %6717 = vmatprep.subr.mxu0 0.0
        %6718 = vmatpush1.msra.mxu0 0.0
        %6719 = vmatprep.mubr.f32.mxu0 0.0
        %6720 = vmatmul.mubr.f32.gmra.mrb[0].mxu0 %v6653
        %v6721 = vpop.f32.mrb[0].mxu0
        %v6722 = vadd.f32 %v6651, %v6721
        %v6723 = vpop.f32.mrb[0].mxu0
        %6724 = vdwg.mxu0
        %v6725 = vxor.u32 %v6722, 2147483648
        %v6726 = vmul.f32 %v6725, 1.442695
        %v6727 = vpow.pop %v6726
        %v6728 = vadd.f32 %v6727, 1.0
        %v6729 = vrcp.pop %v6728
        %v6730 = vmul.f32 1.0, %v6729
        %v6731 = vmul.f32 %v6730, 0.9
        %v6732 = vadd.f32 %v6731, 1.0
        %v6733 = vlaneseq
        %v6734 = vshrl.u32 %v6733, 7
        %v6735 = vsub.s32 0, %v6734
        %v6736 = vrot.slane %v6242, %v6735
        %v6737 = vmul.f32 %v6001, %v6736
        %v6738 = vmul.f32 %v6002, %v6736
        %v6739 = vmul.f32 %v6003, %v6736
        %v6740 = vmul.f32 %v6004, %v6736
        %v6741 = vmul.f32 %v6005, %v6736
        %v6742 = vmul.f32 %v6006, %v6736
        %v6743 = vmul.f32 %v6007, %v6736
        %v6744 = vmul.f32 %v6008, %v6736
        %v6745 = vmul.f32 %v6009, %v6736
        %v6746 = vmul.f32 %v6010, %v6736
        %v6747 = vmul.f32 %v6011, %v6736
        %v6748 = vmul.f32 %v6012, %v6736
        %v6749 = vmul.f32 %v6013, %v6736
        %v6750 = vmul.f32 %v6014, %v6736
        %v6751 = vmul.f32 %v6015, %v6736
        %v6752 = vmul.f32 %v6016, %v6736
        %v6753 = vmul.f32 %v6017, %v6736
        %v6754 = vmul.f32 %v6018, %v6736
        %v6755 = vmul.f32 %v6019, %v6736
        %v6756 = vmul.f32 %v6020, %v6736
        %v6757 = vmul.f32 %v6021, %v6736
        %v6758 = vmul.f32 %v6022, %v6736
        %v6759 = vmul.f32 %v6023, %v6736
        %v6760 = vmul.f32 %v6024, %v6736
        %v6761 = vmul.f32 %v6025, %v6736
        %v6762 = vmul.f32 %v6026, %v6736
        %v6763 = vmul.f32 %v6027, %v6736
        %v6764 = vmul.f32 %v6028, %v6736
        %v6765 = vmul.f32 %v6029, %v6736
        %v6766 = vmul.f32 %v6030, %v6736
        %v6767 = vmul.f32 %v6031, %v6736
        %v6768 = vmul.f32 %v6032, %v6736
        %v6769 = vlaneseq
        %v6770 = vshrl.u32 %v6769, 7
        %v6771 = vsub.s32 0, %v6770
        %v6772 = vrot.slane %v6487, %v6771
        %v6773 = vmul.f32 %v6243, %v6772
        %v6774 = vmul.f32 %v6244, %v6772
        %v6775 = vmul.f32 %v6245, %v6772
        %v6776 = vmul.f32 %v6246, %v6772
        %v6777 = vmul.f32 %v6247, %v6772
        %v6778 = vmul.f32 %v6248, %v6772
        %v6779 = vmul.f32 %v6249, %v6772
        %v6780 = vmul.f32 %v6250, %v6772
        %v6781 = vmul.f32 %v6251, %v6772
        %v6782 = vmul.f32 %v6252, %v6772
        %v6783 = vmul.f32 %v6253, %v6772
        %v6784 = vmul.f32 %v6254, %v6772
        %v6785 = vmul.f32 %v6255, %v6772
        %v6786 = vmul.f32 %v6256, %v6772
        %v6787 = vmul.f32 %v6257, %v6772
        %v6788 = vmul.f32 %v6258, %v6772
        %v6789 = vmul.f32 %v6259, %v6772
        %v6790 = vmul.f32 %v6260, %v6772
        %v6791 = vmul.f32 %v6261, %v6772
        %v6792 = vmul.f32 %v6262, %v6772
        %v6793 = vmul.f32 %v6263, %v6772
        %v6794 = vmul.f32 %v6264, %v6772
        %v6795 = vmul.f32 %v6265, %v6772
        %v6796 = vmul.f32 %v6266, %v6772
        %v6797 = vmul.f32 %v6267, %v6772
        %v6798 = vmul.f32 %v6268, %v6772
        %v6799 = vmul.f32 %v6269, %v6772
        %v6800 = vmul.f32 %v6270, %v6772
        %v6801 = vmul.f32 %v6271, %v6772
        %v6802 = vmul.f32 %v6272, %v6772
        %v6803 = vmul.f32 %v6273, %v6772
        %v6804 = vmul.f32 %v6274, %v6772
        %v6805 = vsub.f32 %v6737, %v6773
        %v6806 = vsub.f32 %v6738, %v6774
        %v6807 = vsub.f32 %v6739, %v6775
        %v6808 = vsub.f32 %v6740, %v6776
        %v6809 = vsub.f32 %v6741, %v6777
        %v6810 = vsub.f32 %v6742, %v6778
        %v6811 = vsub.f32 %v6743, %v6779
        %v6812 = vsub.f32 %v6744, %v6780
        %v6813 = vsub.f32 %v6745, %v6781
        %v6814 = vsub.f32 %v6746, %v6782
        %v6815 = vsub.f32 %v6747, %v6783
        %v6816 = vsub.f32 %v6748, %v6784
        %v6817 = vsub.f32 %v6749, %v6785
        %v6818 = vsub.f32 %v6750, %v6786
        %v6819 = vsub.f32 %v6751, %v6787
        %v6820 = vsub.f32 %v6752, %v6788
        %v6821 = vsub.f32 %v6753, %v6789
        %v6822 = vsub.f32 %v6754, %v6790
        %v6823 = vsub.f32 %v6755, %v6791
        %v6824 = vsub.f32 %v6756, %v6792
        %v6825 = vsub.f32 %v6757, %v6793
        %v6826 = vsub.f32 %v6758, %v6794
        %v6827 = vsub.f32 %v6759, %v6795
        %v6828 = vsub.f32 %v6760, %v6796
        %v6829 = vsub.f32 %v6761, %v6797
        %v6830 = vsub.f32 %v6762, %v6798
        %v6831 = vsub.f32 %v6763, %v6799
        %v6832 = vsub.f32 %v6764, %v6800
        %v6833 = vsub.f32 %v6765, %v6801
        %v6834 = vsub.f32 %v6766, %v6802
        %v6835 = vsub.f32 %v6767, %v6803
        %v6836 = vsub.f32 %v6768, %v6804
        %v6837 = vxor.u32 %v6805, 2147483648
        %v6838 = vxor.u32 %v6806, 2147483648
        %v6839 = vxor.u32 %v6807, 2147483648
        %v6840 = vxor.u32 %v6808, 2147483648
        %v6841 = vxor.u32 %v6809, 2147483648
        %v6842 = vxor.u32 %v6810, 2147483648
        %v6843 = vxor.u32 %v6811, 2147483648
        %v6844 = vxor.u32 %v6812, 2147483648
        %v6845 = vxor.u32 %v6813, 2147483648
        %v6846 = vxor.u32 %v6814, 2147483648
        %v6847 = vxor.u32 %v6815, 2147483648
        %v6848 = vxor.u32 %v6816, 2147483648
        %v6849 = vxor.u32 %v6817, 2147483648
        %v6850 = vxor.u32 %v6818, 2147483648
        %v6851 = vxor.u32 %v6819, 2147483648
        %v6852 = vxor.u32 %v6820, 2147483648
        %v6853 = vxor.u32 %v6821, 2147483648
        %v6854 = vxor.u32 %v6822, 2147483648
        %v6855 = vxor.u32 %v6823, 2147483648
        %v6856 = vxor.u32 %v6824, 2147483648
        %v6857 = vxor.u32 %v6825, 2147483648
        %v6858 = vxor.u32 %v6826, 2147483648
        %v6859 = vxor.u32 %v6827, 2147483648
        %v6860 = vxor.u32 %v6828, 2147483648
        %v6861 = vxor.u32 %v6829, 2147483648
        %v6862 = vxor.u32 %v6830, 2147483648
        %v6863 = vxor.u32 %v6831, 2147483648
        %v6864 = vxor.u32 %v6832, 2147483648
        %v6865 = vxor.u32 %v6833, 2147483648
        %v6866 = vxor.u32 %v6834, 2147483648
        %v6867 = vxor.u32 %v6835, 2147483648
        %v6868 = vxor.u32 %v6836, 2147483648
        %v6869 = vmul.f32 %v6837, 1.442695
        %v6870 = vpow.pop %v6869
        %v6871 = vmul.f32 %v6838, 1.442695
        %v6872 = vpow.pop %v6871
        %v6873 = vmul.f32 %v6839, 1.442695
        %v6874 = vpow.pop %v6873
        %v6875 = vmul.f32 %v6840, 1.442695
        %v6876 = vpow.pop %v6875
        %v6877 = vmul.f32 %v6841, 1.442695
        %v6878 = vpow.pop %v6877
        %v6879 = vmul.f32 %v6842, 1.442695
        %v6880 = vpow.pop %v6879
        %v6881 = vmul.f32 %v6843, 1.442695
        %v6882 = vpow.pop %v6881
        %v6883 = vmul.f32 %v6844, 1.442695
        %v6884 = vpow.pop %v6883
        %v6885 = vmul.f32 %v6845, 1.442695
        %v6886 = vpow.pop %v6885
        %v6887 = vmul.f32 %v6846, 1.442695
        %v6888 = vpow.pop %v6887
        %v6889 = vmul.f32 %v6847, 1.442695
        %v6890 = vpow.pop %v6889
        %v6891 = vmul.f32 %v6848, 1.442695
        %v6892 = vpow.pop %v6891
        %v6893 = vmul.f32 %v6849, 1.442695
        %v6894 = vpow.pop %v6893
        %v6895 = vmul.f32 %v6850, 1.442695
        %v6896 = vpow.pop %v6895
        %v6897 = vmul.f32 %v6851, 1.442695
        %v6898 = vpow.pop %v6897
        %v6899 = vmul.f32 %v6852, 1.442695
        %v6900 = vpow.pop %v6899
        %v6901 = vmul.f32 %v6853, 1.442695
        %v6902 = vpow.pop %v6901
        %v6903 = vmul.f32 %v6854, 1.442695
        %v6904 = vpow.pop %v6903
        %v6905 = vmul.f32 %v6855, 1.442695
        %v6906 = vpow.pop %v6905
        %v6907 = vmul.f32 %v6856, 1.442695
        %v6908 = vpow.pop %v6907
        %v6909 = vmul.f32 %v6857, 1.442695
        %v6910 = vpow.pop %v6909
        %v6911 = vmul.f32 %v6858, 1.442695
        %v6912 = vpow.pop %v6911
        %v6913 = vmul.f32 %v6859, 1.442695
        %v6914 = vpow.pop %v6913
        %v6915 = vmul.f32 %v6860, 1.442695
        %v6916 = vpow.pop %v6915
        %v6917 = vmul.f32 %v6861, 1.442695
        %v6918 = vpow.pop %v6917
        %v6919 = vmul.f32 %v6862, 1.442695
        %v6920 = vpow.pop %v6919
        %v6921 = vmul.f32 %v6863, 1.442695
        %v6922 = vpow.pop %v6921
        %v6923 = vmul.f32 %v6864, 1.442695
        %v6924 = vpow.pop %v6923
        %v6925 = vmul.f32 %v6865, 1.442695
        %v6926 = vpow.pop %v6925
        %v6927 = vmul.f32 %v6866, 1.442695
        %v6928 = vpow.pop %v6927
        %v6929 = vmul.f32 %v6867, 1.442695
        %v6930 = vpow.pop %v6929
        %v6931 = vmul.f32 %v6868, 1.442695
        %v6932 = vpow.pop %v6931
        %v6933 = vadd.f32 %v6870, 1.0
        %v6934 = vadd.f32 %v6872, 1.0
        %v6935 = vadd.f32 %v6874, 1.0
        %v6936 = vadd.f32 %v6876, 1.0
        %v6937 = vadd.f32 %v6878, 1.0
        %v6938 = vadd.f32 %v6880, 1.0
        %v6939 = vadd.f32 %v6882, 1.0
        %v6940 = vadd.f32 %v6884, 1.0
        %v6941 = vadd.f32 %v6886, 1.0
        %v6942 = vadd.f32 %v6888, 1.0
        %v6943 = vadd.f32 %v6890, 1.0
        %v6944 = vadd.f32 %v6892, 1.0
        %v6945 = vadd.f32 %v6894, 1.0
        %v6946 = vadd.f32 %v6896, 1.0
        %v6947 = vadd.f32 %v6898, 1.0
        %v6948 = vadd.f32 %v6900, 1.0
        %v6949 = vadd.f32 %v6902, 1.0
        %v6950 = vadd.f32 %v6904, 1.0
        %v6951 = vadd.f32 %v6906, 1.0
        %v6952 = vadd.f32 %v6908, 1.0
        %v6953 = vadd.f32 %v6910, 1.0
        %v6954 = vadd.f32 %v6912, 1.0
        %v6955 = vadd.f32 %v6914, 1.0
        %v6956 = vadd.f32 %v6916, 1.0
        %v6957 = vadd.f32 %v6918, 1.0
        %v6958 = vadd.f32 %v6920, 1.0
        %v6959 = vadd.f32 %v6922, 1.0
        %v6960 = vadd.f32 %v6924, 1.0
        %v6961 = vadd.f32 %v6926, 1.0
        %v6962 = vadd.f32 %v6928, 1.0
        %v6963 = vadd.f32 %v6930, 1.0
        %v6964 = vadd.f32 %v6932, 1.0
        %v6965 = vrcp.pop %v6933
        %v6966 = vmul.f32 1.0, %v6965
        %v6967 = vrcp.pop %v6934
        %v6968 = vmul.f32 1.0, %v6967
        %v6969 = vrcp.pop %v6935
        %v6970 = vmul.f32 1.0, %v6969
        %v6971 = vrcp.pop %v6936
        %v6972 = vmul.f32 1.0, %v6971
        %v6973 = vrcp.pop %v6937
        %v6974 = vmul.f32 1.0, %v6973
        %v6975 = vrcp.pop %v6938
        %v6976 = vmul.f32 1.0, %v6975
        %v6977 = vrcp.pop %v6939
        %v6978 = vmul.f32 1.0, %v6977
        %v6979 = vrcp.pop %v6940
        %v6980 = vmul.f32 1.0, %v6979
        %v6981 = vrcp.pop %v6941
        %v6982 = vmul.f32 1.0, %v6981
        %v6983 = vrcp.pop %v6942
        %v6984 = vmul.f32 1.0, %v6983
        %v6985 = vrcp.pop %v6943
        %v6986 = vmul.f32 1.0, %v6985
        %v6987 = vrcp.pop %v6944
        %v6988 = vmul.f32 1.0, %v6987
        %v6989 = vrcp.pop %v6945
        %v6990 = vmul.f32 1.0, %v6989
        %v6991 = vrcp.pop %v6946
        %v6992 = vmul.f32 1.0, %v6991
        %v6993 = vrcp.pop %v6947
        %v6994 = vmul.f32 1.0, %v6993
        %v6995 = vrcp.pop %v6948
        %v6996 = vmul.f32 1.0, %v6995
        %v6997 = vrcp.pop %v6949
        %v6998 = vmul.f32 1.0, %v6997
        %v6999 = vrcp.pop %v6950
        %v7000 = vmul.f32 1.0, %v6999
        %v7001 = vrcp.pop %v6951
        %v7002 = vmul.f32 1.0, %v7001
        %v7003 = vrcp.pop %v6952
        %v7004 = vmul.f32 1.0, %v7003
        %v7005 = vrcp.pop %v6953
        %v7006 = vmul.f32 1.0, %v7005
        %v7007 = vrcp.pop %v6954
        %v7008 = vmul.f32 1.0, %v7007
        %v7009 = vrcp.pop %v6955
        %v7010 = vmul.f32 1.0, %v7009
        %v7011 = vrcp.pop %v6956
        %v7012 = vmul.f32 1.0, %v7011
        %v7013 = vrcp.pop %v6957
        %v7014 = vmul.f32 1.0, %v7013
        %v7015 = vrcp.pop %v6958
        %v7016 = vmul.f32 1.0, %v7015
        %v7017 = vrcp.pop %v6959
        %v7018 = vmul.f32 1.0, %v7017
        %v7019 = vrcp.pop %v6960
        %v7020 = vmul.f32 1.0, %v7019
        %v7021 = vrcp.pop %v6961
        %v7022 = vmul.f32 1.0, %v7021
        %v7023 = vrcp.pop %v6962
        %v7024 = vmul.f32 1.0, %v7023
        %v7025 = vrcp.pop %v6963
        %v7026 = vmul.f32 1.0, %v7025
        %v7027 = vrcp.pop %v6964
        %v7028 = vmul.f32 1.0, %v7027
        %v7029 = vlaneseq
        %v7030 = vshrl.u32 %v7029, 7
        %v7031 = vsub.s32 0, %v7030
        %v7032 = vrot.slane %v6732, %v7031
        %v7033 = vmul.f32 %v6488, %v7032
        %v7034 = vmul.f32 %v6489, %v7032
        %v7035 = vmul.f32 %v6490, %v7032
        %v7036 = vmul.f32 %v6491, %v7032
        %v7037 = vmul.f32 %v6492, %v7032
        %v7038 = vmul.f32 %v6493, %v7032
        %v7039 = vmul.f32 %v6494, %v7032
        %v7040 = vmul.f32 %v6495, %v7032
        %v7041 = vmul.f32 %v6496, %v7032
        %v7042 = vmul.f32 %v6497, %v7032
        %v7043 = vmul.f32 %v6498, %v7032
        %v7044 = vmul.f32 %v6499, %v7032
        %v7045 = vmul.f32 %v6500, %v7032
        %v7046 = vmul.f32 %v6501, %v7032
        %v7047 = vmul.f32 %v6502, %v7032
        %v7048 = vmul.f32 %v6503, %v7032
        %v7049 = vmul.f32 %v6504, %v7032
        %v7050 = vmul.f32 %v6505, %v7032
        %v7051 = vmul.f32 %v6506, %v7032
        %v7052 = vmul.f32 %v6507, %v7032
        %v7053 = vmul.f32 %v6508, %v7032
        %v7054 = vmul.f32 %v6509, %v7032
        %v7055 = vmul.f32 %v6510, %v7032
        %v7056 = vmul.f32 %v6511, %v7032
        %v7057 = vmul.f32 %v6512, %v7032
        %v7058 = vmul.f32 %v6513, %v7032
        %v7059 = vmul.f32 %v6514, %v7032
        %v7060 = vmul.f32 %v6515, %v7032
        %v7061 = vmul.f32 %v6516, %v7032
        %v7062 = vmul.f32 %v6517, %v7032
        %v7063 = vmul.f32 %v6518, %v7032
        %v7064 = vmul.f32 %v6519, %v7032
        %v7065 = vmul.f32 %v7033, %v6966
        %v7066 = vmul.f32 %v7034, %v6968
        %v7067 = vmul.f32 %v7035, %v6970
        %v7068 = vmul.f32 %v7036, %v6972
        %v7069 = vmul.f32 %v7037, %v6974
        %v7070 = vmul.f32 %v7038, %v6976
        %v7071 = vmul.f32 %v7039, %v6978
        %v7072 = vmul.f32 %v7040, %v6980
        %v7073 = vmul.f32 %v7041, %v6982
        %v7074 = vmul.f32 %v7042, %v6984
        %v7075 = vmul.f32 %v7043, %v6986
        %v7076 = vmul.f32 %v7044, %v6988
        %v7077 = vmul.f32 %v7045, %v6990
        %v7078 = vmul.f32 %v7046, %v6992
        %v7079 = vmul.f32 %v7047, %v6994
        %v7080 = vmul.f32 %v7048, %v6996
        %v7081 = vmul.f32 %v7049, %v6998
        %v7082 = vmul.f32 %v7050, %v7000
        %v7083 = vmul.f32 %v7051, %v7002
        %v7084 = vmul.f32 %v7052, %v7004
        %v7085 = vmul.f32 %v7053, %v7006
        %v7086 = vmul.f32 %v7054, %v7008
        %v7087 = vmul.f32 %v7055, %v7010
        %v7088 = vmul.f32 %v7056, %v7012
        %v7089 = vmul.f32 %v7057, %v7014
        %v7090 = vmul.f32 %v7058, %v7016
        %v7091 = vmul.f32 %v7059, %v7018
        %v7092 = vmul.f32 %v7060, %v7020
        %v7093 = vmul.f32 %v7061, %v7022
        %v7094 = vmul.f32 %v7062, %v7024
        %v7095 = vmul.f32 %v7063, %v7026
        %v7096 = vmul.f32 %v7064, %v7028
        %7097 = vst [vmem:[%s367] sm:$0xff] %v7065
        %7098 = vst [vmem:[%s367 + $0x8] sm:$0xff] %v7066
        %7099 = vst [vmem:[%s367 + $0x10] sm:$0xff] %v7067
        %7100 = vst [vmem:[%s367 + $0x18] sm:$0xff] %v7068
        %7101 = vst [vmem:[%s367 + $0x20] sm:$0xff] %v7069
        %7102 = vst [vmem:[%s367 + $0x28] sm:$0xff] %v7070
        %7103 = vst [vmem:[%s367 + $0x30] sm:$0xff] %v7071
        %7104 = vst [vmem:[%s367 + $0x38] sm:$0xff] %v7072
        %7105 = vst [vmem:[%s367 + $0x40] sm:$0xff] %v7073
        %7106 = vst [vmem:[%s367 + $0x48] sm:$0xff] %v7074
        %7107 = vst [vmem:[%s367 + $0x50] sm:$0xff] %v7075
        %7108 = vst [vmem:[%s367 + $0x58] sm:$0xff] %v7076
        %7109 = vst [vmem:[%s367 + $0x60] sm:$0xff] %v7077
        %7110 = vst [vmem:[%s367 + $0x68] sm:$0xff] %v7078
        %7111 = vst [vmem:[%s367 + $0x70] sm:$0xff] %v7079
        %7112 = vst [vmem:[%s367 + $0x78] sm:$0xff] %v7080
        %7113 = vst [vmem:[%s367 + $0x80] sm:$0xff] %v7081
        %7114 = vst [vmem:[%s367 + $0x88] sm:$0xff] %v7082
        %7115 = vst [vmem:[%s367 + $0x90] sm:$0xff] %v7083
        %7116 = vst [vmem:[%s367 + $0x98] sm:$0xff] %v7084
        %7117 = vst [vmem:[%s367 + $0xa0] sm:$0xff] %v7085
        %7118 = vst [vmem:[%s367 + $0xa8] sm:$0xff] %v7086
        %7119 = vst [vmem:[%s367 + $0xb0] sm:$0xff] %v7087
        %7120 = vst [vmem:[%s367 + $0xb8] sm:$0xff] %v7088
        %7121 = vst [vmem:[%s367 + $0xc0] sm:$0xff] %v7089
        %7122 = vst [vmem:[%s367 + $0xc8] sm:$0xff] %v7090
        %7123 = vst [vmem:[%s367 + $0xd0] sm:$0xff] %v7091
        %7124 = vst [vmem:[%s367 + $0xd8] sm:$0xff] %v7092
        %7125 = vst [vmem:[%s367 + $0xe0] sm:$0xff] %v7093
        %7126 = vst [vmem:[%s367 + $0xe8] sm:$0xff] %v7094
        %7127 = vst [vmem:[%s367 + $0xf0] sm:$0xff] %v7095
        %7128 = vst [vmem:[%s367 + $0xf8] sm:$0xff] %v7096
        %s7129 = sand.u32 %s252, 1
        %s7130 = scalar_lea.sflag [#allocation7], %s7129
        %s7131 = sand.u32 %s252, 1
        %s7132 = smul.addr %s7131, 256
        %s7133 = scalar_lea.vmem [#allocation6], %s7132
        // Predicated region
        $region61: #{_lambda_.1} parent=59 // pred_check
          %p7134 = pneg %p262
        $region62: #{_lambda_.1} parent=59 // pred_check_branch
          %7136 = sbr.rel (%p7134) target = $region64
        $region63: #{_lambda_.1} parent=59 // pred_region
          %s7138 = ssub.s32 4096, 4096
          %7139 = vsyncadd %s7130, %s7138
          %s7140 = smul.addr %s24, 32
          %s7141 = smul.addr %s7140, 128
          %s7142 = scalar_lea.hbm %s10, %s7141
          %s7143 = sshll.u32 %s7133, 4
          %s7144 = int_to_ptr.vmem [resolvable:$true] %s7143
          %7149 = dma.vmem_to_hbm [thread:$0]  %s7144, 4096, %s7142, %s7130, 128, 128, 8
        $region64: #{_lambda_.1} parent=59 // pred_fallthru
          _
      $region60: #{_lambda_.1} parent=5 // pred_fallthru
        _
      %p7150 = scmp.le.s32.totalorder 2, %s19
      // Predicated region
      $region65: #{_lambda_.1} parent=5 // pred_check
        %p7151 = pneg %p7150
      $region66: #{_lambda_.1} parent=5 // pred_check_branch
        %7153 = sbr.rel (%p7151) target = $region68
      $region67: #{_lambda_.1} parent=5 // pred_region
        %s7154 = ssub.s32 %s19, 2
        // Predicated region
        $region69: #{_lambda_.1} parent=67 // pred_check
          %p7155 = pneg %p268
        $region70: #{_lambda_.1} parent=67 // pred_check_branch
          %7157 = sbr.rel (%p7155) target = $region72
        $region71: #{_lambda_.1} parent=67 // pred_region
          %s7158 = sand.u32 %s253, 1
          %s7159 = scalar_lea.sflag [#allocation7], %s7158
          %s7160 = sand.u32 %s253, 1
          %s7161 = smul.addr %s7160, 256
          %s7162 = scalar_lea.vmem [#allocation6], %s7161
          %7163 = dma.done %s7159, 4096
        $region72: #{_lambda_.1} parent=67 // pred_fallthru
          _
      $region68: #{_lambda_.1} parent=5 // pred_fallthru
        _
    $region6: #{_lambda_.1} parent=1 // loop_footer
      %s23 = sadd.s32 1, %s19
    $region7: #{_lambda_.1} parent=1 // loop_footer_branch
      %18 = sbr.rel target = $region3
    $region8: #{_lambda_.1} parent=1 // loop_exit
      _
    %7164 = vsyncpa [#allocation7], 1
    %s7165 = scalar_lea.sflag [#allocation7], 1
    %7166 = vsyncpa %s7165, 1

</llo_original>
